<compile_context>
chip_gen: v5e
topology: v5e:2x2
jax: 0.10.0
libtpu: 0.0.40
codegen_flags: <defaults>
</compile_context>

<pallas_src>
import jax
import jax.numpy as jnp
from jax.experimental import pallas as pl
from jax.experimental.pallas import tpu as pltpu

KSIZE = 3
STRIDE = 2
PAD = 1
IMG = 28            # input image height/width
H1, H2, H3 = 14, 7, 4
C_HID = 16          # conv1 / conv2 output channels
C_OUT = 10          # conv3 output channels (model)
C_OUT_PAD = 16      # per-column-group channel padding inside the kernel
OUT_LANES = 128     # lane-dense kernel output width (sliced to 10 outside)
MAX_TB = 128        # max batch tile per grid step


def _round_up(n, m):
    return ((n + m - 1) // m) * m


# ---------------- the fused kernel ----------------

def _mnist_cnn_kernel(x_ref, w1_ref, w2_ref, w3_ref, b1_ref, b2_ref, b3_ref,
                      out_ref):
    tb = x_ref.shape[0]
    f32 = jnp.float32

    def conv_banded(prows, w_ref, b_ref, ho):
        """One stride-2 / pad-1 3x3 conv as 3 banded MXU matmuls (one per kh).

        prows[h] = padded-input row h as a (TB, Wi*Ci) slab (zero slabs where
        the conv padding requires); w_ref[kh] is the (Wi*Ci, Wo*Co) banded
        weight handling the kw/cin taps along lanes.  Returns (ho, TB, Wo*Co).
        """
        acc = None
        for kh in range(KSIZE):
            lhs = jnp.stack([prows[2 * io + kh] for io in range(ho)], axis=0)
            lhs = lhs.reshape(ho * tb, lhs.shape[-1]).astype(jnp.bfloat16)
            part = jnp.dot(lhs, w_ref[kh], preferred_element_type=f32)  # MXU
            acc = part if acc is None else acc + part
        y = jnp.maximum(acc + b_ref[...], 0.0)                          # VPU
        return y.reshape(ho, tb, -1)

    # ---- in-kernel space-to-depth: slice the (TB, 784) block into image rows
    #      (static lane slices); explicit zero slabs provide the h-padding.
    x = x_ref[...]                                           # (TB, 784) f32
    zrow = jnp.zeros((tb, IMG), f32)
    prows1 = [zrow] + [x[:, IMG * h:IMG * (h + 1)] for h in range(IMG)]

    # ---- conv1: 28x28x1 -> 14x14x16      (lanes = j1*16 + c, 224 wide)
    y1 = conv_banded(prows1, w1_ref, b1_ref, H1)             # (14, TB, 224)

    # ---- conv2: 14x14x16 -> 7x7x16       (lanes = j2*16 + c, 112 wide)
    z1 = jnp.zeros((tb, H1 * C_HID), f32)
    prows2 = [z1] + [y1[i] for i in range(H1)]
    y2 = conv_banded(prows2, w2_ref, b2_ref, H2)             # (7, TB, 112)

    # ---- conv3: 7x7x16 -> 4x4x16 (10 real channels + 6 zero-padded)
    z2 = jnp.zeros((tb, H2 * C_HID), f32)
    prows3 = [z2] + [y2[i] for i in range(H2)] + [z2]
    y3 = conv_banded(prows3, w3_ref, b3_ref, H3)             # (4, TB, 64)

    # ---- fused F.avg_pool2d(4): mean over the 4x4 spatial map.
    s = y3[0] + y3[1] + y3[2] + y3[3]                        # (TB, 64)
    g = (s[:, 0:16] + s[:, 16:32] + s[:, 32:48] + s[:, 48:64]) * (1.0 / 16.0)
    out_ref[...] = jnp.concatenate(
        [g, jnp.zeros((tb, OUT_LANES - C_OUT_PAD), f32)], axis=1)


# ---------------- wrapper: weight prep (tiny) + pallas_call ----------------

def _banded_weights(w_hwio, wi, wo, co_pad):
    """(3,3,Ci,Co) HWIO conv weights -> (3, wi*Ci, wo*co_pad) bf16 banded
    matrices: B[kh][ji*Ci+ci, jo*co_pad+co] = w[kh,kw,ci,co] iff
    ji == 2*jo + kw - 1 is in range (stride-2 / pad-1 taps along W)."""
    _, _, ci, co = w_hwio.shape
    mats = []
    for kh in range(KSIZE):
        b = jnp.zeros((wi * ci, wo * co_pad), jnp.float32)
        for jo in range(wo):
            for kw in range(KSIZE):
                ji = STRIDE * jo + kw - PAD
                if 0 <= ji < wi:
                    b = b.at[ji * ci:(ji + 1) * ci,
                             jo * co_pad:jo * co_pad + co].set(w_hwio[kh, kw])
        mats.append(b)
    return jnp.stack(mats).astype(jnp.bfloat16)


def _tiled_bias(b, wo, co_pad):
    co = b.shape[0]
    if co_pad != co:
        b = jnp.concatenate([b, jnp.zeros((co_pad - co,), b.dtype)])
    return jnp.tile(b, (wo,))[None, :].astype(jnp.float32)


def mnist_cnn_forward(xb, params):
    """xb: (B, 784) float32 -> (B, 10) float32 (matches Mnist_CNN.forward)."""
    B = xb.shape[0]
    tb = min(MAX_TB, _round_up(B, 8))            # batch on sublanes: mult of 8
    bpad = _round_up(B, tb)

    x = xb.reshape(B, IMG * IMG).astype(jnp.float32)
    if bpad != B:
        x = jnp.concatenate([x, jnp.zeros((bpad - B, IMG * IMG), x.dtype)], 0)

    # banded bf16 weights + lane-tiled f32 biases (tiny, precomputed per call)
    w1 = _banded_weights(params['w1'], IMG, H1, C_HID)        # (3,  28, 224)
    w2 = _banded_weights(params['w2'], H1, H2, C_HID)         # (3, 224, 112)
    w3 = _banded_weights(params['w3'], H2, H3, C_OUT_PAD)     # (3, 112,  64)
    b1 = _tiled_bias(params['b1'], H1, C_HID)                 # (1, 224)
    b2 = _tiled_bias(params['b2'], H2, C_HID)                 # (1, 112)
    b3 = _tiled_bias(params['b3'], H3, C_OUT_PAD)             # (1,  64)

    flops = bpad * 2 * (H1 * H1 * C_HID * 9
                        + H2 * H2 * C_HID * 9 * C_HID
                        + H3 * H3 * C_OUT * 9 * C_HID)
    bytes_accessed = (x.size * 4 + (w1.size + w2.size + w3.size) * 2
                      + (b1.size + b2.size + b3.size) * 4
                      + bpad * OUT_LANES * 4)

    out = pl.pallas_call(
        _mnist_cnn_kernel,
        out_shape=jax.ShapeDtypeStruct((bpad, OUT_LANES), jnp.float32),
        grid=(bpad // tb,),
        in_specs=[
            pl.BlockSpec((tb, IMG * IMG), lambda i: (i, 0)),
            pl.BlockSpec(w1.shape, lambda i: (0, 0, 0)),
            pl.BlockSpec(w2.shape, lambda i: (0, 0, 0)),
            pl.BlockSpec(w3.shape, lambda i: (0, 0, 0)),
            pl.BlockSpec(b1.shape, lambda i: (0, 0)),
            pl.BlockSpec(b2.shape, lambda i: (0, 0)),
            pl.BlockSpec(b3.shape, lambda i: (0, 0)),
        ],
        out_specs=pl.BlockSpec((tb, OUT_LANES), lambda i: (i, 0)),
        compiler_params=pltpu.CompilerParams(
            dimension_semantics=("parallel",),
            vmem_limit_bytes=40 * 1024 * 1024),
        cost_estimate=pl.CostEstimate(flops=flops, transcendentals=0,
                                      bytes_accessed=bytes_accessed),
    )(x, w1, w2, w3, b1, b2, b3)
    return out[:B, :C_OUT]


# ---------------- params / reference ----------------

def init_params(key):
    """Deterministic init mirroring nn.Conv2d defaults; weights kept in HWIO."""
    def conv_init(k, cin, cout):
        k1, k2 = jax.random.split(k)
        fan_in = cin * KSIZE * KSIZE
        bound = 1.0 / jnp.sqrt(jnp.float32(fan_in))
        w_oihw = jax.random.uniform(k1, (cout, cin, KSIZE, KSIZE),
                                    jnp.float32, -bound, bound)
        w_hwio = jnp.transpose(w_oihw, (2, 3, 1, 0))
        b = jax.random.uniform(k2, (cout,), jnp.float32, -bound, bound)
        return w_hwio, b

    k1, k2, k3 = jax.random.split(key, 3)
    w1, b1 = conv_init(k1, 1, C_HID)
    w2, b2 = conv_init(k2, C_HID, C_HID)
    w3, b3 = conv_init(k3, C_HID, C_OUT)
    return dict(w1=w1, b1=b1, w2=w2, b2=b2, w3=w3, b3=b3)


def reference_forward(xb, params):
    """Pure-JAX f32 reference for correctness checking."""
    B = xb.shape[0]
    x = jnp.transpose(xb.reshape(B, 1, IMG, IMG), (0, 2, 3, 1))

    def conv(x, w, b):
        y = jax.lax.conv_general_dilated(
            x, w, window_strides=(STRIDE, STRIDE),
            padding=((PAD, PAD), (PAD, PAD)),
            dimension_numbers=('NHWC', 'HWIO', 'NHWC'))
        return jax.nn.relu(y + b)

    x = conv(x, params['w1'], params['b1'])
    x = conv(x, params['w2'], params['b2'])
    x = conv(x, params['w3'], params['b3'])
    return jnp.mean(x, axis=(1, 2))


if __name__ == "__main__":
    key = jax.random.PRNGKey(0)
    pkey, xkey = jax.random.split(key)
    params = init_params(pkey)

    # 200 samples -> batch tile 128, grid of 2 "parallel" steps (megacore),
    # and exercises the batch-padding path (200 -> 256).
    B = 200
    xb = jax.random.normal(xkey, (B, 784), dtype=jnp.float32)

    fwd = jax.jit(mnist_cnn_forward)
    out = jax.block_until_ready(fwd(xb, params))
    ref = reference_forward(xb, params)

    assert out.shape == (B, 10), out.shape
    err = jnp.max(jnp.abs(out - ref))
    # bf16 MXU operands with f32 accumulation -> ~1e-2 tolerance.
    assert jnp.allclose(out, ref, atol=2e-2, rtol=2e-2), f"max abs err {err}"
    print("KERNEL_OK")
</pallas_src>

<mosaic_0001>
module attributes {stable_mosaic.version = 11 : i64} {
  func.func @_mnist_cnn_kernel(%arg0: i32, %arg1: memref<128x784xf32, #tpu.memory_space<vmem>>, %arg2: memref<3x28x224xbf16, #tpu.memory_space<vmem>>, %arg3: memref<3x224x112xbf16, #tpu.memory_space<vmem>>, %arg4: memref<3x112x64xbf16, #tpu.memory_space<vmem>>, %arg5: memref<1x224xf32, #tpu.memory_space<vmem>>, %arg6: memref<1x112xf32, #tpu.memory_space<vmem>>, %arg7: memref<1x64xf32, #tpu.memory_space<vmem>>, %arg8: memref<128x128xf32, #tpu.memory_space<vmem>>) attributes {dimension_semantics = [#tpu.dimension_semantics<parallel>], iteration_bounds = array<i64: 2>, scalar_prefetch = 0 : i64, scratch_operands = 0 : i64, tpu.core_type = #tpu.core_type<tc>, window_params = [{transform_indices = @transform_0, window_bounds = array<i64: 128, 784>}, {pipeline_mode = #tpu.pipeline_mode<synchronous>, transform_indices = @transform_1, window_bounds = array<i64: 3, 28, 224>}, {pipeline_mode = #tpu.pipeline_mode<synchronous>, transform_indices = @transform_2, window_bounds = array<i64: 3, 224, 112>}, {pipeline_mode = #tpu.pipeline_mode<synchronous>, transform_indices = @transform_3, window_bounds = array<i64: 3, 112, 64>}, {pipeline_mode = #tpu.pipeline_mode<synchronous>, transform_indices = @transform_4, window_bounds = array<i64: 1, 224>}, {pipeline_mode = #tpu.pipeline_mode<synchronous>, transform_indices = @transform_5, window_bounds = array<i64: 1, 112>}, {pipeline_mode = #tpu.pipeline_mode<synchronous>, transform_indices = @transform_6, window_bounds = array<i64: 1, 64>}, {transform_indices = @transform_7, window_bounds = array<i64: 128, 128>}]} {
    %c0 = arith.constant 0 : index
    %c0_0 = arith.constant 0 : index
    %0 = vector.load %arg1[%c0, %c0_0] : memref<128x784xf32, #tpu.memory_space<vmem>>, vector<128x784xf32>
    %cst = arith.constant 0.000000e+00 : f32
    %1 = vector.broadcast %cst : f32 to vector<128x28xf32>
    %2 = vector.extract_strided_slice %0 {offsets = [0, 0], sizes = [128, 28], strides = [1, 1]} : vector<128x784xf32> to vector<128x28xf32>
    %3 = vector.extract_strided_slice %0 {offsets = [0, 28], sizes = [128, 28], strides = [1, 1]} : vector<128x784xf32> to vector<128x28xf32>
    %4 = vector.extract_strided_slice %0 {offsets = [0, 56], sizes = [128, 28], strides = [1, 1]} : vector<128x784xf32> to vector<128x28xf32>
    %5 = vector.extract_strided_slice %0 {offsets = [0, 84], sizes = [128, 28], strides = [1, 1]} : vector<128x784xf32> to vector<128x28xf32>
    %6 = vector.extract_strided_slice %0 {offsets = [0, 112], sizes = [128, 28], strides = [1, 1]} : vector<128x784xf32> to vector<128x28xf32>
    %7 = vector.extract_strided_slice %0 {offsets = [0, 140], sizes = [128, 28], strides = [1, 1]} : vector<128x784xf32> to vector<128x28xf32>
    %8 = vector.extract_strided_slice %0 {offsets = [0, 168], sizes = [128, 28], strides = [1, 1]} : vector<128x784xf32> to vector<128x28xf32>
    %9 = vector.extract_strided_slice %0 {offsets = [0, 196], sizes = [128, 28], strides = [1, 1]} : vector<128x784xf32> to vector<128x28xf32>
    %10 = vector.extract_strided_slice %0 {offsets = [0, 224], sizes = [128, 28], strides = [1, 1]} : vector<128x784xf32> to vector<128x28xf32>
    %11 = vector.extract_strided_slice %0 {offsets = [0, 252], sizes = [128, 28], strides = [1, 1]} : vector<128x784xf32> to vector<128x28xf32>
    %12 = vector.extract_strided_slice %0 {offsets = [0, 280], sizes = [128, 28], strides = [1, 1]} : vector<128x784xf32> to vector<128x28xf32>
    %13 = vector.extract_strided_slice %0 {offsets = [0, 308], sizes = [128, 28], strides = [1, 1]} : vector<128x784xf32> to vector<128x28xf32>
    %14 = vector.extract_strided_slice %0 {offsets = [0, 336], sizes = [128, 28], strides = [1, 1]} : vector<128x784xf32> to vector<128x28xf32>
    %15 = vector.extract_strided_slice %0 {offsets = [0, 364], sizes = [128, 28], strides = [1, 1]} : vector<128x784xf32> to vector<128x28xf32>
    %16 = vector.extract_strided_slice %0 {offsets = [0, 392], sizes = [128, 28], strides = [1, 1]} : vector<128x784xf32> to vector<128x28xf32>
    %17 = vector.extract_strided_slice %0 {offsets = [0, 420], sizes = [128, 28], strides = [1, 1]} : vector<128x784xf32> to vector<128x28xf32>
    %18 = vector.extract_strided_slice %0 {offsets = [0, 448], sizes = [128, 28], strides = [1, 1]} : vector<128x784xf32> to vector<128x28xf32>
    %19 = vector.extract_strided_slice %0 {offsets = [0, 476], sizes = [128, 28], strides = [1, 1]} : vector<128x784xf32> to vector<128x28xf32>
    %20 = vector.extract_strided_slice %0 {offsets = [0, 504], sizes = [128, 28], strides = [1, 1]} : vector<128x784xf32> to vector<128x28xf32>
    %21 = vector.extract_strided_slice %0 {offsets = [0, 532], sizes = [128, 28], strides = [1, 1]} : vector<128x784xf32> to vector<128x28xf32>
    %22 = vector.extract_strided_slice %0 {offsets = [0, 560], sizes = [128, 28], strides = [1, 1]} : vector<128x784xf32> to vector<128x28xf32>
    %23 = vector.extract_strided_slice %0 {offsets = [0, 588], sizes = [128, 28], strides = [1, 1]} : vector<128x784xf32> to vector<128x28xf32>
    %24 = vector.extract_strided_slice %0 {offsets = [0, 616], sizes = [128, 28], strides = [1, 1]} : vector<128x784xf32> to vector<128x28xf32>
    %25 = vector.extract_strided_slice %0 {offsets = [0, 644], sizes = [128, 28], strides = [1, 1]} : vector<128x784xf32> to vector<128x28xf32>
    %26 = vector.extract_strided_slice %0 {offsets = [0, 672], sizes = [128, 28], strides = [1, 1]} : vector<128x784xf32> to vector<128x28xf32>
    %27 = vector.extract_strided_slice %0 {offsets = [0, 700], sizes = [128, 28], strides = [1, 1]} : vector<128x784xf32> to vector<128x28xf32>
    %28 = vector.extract_strided_slice %0 {offsets = [0, 728], sizes = [128, 28], strides = [1, 1]} : vector<128x784xf32> to vector<128x28xf32>
    %29 = vector.extract_strided_slice %0 {offsets = [0, 756], sizes = [128, 28], strides = [1, 1]} : vector<128x784xf32> to vector<128x28xf32>
    %30 = vector.shape_cast %1 : vector<128x28xf32> to vector<1x128x28xf32>
    %31 = vector.shape_cast %3 : vector<128x28xf32> to vector<1x128x28xf32>
    %32 = vector.shape_cast %5 : vector<128x28xf32> to vector<1x128x28xf32>
    %33 = vector.shape_cast %7 : vector<128x28xf32> to vector<1x128x28xf32>
    %34 = vector.shape_cast %9 : vector<128x28xf32> to vector<1x128x28xf32>
    %35 = vector.shape_cast %11 : vector<128x28xf32> to vector<1x128x28xf32>
    %36 = vector.shape_cast %13 : vector<128x28xf32> to vector<1x128x28xf32>
    %37 = vector.shape_cast %15 : vector<128x28xf32> to vector<1x128x28xf32>
    %38 = vector.shape_cast %17 : vector<128x28xf32> to vector<1x128x28xf32>
    %39 = vector.shape_cast %19 : vector<128x28xf32> to vector<1x128x28xf32>
    %40 = vector.shape_cast %21 : vector<128x28xf32> to vector<1x128x28xf32>
    %41 = vector.shape_cast %23 : vector<128x28xf32> to vector<1x128x28xf32>
    %42 = vector.shape_cast %25 : vector<128x28xf32> to vector<1x128x28xf32>
    %43 = vector.shape_cast %27 : vector<128x28xf32> to vector<1x128x28xf32>
    %44 = tpu.concatenate %30, %31, %32, %33, %34, %35, %36, %37, %38, %39, %40, %41, %42, %43 in 0 : vector<1x128x28xf32>, vector<1x128x28xf32>, vector<1x128x28xf32>, vector<1x128x28xf32>, vector<1x128x28xf32>, vector<1x128x28xf32>, vector<1x128x28xf32>, vector<1x128x28xf32>, vector<1x128x28xf32>, vector<1x128x28xf32>, vector<1x128x28xf32>, vector<1x128x28xf32>, vector<1x128x28xf32>, vector<1x128x28xf32> -> vector<14x128x28xf32>
    %45 = vector.shape_cast %44 : vector<14x128x28xf32> to vector<1792x28xf32>
    %46 = arith.truncf %45 : vector<1792x28xf32> to vector<1792x28xbf16>
    %c0_1 = arith.constant 0 : index
    %c0_2 = arith.constant 0 : index
    %c0_3 = arith.constant 0 : index
    %47 = vector.load %arg2[%c0_1, %c0_2, %c0_3] : memref<3x28x224xbf16, #tpu.memory_space<vmem>>, vector<1x28x224xbf16>
    %48 = vector.shape_cast %47 : vector<1x28x224xbf16> to vector<28x224xbf16>
    %cst_4 = arith.constant dense<0.000000e+00> : vector<1792x224xf32>
    %49 = tpu.matmul %46, %48, %cst_4 {dimension_numbers = #tpu.dot_dimension_numbers<[1], [0], [0], [1], [0, 0, 1, 1], [], []>} : vector<1792x28xbf16>, vector<28x224xbf16>, vector<1792x224xf32> -> vector<1792x224xf32>
    %50 = vector.shape_cast %2 : vector<128x28xf32> to vector<1x128x28xf32>
    %51 = vector.shape_cast %4 : vector<128x28xf32> to vector<1x128x28xf32>
    %52 = vector.shape_cast %6 : vector<128x28xf32> to vector<1x128x28xf32>
    %53 = vector.shape_cast %8 : vector<128x28xf32> to vector<1x128x28xf32>
    %54 = vector.shape_cast %10 : vector<128x28xf32> to vector<1x128x28xf32>
    %55 = vector.shape_cast %12 : vector<128x28xf32> to vector<1x128x28xf32>
    %56 = vector.shape_cast %14 : vector<128x28xf32> to vector<1x128x28xf32>
    %57 = vector.shape_cast %16 : vector<128x28xf32> to vector<1x128x28xf32>
    %58 = vector.shape_cast %18 : vector<128x28xf32> to vector<1x128x28xf32>
    %59 = vector.shape_cast %20 : vector<128x28xf32> to vector<1x128x28xf32>
    %60 = vector.shape_cast %22 : vector<128x28xf32> to vector<1x128x28xf32>
    %61 = vector.shape_cast %24 : vector<128x28xf32> to vector<1x128x28xf32>
    %62 = vector.shape_cast %26 : vector<128x28xf32> to vector<1x128x28xf32>
    %63 = vector.shape_cast %28 : vector<128x28xf32> to vector<1x128x28xf32>
    %64 = tpu.concatenate %50, %51, %52, %53, %54, %55, %56, %57, %58, %59, %60, %61, %62, %63 in 0 : vector<1x128x28xf32>, vector<1x128x28xf32>, vector<1x128x28xf32>, vector<1x128x28xf32>, vector<1x128x28xf32>, vector<1x128x28xf32>, vector<1x128x28xf32>, vector<1x128x28xf32>, vector<1x128x28xf32>, vector<1x128x28xf32>, vector<1x128x28xf32>, vector<1x128x28xf32>, vector<1x128x28xf32>, vector<1x128x28xf32> -> vector<14x128x28xf32>
    %65 = vector.shape_cast %64 : vector<14x128x28xf32> to vector<1792x28xf32>
    %66 = arith.truncf %65 : vector<1792x28xf32> to vector<1792x28xbf16>
    %c1 = arith.constant 1 : index
    %c0_5 = arith.constant 0 : index
    %c0_6 = arith.constant 0 : index
    %67 = vector.load %arg2[%c1, %c0_5, %c0_6] : memref<3x28x224xbf16, #tpu.memory_space<vmem>>, vector<1x28x224xbf16>
    %68 = vector.shape_cast %67 : vector<1x28x224xbf16> to vector<28x224xbf16>
    %cst_7 = arith.constant dense<0.000000e+00> : vector<1792x224xf32>
    %69 = tpu.matmul %66, %68, %cst_7 {dimension_numbers = #tpu.dot_dimension_numbers<[1], [0], [0], [1], [0, 0, 1, 1], [], []>} : vector<1792x28xbf16>, vector<28x224xbf16>, vector<1792x224xf32> -> vector<1792x224xf32>
    %70 = arith.addf %49, %69 : vector<1792x224xf32>
    %71 = vector.shape_cast %3 : vector<128x28xf32> to vector<1x128x28xf32>
    %72 = vector.shape_cast %5 : vector<128x28xf32> to vector<1x128x28xf32>
    %73 = vector.shape_cast %7 : vector<128x28xf32> to vector<1x128x28xf32>
    %74 = vector.shape_cast %9 : vector<128x28xf32> to vector<1x128x28xf32>
    %75 = vector.shape_cast %11 : vector<128x28xf32> to vector<1x128x28xf32>
    %76 = vector.shape_cast %13 : vector<128x28xf32> to vector<1x128x28xf32>
    %77 = vector.shape_cast %15 : vector<128x28xf32> to vector<1x128x28xf32>
    %78 = vector.shape_cast %17 : vector<128x28xf32> to vector<1x128x28xf32>
    %79 = vector.shape_cast %19 : vector<128x28xf32> to vector<1x128x28xf32>
    %80 = vector.shape_cast %21 : vector<128x28xf32> to vector<1x128x28xf32>
    %81 = vector.shape_cast %23 : vector<128x28xf32> to vector<1x128x28xf32>
    %82 = vector.shape_cast %25 : vector<128x28xf32> to vector<1x128x28xf32>
    %83 = vector.shape_cast %27 : vector<128x28xf32> to vector<1x128x28xf32>
    %84 = vector.shape_cast %29 : vector<128x28xf32> to vector<1x128x28xf32>
    %85 = tpu.concatenate %71, %72, %73, %74, %75, %76, %77, %78, %79, %80, %81, %82, %83, %84 in 0 : vector<1x128x28xf32>, vector<1x128x28xf32>, vector<1x128x28xf32>, vector<1x128x28xf32>, vector<1x128x28xf32>, vector<1x128x28xf32>, vector<1x128x28xf32>, vector<1x128x28xf32>, vector<1x128x28xf32>, vector<1x128x28xf32>, vector<1x128x28xf32>, vector<1x128x28xf32>, vector<1x128x28xf32>, vector<1x128x28xf32> -> vector<14x128x28xf32>
    %86 = vector.shape_cast %85 : vector<14x128x28xf32> to vector<1792x28xf32>
    %87 = arith.truncf %86 : vector<1792x28xf32> to vector<1792x28xbf16>
    %c2 = arith.constant 2 : index
    %c0_8 = arith.constant 0 : index
    %c0_9 = arith.constant 0 : index
    %88 = vector.load %arg2[%c2, %c0_8, %c0_9] : memref<3x28x224xbf16, #tpu.memory_space<vmem>>, vector<1x28x224xbf16>
    %89 = vector.shape_cast %88 : vector<1x28x224xbf16> to vector<28x224xbf16>
    %cst_10 = arith.constant dense<0.000000e+00> : vector<1792x224xf32>
    %90 = tpu.matmul %87, %89, %cst_10 {dimension_numbers = #tpu.dot_dimension_numbers<[1], [0], [0], [1], [0, 0, 1, 1], [], []>} : vector<1792x28xbf16>, vector<28x224xbf16>, vector<1792x224xf32> -> vector<1792x224xf32>
    %91 = arith.addf %70, %90 : vector<1792x224xf32>
    %c0_11 = arith.constant 0 : index
    %c0_12 = arith.constant 0 : index
    %92 = vector.load %arg5[%c0_11, %c0_12] : memref<1x224xf32, #tpu.memory_space<vmem>>, vector<1x224xf32>
    %93 = vector.broadcast %92 : vector<1x224xf32> to vector<1792x224xf32>
    %94 = arith.addf %91, %93 : vector<1792x224xf32>
    %cst_13 = arith.constant 0.000000e+00 : f32
    %95 = vector.broadcast %cst_13 : f32 to vector<1792x224xf32>
    %96 = arith.maximumf %94, %95 : vector<1792x224xf32>
    %97 = vector.shape_cast %96 : vector<1792x224xf32> to vector<14x128x224xf32>
    %cst_14 = arith.constant 0.000000e+00 : f32
    %98 = vector.broadcast %cst_14 : f32 to vector<128x224xf32>
    %99 = vector.extract_strided_slice %97 {offsets = [0, 0, 0], sizes = [1, 128, 224], strides = [1, 1, 1]} : vector<14x128x224xf32> to vector<1x128x224xf32>
    %100 = vector.shape_cast %99 : vector<1x128x224xf32> to vector<128x224xf32>
    %101 = vector.extract_strided_slice %97 {offsets = [1, 0, 0], sizes = [1, 128, 224], strides = [1, 1, 1]} : vector<14x128x224xf32> to vector<1x128x224xf32>
    %102 = vector.shape_cast %101 : vector<1x128x224xf32> to vector<128x224xf32>
    %103 = vector.extract_strided_slice %97 {offsets = [2, 0, 0], sizes = [1, 128, 224], strides = [1, 1, 1]} : vector<14x128x224xf32> to vector<1x128x224xf32>
    %104 = vector.shape_cast %103 : vector<1x128x224xf32> to vector<128x224xf32>
    %105 = vector.extract_strided_slice %97 {offsets = [3, 0, 0], sizes = [1, 128, 224], strides = [1, 1, 1]} : vector<14x128x224xf32> to vector<1x128x224xf32>
    %106 = vector.shape_cast %105 : vector<1x128x224xf32> to vector<128x224xf32>
    %107 = vector.extract_strided_slice %97 {offsets = [4, 0, 0], sizes = [1, 128, 224], strides = [1, 1, 1]} : vector<14x128x224xf32> to vector<1x128x224xf32>
    %108 = vector.shape_cast %107 : vector<1x128x224xf32> to vector<128x224xf32>
    %109 = vector.extract_strided_slice %97 {offsets = [5, 0, 0], sizes = [1, 128, 224], strides = [1, 1, 1]} : vector<14x128x224xf32> to vector<1x128x224xf32>
    %110 = vector.shape_cast %109 : vector<1x128x224xf32> to vector<128x224xf32>
    %111 = vector.extract_strided_slice %97 {offsets = [6, 0, 0], sizes = [1, 128, 224], strides = [1, 1, 1]} : vector<14x128x224xf32> to vector<1x128x224xf32>
    %112 = vector.shape_cast %111 : vector<1x128x224xf32> to vector<128x224xf32>
    %113 = vector.extract_strided_slice %97 {offsets = [7, 0, 0], sizes = [1, 128, 224], strides = [1, 1, 1]} : vector<14x128x224xf32> to vector<1x128x224xf32>
    %114 = vector.shape_cast %113 : vector<1x128x224xf32> to vector<128x224xf32>
    %115 = vector.extract_strided_slice %97 {offsets = [8, 0, 0], sizes = [1, 128, 224], strides = [1, 1, 1]} : vector<14x128x224xf32> to vector<1x128x224xf32>
    %116 = vector.shape_cast %115 : vector<1x128x224xf32> to vector<128x224xf32>
    %117 = vector.extract_strided_slice %97 {offsets = [9, 0, 0], sizes = [1, 128, 224], strides = [1, 1, 1]} : vector<14x128x224xf32> to vector<1x128x224xf32>
    %118 = vector.shape_cast %117 : vector<1x128x224xf32> to vector<128x224xf32>
    %119 = vector.extract_strided_slice %97 {offsets = [10, 0, 0], sizes = [1, 128, 224], strides = [1, 1, 1]} : vector<14x128x224xf32> to vector<1x128x224xf32>
    %120 = vector.shape_cast %119 : vector<1x128x224xf32> to vector<128x224xf32>
    %121 = vector.extract_strided_slice %97 {offsets = [11, 0, 0], sizes = [1, 128, 224], strides = [1, 1, 1]} : vector<14x128x224xf32> to vector<1x128x224xf32>
    %122 = vector.shape_cast %121 : vector<1x128x224xf32> to vector<128x224xf32>
    %123 = vector.extract_strided_slice %97 {offsets = [12, 0, 0], sizes = [1, 128, 224], strides = [1, 1, 1]} : vector<14x128x224xf32> to vector<1x128x224xf32>
    %124 = vector.shape_cast %123 : vector<1x128x224xf32> to vector<128x224xf32>
    %125 = vector.extract_strided_slice %97 {offsets = [13, 0, 0], sizes = [1, 128, 224], strides = [1, 1, 1]} : vector<14x128x224xf32> to vector<1x128x224xf32>
    %126 = vector.shape_cast %125 : vector<1x128x224xf32> to vector<128x224xf32>
    %127 = vector.shape_cast %98 : vector<128x224xf32> to vector<1x128x224xf32>
    %128 = vector.shape_cast %102 : vector<128x224xf32> to vector<1x128x224xf32>
    %129 = vector.shape_cast %106 : vector<128x224xf32> to vector<1x128x224xf32>
    %130 = vector.shape_cast %110 : vector<128x224xf32> to vector<1x128x224xf32>
    %131 = vector.shape_cast %114 : vector<128x224xf32> to vector<1x128x224xf32>
    %132 = vector.shape_cast %118 : vector<128x224xf32> to vector<1x128x224xf32>
    %133 = vector.shape_cast %122 : vector<128x224xf32> to vector<1x128x224xf32>
    %134 = tpu.concatenate %127, %128, %129, %130, %131, %132, %133 in 0 : vector<1x128x224xf32>, vector<1x128x224xf32>, vector<1x128x224xf32>, vector<1x128x224xf32>, vector<1x128x224xf32>, vector<1x128x224xf32>, vector<1x128x224xf32> -> vector<7x128x224xf32>
    %135 = vector.shape_cast %134 : vector<7x128x224xf32> to vector<896x224xf32>
    %136 = arith.truncf %135 : vector<896x224xf32> to vector<896x224xbf16>
    %c0_15 = arith.constant 0 : index
    %c0_16 = arith.constant 0 : index
    %c0_17 = arith.constant 0 : index
    %137 = vector.load %arg3[%c0_15, %c0_16, %c0_17] : memref<3x224x112xbf16, #tpu.memory_space<vmem>>, vector<1x224x112xbf16>
    %138 = vector.shape_cast %137 : vector<1x224x112xbf16> to vector<224x112xbf16>
    %cst_18 = arith.constant dense<0.000000e+00> : vector<896x112xf32>
    %139 = tpu.matmul %136, %138, %cst_18 {dimension_numbers = #tpu.dot_dimension_numbers<[1], [0], [0], [1], [0, 0, 1, 1], [], []>} : vector<896x224xbf16>, vector<224x112xbf16>, vector<896x112xf32> -> vector<896x112xf32>
    %140 = vector.shape_cast %100 : vector<128x224xf32> to vector<1x128x224xf32>
    %141 = vector.shape_cast %104 : vector<128x224xf32> to vector<1x128x224xf32>
    %142 = vector.shape_cast %108 : vector<128x224xf32> to vector<1x128x224xf32>
    %143 = vector.shape_cast %112 : vector<128x224xf32> to vector<1x128x224xf32>
    %144 = vector.shape_cast %116 : vector<128x224xf32> to vector<1x128x224xf32>
    %145 = vector.shape_cast %120 : vector<128x224xf32> to vector<1x128x224xf32>
    %146 = vector.shape_cast %124 : vector<128x224xf32> to vector<1x128x224xf32>
    %147 = tpu.concatenate %140, %141, %142, %143, %144, %145, %146 in 0 : vector<1x128x224xf32>, vector<1x128x224xf32>, vector<1x128x224xf32>, vector<1x128x224xf32>, vector<1x128x224xf32>, vector<1x128x224xf32>, vector<1x128x224xf32> -> vector<7x128x224xf32>
    %148 = vector.shape_cast %147 : vector<7x128x224xf32> to vector<896x224xf32>
    %149 = arith.truncf %148 : vector<896x224xf32> to vector<896x224xbf16>
    %c1_19 = arith.constant 1 : index
    %c0_20 = arith.constant 0 : index
    %c0_21 = arith.constant 0 : index
    %150 = vector.load %arg3[%c1_19, %c0_20, %c0_21] : memref<3x224x112xbf16, #tpu.memory_space<vmem>>, vector<1x224x112xbf16>
    %151 = vector.shape_cast %150 : vector<1x224x112xbf16> to vector<224x112xbf16>
    %cst_22 = arith.constant dense<0.000000e+00> : vector<896x112xf32>
    %152 = tpu.matmul %149, %151, %cst_22 {dimension_numbers = #tpu.dot_dimension_numbers<[1], [0], [0], [1], [0, 0, 1, 1], [], []>} : vector<896x224xbf16>, vector<224x112xbf16>, vector<896x112xf32> -> vector<896x112xf32>
    %153 = arith.addf %139, %152 : vector<896x112xf32>
    %154 = vector.shape_cast %102 : vector<128x224xf32> to vector<1x128x224xf32>
    %155 = vector.shape_cast %106 : vector<128x224xf32> to vector<1x128x224xf32>
    %156 = vector.shape_cast %110 : vector<128x224xf32> to vector<1x128x224xf32>
    %157 = vector.shape_cast %114 : vector<128x224xf32> to vector<1x128x224xf32>
    %158 = vector.shape_cast %118 : vector<128x224xf32> to vector<1x128x224xf32>
    %159 = vector.shape_cast %122 : vector<128x224xf32> to vector<1x128x224xf32>
    %160 = vector.shape_cast %126 : vector<128x224xf32> to vector<1x128x224xf32>
    %161 = tpu.concatenate %154, %155, %156, %157, %158, %159, %160 in 0 : vector<1x128x224xf32>, vector<1x128x224xf32>, vector<1x128x224xf32>, vector<1x128x224xf32>, vector<1x128x224xf32>, vector<1x128x224xf32>, vector<1x128x224xf32> -> vector<7x128x224xf32>
    %162 = vector.shape_cast %161 : vector<7x128x224xf32> to vector<896x224xf32>
    %163 = arith.truncf %162 : vector<896x224xf32> to vector<896x224xbf16>
    %c2_23 = arith.constant 2 : index
    %c0_24 = arith.constant 0 : index
    %c0_25 = arith.constant 0 : index
    %164 = vector.load %arg3[%c2_23, %c0_24, %c0_25] : memref<3x224x112xbf16, #tpu.memory_space<vmem>>, vector<1x224x112xbf16>
    %165 = vector.shape_cast %164 : vector<1x224x112xbf16> to vector<224x112xbf16>
    %cst_26 = arith.constant dense<0.000000e+00> : vector<896x112xf32>
    %166 = tpu.matmul %163, %165, %cst_26 {dimension_numbers = #tpu.dot_dimension_numbers<[1], [0], [0], [1], [0, 0, 1, 1], [], []>} : vector<896x224xbf16>, vector<224x112xbf16>, vector<896x112xf32> -> vector<896x112xf32>
    %167 = arith.addf %153, %166 : vector<896x112xf32>
    %c0_27 = arith.constant 0 : index
    %c0_28 = arith.constant 0 : index
    %168 = vector.load %arg6[%c0_27, %c0_28] : memref<1x112xf32, #tpu.memory_space<vmem>>, vector<1x112xf32>
    %169 = vector.broadcast %168 : vector<1x112xf32> to vector<896x112xf32>
    %170 = arith.addf %167, %169 : vector<896x112xf32>
    %cst_29 = arith.constant 0.000000e+00 : f32
    %171 = vector.broadcast %cst_29 : f32 to vector<896x112xf32>
    %172 = arith.maximumf %170, %171 : vector<896x112xf32>
    %173 = vector.shape_cast %172 : vector<896x112xf32> to vector<7x128x112xf32>
    %cst_30 = arith.constant 0.000000e+00 : f32
    %174 = vector.broadcast %cst_30 : f32 to vector<128x112xf32>
    %175 = vector.extract_strided_slice %173 {offsets = [0, 0, 0], sizes = [1, 128, 112], strides = [1, 1, 1]} : vector<7x128x112xf32> to vector<1x128x112xf32>
    %176 = vector.shape_cast %175 : vector<1x128x112xf32> to vector<128x112xf32>
    %177 = vector.extract_strided_slice %173 {offsets = [1, 0, 0], sizes = [1, 128, 112], strides = [1, 1, 1]} : vector<7x128x112xf32> to vector<1x128x112xf32>
    %178 = vector.shape_cast %177 : vector<1x128x112xf32> to vector<128x112xf32>
    %179 = vector.extract_strided_slice %173 {offsets = [2, 0, 0], sizes = [1, 128, 112], strides = [1, 1, 1]} : vector<7x128x112xf32> to vector<1x128x112xf32>
    %180 = vector.shape_cast %179 : vector<1x128x112xf32> to vector<128x112xf32>
    %181 = vector.extract_strided_slice %173 {offsets = [3, 0, 0], sizes = [1, 128, 112], strides = [1, 1, 1]} : vector<7x128x112xf32> to vector<1x128x112xf32>
    %182 = vector.shape_cast %181 : vector<1x128x112xf32> to vector<128x112xf32>
    %183 = vector.extract_strided_slice %173 {offsets = [4, 0, 0], sizes = [1, 128, 112], strides = [1, 1, 1]} : vector<7x128x112xf32> to vector<1x128x112xf32>
    %184 = vector.shape_cast %183 : vector<1x128x112xf32> to vector<128x112xf32>
    %185 = vector.extract_strided_slice %173 {offsets = [5, 0, 0], sizes = [1, 128, 112], strides = [1, 1, 1]} : vector<7x128x112xf32> to vector<1x128x112xf32>
    %186 = vector.shape_cast %185 : vector<1x128x112xf32> to vector<128x112xf32>
    %187 = vector.extract_strided_slice %173 {offsets = [6, 0, 0], sizes = [1, 128, 112], strides = [1, 1, 1]} : vector<7x128x112xf32> to vector<1x128x112xf32>
    %188 = vector.shape_cast %187 : vector<1x128x112xf32> to vector<128x112xf32>
    %189 = vector.shape_cast %174 : vector<128x112xf32> to vector<1x128x112xf32>
    %190 = vector.shape_cast %178 : vector<128x112xf32> to vector<1x128x112xf32>
    %191 = vector.shape_cast %182 : vector<128x112xf32> to vector<1x128x112xf32>
    %192 = vector.shape_cast %186 : vector<128x112xf32> to vector<1x128x112xf32>
    %193 = tpu.concatenate %189, %190, %191, %192 in 0 : vector<1x128x112xf32>, vector<1x128x112xf32>, vector<1x128x112xf32>, vector<1x128x112xf32> -> vector<4x128x112xf32>
    %194 = vector.shape_cast %193 : vector<4x128x112xf32> to vector<512x112xf32>
    %195 = arith.truncf %194 : vector<512x112xf32> to vector<512x112xbf16>
    %c0_31 = arith.constant 0 : index
    %c0_32 = arith.constant 0 : index
    %c0_33 = arith.constant 0 : index
    %196 = vector.load %arg4[%c0_31, %c0_32, %c0_33] : memref<3x112x64xbf16, #tpu.memory_space<vmem>>, vector<1x112x64xbf16>
    %197 = vector.shape_cast %196 : vector<1x112x64xbf16> to vector<112x64xbf16>
    %cst_34 = arith.constant dense<0.000000e+00> : vector<512x64xf32>
    %198 = tpu.matmul %195, %197, %cst_34 {dimension_numbers = #tpu.dot_dimension_numbers<[1], [0], [0], [1], [0, 0, 1, 1], [], []>} : vector<512x112xbf16>, vector<112x64xbf16>, vector<512x64xf32> -> vector<512x64xf32>
    %199 = vector.shape_cast %176 : vector<128x112xf32> to vector<1x128x112xf32>
    %200 = vector.shape_cast %180 : vector<128x112xf32> to vector<1x128x112xf32>
    %201 = vector.shape_cast %184 : vector<128x112xf32> to vector<1x128x112xf32>
    %202 = vector.shape_cast %188 : vector<128x112xf32> to vector<1x128x112xf32>
    %203 = tpu.concatenate %199, %200, %201, %202 in 0 : vector<1x128x112xf32>, vector<1x128x112xf32>, vector<1x128x112xf32>, vector<1x128x112xf32> -> vector<4x128x112xf32>
    %204 = vector.shape_cast %203 : vector<4x128x112xf32> to vector<512x112xf32>
    %205 = arith.truncf %204 : vector<512x112xf32> to vector<512x112xbf16>
    %c1_35 = arith.constant 1 : index
    %c0_36 = arith.constant 0 : index
    %c0_37 = arith.constant 0 : index
    %206 = vector.load %arg4[%c1_35, %c0_36, %c0_37] : memref<3x112x64xbf16, #tpu.memory_space<vmem>>, vector<1x112x64xbf16>
    %207 = vector.shape_cast %206 : vector<1x112x64xbf16> to vector<112x64xbf16>
    %cst_38 = arith.constant dense<0.000000e+00> : vector<512x64xf32>
    %208 = tpu.matmul %205, %207, %cst_38 {dimension_numbers = #tpu.dot_dimension_numbers<[1], [0], [0], [1], [0, 0, 1, 1], [], []>} : vector<512x112xbf16>, vector<112x64xbf16>, vector<512x64xf32> -> vector<512x64xf32>
    %209 = arith.addf %198, %208 : vector<512x64xf32>
    %210 = vector.shape_cast %178 : vector<128x112xf32> to vector<1x128x112xf32>
    %211 = vector.shape_cast %182 : vector<128x112xf32> to vector<1x128x112xf32>
    %212 = vector.shape_cast %186 : vector<128x112xf32> to vector<1x128x112xf32>
    %213 = vector.shape_cast %174 : vector<128x112xf32> to vector<1x128x112xf32>
    %214 = tpu.concatenate %210, %211, %212, %213 in 0 : vector<1x128x112xf32>, vector<1x128x112xf32>, vector<1x128x112xf32>, vector<1x128x112xf32> -> vector<4x128x112xf32>
    %215 = vector.shape_cast %214 : vector<4x128x112xf32> to vector<512x112xf32>
    %216 = arith.truncf %215 : vector<512x112xf32> to vector<512x112xbf16>
    %c2_39 = arith.constant 2 : index
    %c0_40 = arith.constant 0 : index
    %c0_41 = arith.constant 0 : index
    %217 = vector.load %arg4[%c2_39, %c0_40, %c0_41] : memref<3x112x64xbf16, #tpu.memory_space<vmem>>, vector<1x112x64xbf16>
    %218 = vector.shape_cast %217 : vector<1x112x64xbf16> to vector<112x64xbf16>
    %cst_42 = arith.constant dense<0.000000e+00> : vector<512x64xf32>
    %219 = tpu.matmul %216, %218, %cst_42 {dimension_numbers = #tpu.dot_dimension_numbers<[1], [0], [0], [1], [0, 0, 1, 1], [], []>} : vector<512x112xbf16>, vector<112x64xbf16>, vector<512x64xf32> -> vector<512x64xf32>
    %220 = arith.addf %209, %219 : vector<512x64xf32>
    %c0_43 = arith.constant 0 : index
    %c0_44 = arith.constant 0 : index
    %221 = vector.load %arg7[%c0_43, %c0_44] : memref<1x64xf32, #tpu.memory_space<vmem>>, vector<1x64xf32>
    %222 = vector.broadcast %221 : vector<1x64xf32> to vector<512x64xf32>
    %223 = arith.addf %220, %222 : vector<512x64xf32>
    %cst_45 = arith.constant 0.000000e+00 : f32
    %224 = vector.broadcast %cst_45 : f32 to vector<512x64xf32>
    %225 = arith.maximumf %223, %224 : vector<512x64xf32>
    %226 = vector.shape_cast %225 : vector<512x64xf32> to vector<4x128x64xf32>
    %227 = vector.extract_strided_slice %226 {offsets = [0, 0, 0], sizes = [1, 128, 64], strides = [1, 1, 1]} : vector<4x128x64xf32> to vector<1x128x64xf32>
    %228 = vector.shape_cast %227 : vector<1x128x64xf32> to vector<128x64xf32>
    %229 = vector.extract_strided_slice %226 {offsets = [1, 0, 0], sizes = [1, 128, 64], strides = [1, 1, 1]} : vector<4x128x64xf32> to vector<1x128x64xf32>
    %230 = vector.shape_cast %229 : vector<1x128x64xf32> to vector<128x64xf32>
    %231 = arith.addf %228, %230 : vector<128x64xf32>
    %232 = vector.extract_strided_slice %226 {offsets = [2, 0, 0], sizes = [1, 128, 64], strides = [1, 1, 1]} : vector<4x128x64xf32> to vector<1x128x64xf32>
    %233 = vector.shape_cast %232 : vector<1x128x64xf32> to vector<128x64xf32>
    %234 = arith.addf %231, %233 : vector<128x64xf32>
    %235 = vector.extract_strided_slice %226 {offsets = [3, 0, 0], sizes = [1, 128, 64], strides = [1, 1, 1]} : vector<4x128x64xf32> to vector<1x128x64xf32>
    %236 = vector.shape_cast %235 : vector<1x128x64xf32> to vector<128x64xf32>
    %237 = arith.addf %234, %236 : vector<128x64xf32>
    %238 = vector.extract_strided_slice %237 {offsets = [0, 0], sizes = [128, 16], strides = [1, 1]} : vector<128x64xf32> to vector<128x16xf32>
    %239 = vector.extract_strided_slice %237 {offsets = [0, 16], sizes = [128, 16], strides = [1, 1]} : vector<128x64xf32> to vector<128x16xf32>
    %240 = arith.addf %238, %239 : vector<128x16xf32>
    %241 = vector.extract_strided_slice %237 {offsets = [0, 32], sizes = [128, 16], strides = [1, 1]} : vector<128x64xf32> to vector<128x16xf32>
    %242 = arith.addf %240, %241 : vector<128x16xf32>
    %243 = vector.extract_strided_slice %237 {offsets = [0, 48], sizes = [128, 16], strides = [1, 1]} : vector<128x64xf32> to vector<128x16xf32>
    %244 = arith.addf %242, %243 : vector<128x16xf32>
    %cst_46 = arith.constant 6.250000e-02 : f32
    %245 = vector.broadcast %cst_46 : f32 to vector<128x16xf32>
    %246 = arith.mulf %244, %245 : vector<128x16xf32>
    %cst_47 = arith.constant 0.000000e+00 : f32
    %247 = vector.broadcast %cst_47 : f32 to vector<128x112xf32>
    %248 = tpu.concatenate %246, %247 in 1 : vector<128x16xf32>, vector<128x112xf32> -> vector<128x128xf32>
    %c0_48 = arith.constant 0 : index
    %c0_49 = arith.constant 0 : index
    %249 = vector.load %arg8[%c0_48, %c0_49] : memref<128x128xf32, #tpu.memory_space<vmem>>, vector<128x128xf32>
    tpu.vector_store %arg8[%c0_48, %c0_49], %248 {strides = array<i32>} : memref<128x128xf32, #tpu.memory_space<vmem>>, vector<128x128xf32>,
    return
  }
  func.func @transform_0(%arg0: i32) -> (i32, i32) {
    %c0_i32 = arith.constant 0 : i32
    %c0_i32_0 = arith.constant 0 : i32
    return %arg0, %c0_i32 : i32, i32
  }
  func.func @transform_1(%arg0: i32) -> (i32, i32, i32) {
    %c0_i32 = arith.constant 0 : i32
    %c0_i32_0 = arith.constant 0 : i32
    %c0_i32_1 = arith.constant 0 : i32
    %c0_i32_2 = arith.constant 0 : i32
    return %c0_i32, %c0_i32_0, %c0_i32_1 : i32, i32, i32
  }
  func.func @transform_2(%arg0: i32) -> (i32, i32, i32) {
    %c0_i32 = arith.constant 0 : i32
    %c0_i32_0 = arith.constant 0 : i32
    %c0_i32_1 = arith.constant 0 : i32
    %c0_i32_2 = arith.constant 0 : i32
    return %c0_i32, %c0_i32_0, %c0_i32_1 : i32, i32, i32
  }
  func.func @transform_3(%arg0: i32) -> (i32, i32, i32) {
    %c0_i32 = arith.constant 0 : i32
    %c0_i32_0 = arith.constant 0 : i32
    %c0_i32_1 = arith.constant 0 : i32
    %c0_i32_2 = arith.constant 0 : i32
    return %c0_i32, %c0_i32_0, %c0_i32_1 : i32, i32, i32
  }
  func.func @transform_4(%arg0: i32) -> (i32, i32) {
    %c0_i32 = arith.constant 0 : i32
    %c0_i32_0 = arith.constant 0 : i32
    %c0_i32_1 = arith.constant 0 : i32
    return %c0_i32, %c0_i32_0 : i32, i32
  }
  func.func @transform_5(%arg0: i32) -> (i32, i32) {
    %c0_i32 = arith.constant 0 : i32
    %c0_i32_0 = arith.constant 0 : i32
    %c0_i32_1 = arith.constant 0 : i32
    return %c0_i32, %c0_i32_0 : i32, i32
  }
  func.func @transform_6(%arg0: i32) -> (i32, i32) {
    %c0_i32 = arith.constant 0 : i32
    %c0_i32_0 = arith.constant 0 : i32
    %c0_i32_1 = arith.constant 0 : i32
    return %c0_i32, %c0_i32_0 : i32, i32
  }
  func.func @transform_7(%arg0: i32) -> (i32, i32) {
    %c0_i32 = arith.constant 0 : i32
    %c0_i32_0 = arith.constant 0 : i32
    return %arg0, %c0_i32 : i32, i32
  }
}

</mosaic_0001>

<llo_original>
// kernel: tile.28
$region0: #{tile.28}
  #allocation0 [shape = 's32[1]{0}', space=sflag, size = 0x4, scoped, tag = 'scoped memory for tile.28']
  %s0 = inlined_call_operand.vmem [shape: f32[16], index: 0, kind: input, shape index: {}]
  %s1 = inlined_call_operand.vmem [shape: f32[4,16], index: 1, kind: output, shape index: {}]
  // Predicated region
  $region2: #{tile.28} parent=0 // pred_check
    _
  $region3: #{tile.28} parent=0 // pred_check_branch
    %3 = sbr.rel (0) target = $region5
  $region4: #{tile.28} parent=0 // pred_region
    _
  $region5: #{tile.28} parent=0 // pred_fallthru
    _
  %v4 = vld [vmem:[%s0] ss:$0 sm:$0xff]
  %5 = vst [vmem:[%s1] sm:$0xf] %v4

// kernel: tile.23
$region0: #{tile.23}
  #allocation0 [shape = 's32[1]{0}', space=sflag, size = 0x4, scoped, tag = 'scoped memory for tile.23']
  %s0 = inlined_call_operand.vmem [shape: f32[16], index: 0, kind: input, shape index: {}]
  %s1 = inlined_call_operand.vmem [shape: f32[7,16], index: 1, kind: output, shape index: {}]
  // Predicated region
  $region2: #{tile.23} parent=0 // pred_check
    _
  $region3: #{tile.23} parent=0 // pred_check_branch
    %3 = sbr.rel (0) target = $region5
  $region4: #{tile.23} parent=0 // pred_region
    _
  $region5: #{tile.23} parent=0 // pred_fallthru
    _
  %v4 = vld [vmem:[%s0] ss:$0 sm:$0xff]
  %5 = vst [vmem:[%s1] sm:$0xff] %v4

// kernel: tile.29
$region0: #{tile.29}
  %s0 = inlined_call_operand.vmem [shape: f32[4,16], index: 0, kind: input, shape index: {}]
  %s1 = inlined_call_operand.vmem [shape: f32[1,64], index: 1, kind: output, shape index: {}]
  $region1: #{tile.29} parent=0
    #allocation0 [shape = 'u8[4096]{0}', space=vmem, size = 0x1000, scoped, tag = 'scoped mem for output reshape']
    #allocation1 [shape = 'u8[4096]{0}', space=vmem, size = 0x1000, scoped, tag = 'scoped mem for input reshape']
    %s3 = ssub.s32 16, 1
    %v4 = vld [vmem:[%s0] sm:%s3]
    %5 = vst [vmem:[#allocation1] sm:%s3] %v4
    %v6 = vld [vmem:[#allocation1] sm:$0x1]
    %vm7 = vcmask 130048
    %8 = vst.msk [vmem:[#allocation0] sm:$0x1] %vm7, %v6
    %s9 = scalar_lea.vmem [#allocation1], 3
    %v10 = vld [vmem:[%s9] sm:$0x1]
    %11 = vrot.lane.b32.xlu0 %v10, 48
    %v12 = vpop.permute.xlu0 %11
    %vm13 = vcmask 523648
    %14 = vst.msk [vmem:[#allocation0] sm:$0x1] %vm13, %v12
    %s15 = scalar_lea.vmem [#allocation1], 2
    %v16 = vld [vmem:[%s15] sm:$0x1]
    %17 = vrot.lane.b32.xlu0 %v16, 32
    %v18 = vpop.permute.xlu0 %17
    %vm19 = vcmask 392448
    %20 = vst.msk [vmem:[#allocation0] sm:$0x1] %vm19, %v18
    %s21 = scalar_lea.vmem [#allocation1], 1
    %v22 = vld [vmem:[%s21] sm:$0x1]
    %23 = vrot.lane.b32.xlu0 %v22, 16
    %v24 = vpop.permute.xlu0 %23
    %vm25 = vcmask 261248
    %26 = vst.msk [vmem:[#allocation0] sm:$0x1] %vm25, %v24
    %s28 = ssub.s32 2, 1
    %v29 = vld [vmem:[#allocation0] sm:%s28]
    %s31 = ssub.s32 2, 1
    %32 = vst [vmem:[%s1] sm:%s31] %v29

// kernel: tile.24
$region0: #{tile.24}
  %s0 = inlined_call_operand.vmem [shape: f32[7,16], index: 0, kind: input, shape index: {}]
  %s1 = inlined_call_operand.vmem [shape: f32[1,112], index: 1, kind: output, shape index: {}]
  $region1: #{tile.24} parent=0
    #allocation0 [shape = 'u8[4096]{0}', space=vmem, size = 0x1000, scoped, tag = 'scoped mem for output reshape']
    %v2 = vld [vmem:[%s0] sm:$0x1]
    %vm3 = vcmask 130048
    %4 = vst.msk [vmem:[#allocation0] sm:$0x1] %vm3, %v2
    %s5 = scalar_lea.vmem %s0, 6
    %v6 = vld [vmem:[%s5] sm:$0x1]
    %7 = vrot.lane.b32.xlu0 %v6, 96
    %v8 = vpop.permute.xlu0 %7
    %vm9 = vcmask 917248
    %10 = vst.msk [vmem:[#allocation0] sm:$0x1] %vm9, %v8
    %s11 = scalar_lea.vmem %s0, 5
    %v12 = vld [vmem:[%s11] sm:$0x1]
    %13 = vrot.lane.b32.xlu0 %v12, 80
    %v14 = vpop.permute.xlu0 %13
    %vm15 = vcmask 786048
    %16 = vst.msk [vmem:[#allocation0] sm:$0x1] %vm15, %v14
    %s17 = scalar_lea.vmem %s0, 4
    %v18 = vld [vmem:[%s17] sm:$0x1]
    %19 = vrot.lane.b32.xlu0 %v18, 64
    %v20 = vpop.permute.xlu0 %19
    %vm21 = vcmask 654848
    %22 = vst.msk [vmem:[#allocation0] sm:$0x1] %vm21, %v20
    %s23 = scalar_lea.vmem %s0, 3
    %v24 = vld [vmem:[%s23] sm:$0x1]
    %25 = vrot.lane.b32.xlu0 %v24, 48
    %v26 = vpop.permute.xlu0 %25
    %vm27 = vcmask 523648
    %28 = vst.msk [vmem:[#allocation0] sm:$0x1] %vm27, %v26
    %s29 = scalar_lea.vmem %s0, 2
    %v30 = vld [vmem:[%s29] sm:$0x1]
    %31 = vrot.lane.b32.xlu0 %v30, 32
    %v32 = vpop.permute.xlu0 %31
    %vm33 = vcmask 392448
    %34 = vst.msk [vmem:[#allocation0] sm:$0x1] %vm33, %v32
    %s35 = scalar_lea.vmem %s0, 1
    %v36 = vld [vmem:[%s35] sm:$0x1]
    %37 = vrot.lane.b32.xlu0 %v36, 16
    %v38 = vpop.permute.xlu0 %37
    %vm39 = vcmask 261248
    %40 = vst.msk [vmem:[#allocation0] sm:$0x1] %vm39, %v38
    %s42 = ssub.s32 2, 1
    %v43 = vld [vmem:[#allocation0] sm:%s42]
    %s45 = ssub.s32 2, 1
    %46 = vst [vmem:[%s1] sm:%s45] %v43

// kernel: tile.18
$region0: #{tile.18}
  #allocation0 [shape = 's32[1]{0}', space=sflag, size = 0x4, scoped, tag = 'scoped memory for tile.18']
  %s0 = inlined_call_operand.vmem [shape: f32[16], index: 0, kind: input, shape index: {}]
  %s1 = inlined_call_operand.vmem [shape: f32[14,16], index: 1, kind: output, shape index: {}]
  // Predicated region
  $region2: #{tile.18} parent=0 // pred_check
    _
  $region3: #{tile.18} parent=0 // pred_check_branch
    %3 = sbr.rel (0) target = $region5
  $region4: #{tile.18} parent=0 // pred_region
    _
  $region5: #{tile.18} parent=0 // pred_fallthru
    _
  %v4 = vld [vmem:[%s0] ss:$0 sm:$0xff]
  %5 = vst [vmem:[%s1] sm:$0xff] %v4
  %s6 = scalar_lea.vmem %s1, 8
  %7 = vst [vmem:[%s6] sm:$0xff] %v4

// kernel: tile.19
$region0: #{tile.19}
  %s0 = inlined_call_operand.vmem [shape: f32[14,16], index: 0, kind: input, shape index: {}]
  %s1 = inlined_call_operand.vmem [shape: f32[1,224], index: 1, kind: output, shape index: {}]
  $region1: #{tile.19} parent=0
    #allocation0 [shape = 'u8[8192]{0}', space=vmem, size = 0x2000, scoped, tag = 'scoped mem for output reshape']
    %s2 = smov 3
    %v3 = vld [vmem:[%s0] ss:$8 sm:%s2]
    %vm4 = vcmask 130048
    %5 = vst.msk [vmem:[#allocation0] ss:$8 sm:$0x3] %vm4, %v3
    %s6 = scalar_lea.vmem %s0, 7
    %v7 = vld [vmem:[%s6] sm:$0x1]
    %8 = vrot.lane.b32.xlu0 %v7, 112
    %v9 = vpop.permute.xlu0 %8
    %vm10 = vcmask 1048448
    %11 = vst.msk [vmem:[#allocation0] sm:$0x1] %vm10, %v9
    %s12 = scalar_lea.vmem %s0, 6
    %v13 = vld [vmem:[%s12] sm:$0x1]
    %14 = vrot.lane.b32.xlu0 %v13, 96
    %v15 = vpop.permute.xlu0 %14
    %vm16 = vcmask 917248
    %17 = vst.msk [vmem:[#allocation0] sm:$0x1] %vm16, %v15
    %s18 = scalar_lea.vmem %s0, 5
    %s19 = smov 3
    %v20 = vld [vmem:[%s18] ss:$8 sm:%s19]
    %21 = vrot.lane.b32.xlu0 %v20, 80
    %v22 = vpop.permute.xlu0 %21
    %vm23 = vcmask 786048
    %24 = vst.msk [vmem:[#allocation0] ss:$8 sm:$0x3] %vm23, %v22
    %s25 = scalar_lea.vmem %s0, 4
    %s26 = smov 3
    %v27 = vld [vmem:[%s25] ss:$8 sm:%s26]
    %28 = vrot.lane.b32.xlu0 %v27, 64
    %v29 = vpop.permute.xlu0 %28
    %vm30 = vcmask 654848
    %31 = vst.msk [vmem:[#allocation0] ss:$8 sm:$0x3] %vm30, %v29
    %s32 = scalar_lea.vmem %s0, 3
    %s33 = smov 3
    %v34 = vld [vmem:[%s32] ss:$8 sm:%s33]
    %35 = vrot.lane.b32.xlu0 %v34, 48
    %v36 = vpop.permute.xlu0 %35
    %vm37 = vcmask 523648
    %38 = vst.msk [vmem:[#allocation0] ss:$8 sm:$0x3] %vm37, %v36
    %s39 = scalar_lea.vmem %s0, 2
    %s40 = smov 3
    %v41 = vld [vmem:[%s39] ss:$8 sm:%s40]
    %42 = vrot.lane.b32.xlu0 %v41, 32
    %v43 = vpop.permute.xlu0 %42
    %vm44 = vcmask 392448
    %45 = vst.msk [vmem:[#allocation0] ss:$8 sm:$0x3] %vm44, %v43
    %s46 = scalar_lea.vmem %s0, 1
    %s47 = smov 3
    %v48 = vld [vmem:[%s46] ss:$8 sm:%s47]
    %49 = vrot.lane.b32.xlu0 %v48, 16
    %v50 = vpop.permute.xlu0 %49
    %vm51 = vcmask 261248
    %52 = vst.msk [vmem:[#allocation0] ss:$8 sm:$0x3] %vm51, %v50
    %s54 = ssub.s32 2, 1
    %v55 = vld [vmem:[#allocation0] sm:%s54]
    %s57 = ssub.s32 2, 1
    %58 = vst [vmem:[%s1] sm:%s57] %v55
    %s59 = scalar_lea.vmem [#allocation0], 8
    %v60 = vld [vmem:[%s59] sm:%s54]
    %s62 = ssub.s32 2, 1
    %s63 = scalar_lea.vmem %s1, 1
    %64 = vst [vmem:[%s63] sm:%s62] %v60

// kernel: mnist_cnn_forward.1
$region0: #{mnist_cnn_forward.1}
  #allocation0 [shape = 'u32[]', space=smem, size = 0x4, offset = 0x4, fixed_abs, tag = 'smem constant byte address 0x4 - core index']
  #allocation1 [shape = 'u32[72,128]{1,0:T(1,128)}', space=vmem, size = 0x9000, scoped, tag = 'internal scratch']
  %s0 = inlined_call_operand.vmem [shape: f32[256,784], index: 0, kind: input, shape index: {}]
  %s1 = inlined_call_operand.vmem [shape: bf16[3,28,224], index: 1, kind: input, shape index: {}]
  %s2 = inlined_call_operand.vmem [shape: bf16[3,224,112], index: 2, kind: input, shape index: {}]
  %s3 = inlined_call_operand.vmem [shape: bf16[3,112,64], index: 3, kind: input, shape index: {}]
  %s4 = inlined_call_operand.vmem [shape: f32[1,224], index: 4, kind: input, shape index: {}]
  %s5 = inlined_call_operand.vmem [shape: f32[1,112], index: 5, kind: input, shape index: {}]
  %s6 = inlined_call_operand.vmem [shape: f32[1,64], index: 6, kind: input, shape index: {}]
  %s7 = inlined_call_operand.vmem [shape: f32[256,128], index: 7, kind: output, shape index: {}]
  %s8 = sld [smem:[#allocation0]]
  $region61: #{mnist_cnn_forward.1} parent=0
    _
  %s10 = ssub.s32 1, %s8
  %s11 = scalar_select 0, %s10, %s8
  loop: start=0, step=1, limit=4
  $region2: #{mnist_cnn_forward.1} parent=0 // loop_pre_header
    _
  $region3: #{mnist_cnn_forward.1} parent=0 // loop_header
    %s13 = sphi 0, %s17
    %p14 = scmp.ge.s32.totalorder %s13, 4
    %s23 = sphi 0, %s25
    %s26 = sphi 0, %s23
    %s27 = sphi 0, %s26
    %s43 = sphi 0, %s27
    %s47 = sphi 0, %s47
    %s49 = sphi 0, %s47
    %s50 = sphi 0, %s49
    %s64 = sphi 0, %s50
    %s68 = sphi 0, %s68
    %s70 = sphi 0, %s68
    %s71 = sphi 0, %s70
    %s85 = sphi 0, %s71
    %s89 = sphi 0, %s89
    %s91 = sphi 0, %s89
    %s92 = sphi 0, %s91
    %s106 = sphi 0, %s92
    %s110 = sphi 0, %s110
    %s112 = sphi 0, %s110
    %s113 = sphi 0, %s112
    %s127 = sphi 0, %s113
    %s131 = sphi 0, %s131
    %s133 = sphi 0, %s131
    %s134 = sphi 0, %s133
    %s148 = sphi 0, %s134
    %s152 = sphi 0, %s152
    %s154 = sphi 0, %s152
    %s155 = sphi 0, %s154
    %s169 = sphi 0, %s155
    %s175 = sphi 0, %s177
    %s178 = sphi 0, %s175
    %s179 = sphi 0, %s178
    %s195 = sphi 0, %s179
  $region4: #{mnist_cnn_forward.1} parent=0 // loop_header_branch
    %16 = sbr.rel (%p14) target = $region8
  $region5: #{mnist_cnn_forward.1} parent=0 // loop_body
    %s18 = ssub.s32 %s13, 1
    %s19 = ssub.s32 %s13, 2
    %s20 = sadd.s32 %s13, 1
    %s21 = ssub.s32 %s13, %s20
    %p22 = scmp.eq.s32.totalorder %s21, 0
    %s24 = sadd.s32 %s23, 1
    %s25 = scalar_select %p22, %s23, %s24
    %p28 = pneg %p22
    %p29 = scmp.eq.s32.totalorder %s13, 1
    %p30 = por %p28, %p29
    %p31 = scmp.ne.s32.totalorder %s23, %s26
    %p32 = scmp.eq.s32.totalorder %s13, 0
    %p33 = por %p31, %p32
    %p34 = scmp.ne.s32.totalorder %s23, %s26
    %p35 = scmp.eq.s32.totalorder %s18, 1
    %p36 = por %p34, %p35
    %p37 = scmp.ne.s32.totalorder %s26, %s27
    %p38 = scmp.eq.s32.totalorder %s18, 0
    %p39 = por %p37, %p38
    %p40 = scmp.ne.s32.totalorder %s26, %s27
    %p41 = scmp.eq.s32.totalorder %s19, 1
    %p42 = por %p40, %p41
    %p44 = scmp.ne.s32.totalorder %s27, %s43
    %p45 = scmp.eq.s32.totalorder %s19, 0
    %p46 = por %p44, %p45
    %s48 = sadd.s32 %s47, 1
    %p51 = scmp.eq.s32.totalorder %s13, 1
    %p52 = scmp.ne.s32.totalorder %s47, %s49
    %p53 = scmp.eq.s32.totalorder %s13, 0
    %p54 = por %p52, %p53
    %p55 = scmp.ne.s32.totalorder %s47, %s49
    %p56 = scmp.eq.s32.totalorder %s18, 1
    %p57 = por %p55, %p56
    %p58 = scmp.ne.s32.totalorder %s49, %s50
    %p59 = scmp.eq.s32.totalorder %s18, 0
    %p60 = por %p58, %p59
    %p61 = scmp.ne.s32.totalorder %s49, %s50
    %p62 = scmp.eq.s32.totalorder %s19, 1
    %p63 = por %p61, %p62
    %p65 = scmp.ne.s32.totalorder %s50, %s64
    %p66 = scmp.eq.s32.totalorder %s19, 0
    %p67 = por %p65, %p66
    %s69 = sadd.s32 %s68, 1
    %p72 = scmp.eq.s32.totalorder %s13, 1
    %p73 = scmp.ne.s32.totalorder %s68, %s70
    %p74 = scmp.eq.s32.totalorder %s13, 0
    %p75 = por %p73, %p74
    %p76 = scmp.ne.s32.totalorder %s68, %s70
    %p77 = scmp.eq.s32.totalorder %s18, 1
    %p78 = por %p76, %p77
    %p79 = scmp.ne.s32.totalorder %s70, %s71
    %p80 = scmp.eq.s32.totalorder %s18, 0
    %p81 = por %p79, %p80
    %p82 = scmp.ne.s32.totalorder %s70, %s71
    %p83 = scmp.eq.s32.totalorder %s19, 1
    %p84 = por %p82, %p83
    %p86 = scmp.ne.s32.totalorder %s71, %s85
    %p87 = scmp.eq.s32.totalorder %s19, 0
    %p88 = por %p86, %p87
    %s90 = sadd.s32 %s89, 1
    %p93 = scmp.eq.s32.totalorder %s13, 1
    %p94 = scmp.ne.s32.totalorder %s89, %s91
    %p95 = scmp.eq.s32.totalorder %s13, 0
    %p96 = por %p94, %p95
    %p97 = scmp.ne.s32.totalorder %s89, %s91
    %p98 = scmp.eq.s32.totalorder %s18, 1
    %p99 = por %p97, %p98
    %p100 = scmp.ne.s32.totalorder %s91, %s92
    %p101 = scmp.eq.s32.totalorder %s18, 0
    %p102 = por %p100, %p101
    %p103 = scmp.ne.s32.totalorder %s91, %s92
    %p104 = scmp.eq.s32.totalorder %s19, 1
    %p105 = por %p103, %p104
    %p107 = scmp.ne.s32.totalorder %s92, %s106
    %p108 = scmp.eq.s32.totalorder %s19, 0
    %p109 = por %p107, %p108
    %s111 = sadd.s32 %s110, 1
    %p114 = scmp.eq.s32.totalorder %s13, 1
    %p115 = scmp.ne.s32.totalorder %s110, %s112
    %p116 = scmp.eq.s32.totalorder %s13, 0
    %p117 = por %p115, %p116
    %p118 = scmp.ne.s32.totalorder %s110, %s112
    %p119 = scmp.eq.s32.totalorder %s18, 1
    %p120 = por %p118, %p119
    %p121 = scmp.ne.s32.totalorder %s112, %s113
    %p122 = scmp.eq.s32.totalorder %s18, 0
    %p123 = por %p121, %p122
    %p124 = scmp.ne.s32.totalorder %s112, %s113
    %p125 = scmp.eq.s32.totalorder %s19, 1
    %p126 = por %p124, %p125
    %p128 = scmp.ne.s32.totalorder %s113, %s127
    %p129 = scmp.eq.s32.totalorder %s19, 0
    %p130 = por %p128, %p129
    %s132 = sadd.s32 %s131, 1
    %p135 = scmp.eq.s32.totalorder %s13, 1
    %p136 = scmp.ne.s32.totalorder %s131, %s133
    %p137 = scmp.eq.s32.totalorder %s13, 0
    %p138 = por %p136, %p137
    %p139 = scmp.ne.s32.totalorder %s131, %s133
    %p140 = scmp.eq.s32.totalorder %s18, 1
    %p141 = por %p139, %p140
    %p142 = scmp.ne.s32.totalorder %s133, %s134
    %p143 = scmp.eq.s32.totalorder %s18, 0
    %p144 = por %p142, %p143
    %p145 = scmp.ne.s32.totalorder %s133, %s134
    %p146 = scmp.eq.s32.totalorder %s19, 1
    %p147 = por %p145, %p146
    %p149 = scmp.ne.s32.totalorder %s134, %s148
    %p150 = scmp.eq.s32.totalorder %s19, 0
    %p151 = por %p149, %p150
    %s153 = sadd.s32 %s152, 1
    %p156 = scmp.eq.s32.totalorder %s13, 1
    %p157 = scmp.ne.s32.totalorder %s152, %s154
    %p158 = scmp.eq.s32.totalorder %s13, 0
    %p159 = por %p157, %p158
    %p160 = scmp.ne.s32.totalorder %s152, %s154
    %p161 = scmp.eq.s32.totalorder %s18, 1
    %p162 = por %p160, %p161
    %p163 = scmp.ne.s32.totalorder %s154, %s155
    %p164 = scmp.eq.s32.totalorder %s18, 0
    %p165 = por %p163, %p164
    %p166 = scmp.ne.s32.totalorder %s154, %s155
    %p167 = scmp.eq.s32.totalorder %s19, 1
    %p168 = por %p166, %p167
    %p170 = scmp.ne.s32.totalorder %s155, %s169
    %p171 = scmp.eq.s32.totalorder %s19, 0
    %p172 = por %p170, %p171
    %s173 = ssub.s32 %s13, %s20
    %p174 = scmp.eq.s32.totalorder %s173, 0
    %s176 = sadd.s32 %s175, 1
    %s177 = scalar_select %p174, %s175, %s176
    %p180 = pneg %p174
    %p181 = scmp.eq.s32.totalorder %s13, 1
    %p182 = por %p180, %p181
    %p183 = scmp.ne.s32.totalorder %s175, %s178
    %p184 = scmp.eq.s32.totalorder %s13, 0
    %p185 = por %p183, %p184
    %p186 = scmp.ne.s32.totalorder %s175, %s178
    %p187 = scmp.eq.s32.totalorder %s18, 1
    %p188 = por %p186, %p187
    %p189 = scmp.ne.s32.totalorder %s178, %s179
    %p190 = scmp.eq.s32.totalorder %s18, 0
    %p191 = por %p189, %p190
    %p192 = scmp.ne.s32.totalorder %s178, %s179
    %p193 = scmp.eq.s32.totalorder %s19, 1
    %p194 = por %p192, %p193
    %p196 = scmp.ne.s32.totalorder %s179, %s195
    %p197 = scmp.eq.s32.totalorder %s19, 0
    %p198 = por %p196, %p197
    %p199 = scmp.le.s32.totalorder 1, %s13
    %p200 = scmp.lt.s32.totalorder %s13, 3
    %p201 = pnand %p199, %p200
    %p202 = pneg %p201
    // Predicated region
    $region9: #{mnist_cnn_forward.1} parent=5 // pred_check
      _
    $region10: #{mnist_cnn_forward.1} parent=5 // pred_check_branch
      %204 = sbr.rel (%p201) target = $region12
    $region11: #{mnist_cnn_forward.1} parent=5 // pred_region
      %s205 = ssub.s32 %s13, 1
      // Predicated region
      $region13: #{mnist_cnn_forward.1} parent=11 // pred_check
        %p206 = pneg %p60
      $region14: #{mnist_cnn_forward.1} parent=11 // pred_check_branch
        %208 = sbr.rel (%p206) target = $region16
      $region15: #{mnist_cnn_forward.1} parent=11 // pred_region
        _
      $region16: #{mnist_cnn_forward.1} parent=11 // pred_fallthru
        _
      // Predicated region
      $region17: #{mnist_cnn_forward.1} parent=11 // pred_check
        %p209 = pneg %p81
      $region18: #{mnist_cnn_forward.1} parent=11 // pred_check_branch
        %211 = sbr.rel (%p209) target = $region20
      $region19: #{mnist_cnn_forward.1} parent=11 // pred_region
        _
      $region20: #{mnist_cnn_forward.1} parent=11 // pred_fallthru
        _
      // Predicated region
      $region21: #{mnist_cnn_forward.1} parent=11 // pred_check
        %p212 = pneg %p102
      $region22: #{mnist_cnn_forward.1} parent=11 // pred_check_branch
        %214 = sbr.rel (%p212) target = $region24
      $region23: #{mnist_cnn_forward.1} parent=11 // pred_region
        _
      $region24: #{mnist_cnn_forward.1} parent=11 // pred_fallthru
        _
      // Predicated region
      $region25: #{mnist_cnn_forward.1} parent=11 // pred_check
        %p215 = pneg %p123
      $region26: #{mnist_cnn_forward.1} parent=11 // pred_check_branch
        %217 = sbr.rel (%p215) target = $region28
      $region27: #{mnist_cnn_forward.1} parent=11 // pred_region
        _
      $region28: #{mnist_cnn_forward.1} parent=11 // pred_fallthru
        _
      // Predicated region
      $region29: #{mnist_cnn_forward.1} parent=11 // pred_check
        %p218 = pneg %p144
      $region30: #{mnist_cnn_forward.1} parent=11 // pred_check_branch
        %220 = sbr.rel (%p218) target = $region32
      $region31: #{mnist_cnn_forward.1} parent=11 // pred_region
        _
      $region32: #{mnist_cnn_forward.1} parent=11 // pred_fallthru
        _
      // Predicated region
      $region33: #{mnist_cnn_forward.1} parent=11 // pred_check
        %p221 = pneg %p165
      $region34: #{mnist_cnn_forward.1} parent=11 // pred_check_branch
        %223 = sbr.rel (%p221) target = $region36
      $region35: #{mnist_cnn_forward.1} parent=11 // pred_region
        _
      $region36: #{mnist_cnn_forward.1} parent=11 // pred_fallthru
        _
    $region12: #{mnist_cnn_forward.1} parent=5 // pred_fallthru
      _
    %p224 = scmp.lt.s32.totalorder %s13, 2
    // Predicated region
    $region37: #{mnist_cnn_forward.1} parent=5 // pred_check
      %p225 = pneg %p224
    $region38: #{mnist_cnn_forward.1} parent=5 // pred_check_branch
      %227 = sbr.rel (%p225) target = $region40
    $region39: #{mnist_cnn_forward.1} parent=5 // pred_region
      // Predicated region
      $region41: #{mnist_cnn_forward.1} parent=39 // pred_check
        %p228 = pneg %p33
      $region42: #{mnist_cnn_forward.1} parent=39 // pred_check_branch
        %230 = sbr.rel (%p228) target = $region44
      $region43: #{mnist_cnn_forward.1} parent=39 // pred_region
        %s231 = smul.u32 16, %s13
        %p232 = scmp.lt.s32.totalorder %s231, 31
        %s233 = scalar_select %p232, %s231, 31
        %s234 = smul.addr %s233, 7
        %s235 = smul.addr %s234, 8
        %s236 = scalar_lea.vmem %s0, %s235
        %s237 = smul.u32 16, %s13
      $region44: #{mnist_cnn_forward.1} parent=39 // pred_fallthru
        _
    $region40: #{mnist_cnn_forward.1} parent=5 // pred_fallthru
      _
    %p238 = scmp.le.s32.totalorder 1, %s13
    %p239 = scmp.lt.s32.totalorder %s13, 3
    %p240 = pnand %p238, %p239
    %p241 = pneg %p240
    // Predicated region
    $region45: #{mnist_cnn_forward.1} parent=5 // pred_check
      _
    $region46: #{mnist_cnn_forward.1} parent=5 // pred_check_branch
      %243 = sbr.rel (%p240) target = $region48
    $region47: #{mnist_cnn_forward.1} parent=5 // pred_region
      %s244 = ssub.s32 %s13, 1
      %s245 = smul.u32 16, %s18
      %p246 = scmp.lt.s32.totalorder %s245, 31
      %s247 = scalar_select %p246, %s245, 31
      %s248 = smul.addr %s247, 7
      %s249 = smul.addr %s248, 8
      %s250 = scalar_lea.vmem %s0, %s249
      %p251 = pneg %p39
      %p252 = pneg %p36
      %p253 = pneg %p60
      %p254 = pneg %p57
      %p255 = pneg %p81
      %p256 = pneg %p78
      %p257 = pneg %p102
      %p258 = pneg %p99
      %p259 = pneg %p123
      %p260 = pneg %p120
      %p261 = pneg %p144
      %p262 = pneg %p141
      %p263 = pneg %p165
      %p264 = pneg %p162
      %p265 = pneg %p191
      %p266 = pneg %p188
      %s267 = smul.u32 16, %s18
      %p268 = scmp.lt.s32.totalorder %s267, 31
      %s269 = scalar_select %p268, %s267, 31
      %s270 = smul.addr %s269, 8
      %s271 = scalar_lea.vmem %s7, %s270
      %s272 = smul.u32 16, %s18
      %p273 = scmp.lt.s32.totalorder %s272, 31
      %s274 = scalar_select %p273, %s272, 31
      %s275 = smul.addr %s274, 7
      %s276 = smul.addr %s275, 8
      %s277 = scalar_lea.vmem %s0, %s276
      %s278 = smul.u32 16, %s18
      %s279 = smul.u32 16, %s18
      %p280 = scmp.lt.s32.totalorder %s279, 31
      %s281 = scalar_select %p280, %s279, 31
      %s282 = smul.addr %s281, 8
      %s283 = scalar_lea.vmem %s7, %s282
      %s284 = smul.u32 16, %s18
      %v286 = vld [vmem:[%s277] sm:$0xff]
      %v287 = vld [vmem:[%s277 + $0x8] sm:$0xff]
      %v288 = vld [vmem:[%s277 + $0x10] sm:$0xff]
      %v289 = vld [vmem:[%s277 + $0x18] sm:$0xff]
      %v290 = vld [vmem:[%s277 + $0x20] sm:$0xff]
      %v291 = vld [vmem:[%s277 + $0x28] sm:$0xff]
      %v292 = vld [vmem:[%s277 + $0x30] sm:$0xff]
      %v293 = vld [vmem:[%s277 + $0x38] sm:$0xff]
      %v294 = vld [vmem:[%s277 + $0x40] sm:$0xff]
      %v295 = vld [vmem:[%s277 + $0x48] sm:$0xff]
      %v296 = vld [vmem:[%s277 + $0x50] sm:$0xff]
      %v297 = vld [vmem:[%s277 + $0x58] sm:$0xff]
      %v298 = vld [vmem:[%s277 + $0x60] sm:$0xff]
      %v299 = vld [vmem:[%s277 + $0x68] sm:$0xff]
      %v300 = vld [vmem:[%s277 + $0x70] sm:$0xff]
      %v301 = vld [vmem:[%s277 + $0x78] sm:$0xff]
      %v302 = vld [vmem:[%s277 + $0x80] sm:$0xff]
      %v303 = vld [vmem:[%s277 + $0x88] sm:$0xff]
      %v304 = vld [vmem:[%s277 + $0x90] sm:$0xff]
      %v305 = vld [vmem:[%s277 + $0x98] sm:$0xff]
      %v306 = vld [vmem:[%s277 + $0xa0] sm:$0xff]
      %v307 = vld [vmem:[%s277 + $0xa8] sm:$0xff]
      %v308 = vld [vmem:[%s277 + $0xb0] sm:$0xff]
      %v309 = vld [vmem:[%s277 + $0xb8] sm:$0xff]
      %v310 = vld [vmem:[%s277 + $0xc0] sm:$0xff]
      %v311 = vld [vmem:[%s277 + $0xc8] sm:$0xff]
      %v312 = vld [vmem:[%s277 + $0xd0] sm:$0xff]
      %v313 = vld [vmem:[%s277 + $0xd8] sm:$0xff]
      %v314 = vld [vmem:[%s277 + $0xe0] sm:$0xff]
      %v315 = vld [vmem:[%s277 + $0xe8] sm:$0xff]
      %v316 = vld [vmem:[%s277 + $0xf0] sm:$0xff]
      %v317 = vld [vmem:[%s277 + $0xf8] sm:$0xff]
      %v318 = vld [vmem:[%s277 + $0x100] sm:$0xff]
      %v319 = vld [vmem:[%s277 + $0x108] sm:$0xff]
      %v320 = vld [vmem:[%s277 + $0x110] sm:$0xff]
      %v321 = vld [vmem:[%s277 + $0x118] sm:$0xff]
      %v322 = vld [vmem:[%s277 + $0x120] sm:$0xff]
      %v323 = vld [vmem:[%s277 + $0x128] sm:$0xff]
      %v324 = vld [vmem:[%s277 + $0x130] sm:$0xff]
      %v325 = vld [vmem:[%s277 + $0x138] sm:$0xff]
      %v326 = vld [vmem:[%s277 + $0x140] sm:$0xff]
      %v327 = vld [vmem:[%s277 + $0x148] sm:$0xff]
      %v328 = vld [vmem:[%s277 + $0x150] sm:$0xff]
      %v329 = vld [vmem:[%s277 + $0x158] sm:$0xff]
      %v330 = vld [vmem:[%s277 + $0x160] sm:$0xff]
      %v331 = vld [vmem:[%s277 + $0x168] sm:$0xff]
      %v332 = vld [vmem:[%s277 + $0x170] sm:$0xff]
      %v333 = vld [vmem:[%s277 + $0x178] sm:$0xff]
      %v334 = vld [vmem:[%s277 + $0x180] sm:$0xff]
      %v335 = vld [vmem:[%s277 + $0x188] sm:$0xff]
      %v336 = vld [vmem:[%s277 + $0x190] sm:$0xff]
      %v337 = vld [vmem:[%s277 + $0x198] sm:$0xff]
      %v338 = vld [vmem:[%s277 + $0x1a0] sm:$0xff]
      %v339 = vld [vmem:[%s277 + $0x1a8] sm:$0xff]
      %v340 = vld [vmem:[%s277 + $0x1b0] sm:$0xff]
      %v341 = vld [vmem:[%s277 + $0x1b8] sm:$0xff]
      %v342 = vld [vmem:[%s277 + $0x1c0] sm:$0xff]
      %v343 = vld [vmem:[%s277 + $0x1c8] sm:$0xff]
      %v344 = vld [vmem:[%s277 + $0x1d0] sm:$0xff]
      %v345 = vld [vmem:[%s277 + $0x1d8] sm:$0xff]
      %v346 = vld [vmem:[%s277 + $0x1e0] sm:$0xff]
      %v347 = vld [vmem:[%s277 + $0x1e8] sm:$0xff]
      %v348 = vld [vmem:[%s277 + $0x1f0] sm:$0xff]
      %v349 = vld [vmem:[%s277 + $0x1f8] sm:$0xff]
      %v350 = vld [vmem:[%s277 + $0x200] sm:$0xff]
      %v351 = vld [vmem:[%s277 + $0x208] sm:$0xff]
      %v352 = vld [vmem:[%s277 + $0x210] sm:$0xff]
      %v353 = vld [vmem:[%s277 + $0x218] sm:$0xff]
      %v354 = vld [vmem:[%s277 + $0x220] sm:$0xff]
      %v355 = vld [vmem:[%s277 + $0x228] sm:$0xff]
      %v356 = vld [vmem:[%s277 + $0x230] sm:$0xff]
      %v357 = vld [vmem:[%s277 + $0x238] sm:$0xff]
      %v358 = vld [vmem:[%s277 + $0x240] sm:$0xff]
      %v359 = vld [vmem:[%s277 + $0x248] sm:$0xff]
      %v360 = vld [vmem:[%s277 + $0x250] sm:$0xff]
      %v361 = vld [vmem:[%s277 + $0x258] sm:$0xff]
      %v362 = vld [vmem:[%s277 + $0x260] sm:$0xff]
      %v363 = vld [vmem:[%s277 + $0x268] sm:$0xff]
      %v364 = vld [vmem:[%s277 + $0x270] sm:$0xff]
      %v365 = vld [vmem:[%s277 + $0x278] sm:$0xff]
      %v366 = vld [vmem:[%s277 + $0x280] sm:$0xff]
      %v367 = vld [vmem:[%s277 + $0x288] sm:$0xff]
      %v368 = vld [vmem:[%s277 + $0x290] sm:$0xff]
      %v369 = vld [vmem:[%s277 + $0x298] sm:$0xff]
      %v370 = vld [vmem:[%s277 + $0x2a0] sm:$0xff]
      %v371 = vld [vmem:[%s277 + $0x2a8] sm:$0xff]
      %v372 = vld [vmem:[%s277 + $0x2b0] sm:$0xff]
      %v373 = vld [vmem:[%s277 + $0x2b8] sm:$0xff]
      %v374 = vld [vmem:[%s277 + $0x2c0] sm:$0xff]
      %v375 = vld [vmem:[%s277 + $0x2c8] sm:$0xff]
      %v376 = vld [vmem:[%s277 + $0x2d0] sm:$0xff]
      %v377 = vld [vmem:[%s277 + $0x2d8] sm:$0xff]
      %v378 = vld [vmem:[%s277 + $0x2e0] sm:$0xff]
      %v379 = vld [vmem:[%s277 + $0x2e8] sm:$0xff]
      %v380 = vld [vmem:[%s277 + $0x2f0] sm:$0xff]
      %v381 = vld [vmem:[%s277 + $0x2f8] sm:$0xff]
      %v382 = vld [vmem:[%s277 + $0x300] sm:$0xff]
      %v383 = vld [vmem:[%s277 + $0x308] sm:$0xff]
      %v384 = vld [vmem:[%s277 + $0x310] sm:$0xff]
      %v385 = vld [vmem:[%s277 + $0x318] sm:$0xff]
      %v386 = vld [vmem:[%s277 + $0x320] sm:$0xff]
      %v387 = vld [vmem:[%s277 + $0x328] sm:$0xff]
      %v388 = vld [vmem:[%s277 + $0x330] sm:$0xff]
      %v389 = vld [vmem:[%s277 + $0x338] sm:$0xff]
      %v390 = vld [vmem:[%s277 + $0x340] sm:$0xff]
      %v391 = vld [vmem:[%s277 + $0x348] sm:$0xff]
      %v392 = vld [vmem:[%s277 + $0x350] sm:$0xff]
      %v393 = vld [vmem:[%s277 + $0x358] sm:$0xff]
      %v394 = vld [vmem:[%s277 + $0x360] sm:$0xff]
      %v395 = vld [vmem:[%s277 + $0x368] sm:$0xff]
      %v396 = vld [vmem:[%s277 + $0x370] sm:$0xff]
      %v397 = vld [vmem:[%s277 + $0x378] sm:$0xff]
      %414 = vrot.lane.b32.xlu0 %v286, 100
      %v415 = vpop.permute.xlu0 %414
      %416 = vrot.lane.b32.xlu0 %v293, 100
      %v417 = vpop.permute.xlu0 %416
      %418 = vrot.lane.b32.xlu0 %v300, 100
      %v419 = vpop.permute.xlu0 %418
      %420 = vrot.lane.b32.xlu0 %v307, 100
      %v421 = vpop.permute.xlu0 %420
      %422 = vrot.lane.b32.xlu0 %v314, 100
      %v423 = vpop.permute.xlu0 %422
      %424 = vrot.lane.b32.xlu0 %v321, 100
      %v425 = vpop.permute.xlu0 %424
      %426 = vrot.lane.b32.xlu0 %v328, 100
      %v427 = vpop.permute.xlu0 %426
      %428 = vrot.lane.b32.xlu0 %v335, 100
      %v429 = vpop.permute.xlu0 %428
      %430 = vrot.lane.b32.xlu0 %v342, 100
      %v431 = vpop.permute.xlu0 %430
      %432 = vrot.lane.b32.xlu0 %v349, 100
      %v433 = vpop.permute.xlu0 %432
      %434 = vrot.lane.b32.xlu0 %v356, 100
      %v435 = vpop.permute.xlu0 %434
      %436 = vrot.lane.b32.xlu0 %v363, 100
      %v437 = vpop.permute.xlu0 %436
      %438 = vrot.lane.b32.xlu0 %v370, 100
      %v439 = vpop.permute.xlu0 %438
      %440 = vrot.lane.b32.xlu0 %v377, 100
      %v441 = vpop.permute.xlu0 %440
      %442 = vrot.lane.b32.xlu0 %v384, 100
      %v443 = vpop.permute.xlu0 %442
      %444 = vrot.lane.b32.xlu0 %v391, 100
      %v445 = vpop.permute.xlu0 %444
      %462 = vrot.lane.b32.xlu0 %v286, 44
      %v463 = vpop.permute.xlu0 %462
      %464 = vrot.lane.b32.xlu0 %v293, 44
      %v465 = vpop.permute.xlu0 %464
      %466 = vrot.lane.b32.xlu0 %v300, 44
      %v467 = vpop.permute.xlu0 %466
      %468 = vrot.lane.b32.xlu0 %v307, 44
      %v469 = vpop.permute.xlu0 %468
      %470 = vrot.lane.b32.xlu0 %v314, 44
      %v471 = vpop.permute.xlu0 %470
      %472 = vrot.lane.b32.xlu0 %v321, 44
      %v473 = vpop.permute.xlu0 %472
      %474 = vrot.lane.b32.xlu0 %v328, 44
      %v475 = vpop.permute.xlu0 %474
      %476 = vrot.lane.b32.xlu0 %v335, 44
      %v477 = vpop.permute.xlu0 %476
      %478 = vrot.lane.b32.xlu0 %v342, 44
      %v479 = vpop.permute.xlu0 %478
      %480 = vrot.lane.b32.xlu0 %v349, 44
      %v481 = vpop.permute.xlu0 %480
      %482 = vrot.lane.b32.xlu0 %v356, 44
      %v483 = vpop.permute.xlu0 %482
      %484 = vrot.lane.b32.xlu0 %v363, 44
      %v485 = vpop.permute.xlu0 %484
      %486 = vrot.lane.b32.xlu0 %v370, 44
      %v487 = vpop.permute.xlu0 %486
      %488 = vrot.lane.b32.xlu0 %v377, 44
      %v489 = vpop.permute.xlu0 %488
      %490 = vrot.lane.b32.xlu0 %v384, 44
      %v491 = vpop.permute.xlu0 %490
      %492 = vrot.lane.b32.xlu0 %v391, 44
      %v493 = vpop.permute.xlu0 %492
      %526 = vrot.lane.b32.xlu0 %v287, 116
      %v527 = vpop.permute.xlu0 %526
      %528 = vrot.lane.b32.xlu0 %v294, 116
      %v529 = vpop.permute.xlu0 %528
      %530 = vrot.lane.b32.xlu0 %v301, 116
      %v531 = vpop.permute.xlu0 %530
      %532 = vrot.lane.b32.xlu0 %v308, 116
      %v533 = vpop.permute.xlu0 %532
      %534 = vrot.lane.b32.xlu0 %v315, 116
      %v535 = vpop.permute.xlu0 %534
      %536 = vrot.lane.b32.xlu0 %v322, 116
      %v537 = vpop.permute.xlu0 %536
      %538 = vrot.lane.b32.xlu0 %v329, 116
      %v539 = vpop.permute.xlu0 %538
      %540 = vrot.lane.b32.xlu0 %v336, 116
      %v541 = vpop.permute.xlu0 %540
      %542 = vrot.lane.b32.xlu0 %v343, 116
      %v543 = vpop.permute.xlu0 %542
      %544 = vrot.lane.b32.xlu0 %v350, 116
      %v545 = vpop.permute.xlu0 %544
      %546 = vrot.lane.b32.xlu0 %v357, 116
      %v547 = vpop.permute.xlu0 %546
      %548 = vrot.lane.b32.xlu0 %v364, 116
      %v549 = vpop.permute.xlu0 %548
      %550 = vrot.lane.b32.xlu0 %v371, 116
      %v551 = vpop.permute.xlu0 %550
      %552 = vrot.lane.b32.xlu0 %v378, 116
      %v553 = vpop.permute.xlu0 %552
      %554 = vrot.lane.b32.xlu0 %v385, 116
      %v555 = vpop.permute.xlu0 %554
      %556 = vrot.lane.b32.xlu0 %v392, 116
      %v557 = vpop.permute.xlu0 %556
      %574 = vrot.lane.b32.xlu0 %v287, 60
      %v575 = vpop.permute.xlu0 %574
      %576 = vrot.lane.b32.xlu0 %v294, 60
      %v577 = vpop.permute.xlu0 %576
      %578 = vrot.lane.b32.xlu0 %v301, 60
      %v579 = vpop.permute.xlu0 %578
      %580 = vrot.lane.b32.xlu0 %v308, 60
      %v581 = vpop.permute.xlu0 %580
      %582 = vrot.lane.b32.xlu0 %v315, 60
      %v583 = vpop.permute.xlu0 %582
      %584 = vrot.lane.b32.xlu0 %v322, 60
      %v585 = vpop.permute.xlu0 %584
      %586 = vrot.lane.b32.xlu0 %v329, 60
      %v587 = vpop.permute.xlu0 %586
      %588 = vrot.lane.b32.xlu0 %v336, 60
      %v589 = vpop.permute.xlu0 %588
      %590 = vrot.lane.b32.xlu0 %v343, 60
      %v591 = vpop.permute.xlu0 %590
      %592 = vrot.lane.b32.xlu0 %v350, 60
      %v593 = vpop.permute.xlu0 %592
      %594 = vrot.lane.b32.xlu0 %v357, 60
      %v595 = vpop.permute.xlu0 %594
      %596 = vrot.lane.b32.xlu0 %v364, 60
      %v597 = vpop.permute.xlu0 %596
      %598 = vrot.lane.b32.xlu0 %v371, 60
      %v599 = vpop.permute.xlu0 %598
      %600 = vrot.lane.b32.xlu0 %v378, 60
      %v601 = vpop.permute.xlu0 %600
      %602 = vrot.lane.b32.xlu0 %v385, 60
      %v603 = vpop.permute.xlu0 %602
      %604 = vrot.lane.b32.xlu0 %v392, 60
      %v605 = vpop.permute.xlu0 %604
      %638 = vrot.lane.b32.xlu0 %v287, 4
      %v639 = vpop.permute.xlu0 %638
      %640 = vrot.lane.b32.xlu0 %v288, 4
      %v641 = vpop.permute.xlu0 %640
      %642 = vrot.lane.b32.xlu0 %v294, 4
      %v643 = vpop.permute.xlu0 %642
      %644 = vrot.lane.b32.xlu0 %v295, 4
      %v645 = vpop.permute.xlu0 %644
      %646 = vrot.lane.b32.xlu0 %v301, 4
      %v647 = vpop.permute.xlu0 %646
      %648 = vrot.lane.b32.xlu0 %v302, 4
      %v649 = vpop.permute.xlu0 %648
      %650 = vrot.lane.b32.xlu0 %v308, 4
      %v651 = vpop.permute.xlu0 %650
      %652 = vrot.lane.b32.xlu0 %v309, 4
      %v653 = vpop.permute.xlu0 %652
      %654 = vrot.lane.b32.xlu0 %v315, 4
      %v655 = vpop.permute.xlu0 %654
      %656 = vrot.lane.b32.xlu0 %v316, 4
      %v657 = vpop.permute.xlu0 %656
      %658 = vrot.lane.b32.xlu0 %v322, 4
      %v659 = vpop.permute.xlu0 %658
      %660 = vrot.lane.b32.xlu0 %v323, 4
      %v661 = vpop.permute.xlu0 %660
      %662 = vrot.lane.b32.xlu0 %v329, 4
      %v663 = vpop.permute.xlu0 %662
      %664 = vrot.lane.b32.xlu0 %v330, 4
      %v665 = vpop.permute.xlu0 %664
      %666 = vrot.lane.b32.xlu0 %v336, 4
      %v667 = vpop.permute.xlu0 %666
      %668 = vrot.lane.b32.xlu0 %v337, 4
      %v669 = vpop.permute.xlu0 %668
      %670 = vrot.lane.b32.xlu0 %v343, 4
      %v671 = vpop.permute.xlu0 %670
      %672 = vrot.lane.b32.xlu0 %v344, 4
      %v673 = vpop.permute.xlu0 %672
      %674 = vrot.lane.b32.xlu0 %v350, 4
      %v675 = vpop.permute.xlu0 %674
      %676 = vrot.lane.b32.xlu0 %v351, 4
      %v677 = vpop.permute.xlu0 %676
      %678 = vrot.lane.b32.xlu0 %v357, 4
      %v679 = vpop.permute.xlu0 %678
      %680 = vrot.lane.b32.xlu0 %v358, 4
      %v681 = vpop.permute.xlu0 %680
      %682 = vrot.lane.b32.xlu0 %v364, 4
      %v683 = vpop.permute.xlu0 %682
      %684 = vrot.lane.b32.xlu0 %v365, 4
      %v685 = vpop.permute.xlu0 %684
      %686 = vrot.lane.b32.xlu0 %v371, 4
      %v687 = vpop.permute.xlu0 %686
      %688 = vrot.lane.b32.xlu0 %v372, 4
      %v689 = vpop.permute.xlu0 %688
      %690 = vrot.lane.b32.xlu0 %v378, 4
      %v691 = vpop.permute.xlu0 %690
      %692 = vrot.lane.b32.xlu0 %v379, 4
      %v693 = vpop.permute.xlu0 %692
      %694 = vrot.lane.b32.xlu0 %v385, 4
      %v695 = vpop.permute.xlu0 %694
      %696 = vrot.lane.b32.xlu0 %v386, 4
      %v697 = vpop.permute.xlu0 %696
      %698 = vrot.lane.b32.xlu0 %v392, 4
      %v699 = vpop.permute.xlu0 %698
      %700 = vrot.lane.b32.xlu0 %v393, 4
      %v701 = vpop.permute.xlu0 %700
      %vm702 = vcmask 31744
      %v703 = vsel %vm702, %v639, %v641
      %v704 = vsel %vm702, %v643, %v645
      %v705 = vsel %vm702, %v647, %v649
      %v706 = vsel %vm702, %v651, %v653
      %v707 = vsel %vm702, %v655, %v657
      %v708 = vsel %vm702, %v659, %v661
      %v709 = vsel %vm702, %v663, %v665
      %v710 = vsel %vm702, %v667, %v669
      %v711 = vsel %vm702, %v671, %v673
      %v712 = vsel %vm702, %v675, %v677
      %v713 = vsel %vm702, %v679, %v681
      %v714 = vsel %vm702, %v683, %v685
      %v715 = vsel %vm702, %v687, %v689
      %v716 = vsel %vm702, %v691, %v693
      %v717 = vsel %vm702, %v695, %v697
      %v718 = vsel %vm702, %v699, %v701
      %735 = vrot.lane.b32.xlu0 %v288, 76
      %v736 = vpop.permute.xlu0 %735
      %737 = vrot.lane.b32.xlu0 %v295, 76
      %v738 = vpop.permute.xlu0 %737
      %739 = vrot.lane.b32.xlu0 %v302, 76
      %v740 = vpop.permute.xlu0 %739
      %741 = vrot.lane.b32.xlu0 %v309, 76
      %v742 = vpop.permute.xlu0 %741
      %743 = vrot.lane.b32.xlu0 %v316, 76
      %v744 = vpop.permute.xlu0 %743
      %745 = vrot.lane.b32.xlu0 %v323, 76
      %v746 = vpop.permute.xlu0 %745
      %747 = vrot.lane.b32.xlu0 %v330, 76
      %v748 = vpop.permute.xlu0 %747
      %749 = vrot.lane.b32.xlu0 %v337, 76
      %v750 = vpop.permute.xlu0 %749
      %751 = vrot.lane.b32.xlu0 %v344, 76
      %v752 = vpop.permute.xlu0 %751
      %753 = vrot.lane.b32.xlu0 %v351, 76
      %v754 = vpop.permute.xlu0 %753
      %755 = vrot.lane.b32.xlu0 %v358, 76
      %v756 = vpop.permute.xlu0 %755
      %757 = vrot.lane.b32.xlu0 %v365, 76
      %v758 = vpop.permute.xlu0 %757
      %759 = vrot.lane.b32.xlu0 %v372, 76
      %v760 = vpop.permute.xlu0 %759
      %761 = vrot.lane.b32.xlu0 %v379, 76
      %v762 = vpop.permute.xlu0 %761
      %763 = vrot.lane.b32.xlu0 %v386, 76
      %v764 = vpop.permute.xlu0 %763
      %765 = vrot.lane.b32.xlu0 %v393, 76
      %v766 = vpop.permute.xlu0 %765
      %799 = vrot.lane.b32.xlu0 %v288, 20
      %v800 = vpop.permute.xlu0 %799
      %801 = vrot.lane.b32.xlu0 %v289, 20
      %v802 = vpop.permute.xlu0 %801
      %803 = vrot.lane.b32.xlu0 %v295, 20
      %v804 = vpop.permute.xlu0 %803
      %805 = vrot.lane.b32.xlu0 %v296, 20
      %v806 = vpop.permute.xlu0 %805
      %807 = vrot.lane.b32.xlu0 %v302, 20
      %v808 = vpop.permute.xlu0 %807
      %809 = vrot.lane.b32.xlu0 %v303, 20
      %v810 = vpop.permute.xlu0 %809
      %811 = vrot.lane.b32.xlu0 %v309, 20
      %v812 = vpop.permute.xlu0 %811
      %813 = vrot.lane.b32.xlu0 %v310, 20
      %v814 = vpop.permute.xlu0 %813
      %815 = vrot.lane.b32.xlu0 %v316, 20
      %v816 = vpop.permute.xlu0 %815
      %817 = vrot.lane.b32.xlu0 %v317, 20
      %v818 = vpop.permute.xlu0 %817
      %819 = vrot.lane.b32.xlu0 %v323, 20
      %v820 = vpop.permute.xlu0 %819
      %821 = vrot.lane.b32.xlu0 %v324, 20
      %v822 = vpop.permute.xlu0 %821
      %823 = vrot.lane.b32.xlu0 %v330, 20
      %v824 = vpop.permute.xlu0 %823
      %825 = vrot.lane.b32.xlu0 %v331, 20
      %v826 = vpop.permute.xlu0 %825
      %827 = vrot.lane.b32.xlu0 %v337, 20
      %v828 = vpop.permute.xlu0 %827
      %829 = vrot.lane.b32.xlu0 %v338, 20
      %v830 = vpop.permute.xlu0 %829
      %831 = vrot.lane.b32.xlu0 %v344, 20
      %v832 = vpop.permute.xlu0 %831
      %833 = vrot.lane.b32.xlu0 %v345, 20
      %v834 = vpop.permute.xlu0 %833
      %835 = vrot.lane.b32.xlu0 %v351, 20
      %v836 = vpop.permute.xlu0 %835
      %837 = vrot.lane.b32.xlu0 %v352, 20
      %v838 = vpop.permute.xlu0 %837
      %839 = vrot.lane.b32.xlu0 %v358, 20
      %v840 = vpop.permute.xlu0 %839
      %841 = vrot.lane.b32.xlu0 %v359, 20
      %v842 = vpop.permute.xlu0 %841
      %843 = vrot.lane.b32.xlu0 %v365, 20
      %v844 = vpop.permute.xlu0 %843
      %845 = vrot.lane.b32.xlu0 %v366, 20
      %v846 = vpop.permute.xlu0 %845
      %847 = vrot.lane.b32.xlu0 %v372, 20
      %v848 = vpop.permute.xlu0 %847
      %849 = vrot.lane.b32.xlu0 %v373, 20
      %v850 = vpop.permute.xlu0 %849
      %851 = vrot.lane.b32.xlu0 %v379, 20
      %v852 = vpop.permute.xlu0 %851
      %853 = vrot.lane.b32.xlu0 %v380, 20
      %v854 = vpop.permute.xlu0 %853
      %855 = vrot.lane.b32.xlu0 %v386, 20
      %v856 = vpop.permute.xlu0 %855
      %857 = vrot.lane.b32.xlu0 %v387, 20
      %v858 = vpop.permute.xlu0 %857
      %859 = vrot.lane.b32.xlu0 %v393, 20
      %v860 = vpop.permute.xlu0 %859
      %861 = vrot.lane.b32.xlu0 %v394, 20
      %v862 = vpop.permute.xlu0 %861
      %vm863 = vcmask 162816
      %v864 = vsel %vm863, %v800, %v802
      %v865 = vsel %vm863, %v804, %v806
      %v866 = vsel %vm863, %v808, %v810
      %v867 = vsel %vm863, %v812, %v814
      %v868 = vsel %vm863, %v816, %v818
      %v869 = vsel %vm863, %v820, %v822
      %v870 = vsel %vm863, %v824, %v826
      %v871 = vsel %vm863, %v828, %v830
      %v872 = vsel %vm863, %v832, %v834
      %v873 = vsel %vm863, %v836, %v838
      %v874 = vsel %vm863, %v840, %v842
      %v875 = vsel %vm863, %v844, %v846
      %v876 = vsel %vm863, %v848, %v850
      %v877 = vsel %vm863, %v852, %v854
      %v878 = vsel %vm863, %v856, %v858
      %v879 = vsel %vm863, %v860, %v862
      %896 = vrot.lane.b32.xlu0 %v289, 92
      %v897 = vpop.permute.xlu0 %896
      %898 = vrot.lane.b32.xlu0 %v296, 92
      %v899 = vpop.permute.xlu0 %898
      %900 = vrot.lane.b32.xlu0 %v303, 92
      %v901 = vpop.permute.xlu0 %900
      %902 = vrot.lane.b32.xlu0 %v310, 92
      %v903 = vpop.permute.xlu0 %902
      %904 = vrot.lane.b32.xlu0 %v317, 92
      %v905 = vpop.permute.xlu0 %904
      %906 = vrot.lane.b32.xlu0 %v324, 92
      %v907 = vpop.permute.xlu0 %906
      %908 = vrot.lane.b32.xlu0 %v331, 92
      %v909 = vpop.permute.xlu0 %908
      %910 = vrot.lane.b32.xlu0 %v338, 92
      %v911 = vpop.permute.xlu0 %910
      %912 = vrot.lane.b32.xlu0 %v345, 92
      %v913 = vpop.permute.xlu0 %912
      %914 = vrot.lane.b32.xlu0 %v352, 92
      %v915 = vpop.permute.xlu0 %914
      %916 = vrot.lane.b32.xlu0 %v359, 92
      %v917 = vpop.permute.xlu0 %916
      %918 = vrot.lane.b32.xlu0 %v366, 92
      %v919 = vpop.permute.xlu0 %918
      %920 = vrot.lane.b32.xlu0 %v373, 92
      %v921 = vpop.permute.xlu0 %920
      %922 = vrot.lane.b32.xlu0 %v380, 92
      %v923 = vpop.permute.xlu0 %922
      %924 = vrot.lane.b32.xlu0 %v387, 92
      %v925 = vpop.permute.xlu0 %924
      %926 = vrot.lane.b32.xlu0 %v394, 92
      %v927 = vpop.permute.xlu0 %926
      %944 = vrot.lane.b32.xlu0 %v289, 36
      %v945 = vpop.permute.xlu0 %944
      %946 = vrot.lane.b32.xlu0 %v296, 36
      %v947 = vpop.permute.xlu0 %946
      %948 = vrot.lane.b32.xlu0 %v303, 36
      %v949 = vpop.permute.xlu0 %948
      %950 = vrot.lane.b32.xlu0 %v310, 36
      %v951 = vpop.permute.xlu0 %950
      %952 = vrot.lane.b32.xlu0 %v317, 36
      %v953 = vpop.permute.xlu0 %952
      %954 = vrot.lane.b32.xlu0 %v324, 36
      %v955 = vpop.permute.xlu0 %954
      %956 = vrot.lane.b32.xlu0 %v331, 36
      %v957 = vpop.permute.xlu0 %956
      %958 = vrot.lane.b32.xlu0 %v338, 36
      %v959 = vpop.permute.xlu0 %958
      %960 = vrot.lane.b32.xlu0 %v345, 36
      %v961 = vpop.permute.xlu0 %960
      %962 = vrot.lane.b32.xlu0 %v352, 36
      %v963 = vpop.permute.xlu0 %962
      %964 = vrot.lane.b32.xlu0 %v359, 36
      %v965 = vpop.permute.xlu0 %964
      %966 = vrot.lane.b32.xlu0 %v366, 36
      %v967 = vpop.permute.xlu0 %966
      %968 = vrot.lane.b32.xlu0 %v373, 36
      %v969 = vpop.permute.xlu0 %968
      %970 = vrot.lane.b32.xlu0 %v380, 36
      %v971 = vpop.permute.xlu0 %970
      %972 = vrot.lane.b32.xlu0 %v387, 36
      %v973 = vpop.permute.xlu0 %972
      %974 = vrot.lane.b32.xlu0 %v394, 36
      %v975 = vpop.permute.xlu0 %974
      %1008 = vrot.lane.b32.xlu0 %v290, 108
      %v1009 = vpop.permute.xlu0 %1008
      %1010 = vrot.lane.b32.xlu0 %v297, 108
      %v1011 = vpop.permute.xlu0 %1010
      %1012 = vrot.lane.b32.xlu0 %v304, 108
      %v1013 = vpop.permute.xlu0 %1012
      %1014 = vrot.lane.b32.xlu0 %v311, 108
      %v1015 = vpop.permute.xlu0 %1014
      %1016 = vrot.lane.b32.xlu0 %v318, 108
      %v1017 = vpop.permute.xlu0 %1016
      %1018 = vrot.lane.b32.xlu0 %v325, 108
      %v1019 = vpop.permute.xlu0 %1018
      %1020 = vrot.lane.b32.xlu0 %v332, 108
      %v1021 = vpop.permute.xlu0 %1020
      %1022 = vrot.lane.b32.xlu0 %v339, 108
      %v1023 = vpop.permute.xlu0 %1022
      %1024 = vrot.lane.b32.xlu0 %v346, 108
      %v1025 = vpop.permute.xlu0 %1024
      %1026 = vrot.lane.b32.xlu0 %v353, 108
      %v1027 = vpop.permute.xlu0 %1026
      %1028 = vrot.lane.b32.xlu0 %v360, 108
      %v1029 = vpop.permute.xlu0 %1028
      %1030 = vrot.lane.b32.xlu0 %v367, 108
      %v1031 = vpop.permute.xlu0 %1030
      %1032 = vrot.lane.b32.xlu0 %v374, 108
      %v1033 = vpop.permute.xlu0 %1032
      %1034 = vrot.lane.b32.xlu0 %v381, 108
      %v1035 = vpop.permute.xlu0 %1034
      %1036 = vrot.lane.b32.xlu0 %v388, 108
      %v1037 = vpop.permute.xlu0 %1036
      %1038 = vrot.lane.b32.xlu0 %v395, 108
      %v1039 = vpop.permute.xlu0 %1038
      %1056 = vrot.lane.b32.xlu0 %v290, 52
      %v1057 = vpop.permute.xlu0 %1056
      %1058 = vrot.lane.b32.xlu0 %v297, 52
      %v1059 = vpop.permute.xlu0 %1058
      %1060 = vrot.lane.b32.xlu0 %v304, 52
      %v1061 = vpop.permute.xlu0 %1060
      %1062 = vrot.lane.b32.xlu0 %v311, 52
      %v1063 = vpop.permute.xlu0 %1062
      %1064 = vrot.lane.b32.xlu0 %v318, 52
      %v1065 = vpop.permute.xlu0 %1064
      %1066 = vrot.lane.b32.xlu0 %v325, 52
      %v1067 = vpop.permute.xlu0 %1066
      %1068 = vrot.lane.b32.xlu0 %v332, 52
      %v1069 = vpop.permute.xlu0 %1068
      %1070 = vrot.lane.b32.xlu0 %v339, 52
      %v1071 = vpop.permute.xlu0 %1070
      %1072 = vrot.lane.b32.xlu0 %v346, 52
      %v1073 = vpop.permute.xlu0 %1072
      %1074 = vrot.lane.b32.xlu0 %v353, 52
      %v1075 = vpop.permute.xlu0 %1074
      %1076 = vrot.lane.b32.xlu0 %v360, 52
      %v1077 = vpop.permute.xlu0 %1076
      %1078 = vrot.lane.b32.xlu0 %v367, 52
      %v1079 = vpop.permute.xlu0 %1078
      %1080 = vrot.lane.b32.xlu0 %v374, 52
      %v1081 = vpop.permute.xlu0 %1080
      %1082 = vrot.lane.b32.xlu0 %v381, 52
      %v1083 = vpop.permute.xlu0 %1082
      %1084 = vrot.lane.b32.xlu0 %v388, 52
      %v1085 = vpop.permute.xlu0 %1084
      %1086 = vrot.lane.b32.xlu0 %v395, 52
      %v1087 = vpop.permute.xlu0 %1086
      %1120 = vrot.lane.b32.xlu0 %v291, 124
      %v1121 = vpop.permute.xlu0 %1120
      %1122 = vrot.lane.b32.xlu0 %v298, 124
      %v1123 = vpop.permute.xlu0 %1122
      %1124 = vrot.lane.b32.xlu0 %v305, 124
      %v1125 = vpop.permute.xlu0 %1124
      %1126 = vrot.lane.b32.xlu0 %v312, 124
      %v1127 = vpop.permute.xlu0 %1126
      %1128 = vrot.lane.b32.xlu0 %v319, 124
      %v1129 = vpop.permute.xlu0 %1128
      %1130 = vrot.lane.b32.xlu0 %v326, 124
      %v1131 = vpop.permute.xlu0 %1130
      %1132 = vrot.lane.b32.xlu0 %v333, 124
      %v1133 = vpop.permute.xlu0 %1132
      %1134 = vrot.lane.b32.xlu0 %v340, 124
      %v1135 = vpop.permute.xlu0 %1134
      %1136 = vrot.lane.b32.xlu0 %v347, 124
      %v1137 = vpop.permute.xlu0 %1136
      %1138 = vrot.lane.b32.xlu0 %v354, 124
      %v1139 = vpop.permute.xlu0 %1138
      %1140 = vrot.lane.b32.xlu0 %v361, 124
      %v1141 = vpop.permute.xlu0 %1140
      %1142 = vrot.lane.b32.xlu0 %v368, 124
      %v1143 = vpop.permute.xlu0 %1142
      %1144 = vrot.lane.b32.xlu0 %v375, 124
      %v1145 = vpop.permute.xlu0 %1144
      %1146 = vrot.lane.b32.xlu0 %v382, 124
      %v1147 = vpop.permute.xlu0 %1146
      %1148 = vrot.lane.b32.xlu0 %v389, 124
      %v1149 = vpop.permute.xlu0 %1148
      %1150 = vrot.lane.b32.xlu0 %v396, 124
      %v1151 = vpop.permute.xlu0 %1150
      %1168 = vrot.lane.b32.xlu0 %v291, 68
      %v1169 = vpop.permute.xlu0 %1168
      %1170 = vrot.lane.b32.xlu0 %v298, 68
      %v1171 = vpop.permute.xlu0 %1170
      %1172 = vrot.lane.b32.xlu0 %v305, 68
      %v1173 = vpop.permute.xlu0 %1172
      %1174 = vrot.lane.b32.xlu0 %v312, 68
      %v1175 = vpop.permute.xlu0 %1174
      %1176 = vrot.lane.b32.xlu0 %v319, 68
      %v1177 = vpop.permute.xlu0 %1176
      %1178 = vrot.lane.b32.xlu0 %v326, 68
      %v1179 = vpop.permute.xlu0 %1178
      %1180 = vrot.lane.b32.xlu0 %v333, 68
      %v1181 = vpop.permute.xlu0 %1180
      %1182 = vrot.lane.b32.xlu0 %v340, 68
      %v1183 = vpop.permute.xlu0 %1182
      %1184 = vrot.lane.b32.xlu0 %v347, 68
      %v1185 = vpop.permute.xlu0 %1184
      %1186 = vrot.lane.b32.xlu0 %v354, 68
      %v1187 = vpop.permute.xlu0 %1186
      %1188 = vrot.lane.b32.xlu0 %v361, 68
      %v1189 = vpop.permute.xlu0 %1188
      %1190 = vrot.lane.b32.xlu0 %v368, 68
      %v1191 = vpop.permute.xlu0 %1190
      %1192 = vrot.lane.b32.xlu0 %v375, 68
      %v1193 = vpop.permute.xlu0 %1192
      %1194 = vrot.lane.b32.xlu0 %v382, 68
      %v1195 = vpop.permute.xlu0 %1194
      %1196 = vrot.lane.b32.xlu0 %v389, 68
      %v1197 = vpop.permute.xlu0 %1196
      %1198 = vrot.lane.b32.xlu0 %v396, 68
      %v1199 = vpop.permute.xlu0 %1198
      %v1216 = vpack.c.bf16 0.0, 0.0
      %v1217 = vpack.c.bf16 %v417, %v415
      %v1218 = vpack.c.bf16 %v421, %v419
      %v1219 = vpack.c.bf16 %v425, %v423
      %v1220 = vpack.c.bf16 %v429, %v427
      %v1221 = vpack.c.bf16 %v433, %v431
      %v1222 = vpack.c.bf16 %v437, %v435
      %v1223 = vpack.c.bf16 %v441, %v439
      %v1224 = vpack.c.bf16 %v445, %v443
      %v1225 = vpack.c.bf16 %v465, %v463
      %v1226 = vpack.c.bf16 %v469, %v467
      %v1227 = vpack.c.bf16 %v473, %v471
      %v1228 = vpack.c.bf16 %v477, %v475
      %v1229 = vpack.c.bf16 %v481, %v479
      %v1230 = vpack.c.bf16 %v485, %v483
      %v1231 = vpack.c.bf16 %v489, %v487
      %v1232 = vpack.c.bf16 %v493, %v491
      %v1233 = vpack.c.bf16 %v529, %v527
      %v1234 = vpack.c.bf16 %v533, %v531
      %v1235 = vpack.c.bf16 %v537, %v535
      %v1236 = vpack.c.bf16 %v541, %v539
      %v1237 = vpack.c.bf16 %v545, %v543
      %v1238 = vpack.c.bf16 %v549, %v547
      %v1239 = vpack.c.bf16 %v553, %v551
      %v1240 = vpack.c.bf16 %v557, %v555
      %v1241 = vpack.c.bf16 %v577, %v575
      %v1242 = vpack.c.bf16 %v581, %v579
      %v1243 = vpack.c.bf16 %v585, %v583
      %v1244 = vpack.c.bf16 %v589, %v587
      %v1245 = vpack.c.bf16 %v593, %v591
      %v1246 = vpack.c.bf16 %v597, %v595
      %v1247 = vpack.c.bf16 %v601, %v599
      %v1248 = vpack.c.bf16 %v605, %v603
      %v1249 = vpack.c.bf16 %v704, %v703
      %v1250 = vpack.c.bf16 %v706, %v705
      %v1251 = vpack.c.bf16 %v708, %v707
      %v1252 = vpack.c.bf16 %v710, %v709
      %v1253 = vpack.c.bf16 %v712, %v711
      %v1254 = vpack.c.bf16 %v714, %v713
      %v1255 = vpack.c.bf16 %v716, %v715
      %v1256 = vpack.c.bf16 %v718, %v717
      %v1257 = vpack.c.bf16 %v738, %v736
      %v1258 = vpack.c.bf16 %v742, %v740
      %v1259 = vpack.c.bf16 %v746, %v744
      %v1260 = vpack.c.bf16 %v750, %v748
      %v1261 = vpack.c.bf16 %v754, %v752
      %v1262 = vpack.c.bf16 %v758, %v756
      %v1263 = vpack.c.bf16 %v762, %v760
      %v1264 = vpack.c.bf16 %v766, %v764
      %v1265 = vpack.c.bf16 %v865, %v864
      %v1266 = vpack.c.bf16 %v867, %v866
      %v1267 = vpack.c.bf16 %v869, %v868
      %v1268 = vpack.c.bf16 %v871, %v870
      %v1269 = vpack.c.bf16 %v873, %v872
      %v1270 = vpack.c.bf16 %v875, %v874
      %v1271 = vpack.c.bf16 %v877, %v876
      %v1272 = vpack.c.bf16 %v879, %v878
      %v1273 = vpack.c.bf16 %v899, %v897
      %v1274 = vpack.c.bf16 %v903, %v901
      %v1275 = vpack.c.bf16 %v907, %v905
      %v1276 = vpack.c.bf16 %v911, %v909
      %v1277 = vpack.c.bf16 %v915, %v913
      %v1278 = vpack.c.bf16 %v919, %v917
      %v1279 = vpack.c.bf16 %v923, %v921
      %v1280 = vpack.c.bf16 %v927, %v925
      %v1281 = vpack.c.bf16 %v947, %v945
      %v1282 = vpack.c.bf16 %v951, %v949
      %v1283 = vpack.c.bf16 %v955, %v953
      %v1284 = vpack.c.bf16 %v959, %v957
      %v1285 = vpack.c.bf16 %v963, %v961
      %v1286 = vpack.c.bf16 %v967, %v965
      %v1287 = vpack.c.bf16 %v971, %v969
      %v1288 = vpack.c.bf16 %v975, %v973
      %v1289 = vpack.c.bf16 %v1011, %v1009
      %v1290 = vpack.c.bf16 %v1015, %v1013
      %v1291 = vpack.c.bf16 %v1019, %v1017
      %v1292 = vpack.c.bf16 %v1023, %v1021
      %v1293 = vpack.c.bf16 %v1027, %v1025
      %v1294 = vpack.c.bf16 %v1031, %v1029
      %v1295 = vpack.c.bf16 %v1035, %v1033
      %v1296 = vpack.c.bf16 %v1039, %v1037
      %v1297 = vpack.c.bf16 %v1059, %v1057
      %v1298 = vpack.c.bf16 %v1063, %v1061
      %v1299 = vpack.c.bf16 %v1067, %v1065
      %v1300 = vpack.c.bf16 %v1071, %v1069
      %v1301 = vpack.c.bf16 %v1075, %v1073
      %v1302 = vpack.c.bf16 %v1079, %v1077
      %v1303 = vpack.c.bf16 %v1083, %v1081
      %v1304 = vpack.c.bf16 %v1087, %v1085
      %v1305 = vpack.c.bf16 %v1123, %v1121
      %v1306 = vpack.c.bf16 %v1127, %v1125
      %v1307 = vpack.c.bf16 %v1131, %v1129
      %v1308 = vpack.c.bf16 %v1135, %v1133
      %v1309 = vpack.c.bf16 %v1139, %v1137
      %v1310 = vpack.c.bf16 %v1143, %v1141
      %v1311 = vpack.c.bf16 %v1147, %v1145
      %v1312 = vpack.c.bf16 %v1151, %v1149
      %v1313 = vpack.c.bf16 %v1171, %v1169
      %v1314 = vpack.c.bf16 %v1175, %v1173
      %v1315 = vpack.c.bf16 %v1179, %v1177
      %v1316 = vpack.c.bf16 %v1183, %v1181
      %v1317 = vpack.c.bf16 %v1187, %v1185
      %v1318 = vpack.c.bf16 %v1191, %v1189
      %v1319 = vpack.c.bf16 %v1195, %v1193
      %v1320 = vpack.c.bf16 %v1199, %v1197
      %v1321 = vld [vmem:[%s1] sm:$0xff]
      %v1322 = vld [vmem:[%s1 + $0x8] sm:$0xff]
      %v1323 = vld [vmem:[%s1 + $0x10] sm:$0xff]
      %v1324 = vld [vmem:[%s1 + $0x18] sm:$0x33]
      %1325 = vrot.lane.b32.xlu0 %v286, 72
      %v1326 = vpop.permute.xlu0 %1325
      %1327 = vrot.lane.b32.xlu0 %v293, 72
      %v1328 = vpop.permute.xlu0 %1327
      %1329 = vrot.lane.b32.xlu0 %v300, 72
      %v1330 = vpop.permute.xlu0 %1329
      %1331 = vrot.lane.b32.xlu0 %v307, 72
      %v1332 = vpop.permute.xlu0 %1331
      %1333 = vrot.lane.b32.xlu0 %v314, 72
      %v1334 = vpop.permute.xlu0 %1333
      %1335 = vrot.lane.b32.xlu0 %v321, 72
      %v1336 = vpop.permute.xlu0 %1335
      %1337 = vrot.lane.b32.xlu0 %v328, 72
      %v1338 = vpop.permute.xlu0 %1337
      %1339 = vrot.lane.b32.xlu0 %v335, 72
      %v1340 = vpop.permute.xlu0 %1339
      %1341 = vrot.lane.b32.xlu0 %v342, 72
      %v1342 = vpop.permute.xlu0 %1341
      %1343 = vrot.lane.b32.xlu0 %v349, 72
      %v1344 = vpop.permute.xlu0 %1343
      %1345 = vrot.lane.b32.xlu0 %v356, 72
      %v1346 = vpop.permute.xlu0 %1345
      %1347 = vrot.lane.b32.xlu0 %v363, 72
      %v1348 = vpop.permute.xlu0 %1347
      %1349 = vrot.lane.b32.xlu0 %v370, 72
      %v1350 = vpop.permute.xlu0 %1349
      %1351 = vrot.lane.b32.xlu0 %v377, 72
      %v1352 = vpop.permute.xlu0 %1351
      %1353 = vrot.lane.b32.xlu0 %v384, 72
      %v1354 = vpop.permute.xlu0 %1353
      %1355 = vrot.lane.b32.xlu0 %v391, 72
      %v1356 = vpop.permute.xlu0 %1355
      %1373 = vrot.lane.b32.xlu0 %v286, 16
      %v1374 = vpop.permute.xlu0 %1373
      %1375 = vrot.lane.b32.xlu0 %v287, 16
      %v1376 = vpop.permute.xlu0 %1375
      %1377 = vrot.lane.b32.xlu0 %v293, 16
      %v1378 = vpop.permute.xlu0 %1377
      %1379 = vrot.lane.b32.xlu0 %v294, 16
      %v1380 = vpop.permute.xlu0 %1379
      %1381 = vrot.lane.b32.xlu0 %v300, 16
      %v1382 = vpop.permute.xlu0 %1381
      %1383 = vrot.lane.b32.xlu0 %v301, 16
      %v1384 = vpop.permute.xlu0 %1383
      %1385 = vrot.lane.b32.xlu0 %v307, 16
      %v1386 = vpop.permute.xlu0 %1385
      %1387 = vrot.lane.b32.xlu0 %v308, 16
      %v1388 = vpop.permute.xlu0 %1387
      %1389 = vrot.lane.b32.xlu0 %v314, 16
      %v1390 = vpop.permute.xlu0 %1389
      %1391 = vrot.lane.b32.xlu0 %v315, 16
      %v1392 = vpop.permute.xlu0 %1391
      %1393 = vrot.lane.b32.xlu0 %v321, 16
      %v1394 = vpop.permute.xlu0 %1393
      %1395 = vrot.lane.b32.xlu0 %v322, 16
      %v1396 = vpop.permute.xlu0 %1395
      %1397 = vrot.lane.b32.xlu0 %v328, 16
      %v1398 = vpop.permute.xlu0 %1397
      %1399 = vrot.lane.b32.xlu0 %v329, 16
      %v1400 = vpop.permute.xlu0 %1399
      %1401 = vrot.lane.b32.xlu0 %v335, 16
      %v1402 = vpop.permute.xlu0 %1401
      %1403 = vrot.lane.b32.xlu0 %v336, 16
      %v1404 = vpop.permute.xlu0 %1403
      %1405 = vrot.lane.b32.xlu0 %v342, 16
      %v1406 = vpop.permute.xlu0 %1405
      %1407 = vrot.lane.b32.xlu0 %v343, 16
      %v1408 = vpop.permute.xlu0 %1407
      %1409 = vrot.lane.b32.xlu0 %v349, 16
      %v1410 = vpop.permute.xlu0 %1409
      %1411 = vrot.lane.b32.xlu0 %v350, 16
      %v1412 = vpop.permute.xlu0 %1411
      %1413 = vrot.lane.b32.xlu0 %v356, 16
      %v1414 = vpop.permute.xlu0 %1413
      %1415 = vrot.lane.b32.xlu0 %v357, 16
      %v1416 = vpop.permute.xlu0 %1415
      %1417 = vrot.lane.b32.xlu0 %v363, 16
      %v1418 = vpop.permute.xlu0 %1417
      %1419 = vrot.lane.b32.xlu0 %v364, 16
      %v1420 = vpop.permute.xlu0 %1419
      %1421 = vrot.lane.b32.xlu0 %v370, 16
      %v1422 = vpop.permute.xlu0 %1421
      %1423 = vrot.lane.b32.xlu0 %v371, 16
      %v1424 = vpop.permute.xlu0 %1423
      %1425 = vrot.lane.b32.xlu0 %v377, 16
      %v1426 = vpop.permute.xlu0 %1425
      %1427 = vrot.lane.b32.xlu0 %v378, 16
      %v1428 = vpop.permute.xlu0 %1427
      %1429 = vrot.lane.b32.xlu0 %v384, 16
      %v1430 = vpop.permute.xlu0 %1429
      %1431 = vrot.lane.b32.xlu0 %v385, 16
      %v1432 = vpop.permute.xlu0 %1431
      %1433 = vrot.lane.b32.xlu0 %v391, 16
      %v1434 = vpop.permute.xlu0 %1433
      %1435 = vrot.lane.b32.xlu0 %v392, 16
      %v1436 = vpop.permute.xlu0 %1435
      %vm1437 = vcmask 130048
      %v1438 = vsel %vm1437, %v1374, %v1376
      %v1439 = vsel %vm1437, %v1378, %v1380
      %v1440 = vsel %vm1437, %v1382, %v1384
      %v1441 = vsel %vm1437, %v1386, %v1388
      %v1442 = vsel %vm1437, %v1390, %v1392
      %v1443 = vsel %vm1437, %v1394, %v1396
      %v1444 = vsel %vm1437, %v1398, %v1400
      %v1445 = vsel %vm1437, %v1402, %v1404
      %v1446 = vsel %vm1437, %v1406, %v1408
      %v1447 = vsel %vm1437, %v1410, %v1412
      %v1448 = vsel %vm1437, %v1414, %v1416
      %v1449 = vsel %vm1437, %v1418, %v1420
      %v1450 = vsel %vm1437, %v1422, %v1424
      %v1451 = vsel %vm1437, %v1426, %v1428
      %v1452 = vsel %vm1437, %v1430, %v1432
      %v1453 = vsel %vm1437, %v1434, %v1436
      %1470 = vrot.lane.b32.xlu0 %v287, 88
      %v1471 = vpop.permute.xlu0 %1470
      %1472 = vrot.lane.b32.xlu0 %v294, 88
      %v1473 = vpop.permute.xlu0 %1472
      %1474 = vrot.lane.b32.xlu0 %v301, 88
      %v1475 = vpop.permute.xlu0 %1474
      %1476 = vrot.lane.b32.xlu0 %v308, 88
      %v1477 = vpop.permute.xlu0 %1476
      %1478 = vrot.lane.b32.xlu0 %v315, 88
      %v1479 = vpop.permute.xlu0 %1478
      %1480 = vrot.lane.b32.xlu0 %v322, 88
      %v1481 = vpop.permute.xlu0 %1480
      %1482 = vrot.lane.b32.xlu0 %v329, 88
      %v1483 = vpop.permute.xlu0 %1482
      %1484 = vrot.lane.b32.xlu0 %v336, 88
      %v1485 = vpop.permute.xlu0 %1484
      %1486 = vrot.lane.b32.xlu0 %v343, 88
      %v1487 = vpop.permute.xlu0 %1486
      %1488 = vrot.lane.b32.xlu0 %v350, 88
      %v1489 = vpop.permute.xlu0 %1488
      %1490 = vrot.lane.b32.xlu0 %v357, 88
      %v1491 = vpop.permute.xlu0 %1490
      %1492 = vrot.lane.b32.xlu0 %v364, 88
      %v1493 = vpop.permute.xlu0 %1492
      %1494 = vrot.lane.b32.xlu0 %v371, 88
      %v1495 = vpop.permute.xlu0 %1494
      %1496 = vrot.lane.b32.xlu0 %v378, 88
      %v1497 = vpop.permute.xlu0 %1496
      %1498 = vrot.lane.b32.xlu0 %v385, 88
      %v1499 = vpop.permute.xlu0 %1498
      %1500 = vrot.lane.b32.xlu0 %v392, 88
      %v1501 = vpop.permute.xlu0 %1500
      %1518 = vrot.lane.b32.xlu0 %v287, 32
      %v1519 = vpop.permute.xlu0 %1518
      %1520 = vrot.lane.b32.xlu0 %v294, 32
      %v1521 = vpop.permute.xlu0 %1520
      %1522 = vrot.lane.b32.xlu0 %v301, 32
      %v1523 = vpop.permute.xlu0 %1522
      %1524 = vrot.lane.b32.xlu0 %v308, 32
      %v1525 = vpop.permute.xlu0 %1524
      %1526 = vrot.lane.b32.xlu0 %v315, 32
      %v1527 = vpop.permute.xlu0 %1526
      %1528 = vrot.lane.b32.xlu0 %v322, 32
      %v1529 = vpop.permute.xlu0 %1528
      %1530 = vrot.lane.b32.xlu0 %v329, 32
      %v1531 = vpop.permute.xlu0 %1530
      %1532 = vrot.lane.b32.xlu0 %v336, 32
      %v1533 = vpop.permute.xlu0 %1532
      %1534 = vrot.lane.b32.xlu0 %v343, 32
      %v1535 = vpop.permute.xlu0 %1534
      %1536 = vrot.lane.b32.xlu0 %v350, 32
      %v1537 = vpop.permute.xlu0 %1536
      %1538 = vrot.lane.b32.xlu0 %v357, 32
      %v1539 = vpop.permute.xlu0 %1538
      %1540 = vrot.lane.b32.xlu0 %v364, 32
      %v1541 = vpop.permute.xlu0 %1540
      %1542 = vrot.lane.b32.xlu0 %v371, 32
      %v1543 = vpop.permute.xlu0 %1542
      %1544 = vrot.lane.b32.xlu0 %v378, 32
      %v1545 = vpop.permute.xlu0 %1544
      %1546 = vrot.lane.b32.xlu0 %v385, 32
      %v1547 = vpop.permute.xlu0 %1546
      %1548 = vrot.lane.b32.xlu0 %v392, 32
      %v1549 = vpop.permute.xlu0 %1548
      %1566 = vrot.lane.b32.xlu0 %v288, 104
      %v1567 = vpop.permute.xlu0 %1566
      %1568 = vrot.lane.b32.xlu0 %v295, 104
      %v1569 = vpop.permute.xlu0 %1568
      %1570 = vrot.lane.b32.xlu0 %v302, 104
      %v1571 = vpop.permute.xlu0 %1570
      %1572 = vrot.lane.b32.xlu0 %v309, 104
      %v1573 = vpop.permute.xlu0 %1572
      %1574 = vrot.lane.b32.xlu0 %v316, 104
      %v1575 = vpop.permute.xlu0 %1574
      %1576 = vrot.lane.b32.xlu0 %v323, 104
      %v1577 = vpop.permute.xlu0 %1576
      %1578 = vrot.lane.b32.xlu0 %v330, 104
      %v1579 = vpop.permute.xlu0 %1578
      %1580 = vrot.lane.b32.xlu0 %v337, 104
      %v1581 = vpop.permute.xlu0 %1580
      %1582 = vrot.lane.b32.xlu0 %v344, 104
      %v1583 = vpop.permute.xlu0 %1582
      %1584 = vrot.lane.b32.xlu0 %v351, 104
      %v1585 = vpop.permute.xlu0 %1584
      %1586 = vrot.lane.b32.xlu0 %v358, 104
      %v1587 = vpop.permute.xlu0 %1586
      %1588 = vrot.lane.b32.xlu0 %v365, 104
      %v1589 = vpop.permute.xlu0 %1588
      %1590 = vrot.lane.b32.xlu0 %v372, 104
      %v1591 = vpop.permute.xlu0 %1590
      %1592 = vrot.lane.b32.xlu0 %v379, 104
      %v1593 = vpop.permute.xlu0 %1592
      %1594 = vrot.lane.b32.xlu0 %v386, 104
      %v1595 = vpop.permute.xlu0 %1594
      %1596 = vrot.lane.b32.xlu0 %v393, 104
      %v1597 = vpop.permute.xlu0 %1596
      %1614 = vrot.lane.b32.xlu0 %v288, 48
      %v1615 = vpop.permute.xlu0 %1614
      %1616 = vrot.lane.b32.xlu0 %v295, 48
      %v1617 = vpop.permute.xlu0 %1616
      %1618 = vrot.lane.b32.xlu0 %v302, 48
      %v1619 = vpop.permute.xlu0 %1618
      %1620 = vrot.lane.b32.xlu0 %v309, 48
      %v1621 = vpop.permute.xlu0 %1620
      %1622 = vrot.lane.b32.xlu0 %v316, 48
      %v1623 = vpop.permute.xlu0 %1622
      %1624 = vrot.lane.b32.xlu0 %v323, 48
      %v1625 = vpop.permute.xlu0 %1624
      %1626 = vrot.lane.b32.xlu0 %v330, 48
      %v1627 = vpop.permute.xlu0 %1626
      %1628 = vrot.lane.b32.xlu0 %v337, 48
      %v1629 = vpop.permute.xlu0 %1628
      %1630 = vrot.lane.b32.xlu0 %v344, 48
      %v1631 = vpop.permute.xlu0 %1630
      %1632 = vrot.lane.b32.xlu0 %v351, 48
      %v1633 = vpop.permute.xlu0 %1632
      %1634 = vrot.lane.b32.xlu0 %v358, 48
      %v1635 = vpop.permute.xlu0 %1634
      %1636 = vrot.lane.b32.xlu0 %v365, 48
      %v1637 = vpop.permute.xlu0 %1636
      %1638 = vrot.lane.b32.xlu0 %v372, 48
      %v1639 = vpop.permute.xlu0 %1638
      %1640 = vrot.lane.b32.xlu0 %v379, 48
      %v1641 = vpop.permute.xlu0 %1640
      %1642 = vrot.lane.b32.xlu0 %v386, 48
      %v1643 = vpop.permute.xlu0 %1642
      %1644 = vrot.lane.b32.xlu0 %v393, 48
      %v1645 = vpop.permute.xlu0 %1644
      %1662 = vrot.lane.b32.xlu0 %v289, 120
      %v1663 = vpop.permute.xlu0 %1662
      %1664 = vrot.lane.b32.xlu0 %v296, 120
      %v1665 = vpop.permute.xlu0 %1664
      %1666 = vrot.lane.b32.xlu0 %v303, 120
      %v1667 = vpop.permute.xlu0 %1666
      %1668 = vrot.lane.b32.xlu0 %v310, 120
      %v1669 = vpop.permute.xlu0 %1668
      %1670 = vrot.lane.b32.xlu0 %v317, 120
      %v1671 = vpop.permute.xlu0 %1670
      %1672 = vrot.lane.b32.xlu0 %v324, 120
      %v1673 = vpop.permute.xlu0 %1672
      %1674 = vrot.lane.b32.xlu0 %v331, 120
      %v1675 = vpop.permute.xlu0 %1674
      %1676 = vrot.lane.b32.xlu0 %v338, 120
      %v1677 = vpop.permute.xlu0 %1676
      %1678 = vrot.lane.b32.xlu0 %v345, 120
      %v1679 = vpop.permute.xlu0 %1678
      %1680 = vrot.lane.b32.xlu0 %v352, 120
      %v1681 = vpop.permute.xlu0 %1680
      %1682 = vrot.lane.b32.xlu0 %v359, 120
      %v1683 = vpop.permute.xlu0 %1682
      %1684 = vrot.lane.b32.xlu0 %v366, 120
      %v1685 = vpop.permute.xlu0 %1684
      %1686 = vrot.lane.b32.xlu0 %v373, 120
      %v1687 = vpop.permute.xlu0 %1686
      %1688 = vrot.lane.b32.xlu0 %v380, 120
      %v1689 = vpop.permute.xlu0 %1688
      %1690 = vrot.lane.b32.xlu0 %v387, 120
      %v1691 = vpop.permute.xlu0 %1690
      %1692 = vrot.lane.b32.xlu0 %v394, 120
      %v1693 = vpop.permute.xlu0 %1692
      %1710 = vrot.lane.b32.xlu0 %v289, 64
      %v1711 = vpop.permute.xlu0 %1710
      %1712 = vrot.lane.b32.xlu0 %v296, 64
      %v1713 = vpop.permute.xlu0 %1712
      %1714 = vrot.lane.b32.xlu0 %v303, 64
      %v1715 = vpop.permute.xlu0 %1714
      %1716 = vrot.lane.b32.xlu0 %v310, 64
      %v1717 = vpop.permute.xlu0 %1716
      %1718 = vrot.lane.b32.xlu0 %v317, 64
      %v1719 = vpop.permute.xlu0 %1718
      %1720 = vrot.lane.b32.xlu0 %v324, 64
      %v1721 = vpop.permute.xlu0 %1720
      %1722 = vrot.lane.b32.xlu0 %v331, 64
      %v1723 = vpop.permute.xlu0 %1722
      %1724 = vrot.lane.b32.xlu0 %v338, 64
      %v1725 = vpop.permute.xlu0 %1724
      %1726 = vrot.lane.b32.xlu0 %v345, 64
      %v1727 = vpop.permute.xlu0 %1726
      %1728 = vrot.lane.b32.xlu0 %v352, 64
      %v1729 = vpop.permute.xlu0 %1728
      %1730 = vrot.lane.b32.xlu0 %v359, 64
      %v1731 = vpop.permute.xlu0 %1730
      %1732 = vrot.lane.b32.xlu0 %v366, 64
      %v1733 = vpop.permute.xlu0 %1732
      %1734 = vrot.lane.b32.xlu0 %v373, 64
      %v1735 = vpop.permute.xlu0 %1734
      %1736 = vrot.lane.b32.xlu0 %v380, 64
      %v1737 = vpop.permute.xlu0 %1736
      %1738 = vrot.lane.b32.xlu0 %v387, 64
      %v1739 = vpop.permute.xlu0 %1738
      %1740 = vrot.lane.b32.xlu0 %v394, 64
      %v1741 = vpop.permute.xlu0 %1740
      %1758 = vrot.lane.b32.xlu0 %v289, 8
      %v1759 = vpop.permute.xlu0 %1758
      %1760 = vrot.lane.b32.xlu0 %v290, 8
      %v1761 = vpop.permute.xlu0 %1760
      %1762 = vrot.lane.b32.xlu0 %v296, 8
      %v1763 = vpop.permute.xlu0 %1762
      %1764 = vrot.lane.b32.xlu0 %v297, 8
      %v1765 = vpop.permute.xlu0 %1764
      %1766 = vrot.lane.b32.xlu0 %v303, 8
      %v1767 = vpop.permute.xlu0 %1766
      %1768 = vrot.lane.b32.xlu0 %v304, 8
      %v1769 = vpop.permute.xlu0 %1768
      %1770 = vrot.lane.b32.xlu0 %v310, 8
      %v1771 = vpop.permute.xlu0 %1770
      %1772 = vrot.lane.b32.xlu0 %v311, 8
      %v1773 = vpop.permute.xlu0 %1772
      %1774 = vrot.lane.b32.xlu0 %v317, 8
      %v1775 = vpop.permute.xlu0 %1774
      %1776 = vrot.lane.b32.xlu0 %v318, 8
      %v1777 = vpop.permute.xlu0 %1776
      %1778 = vrot.lane.b32.xlu0 %v324, 8
      %v1779 = vpop.permute.xlu0 %1778
      %1780 = vrot.lane.b32.xlu0 %v325, 8
      %v1781 = vpop.permute.xlu0 %1780
      %1782 = vrot.lane.b32.xlu0 %v331, 8
      %v1783 = vpop.permute.xlu0 %1782
      %1784 = vrot.lane.b32.xlu0 %v332, 8
      %v1785 = vpop.permute.xlu0 %1784
      %1786 = vrot.lane.b32.xlu0 %v338, 8
      %v1787 = vpop.permute.xlu0 %1786
      %1788 = vrot.lane.b32.xlu0 %v339, 8
      %v1789 = vpop.permute.xlu0 %1788
      %1790 = vrot.lane.b32.xlu0 %v345, 8
      %v1791 = vpop.permute.xlu0 %1790
      %1792 = vrot.lane.b32.xlu0 %v346, 8
      %v1793 = vpop.permute.xlu0 %1792
      %1794 = vrot.lane.b32.xlu0 %v352, 8
      %v1795 = vpop.permute.xlu0 %1794
      %1796 = vrot.lane.b32.xlu0 %v353, 8
      %v1797 = vpop.permute.xlu0 %1796
      %1798 = vrot.lane.b32.xlu0 %v359, 8
      %v1799 = vpop.permute.xlu0 %1798
      %1800 = vrot.lane.b32.xlu0 %v360, 8
      %v1801 = vpop.permute.xlu0 %1800
      %1802 = vrot.lane.b32.xlu0 %v366, 8
      %v1803 = vpop.permute.xlu0 %1802
      %1804 = vrot.lane.b32.xlu0 %v367, 8
      %v1805 = vpop.permute.xlu0 %1804
      %1806 = vrot.lane.b32.xlu0 %v373, 8
      %v1807 = vpop.permute.xlu0 %1806
      %1808 = vrot.lane.b32.xlu0 %v374, 8
      %v1809 = vpop.permute.xlu0 %1808
      %1810 = vrot.lane.b32.xlu0 %v380, 8
      %v1811 = vpop.permute.xlu0 %1810
      %1812 = vrot.lane.b32.xlu0 %v381, 8
      %v1813 = vpop.permute.xlu0 %1812
      %1814 = vrot.lane.b32.xlu0 %v387, 8
      %v1815 = vpop.permute.xlu0 %1814
      %1816 = vrot.lane.b32.xlu0 %v388, 8
      %v1817 = vpop.permute.xlu0 %1816
      %1818 = vrot.lane.b32.xlu0 %v394, 8
      %v1819 = vpop.permute.xlu0 %1818
      %1820 = vrot.lane.b32.xlu0 %v395, 8
      %v1821 = vpop.permute.xlu0 %1820
      %vm1822 = vcmask 64512
      %v1823 = vsel %vm1822, %v1759, %v1761
      %v1824 = vsel %vm1822, %v1763, %v1765
      %v1825 = vsel %vm1822, %v1767, %v1769
      %v1826 = vsel %vm1822, %v1771, %v1773
      %v1827 = vsel %vm1822, %v1775, %v1777
      %v1828 = vsel %vm1822, %v1779, %v1781
      %v1829 = vsel %vm1822, %v1783, %v1785
      %v1830 = vsel %vm1822, %v1787, %v1789
      %v1831 = vsel %vm1822, %v1791, %v1793
      %v1832 = vsel %vm1822, %v1795, %v1797
      %v1833 = vsel %vm1822, %v1799, %v1801
      %v1834 = vsel %vm1822, %v1803, %v1805
      %v1835 = vsel %vm1822, %v1807, %v1809
      %v1836 = vsel %vm1822, %v1811, %v1813
      %v1837 = vsel %vm1822, %v1815, %v1817
      %v1838 = vsel %vm1822, %v1819, %v1821
      %1855 = vrot.lane.b32.xlu0 %v290, 80
      %v1856 = vpop.permute.xlu0 %1855
      %1857 = vrot.lane.b32.xlu0 %v297, 80
      %v1858 = vpop.permute.xlu0 %1857
      %1859 = vrot.lane.b32.xlu0 %v304, 80
      %v1860 = vpop.permute.xlu0 %1859
      %1861 = vrot.lane.b32.xlu0 %v311, 80
      %v1862 = vpop.permute.xlu0 %1861
      %1863 = vrot.lane.b32.xlu0 %v318, 80
      %v1864 = vpop.permute.xlu0 %1863
      %1865 = vrot.lane.b32.xlu0 %v325, 80
      %v1866 = vpop.permute.xlu0 %1865
      %1867 = vrot.lane.b32.xlu0 %v332, 80
      %v1868 = vpop.permute.xlu0 %1867
      %1869 = vrot.lane.b32.xlu0 %v339, 80
      %v1870 = vpop.permute.xlu0 %1869
      %1871 = vrot.lane.b32.xlu0 %v346, 80
      %v1872 = vpop.permute.xlu0 %1871
      %1873 = vrot.lane.b32.xlu0 %v353, 80
      %v1874 = vpop.permute.xlu0 %1873
      %1875 = vrot.lane.b32.xlu0 %v360, 80
      %v1876 = vpop.permute.xlu0 %1875
      %1877 = vrot.lane.b32.xlu0 %v367, 80
      %v1878 = vpop.permute.xlu0 %1877
      %1879 = vrot.lane.b32.xlu0 %v374, 80
      %v1880 = vpop.permute.xlu0 %1879
      %1881 = vrot.lane.b32.xlu0 %v381, 80
      %v1882 = vpop.permute.xlu0 %1881
      %1883 = vrot.lane.b32.xlu0 %v388, 80
      %v1884 = vpop.permute.xlu0 %1883
      %1885 = vrot.lane.b32.xlu0 %v395, 80
      %v1886 = vpop.permute.xlu0 %1885
      %1903 = vrot.lane.b32.xlu0 %v290, 24
      %v1904 = vpop.permute.xlu0 %1903
      %1905 = vrot.lane.b32.xlu0 %v291, 24
      %v1906 = vpop.permute.xlu0 %1905
      %1907 = vrot.lane.b32.xlu0 %v297, 24
      %v1908 = vpop.permute.xlu0 %1907
      %1909 = vrot.lane.b32.xlu0 %v298, 24
      %v1910 = vpop.permute.xlu0 %1909
      %1911 = vrot.lane.b32.xlu0 %v304, 24
      %v1912 = vpop.permute.xlu0 %1911
      %1913 = vrot.lane.b32.xlu0 %v305, 24
      %v1914 = vpop.permute.xlu0 %1913
      %1915 = vrot.lane.b32.xlu0 %v311, 24
      %v1916 = vpop.permute.xlu0 %1915
      %1917 = vrot.lane.b32.xlu0 %v312, 24
      %v1918 = vpop.permute.xlu0 %1917
      %1919 = vrot.lane.b32.xlu0 %v318, 24
      %v1920 = vpop.permute.xlu0 %1919
      %1921 = vrot.lane.b32.xlu0 %v319, 24
      %v1922 = vpop.permute.xlu0 %1921
      %1923 = vrot.lane.b32.xlu0 %v325, 24
      %v1924 = vpop.permute.xlu0 %1923
      %1925 = vrot.lane.b32.xlu0 %v326, 24
      %v1926 = vpop.permute.xlu0 %1925
      %1927 = vrot.lane.b32.xlu0 %v332, 24
      %v1928 = vpop.permute.xlu0 %1927
      %1929 = vrot.lane.b32.xlu0 %v333, 24
      %v1930 = vpop.permute.xlu0 %1929
      %1931 = vrot.lane.b32.xlu0 %v339, 24
      %v1932 = vpop.permute.xlu0 %1931
      %1933 = vrot.lane.b32.xlu0 %v340, 24
      %v1934 = vpop.permute.xlu0 %1933
      %1935 = vrot.lane.b32.xlu0 %v346, 24
      %v1936 = vpop.permute.xlu0 %1935
      %1937 = vrot.lane.b32.xlu0 %v347, 24
      %v1938 = vpop.permute.xlu0 %1937
      %1939 = vrot.lane.b32.xlu0 %v353, 24
      %v1940 = vpop.permute.xlu0 %1939
      %1941 = vrot.lane.b32.xlu0 %v354, 24
      %v1942 = vpop.permute.xlu0 %1941
      %1943 = vrot.lane.b32.xlu0 %v360, 24
      %v1944 = vpop.permute.xlu0 %1943
      %1945 = vrot.lane.b32.xlu0 %v361, 24
      %v1946 = vpop.permute.xlu0 %1945
      %1947 = vrot.lane.b32.xlu0 %v367, 24
      %v1948 = vpop.permute.xlu0 %1947
      %1949 = vrot.lane.b32.xlu0 %v368, 24
      %v1950 = vpop.permute.xlu0 %1949
      %1951 = vrot.lane.b32.xlu0 %v374, 24
      %v1952 = vpop.permute.xlu0 %1951
      %1953 = vrot.lane.b32.xlu0 %v375, 24
      %v1954 = vpop.permute.xlu0 %1953
      %1955 = vrot.lane.b32.xlu0 %v381, 24
      %v1956 = vpop.permute.xlu0 %1955
      %1957 = vrot.lane.b32.xlu0 %v382, 24
      %v1958 = vpop.permute.xlu0 %1957
      %1959 = vrot.lane.b32.xlu0 %v388, 24
      %v1960 = vpop.permute.xlu0 %1959
      %1961 = vrot.lane.b32.xlu0 %v389, 24
      %v1962 = vpop.permute.xlu0 %1961
      %1963 = vrot.lane.b32.xlu0 %v395, 24
      %v1964 = vpop.permute.xlu0 %1963
      %1965 = vrot.lane.b32.xlu0 %v396, 24
      %v1966 = vpop.permute.xlu0 %1965
      %vm1967 = vcmask 195584
      %v1968 = vsel %vm1967, %v1904, %v1906
      %v1969 = vsel %vm1967, %v1908, %v1910
      %v1970 = vsel %vm1967, %v1912, %v1914
      %v1971 = vsel %vm1967, %v1916, %v1918
      %v1972 = vsel %vm1967, %v1920, %v1922
      %v1973 = vsel %vm1967, %v1924, %v1926
      %v1974 = vsel %vm1967, %v1928, %v1930
      %v1975 = vsel %vm1967, %v1932, %v1934
      %v1976 = vsel %vm1967, %v1936, %v1938
      %v1977 = vsel %vm1967, %v1940, %v1942
      %v1978 = vsel %vm1967, %v1944, %v1946
      %v1979 = vsel %vm1967, %v1948, %v1950
      %v1980 = vsel %vm1967, %v1952, %v1954
      %v1981 = vsel %vm1967, %v1956, %v1958
      %v1982 = vsel %vm1967, %v1960, %v1962
      %v1983 = vsel %vm1967, %v1964, %v1966
      %2000 = vrot.lane.b32.xlu0 %v291, 96
      %v2001 = vpop.permute.xlu0 %2000
      %2002 = vrot.lane.b32.xlu0 %v298, 96
      %v2003 = vpop.permute.xlu0 %2002
      %2004 = vrot.lane.b32.xlu0 %v305, 96
      %v2005 = vpop.permute.xlu0 %2004
      %2006 = vrot.lane.b32.xlu0 %v312, 96
      %v2007 = vpop.permute.xlu0 %2006
      %2008 = vrot.lane.b32.xlu0 %v319, 96
      %v2009 = vpop.permute.xlu0 %2008
      %2010 = vrot.lane.b32.xlu0 %v326, 96
      %v2011 = vpop.permute.xlu0 %2010
      %2012 = vrot.lane.b32.xlu0 %v333, 96
      %v2013 = vpop.permute.xlu0 %2012
      %2014 = vrot.lane.b32.xlu0 %v340, 96
      %v2015 = vpop.permute.xlu0 %2014
      %2016 = vrot.lane.b32.xlu0 %v347, 96
      %v2017 = vpop.permute.xlu0 %2016
      %2018 = vrot.lane.b32.xlu0 %v354, 96
      %v2019 = vpop.permute.xlu0 %2018
      %2020 = vrot.lane.b32.xlu0 %v361, 96
      %v2021 = vpop.permute.xlu0 %2020
      %2022 = vrot.lane.b32.xlu0 %v368, 96
      %v2023 = vpop.permute.xlu0 %2022
      %2024 = vrot.lane.b32.xlu0 %v375, 96
      %v2025 = vpop.permute.xlu0 %2024
      %2026 = vrot.lane.b32.xlu0 %v382, 96
      %v2027 = vpop.permute.xlu0 %2026
      %2028 = vrot.lane.b32.xlu0 %v389, 96
      %v2029 = vpop.permute.xlu0 %2028
      %2030 = vrot.lane.b32.xlu0 %v396, 96
      %v2031 = vpop.permute.xlu0 %2030
      %2048 = vrot.lane.b32.xlu0 %v291, 40
      %v2049 = vpop.permute.xlu0 %2048
      %2050 = vrot.lane.b32.xlu0 %v298, 40
      %v2051 = vpop.permute.xlu0 %2050
      %2052 = vrot.lane.b32.xlu0 %v305, 40
      %v2053 = vpop.permute.xlu0 %2052
      %2054 = vrot.lane.b32.xlu0 %v312, 40
      %v2055 = vpop.permute.xlu0 %2054
      %2056 = vrot.lane.b32.xlu0 %v319, 40
      %v2057 = vpop.permute.xlu0 %2056
      %2058 = vrot.lane.b32.xlu0 %v326, 40
      %v2059 = vpop.permute.xlu0 %2058
      %2060 = vrot.lane.b32.xlu0 %v333, 40
      %v2061 = vpop.permute.xlu0 %2060
      %2062 = vrot.lane.b32.xlu0 %v340, 40
      %v2063 = vpop.permute.xlu0 %2062
      %2064 = vrot.lane.b32.xlu0 %v347, 40
      %v2065 = vpop.permute.xlu0 %2064
      %2066 = vrot.lane.b32.xlu0 %v354, 40
      %v2067 = vpop.permute.xlu0 %2066
      %2068 = vrot.lane.b32.xlu0 %v361, 40
      %v2069 = vpop.permute.xlu0 %2068
      %2070 = vrot.lane.b32.xlu0 %v368, 40
      %v2071 = vpop.permute.xlu0 %2070
      %2072 = vrot.lane.b32.xlu0 %v375, 40
      %v2073 = vpop.permute.xlu0 %2072
      %2074 = vrot.lane.b32.xlu0 %v382, 40
      %v2075 = vpop.permute.xlu0 %2074
      %2076 = vrot.lane.b32.xlu0 %v389, 40
      %v2077 = vpop.permute.xlu0 %2076
      %2078 = vrot.lane.b32.xlu0 %v396, 40
      %v2079 = vpop.permute.xlu0 %2078
      %v2096 = vpack.c.bf16 %v293, %v286
      %v2097 = vpack.c.bf16 %v307, %v300
      %v2098 = vpack.c.bf16 %v321, %v314
      %v2099 = vpack.c.bf16 %v335, %v328
      %v2100 = vpack.c.bf16 %v349, %v342
      %v2101 = vpack.c.bf16 %v363, %v356
      %v2102 = vpack.c.bf16 %v377, %v370
      %v2103 = vpack.c.bf16 %v391, %v384
      %v2104 = vpack.c.bf16 %v1328, %v1326
      %v2105 = vpack.c.bf16 %v1332, %v1330
      %v2106 = vpack.c.bf16 %v1336, %v1334
      %v2107 = vpack.c.bf16 %v1340, %v1338
      %v2108 = vpack.c.bf16 %v1344, %v1342
      %v2109 = vpack.c.bf16 %v1348, %v1346
      %v2110 = vpack.c.bf16 %v1352, %v1350
      %v2111 = vpack.c.bf16 %v1356, %v1354
      %v2112 = vpack.c.bf16 %v1439, %v1438
      %v2113 = vpack.c.bf16 %v1441, %v1440
      %v2114 = vpack.c.bf16 %v1443, %v1442
      %v2115 = vpack.c.bf16 %v1445, %v1444
      %v2116 = vpack.c.bf16 %v1447, %v1446
      %v2117 = vpack.c.bf16 %v1449, %v1448
      %v2118 = vpack.c.bf16 %v1451, %v1450
      %v2119 = vpack.c.bf16 %v1453, %v1452
      %v2120 = vpack.c.bf16 %v1473, %v1471
      %v2121 = vpack.c.bf16 %v1477, %v1475
      %v2122 = vpack.c.bf16 %v1481, %v1479
      %v2123 = vpack.c.bf16 %v1485, %v1483
      %v2124 = vpack.c.bf16 %v1489, %v1487
      %v2125 = vpack.c.bf16 %v1493, %v1491
      %v2126 = vpack.c.bf16 %v1497, %v1495
      %v2127 = vpack.c.bf16 %v1501, %v1499
      %v2128 = vpack.c.bf16 %v1521, %v1519
      %v2129 = vpack.c.bf16 %v1525, %v1523
      %v2130 = vpack.c.bf16 %v1529, %v1527
      %v2131 = vpack.c.bf16 %v1533, %v1531
      %v2132 = vpack.c.bf16 %v1537, %v1535
      %v2133 = vpack.c.bf16 %v1541, %v1539
      %v2134 = vpack.c.bf16 %v1545, %v1543
      %v2135 = vpack.c.bf16 %v1549, %v1547
      %v2136 = vpack.c.bf16 %v1569, %v1567
      %v2137 = vpack.c.bf16 %v1573, %v1571
      %v2138 = vpack.c.bf16 %v1577, %v1575
      %v2139 = vpack.c.bf16 %v1581, %v1579
      %v2140 = vpack.c.bf16 %v1585, %v1583
      %v2141 = vpack.c.bf16 %v1589, %v1587
      %v2142 = vpack.c.bf16 %v1593, %v1591
      %v2143 = vpack.c.bf16 %v1597, %v1595
      %v2144 = vpack.c.bf16 %v1617, %v1615
      %v2145 = vpack.c.bf16 %v1621, %v1619
      %v2146 = vpack.c.bf16 %v1625, %v1623
      %v2147 = vpack.c.bf16 %v1629, %v1627
      %v2148 = vpack.c.bf16 %v1633, %v1631
      %v2149 = vpack.c.bf16 %v1637, %v1635
      %v2150 = vpack.c.bf16 %v1641, %v1639
      %v2151 = vpack.c.bf16 %v1645, %v1643
      %v2152 = vpack.c.bf16 %v1665, %v1663
      %v2153 = vpack.c.bf16 %v1669, %v1667
      %v2154 = vpack.c.bf16 %v1673, %v1671
      %v2155 = vpack.c.bf16 %v1677, %v1675
      %v2156 = vpack.c.bf16 %v1681, %v1679
      %v2157 = vpack.c.bf16 %v1685, %v1683
      %v2158 = vpack.c.bf16 %v1689, %v1687
      %v2159 = vpack.c.bf16 %v1693, %v1691
      %v2160 = vpack.c.bf16 %v1713, %v1711
      %v2161 = vpack.c.bf16 %v1717, %v1715
      %v2162 = vpack.c.bf16 %v1721, %v1719
      %v2163 = vpack.c.bf16 %v1725, %v1723
      %v2164 = vpack.c.bf16 %v1729, %v1727
      %v2165 = vpack.c.bf16 %v1733, %v1731
      %v2166 = vpack.c.bf16 %v1737, %v1735
      %v2167 = vpack.c.bf16 %v1741, %v1739
      %v2168 = vpack.c.bf16 %v1824, %v1823
      %v2169 = vpack.c.bf16 %v1826, %v1825
      %v2170 = vpack.c.bf16 %v1828, %v1827
      %v2171 = vpack.c.bf16 %v1830, %v1829
      %v2172 = vpack.c.bf16 %v1832, %v1831
      %v2173 = vpack.c.bf16 %v1834, %v1833
      %v2174 = vpack.c.bf16 %v1836, %v1835
      %v2175 = vpack.c.bf16 %v1838, %v1837
      %v2176 = vpack.c.bf16 %v1858, %v1856
      %v2177 = vpack.c.bf16 %v1862, %v1860
      %v2178 = vpack.c.bf16 %v1866, %v1864
      %v2179 = vpack.c.bf16 %v1870, %v1868
      %v2180 = vpack.c.bf16 %v1874, %v1872
      %v2181 = vpack.c.bf16 %v1878, %v1876
      %v2182 = vpack.c.bf16 %v1882, %v1880
      %v2183 = vpack.c.bf16 %v1886, %v1884
      %v2184 = vpack.c.bf16 %v1969, %v1968
      %v2185 = vpack.c.bf16 %v1971, %v1970
      %v2186 = vpack.c.bf16 %v1973, %v1972
      %v2187 = vpack.c.bf16 %v1975, %v1974
      %v2188 = vpack.c.bf16 %v1977, %v1976
      %v2189 = vpack.c.bf16 %v1979, %v1978
      %v2190 = vpack.c.bf16 %v1981, %v1980
      %v2191 = vpack.c.bf16 %v1983, %v1982
      %v2192 = vpack.c.bf16 %v2003, %v2001
      %v2193 = vpack.c.bf16 %v2007, %v2005
      %v2194 = vpack.c.bf16 %v2011, %v2009
      %v2195 = vpack.c.bf16 %v2015, %v2013
      %v2196 = vpack.c.bf16 %v2019, %v2017
      %v2197 = vpack.c.bf16 %v2023, %v2021
      %v2198 = vpack.c.bf16 %v2027, %v2025
      %v2199 = vpack.c.bf16 %v2031, %v2029
      %v2200 = vpack.c.bf16 %v2051, %v2049
      %v2201 = vpack.c.bf16 %v2055, %v2053
      %v2202 = vpack.c.bf16 %v2059, %v2057
      %v2203 = vpack.c.bf16 %v2063, %v2061
      %v2204 = vpack.c.bf16 %v2067, %v2065
      %v2205 = vpack.c.bf16 %v2071, %v2069
      %v2206 = vpack.c.bf16 %v2075, %v2073
      %v2207 = vpack.c.bf16 %v2079, %v2077
      %s2208 = scalar_lea.vmem %s1, 32
      %v2209 = vld [vmem:[%s2208] sm:$0xff]
      %v2210 = vld [vmem:[%s2208 + $0x8] sm:$0xff]
      %v2211 = vld [vmem:[%s2208 + $0x10] sm:$0xff]
      %v2212 = vld [vmem:[%s2208 + $0x18] sm:$0x33]
      %v2217 = vunpack.c.l.b16 %v2209
      %v2218 = vunpack.c.h.b16 %v2209
      %v2219 = vunpack.c.l.b16 %v2210
      %v2220 = vunpack.c.h.b16 %v2210
      %v2221 = vunpack.c.l.b16 %v2211
      %v2222 = vunpack.c.h.b16 %v2211
      %v2223 = vunpack.c.l.b16 %v2212
      %v2224 = vunpack.c.h.b16 %v2212
      %v2225 = vpack.c.b16 %v2219, %v2217
      %v2226 = vpack.c.b16 %v2220, %v2218
      %v2227 = vpack.c.b16 %v2223, %v2221
      %v2228 = vpack.c.b16 %v2224, %v2222
      %vm2231 = vcmask 228352
      %v2233 = vsel %vm2231, %v2096, 0
      %v2236 = vsel %vm2231, %v2097, 0
      %v2239 = vsel %vm2231, %v2098, 0
      %v2242 = vsel %vm2231, %v2099, 0
      %v2245 = vsel %vm2231, %v2100, 0
      %v2248 = vsel %vm2231, %v2101, 0
      %v2251 = vsel %vm2231, %v2102, 0
      %v2254 = vsel %vm2231, %v2103, 0
      %v2257 = vsel %vm2231, %v2104, 0
      %v2260 = vsel %vm2231, %v2105, 0
      %v2263 = vsel %vm2231, %v2106, 0
      %v2266 = vsel %vm2231, %v2107, 0
      %v2269 = vsel %vm2231, %v2108, 0
      %v2272 = vsel %vm2231, %v2109, 0
      %v2275 = vsel %vm2231, %v2110, 0
      %v2278 = vsel %vm2231, %v2111, 0
      %v2281 = vsel %vm2231, %v2112, 0
      %v2284 = vsel %vm2231, %v2113, 0
      %v2287 = vsel %vm2231, %v2114, 0
      %v2290 = vsel %vm2231, %v2115, 0
      %v2293 = vsel %vm2231, %v2116, 0
      %v2296 = vsel %vm2231, %v2117, 0
      %v2299 = vsel %vm2231, %v2118, 0
      %v2302 = vsel %vm2231, %v2119, 0
      %v2305 = vsel %vm2231, %v2120, 0
      %v2308 = vsel %vm2231, %v2121, 0
      %v2311 = vsel %vm2231, %v2122, 0
      %v2314 = vsel %vm2231, %v2123, 0
      %v2317 = vsel %vm2231, %v2124, 0
      %v2320 = vsel %vm2231, %v2125, 0
      %v2323 = vsel %vm2231, %v2126, 0
      %v2326 = vsel %vm2231, %v2127, 0
      %v2329 = vsel %vm2231, %v2128, 0
      %v2332 = vsel %vm2231, %v2129, 0
      %v2335 = vsel %vm2231, %v2130, 0
      %v2338 = vsel %vm2231, %v2131, 0
      %v2341 = vsel %vm2231, %v2132, 0
      %v2344 = vsel %vm2231, %v2133, 0
      %v2347 = vsel %vm2231, %v2134, 0
      %v2350 = vsel %vm2231, %v2135, 0
      %v2353 = vsel %vm2231, %v2136, 0
      %v2356 = vsel %vm2231, %v2137, 0
      %v2359 = vsel %vm2231, %v2138, 0
      %v2362 = vsel %vm2231, %v2139, 0
      %v2365 = vsel %vm2231, %v2140, 0
      %v2368 = vsel %vm2231, %v2141, 0
      %v2371 = vsel %vm2231, %v2142, 0
      %v2374 = vsel %vm2231, %v2143, 0
      %v2377 = vsel %vm2231, %v2144, 0
      %v2380 = vsel %vm2231, %v2145, 0
      %v2383 = vsel %vm2231, %v2146, 0
      %v2386 = vsel %vm2231, %v2147, 0
      %v2389 = vsel %vm2231, %v2148, 0
      %v2392 = vsel %vm2231, %v2149, 0
      %v2395 = vsel %vm2231, %v2150, 0
      %v2398 = vsel %vm2231, %v2151, 0
      %v2401 = vsel %vm2231, %v2152, 0
      %v2404 = vsel %vm2231, %v2153, 0
      %v2407 = vsel %vm2231, %v2154, 0
      %v2410 = vsel %vm2231, %v2155, 0
      %v2413 = vsel %vm2231, %v2156, 0
      %v2416 = vsel %vm2231, %v2157, 0
      %v2419 = vsel %vm2231, %v2158, 0
      %v2422 = vsel %vm2231, %v2159, 0
      %v2425 = vsel %vm2231, %v2160, 0
      %v2428 = vsel %vm2231, %v2161, 0
      %v2431 = vsel %vm2231, %v2162, 0
      %v2434 = vsel %vm2231, %v2163, 0
      %v2437 = vsel %vm2231, %v2164, 0
      %v2440 = vsel %vm2231, %v2165, 0
      %v2443 = vsel %vm2231, %v2166, 0
      %v2446 = vsel %vm2231, %v2167, 0
      %v2449 = vsel %vm2231, %v2168, 0
      %v2452 = vsel %vm2231, %v2169, 0
      %v2455 = vsel %vm2231, %v2170, 0
      %v2458 = vsel %vm2231, %v2171, 0
      %v2461 = vsel %vm2231, %v2172, 0
      %v2464 = vsel %vm2231, %v2173, 0
      %v2467 = vsel %vm2231, %v2174, 0
      %v2470 = vsel %vm2231, %v2175, 0
      %v2473 = vsel %vm2231, %v2176, 0
      %v2476 = vsel %vm2231, %v2177, 0
      %v2479 = vsel %vm2231, %v2178, 0
      %v2482 = vsel %vm2231, %v2179, 0
      %v2485 = vsel %vm2231, %v2180, 0
      %v2488 = vsel %vm2231, %v2181, 0
      %v2491 = vsel %vm2231, %v2182, 0
      %v2494 = vsel %vm2231, %v2183, 0
      %v2497 = vsel %vm2231, %v2184, 0
      %v2500 = vsel %vm2231, %v2185, 0
      %v2503 = vsel %vm2231, %v2186, 0
      %v2506 = vsel %vm2231, %v2187, 0
      %v2509 = vsel %vm2231, %v2188, 0
      %v2512 = vsel %vm2231, %v2189, 0
      %v2515 = vsel %vm2231, %v2190, 0
      %v2518 = vsel %vm2231, %v2191, 0
      %v2521 = vsel %vm2231, %v2192, 0
      %v2524 = vsel %vm2231, %v2193, 0
      %v2527 = vsel %vm2231, %v2194, 0
      %v2530 = vsel %vm2231, %v2195, 0
      %v2533 = vsel %vm2231, %v2196, 0
      %v2536 = vsel %vm2231, %v2197, 0
      %v2539 = vsel %vm2231, %v2198, 0
      %v2542 = vsel %vm2231, %v2199, 0
      %v2545 = vsel %vm2231, %v2200, 0
      %v2548 = vsel %vm2231, %v2201, 0
      %v2551 = vsel %vm2231, %v2202, 0
      %v2554 = vsel %vm2231, %v2203, 0
      %v2557 = vsel %vm2231, %v2204, 0
      %v2560 = vsel %vm2231, %v2205, 0
      %v2563 = vsel %vm2231, %v2206, 0
      %v2566 = vsel %vm2231, %v2207, 0
      %vm2568 = vcmask 1045504
      %v2570 = vsel %vm2568, %v2227, 0
      %v2573 = vsel %vm2568, %v2228, 0
      %2575 = vmatpush.bf16.msra.mxu0 0
      %2576 = vmatpush.bf16.msra.mxu0 0
      %2577 = vmatpush.bf16.msra.mxu0 0
      %2578 = vmatpush.bf16.msra.mxu0 0
      %2579 = vmatpush.bf16.msra.mxu0 0
      %2580 = vmatpush.bf16.msra.mxu0 0
      %2581 = vmatpush.bf16.msra.mxu0 %v2570
      %2582 = vmatpush.bf16.msra.mxu0 %v2225
      %2583 = vmatmul.bf16.gmra.mxu0 %v2233
      %v2584 = vpop.f32.mrf.mxu0
      %v2585 = vadd.f32 0.0, %v2584
      %v2586 = vpop.f32.mrf.mxu0
      %v2587 = vadd.f32 0.0, %v2586
      %2588 = vmatmul.bf16.gmra.mxu0 %v2236
      %v2589 = vpop.f32.mrf.mxu0
      %v2590 = vadd.f32 0.0, %v2589
      %v2591 = vpop.f32.mrf.mxu0
      %v2592 = vadd.f32 0.0, %v2591
      %2593 = vmatmul.bf16.gmra.mxu0 %v2239
      %v2594 = vpop.f32.mrf.mxu0
      %v2595 = vadd.f32 0.0, %v2594
      %v2596 = vpop.f32.mrf.mxu0
      %v2597 = vadd.f32 0.0, %v2596
      %2598 = vmatmul.bf16.gmra.mxu0 %v2242
      %v2599 = vpop.f32.mrf.mxu0
      %v2600 = vadd.f32 0.0, %v2599
      %v2601 = vpop.f32.mrf.mxu0
      %v2602 = vadd.f32 0.0, %v2601
      %2603 = vmatmul.bf16.gmra.mxu0 %v2245
      %v2604 = vpop.f32.mrf.mxu0
      %v2605 = vadd.f32 0.0, %v2604
      %v2606 = vpop.f32.mrf.mxu0
      %v2607 = vadd.f32 0.0, %v2606
      %2608 = vmatmul.bf16.gmra.mxu0 %v2248
      %v2609 = vpop.f32.mrf.mxu0
      %v2610 = vadd.f32 0.0, %v2609
      %v2611 = vpop.f32.mrf.mxu0
      %v2612 = vadd.f32 0.0, %v2611
      %2613 = vmatmul.bf16.gmra.mxu0 %v2251
      %v2614 = vpop.f32.mrf.mxu0
      %v2615 = vadd.f32 0.0, %v2614
      %v2616 = vpop.f32.mrf.mxu0
      %v2617 = vadd.f32 0.0, %v2616
      %2618 = vmatmul.bf16.gmra.mxu0 %v2254
      %v2619 = vpop.f32.mrf.mxu0
      %v2620 = vadd.f32 0.0, %v2619
      %v2621 = vpop.f32.mrf.mxu0
      %v2622 = vadd.f32 0.0, %v2621
      %2623 = vmatmul.bf16.gmra.mxu0 %v2257
      %v2624 = vpop.f32.mrf.mxu0
      %v2625 = vadd.f32 0.0, %v2624
      %v2626 = vpop.f32.mrf.mxu0
      %v2627 = vadd.f32 0.0, %v2626
      %2628 = vmatmul.bf16.gmra.mxu0 %v2260
      %v2629 = vpop.f32.mrf.mxu0
      %v2630 = vadd.f32 0.0, %v2629
      %v2631 = vpop.f32.mrf.mxu0
      %v2632 = vadd.f32 0.0, %v2631
      %2633 = vmatmul.bf16.gmra.mxu0 %v2263
      %v2634 = vpop.f32.mrf.mxu0
      %v2635 = vadd.f32 0.0, %v2634
      %v2636 = vpop.f32.mrf.mxu0
      %v2637 = vadd.f32 0.0, %v2636
      %2638 = vmatmul.bf16.gmra.mxu0 %v2266
      %v2639 = vpop.f32.mrf.mxu0
      %v2640 = vadd.f32 0.0, %v2639
      %v2641 = vpop.f32.mrf.mxu0
      %v2642 = vadd.f32 0.0, %v2641
      %2643 = vmatmul.bf16.gmra.mxu0 %v2269
      %v2644 = vpop.f32.mrf.mxu0
      %v2645 = vadd.f32 0.0, %v2644
      %v2646 = vpop.f32.mrf.mxu0
      %v2647 = vadd.f32 0.0, %v2646
      %2648 = vmatmul.bf16.gmra.mxu0 %v2272
      %v2649 = vpop.f32.mrf.mxu0
      %v2650 = vadd.f32 0.0, %v2649
      %v2651 = vpop.f32.mrf.mxu0
      %v2652 = vadd.f32 0.0, %v2651
      %2653 = vmatmul.bf16.gmra.mxu0 %v2275
      %v2654 = vpop.f32.mrf.mxu0
      %v2655 = vadd.f32 0.0, %v2654
      %v2656 = vpop.f32.mrf.mxu0
      %v2657 = vadd.f32 0.0, %v2656
      %2658 = vmatmul.bf16.gmra.mxu0 %v2278
      %v2659 = vpop.f32.mrf.mxu0
      %v2660 = vadd.f32 0.0, %v2659
      %v2661 = vpop.f32.mrf.mxu0
      %v2662 = vadd.f32 0.0, %v2661
      %2663 = vmatmul.bf16.gmra.mxu0 %v2281
      %v2664 = vpop.f32.mrf.mxu0
      %v2665 = vadd.f32 0.0, %v2664
      %v2666 = vpop.f32.mrf.mxu0
      %v2667 = vadd.f32 0.0, %v2666
      %2668 = vmatmul.bf16.gmra.mxu0 %v2284
      %v2669 = vpop.f32.mrf.mxu0
      %v2670 = vadd.f32 0.0, %v2669
      %v2671 = vpop.f32.mrf.mxu0
      %v2672 = vadd.f32 0.0, %v2671
      %2673 = vmatmul.bf16.gmra.mxu0 %v2287
      %v2674 = vpop.f32.mrf.mxu0
      %v2675 = vadd.f32 0.0, %v2674
      %v2676 = vpop.f32.mrf.mxu0
      %v2677 = vadd.f32 0.0, %v2676
      %2678 = vmatmul.bf16.gmra.mxu0 %v2290
      %v2679 = vpop.f32.mrf.mxu0
      %v2680 = vadd.f32 0.0, %v2679
      %v2681 = vpop.f32.mrf.mxu0
      %v2682 = vadd.f32 0.0, %v2681
      %2683 = vmatmul.bf16.gmra.mxu0 %v2293
      %v2684 = vpop.f32.mrf.mxu0
      %v2685 = vadd.f32 0.0, %v2684
      %v2686 = vpop.f32.mrf.mxu0
      %v2687 = vadd.f32 0.0, %v2686
      %2688 = vmatmul.bf16.gmra.mxu0 %v2296
      %v2689 = vpop.f32.mrf.mxu0
      %v2690 = vadd.f32 0.0, %v2689
      %v2691 = vpop.f32.mrf.mxu0
      %v2692 = vadd.f32 0.0, %v2691
      %2693 = vmatmul.bf16.gmra.mxu0 %v2299
      %v2694 = vpop.f32.mrf.mxu0
      %v2695 = vadd.f32 0.0, %v2694
      %v2696 = vpop.f32.mrf.mxu0
      %v2697 = vadd.f32 0.0, %v2696
      %2698 = vmatmul.bf16.gmra.mxu0 %v2302
      %v2699 = vpop.f32.mrf.mxu0
      %v2700 = vadd.f32 0.0, %v2699
      %v2701 = vpop.f32.mrf.mxu0
      %v2702 = vadd.f32 0.0, %v2701
      %2703 = vmatmul.bf16.gmra.mxu0 %v2305
      %v2704 = vpop.f32.mrf.mxu0
      %v2705 = vadd.f32 0.0, %v2704
      %v2706 = vpop.f32.mrf.mxu0
      %v2707 = vadd.f32 0.0, %v2706
      %2708 = vmatmul.bf16.gmra.mxu0 %v2308
      %v2709 = vpop.f32.mrf.mxu0
      %v2710 = vadd.f32 0.0, %v2709
      %v2711 = vpop.f32.mrf.mxu0
      %v2712 = vadd.f32 0.0, %v2711
      %2713 = vmatmul.bf16.gmra.mxu0 %v2311
      %v2714 = vpop.f32.mrf.mxu0
      %v2715 = vadd.f32 0.0, %v2714
      %v2716 = vpop.f32.mrf.mxu0
      %v2717 = vadd.f32 0.0, %v2716
      %2718 = vmatmul.bf16.gmra.mxu0 %v2314
      %v2719 = vpop.f32.mrf.mxu0
      %v2720 = vadd.f32 0.0, %v2719
      %v2721 = vpop.f32.mrf.mxu0
      %v2722 = vadd.f32 0.0, %v2721
      %2723 = vmatmul.bf16.gmra.mxu0 %v2317
      %v2724 = vpop.f32.mrf.mxu0
      %v2725 = vadd.f32 0.0, %v2724
      %v2726 = vpop.f32.mrf.mxu0
      %v2727 = vadd.f32 0.0, %v2726
      %2728 = vmatmul.bf16.gmra.mxu0 %v2320
      %v2729 = vpop.f32.mrf.mxu0
      %v2730 = vadd.f32 0.0, %v2729
      %v2731 = vpop.f32.mrf.mxu0
      %v2732 = vadd.f32 0.0, %v2731
      %2733 = vmatmul.bf16.gmra.mxu0 %v2323
      %v2734 = vpop.f32.mrf.mxu0
      %v2735 = vadd.f32 0.0, %v2734
      %v2736 = vpop.f32.mrf.mxu0
      %v2737 = vadd.f32 0.0, %v2736
      %2738 = vmatmul.bf16.gmra.mxu0 %v2326
      %v2739 = vpop.f32.mrf.mxu0
      %v2740 = vadd.f32 0.0, %v2739
      %v2741 = vpop.f32.mrf.mxu0
      %v2742 = vadd.f32 0.0, %v2741
      %2743 = vmatmul.bf16.gmra.mxu0 %v2329
      %v2744 = vpop.f32.mrf.mxu0
      %v2745 = vadd.f32 0.0, %v2744
      %v2746 = vpop.f32.mrf.mxu0
      %v2747 = vadd.f32 0.0, %v2746
      %2748 = vmatmul.bf16.gmra.mxu0 %v2332
      %v2749 = vpop.f32.mrf.mxu0
      %v2750 = vadd.f32 0.0, %v2749
      %v2751 = vpop.f32.mrf.mxu0
      %v2752 = vadd.f32 0.0, %v2751
      %2753 = vmatmul.bf16.gmra.mxu0 %v2335
      %v2754 = vpop.f32.mrf.mxu0
      %v2755 = vadd.f32 0.0, %v2754
      %v2756 = vpop.f32.mrf.mxu0
      %v2757 = vadd.f32 0.0, %v2756
      %2758 = vmatmul.bf16.gmra.mxu0 %v2338
      %v2759 = vpop.f32.mrf.mxu0
      %v2760 = vadd.f32 0.0, %v2759
      %v2761 = vpop.f32.mrf.mxu0
      %v2762 = vadd.f32 0.0, %v2761
      %2763 = vmatmul.bf16.gmra.mxu0 %v2341
      %v2764 = vpop.f32.mrf.mxu0
      %v2765 = vadd.f32 0.0, %v2764
      %v2766 = vpop.f32.mrf.mxu0
      %v2767 = vadd.f32 0.0, %v2766
      %2768 = vmatmul.bf16.gmra.mxu0 %v2344
      %v2769 = vpop.f32.mrf.mxu0
      %v2770 = vadd.f32 0.0, %v2769
      %v2771 = vpop.f32.mrf.mxu0
      %v2772 = vadd.f32 0.0, %v2771
      %2773 = vmatmul.bf16.gmra.mxu0 %v2347
      %v2774 = vpop.f32.mrf.mxu0
      %v2775 = vadd.f32 0.0, %v2774
      %v2776 = vpop.f32.mrf.mxu0
      %v2777 = vadd.f32 0.0, %v2776
      %2778 = vmatmul.bf16.gmra.mxu0 %v2350
      %v2779 = vpop.f32.mrf.mxu0
      %v2780 = vadd.f32 0.0, %v2779
      %v2781 = vpop.f32.mrf.mxu0
      %v2782 = vadd.f32 0.0, %v2781
      %2783 = vmatmul.bf16.gmra.mxu0 %v2353
      %v2784 = vpop.f32.mrf.mxu0
      %v2785 = vadd.f32 0.0, %v2784
      %v2786 = vpop.f32.mrf.mxu0
      %v2787 = vadd.f32 0.0, %v2786
      %2788 = vmatmul.bf16.gmra.mxu0 %v2356
      %v2789 = vpop.f32.mrf.mxu0
      %v2790 = vadd.f32 0.0, %v2789
      %v2791 = vpop.f32.mrf.mxu0
      %v2792 = vadd.f32 0.0, %v2791
      %2793 = vmatmul.bf16.gmra.mxu0 %v2359
      %v2794 = vpop.f32.mrf.mxu0
      %v2795 = vadd.f32 0.0, %v2794
      %v2796 = vpop.f32.mrf.mxu0
      %v2797 = vadd.f32 0.0, %v2796
      %2798 = vmatmul.bf16.gmra.mxu0 %v2362
      %v2799 = vpop.f32.mrf.mxu0
      %v2800 = vadd.f32 0.0, %v2799
      %v2801 = vpop.f32.mrf.mxu0
      %v2802 = vadd.f32 0.0, %v2801
      %2803 = vmatmul.bf16.gmra.mxu0 %v2365
      %v2804 = vpop.f32.mrf.mxu0
      %v2805 = vadd.f32 0.0, %v2804
      %v2806 = vpop.f32.mrf.mxu0
      %v2807 = vadd.f32 0.0, %v2806
      %2808 = vmatmul.bf16.gmra.mxu0 %v2368
      %v2809 = vpop.f32.mrf.mxu0
      %v2810 = vadd.f32 0.0, %v2809
      %v2811 = vpop.f32.mrf.mxu0
      %v2812 = vadd.f32 0.0, %v2811
      %2813 = vmatmul.bf16.gmra.mxu0 %v2371
      %v2814 = vpop.f32.mrf.mxu0
      %v2815 = vadd.f32 0.0, %v2814
      %v2816 = vpop.f32.mrf.mxu0
      %v2817 = vadd.f32 0.0, %v2816
      %2818 = vmatmul.bf16.gmra.mxu0 %v2374
      %v2819 = vpop.f32.mrf.mxu0
      %v2820 = vadd.f32 0.0, %v2819
      %v2821 = vpop.f32.mrf.mxu0
      %v2822 = vadd.f32 0.0, %v2821
      %2823 = vmatmul.bf16.gmra.mxu0 %v2377
      %v2824 = vpop.f32.mrf.mxu0
      %v2825 = vadd.f32 0.0, %v2824
      %v2826 = vpop.f32.mrf.mxu0
      %v2827 = vadd.f32 0.0, %v2826
      %2828 = vmatmul.bf16.gmra.mxu0 %v2380
      %v2829 = vpop.f32.mrf.mxu0
      %v2830 = vadd.f32 0.0, %v2829
      %v2831 = vpop.f32.mrf.mxu0
      %v2832 = vadd.f32 0.0, %v2831
      %2833 = vmatmul.bf16.gmra.mxu0 %v2383
      %v2834 = vpop.f32.mrf.mxu0
      %v2835 = vadd.f32 0.0, %v2834
      %v2836 = vpop.f32.mrf.mxu0
      %v2837 = vadd.f32 0.0, %v2836
      %2838 = vmatmul.bf16.gmra.mxu0 %v2386
      %v2839 = vpop.f32.mrf.mxu0
      %v2840 = vadd.f32 0.0, %v2839
      %v2841 = vpop.f32.mrf.mxu0
      %v2842 = vadd.f32 0.0, %v2841
      %2843 = vmatmul.bf16.gmra.mxu0 %v2389
      %v2844 = vpop.f32.mrf.mxu0
      %v2845 = vadd.f32 0.0, %v2844
      %v2846 = vpop.f32.mrf.mxu0
      %v2847 = vadd.f32 0.0, %v2846
      %2848 = vmatmul.bf16.gmra.mxu0 %v2392
      %v2849 = vpop.f32.mrf.mxu0
      %v2850 = vadd.f32 0.0, %v2849
      %v2851 = vpop.f32.mrf.mxu0
      %v2852 = vadd.f32 0.0, %v2851
      %2853 = vmatmul.bf16.gmra.mxu0 %v2395
      %v2854 = vpop.f32.mrf.mxu0
      %v2855 = vadd.f32 0.0, %v2854
      %v2856 = vpop.f32.mrf.mxu0
      %v2857 = vadd.f32 0.0, %v2856
      %2858 = vmatmul.bf16.gmra.mxu0 %v2398
      %v2859 = vpop.f32.mrf.mxu0
      %v2860 = vadd.f32 0.0, %v2859
      %v2861 = vpop.f32.mrf.mxu0
      %v2862 = vadd.f32 0.0, %v2861
      %2863 = vmatmul.bf16.gmra.mxu0 %v2401
      %v2864 = vpop.f32.mrf.mxu0
      %v2865 = vadd.f32 0.0, %v2864
      %v2866 = vpop.f32.mrf.mxu0
      %v2867 = vadd.f32 0.0, %v2866
      %2868 = vmatmul.bf16.gmra.mxu0 %v2404
      %v2869 = vpop.f32.mrf.mxu0
      %v2870 = vadd.f32 0.0, %v2869
      %v2871 = vpop.f32.mrf.mxu0
      %v2872 = vadd.f32 0.0, %v2871
      %2873 = vmatmul.bf16.gmra.mxu0 %v2407
      %v2874 = vpop.f32.mrf.mxu0
      %v2875 = vadd.f32 0.0, %v2874
      %v2876 = vpop.f32.mrf.mxu0
      %v2877 = vadd.f32 0.0, %v2876
      %2878 = vmatmul.bf16.gmra.mxu0 %v2410
      %v2879 = vpop.f32.mrf.mxu0
      %v2880 = vadd.f32 0.0, %v2879
      %v2881 = vpop.f32.mrf.mxu0
      %v2882 = vadd.f32 0.0, %v2881
      %2883 = vmatmul.bf16.gmra.mxu0 %v2413
      %v2884 = vpop.f32.mrf.mxu0
      %v2885 = vadd.f32 0.0, %v2884
      %v2886 = vpop.f32.mrf.mxu0
      %v2887 = vadd.f32 0.0, %v2886
      %2888 = vmatmul.bf16.gmra.mxu0 %v2416
      %v2889 = vpop.f32.mrf.mxu0
      %v2890 = vadd.f32 0.0, %v2889
      %v2891 = vpop.f32.mrf.mxu0
      %v2892 = vadd.f32 0.0, %v2891
      %2893 = vmatmul.bf16.gmra.mxu0 %v2419
      %v2894 = vpop.f32.mrf.mxu0
      %v2895 = vadd.f32 0.0, %v2894
      %v2896 = vpop.f32.mrf.mxu0
      %v2897 = vadd.f32 0.0, %v2896
      %2898 = vmatmul.bf16.gmra.mxu0 %v2422
      %v2899 = vpop.f32.mrf.mxu0
      %v2900 = vadd.f32 0.0, %v2899
      %v2901 = vpop.f32.mrf.mxu0
      %v2902 = vadd.f32 0.0, %v2901
      %2903 = vmatmul.bf16.gmra.mxu0 %v2425
      %v2904 = vpop.f32.mrf.mxu0
      %v2905 = vadd.f32 0.0, %v2904
      %v2906 = vpop.f32.mrf.mxu0
      %v2907 = vadd.f32 0.0, %v2906
      %2908 = vmatmul.bf16.gmra.mxu0 %v2428
      %v2909 = vpop.f32.mrf.mxu0
      %v2910 = vadd.f32 0.0, %v2909
      %v2911 = vpop.f32.mrf.mxu0
      %v2912 = vadd.f32 0.0, %v2911
      %2913 = vmatmul.bf16.gmra.mxu0 %v2431
      %v2914 = vpop.f32.mrf.mxu0
      %v2915 = vadd.f32 0.0, %v2914
      %v2916 = vpop.f32.mrf.mxu0
      %v2917 = vadd.f32 0.0, %v2916
      %2918 = vmatmul.bf16.gmra.mxu0 %v2434
      %v2919 = vpop.f32.mrf.mxu0
      %v2920 = vadd.f32 0.0, %v2919
      %v2921 = vpop.f32.mrf.mxu0
      %v2922 = vadd.f32 0.0, %v2921
      %2923 = vmatmul.bf16.gmra.mxu0 %v2437
      %v2924 = vpop.f32.mrf.mxu0
      %v2925 = vadd.f32 0.0, %v2924
      %v2926 = vpop.f32.mrf.mxu0
      %v2927 = vadd.f32 0.0, %v2926
      %2928 = vmatmul.bf16.gmra.mxu0 %v2440
      %v2929 = vpop.f32.mrf.mxu0
      %v2930 = vadd.f32 0.0, %v2929
      %v2931 = vpop.f32.mrf.mxu0
      %v2932 = vadd.f32 0.0, %v2931
      %2933 = vmatmul.bf16.gmra.mxu0 %v2443
      %v2934 = vpop.f32.mrf.mxu0
      %v2935 = vadd.f32 0.0, %v2934
      %v2936 = vpop.f32.mrf.mxu0
      %v2937 = vadd.f32 0.0, %v2936
      %2938 = vmatmul.bf16.gmra.mxu0 %v2446
      %v2939 = vpop.f32.mrf.mxu0
      %v2940 = vadd.f32 0.0, %v2939
      %v2941 = vpop.f32.mrf.mxu0
      %v2942 = vadd.f32 0.0, %v2941
      %2943 = vmatmul.bf16.gmra.mxu0 %v2449
      %v2944 = vpop.f32.mrf.mxu0
      %v2945 = vadd.f32 0.0, %v2944
      %v2946 = vpop.f32.mrf.mxu0
      %v2947 = vadd.f32 0.0, %v2946
      %2948 = vmatmul.bf16.gmra.mxu0 %v2452
      %v2949 = vpop.f32.mrf.mxu0
      %v2950 = vadd.f32 0.0, %v2949
      %v2951 = vpop.f32.mrf.mxu0
      %v2952 = vadd.f32 0.0, %v2951
      %2953 = vmatmul.bf16.gmra.mxu0 %v2455
      %v2954 = vpop.f32.mrf.mxu0
      %v2955 = vadd.f32 0.0, %v2954
      %v2956 = vpop.f32.mrf.mxu0
      %v2957 = vadd.f32 0.0, %v2956
      %2958 = vmatmul.bf16.gmra.mxu0 %v2458
      %v2959 = vpop.f32.mrf.mxu0
      %v2960 = vadd.f32 0.0, %v2959
      %v2961 = vpop.f32.mrf.mxu0
      %v2962 = vadd.f32 0.0, %v2961
      %2963 = vmatmul.bf16.gmra.mxu0 %v2461
      %v2964 = vpop.f32.mrf.mxu0
      %v2965 = vadd.f32 0.0, %v2964
      %v2966 = vpop.f32.mrf.mxu0
      %v2967 = vadd.f32 0.0, %v2966
      %2968 = vmatmul.bf16.gmra.mxu0 %v2464
      %v2969 = vpop.f32.mrf.mxu0
      %v2970 = vadd.f32 0.0, %v2969
      %v2971 = vpop.f32.mrf.mxu0
      %v2972 = vadd.f32 0.0, %v2971
      %2973 = vmatmul.bf16.gmra.mxu0 %v2467
      %v2974 = vpop.f32.mrf.mxu0
      %v2975 = vadd.f32 0.0, %v2974
      %v2976 = vpop.f32.mrf.mxu0
      %v2977 = vadd.f32 0.0, %v2976
      %2978 = vmatmul.bf16.gmra.mxu0 %v2470
      %v2979 = vpop.f32.mrf.mxu0
      %v2980 = vadd.f32 0.0, %v2979
      %v2981 = vpop.f32.mrf.mxu0
      %v2982 = vadd.f32 0.0, %v2981
      %2983 = vmatmul.bf16.gmra.mxu0 %v2473
      %v2984 = vpop.f32.mrf.mxu0
      %v2985 = vadd.f32 0.0, %v2984
      %v2986 = vpop.f32.mrf.mxu0
      %v2987 = vadd.f32 0.0, %v2986
      %2988 = vmatmul.bf16.gmra.mxu0 %v2476
      %v2989 = vpop.f32.mrf.mxu0
      %v2990 = vadd.f32 0.0, %v2989
      %v2991 = vpop.f32.mrf.mxu0
      %v2992 = vadd.f32 0.0, %v2991
      %2993 = vmatmul.bf16.gmra.mxu0 %v2479
      %v2994 = vpop.f32.mrf.mxu0
      %v2995 = vadd.f32 0.0, %v2994
      %v2996 = vpop.f32.mrf.mxu0
      %v2997 = vadd.f32 0.0, %v2996
      %2998 = vmatmul.bf16.gmra.mxu0 %v2482
      %v2999 = vpop.f32.mrf.mxu0
      %v3000 = vadd.f32 0.0, %v2999
      %v3001 = vpop.f32.mrf.mxu0
      %v3002 = vadd.f32 0.0, %v3001
      %3003 = vmatmul.bf16.gmra.mxu0 %v2485
      %v3004 = vpop.f32.mrf.mxu0
      %v3005 = vadd.f32 0.0, %v3004
      %v3006 = vpop.f32.mrf.mxu0
      %v3007 = vadd.f32 0.0, %v3006
      %3008 = vmatmul.bf16.gmra.mxu0 %v2488
      %v3009 = vpop.f32.mrf.mxu0
      %v3010 = vadd.f32 0.0, %v3009
      %v3011 = vpop.f32.mrf.mxu0
      %v3012 = vadd.f32 0.0, %v3011
      %3013 = vmatmul.bf16.gmra.mxu0 %v2491
      %v3014 = vpop.f32.mrf.mxu0
      %v3015 = vadd.f32 0.0, %v3014
      %v3016 = vpop.f32.mrf.mxu0
      %v3017 = vadd.f32 0.0, %v3016
      %3018 = vmatmul.bf16.gmra.mxu0 %v2494
      %v3019 = vpop.f32.mrf.mxu0
      %v3020 = vadd.f32 0.0, %v3019
      %v3021 = vpop.f32.mrf.mxu0
      %v3022 = vadd.f32 0.0, %v3021
      %3023 = vmatmul.bf16.gmra.mxu0 %v2497
      %v3024 = vpop.f32.mrf.mxu0
      %v3025 = vadd.f32 0.0, %v3024
      %v3026 = vpop.f32.mrf.mxu0
      %v3027 = vadd.f32 0.0, %v3026
      %3028 = vmatmul.bf16.gmra.mxu0 %v2500
      %v3029 = vpop.f32.mrf.mxu0
      %v3030 = vadd.f32 0.0, %v3029
      %v3031 = vpop.f32.mrf.mxu0
      %v3032 = vadd.f32 0.0, %v3031
      %3033 = vmatmul.bf16.gmra.mxu0 %v2503
      %v3034 = vpop.f32.mrf.mxu0
      %v3035 = vadd.f32 0.0, %v3034
      %v3036 = vpop.f32.mrf.mxu0
      %v3037 = vadd.f32 0.0, %v3036
      %3038 = vmatmul.bf16.gmra.mxu0 %v2506
      %v3039 = vpop.f32.mrf.mxu0
      %v3040 = vadd.f32 0.0, %v3039
      %v3041 = vpop.f32.mrf.mxu0
      %v3042 = vadd.f32 0.0, %v3041
      %3043 = vmatmul.bf16.gmra.mxu0 %v2509
      %v3044 = vpop.f32.mrf.mxu0
      %v3045 = vadd.f32 0.0, %v3044
      %v3046 = vpop.f32.mrf.mxu0
      %v3047 = vadd.f32 0.0, %v3046
      %3048 = vmatmul.bf16.gmra.mxu0 %v2512
      %v3049 = vpop.f32.mrf.mxu0
      %v3050 = vadd.f32 0.0, %v3049
      %v3051 = vpop.f32.mrf.mxu0
      %v3052 = vadd.f32 0.0, %v3051
      %3053 = vmatmul.bf16.gmra.mxu0 %v2515
      %v3054 = vpop.f32.mrf.mxu0
      %v3055 = vadd.f32 0.0, %v3054
      %v3056 = vpop.f32.mrf.mxu0
      %v3057 = vadd.f32 0.0, %v3056
      %3058 = vmatmul.bf16.gmra.mxu0 %v2518
      %v3059 = vpop.f32.mrf.mxu0
      %v3060 = vadd.f32 0.0, %v3059
      %v3061 = vpop.f32.mrf.mxu0
      %v3062 = vadd.f32 0.0, %v3061
      %3063 = vmatmul.bf16.gmra.mxu0 %v2521
      %v3064 = vpop.f32.mrf.mxu0
      %v3065 = vadd.f32 0.0, %v3064
      %v3066 = vpop.f32.mrf.mxu0
      %v3067 = vadd.f32 0.0, %v3066
      %3068 = vmatmul.bf16.gmra.mxu0 %v2524
      %v3069 = vpop.f32.mrf.mxu0
      %v3070 = vadd.f32 0.0, %v3069
      %v3071 = vpop.f32.mrf.mxu0
      %v3072 = vadd.f32 0.0, %v3071
      %3073 = vmatmul.bf16.gmra.mxu0 %v2527
      %v3074 = vpop.f32.mrf.mxu0
      %v3075 = vadd.f32 0.0, %v3074
      %v3076 = vpop.f32.mrf.mxu0
      %v3077 = vadd.f32 0.0, %v3076
      %3078 = vmatmul.bf16.gmra.mxu0 %v2530
      %v3079 = vpop.f32.mrf.mxu0
      %v3080 = vadd.f32 0.0, %v3079
      %v3081 = vpop.f32.mrf.mxu0
      %v3082 = vadd.f32 0.0, %v3081
      %3083 = vmatmul.bf16.gmra.mxu0 %v2533
      %v3084 = vpop.f32.mrf.mxu0
      %v3085 = vadd.f32 0.0, %v3084
      %v3086 = vpop.f32.mrf.mxu0
      %v3087 = vadd.f32 0.0, %v3086
      %3088 = vmatmul.bf16.gmra.mxu0 %v2536
      %v3089 = vpop.f32.mrf.mxu0
      %v3090 = vadd.f32 0.0, %v3089
      %v3091 = vpop.f32.mrf.mxu0
      %v3092 = vadd.f32 0.0, %v3091
      %3093 = vmatmul.bf16.gmra.mxu0 %v2539
      %v3094 = vpop.f32.mrf.mxu0
      %v3095 = vadd.f32 0.0, %v3094
      %v3096 = vpop.f32.mrf.mxu0
      %v3097 = vadd.f32 0.0, %v3096
      %3098 = vmatmul.bf16.gmra.mxu0 %v2542
      %v3099 = vpop.f32.mrf.mxu0
      %v3100 = vadd.f32 0.0, %v3099
      %v3101 = vpop.f32.mrf.mxu0
      %v3102 = vadd.f32 0.0, %v3101
      %3103 = vmatmul.bf16.gmra.mxu0 %v2545
      %v3104 = vpop.f32.mrf.mxu0
      %v3105 = vadd.f32 0.0, %v3104
      %v3106 = vpop.f32.mrf.mxu0
      %v3107 = vadd.f32 0.0, %v3106
      %3108 = vmatmul.bf16.gmra.mxu0 %v2548
      %v3109 = vpop.f32.mrf.mxu0
      %v3110 = vadd.f32 0.0, %v3109
      %v3111 = vpop.f32.mrf.mxu0
      %v3112 = vadd.f32 0.0, %v3111
      %3113 = vmatmul.bf16.gmra.mxu0 %v2551
      %v3114 = vpop.f32.mrf.mxu0
      %v3115 = vadd.f32 0.0, %v3114
      %v3116 = vpop.f32.mrf.mxu0
      %v3117 = vadd.f32 0.0, %v3116
      %3118 = vmatmul.bf16.gmra.mxu0 %v2554
      %v3119 = vpop.f32.mrf.mxu0
      %v3120 = vadd.f32 0.0, %v3119
      %v3121 = vpop.f32.mrf.mxu0
      %v3122 = vadd.f32 0.0, %v3121
      %3123 = vmatmul.bf16.gmra.mxu0 %v2557
      %v3124 = vpop.f32.mrf.mxu0
      %v3125 = vadd.f32 0.0, %v3124
      %v3126 = vpop.f32.mrf.mxu0
      %v3127 = vadd.f32 0.0, %v3126
      %3128 = vmatmul.bf16.gmra.mxu0 %v2560
      %v3129 = vpop.f32.mrf.mxu0
      %v3130 = vadd.f32 0.0, %v3129
      %v3131 = vpop.f32.mrf.mxu0
      %v3132 = vadd.f32 0.0, %v3131
      %3133 = vmatmul.bf16.gmra.mxu0 %v2563
      %v3134 = vpop.f32.mrf.mxu0
      %v3135 = vadd.f32 0.0, %v3134
      %v3136 = vpop.f32.mrf.mxu0
      %v3137 = vadd.f32 0.0, %v3136
      %3138 = vmatmul.bf16.gmra.mxu0 %v2566
      %v3139 = vpop.f32.mrf.mxu0
      %v3140 = vadd.f32 0.0, %v3139
      %v3141 = vpop.f32.mrf.mxu0
      %v3142 = vadd.f32 0.0, %v3141
      %3143 = vdwg.mxu0
      %3144 = vmatpush.bf16.msra.mxu0 0
      %3145 = vmatpush.bf16.msra.mxu0 0
      %3146 = vmatpush.bf16.msra.mxu0 0
      %3147 = vmatpush.bf16.msra.mxu0 0
      %3148 = vmatpush.bf16.msra.mxu0 0
      %3149 = vmatpush.bf16.msra.mxu0 0
      %3150 = vmatpush.bf16.msra.mxu0 %v2573
      %3151 = vmatpush.bf16.msra.mxu0 %v2226
      %3152 = vmatmul.bf16.gmra.mxu0 %v2233
      %v3153 = vpop.f32.mrf.mxu0
      %v3154 = vadd.f32 0.0, %v3153
      %v3155 = vpop.f32.mrf.mxu0
      %v3156 = vadd.f32 0.0, %v3155
      %3157 = vmatmul.bf16.gmra.mxu0 %v2236
      %v3158 = vpop.f32.mrf.mxu0
      %v3159 = vadd.f32 0.0, %v3158
      %v3160 = vpop.f32.mrf.mxu0
      %v3161 = vadd.f32 0.0, %v3160
      %3162 = vmatmul.bf16.gmra.mxu0 %v2239
      %v3163 = vpop.f32.mrf.mxu0
      %v3164 = vadd.f32 0.0, %v3163
      %v3165 = vpop.f32.mrf.mxu0
      %v3166 = vadd.f32 0.0, %v3165
      %3167 = vmatmul.bf16.gmra.mxu0 %v2242
      %v3168 = vpop.f32.mrf.mxu0
      %v3169 = vadd.f32 0.0, %v3168
      %v3170 = vpop.f32.mrf.mxu0
      %v3171 = vadd.f32 0.0, %v3170
      %3172 = vmatmul.bf16.gmra.mxu0 %v2245
      %v3173 = vpop.f32.mrf.mxu0
      %v3174 = vadd.f32 0.0, %v3173
      %v3175 = vpop.f32.mrf.mxu0
      %v3176 = vadd.f32 0.0, %v3175
      %3177 = vmatmul.bf16.gmra.mxu0 %v2248
      %v3178 = vpop.f32.mrf.mxu0
      %v3179 = vadd.f32 0.0, %v3178
      %v3180 = vpop.f32.mrf.mxu0
      %v3181 = vadd.f32 0.0, %v3180
      %3182 = vmatmul.bf16.gmra.mxu0 %v2251
      %v3183 = vpop.f32.mrf.mxu0
      %v3184 = vadd.f32 0.0, %v3183
      %v3185 = vpop.f32.mrf.mxu0
      %v3186 = vadd.f32 0.0, %v3185
      %3187 = vmatmul.bf16.gmra.mxu0 %v2254
      %v3188 = vpop.f32.mrf.mxu0
      %v3189 = vadd.f32 0.0, %v3188
      %v3190 = vpop.f32.mrf.mxu0
      %v3191 = vadd.f32 0.0, %v3190
      %3192 = vmatmul.bf16.gmra.mxu0 %v2257
      %v3193 = vpop.f32.mrf.mxu0
      %v3194 = vadd.f32 0.0, %v3193
      %v3195 = vpop.f32.mrf.mxu0
      %v3196 = vadd.f32 0.0, %v3195
      %3197 = vmatmul.bf16.gmra.mxu0 %v2260
      %v3198 = vpop.f32.mrf.mxu0
      %v3199 = vadd.f32 0.0, %v3198
      %v3200 = vpop.f32.mrf.mxu0
      %v3201 = vadd.f32 0.0, %v3200
      %3202 = vmatmul.bf16.gmra.mxu0 %v2263
      %v3203 = vpop.f32.mrf.mxu0
      %v3204 = vadd.f32 0.0, %v3203
      %v3205 = vpop.f32.mrf.mxu0
      %v3206 = vadd.f32 0.0, %v3205
      %3207 = vmatmul.bf16.gmra.mxu0 %v2266
      %v3208 = vpop.f32.mrf.mxu0
      %v3209 = vadd.f32 0.0, %v3208
      %v3210 = vpop.f32.mrf.mxu0
      %v3211 = vadd.f32 0.0, %v3210
      %3212 = vmatmul.bf16.gmra.mxu0 %v2269
      %v3213 = vpop.f32.mrf.mxu0
      %v3214 = vadd.f32 0.0, %v3213
      %v3215 = vpop.f32.mrf.mxu0
      %v3216 = vadd.f32 0.0, %v3215
      %3217 = vmatmul.bf16.gmra.mxu0 %v2272
      %v3218 = vpop.f32.mrf.mxu0
      %v3219 = vadd.f32 0.0, %v3218
      %v3220 = vpop.f32.mrf.mxu0
      %v3221 = vadd.f32 0.0, %v3220
      %3222 = vmatmul.bf16.gmra.mxu0 %v2275
      %v3223 = vpop.f32.mrf.mxu0
      %v3224 = vadd.f32 0.0, %v3223
      %v3225 = vpop.f32.mrf.mxu0
      %v3226 = vadd.f32 0.0, %v3225
      %3227 = vmatmul.bf16.gmra.mxu0 %v2278
      %v3228 = vpop.f32.mrf.mxu0
      %v3229 = vadd.f32 0.0, %v3228
      %v3230 = vpop.f32.mrf.mxu0
      %v3231 = vadd.f32 0.0, %v3230
      %3232 = vmatmul.bf16.gmra.mxu0 %v2281
      %v3233 = vpop.f32.mrf.mxu0
      %v3234 = vadd.f32 0.0, %v3233
      %v3235 = vpop.f32.mrf.mxu0
      %v3236 = vadd.f32 0.0, %v3235
      %3237 = vmatmul.bf16.gmra.mxu0 %v2284
      %v3238 = vpop.f32.mrf.mxu0
      %v3239 = vadd.f32 0.0, %v3238
      %v3240 = vpop.f32.mrf.mxu0
      %v3241 = vadd.f32 0.0, %v3240
      %3242 = vmatmul.bf16.gmra.mxu0 %v2287
      %v3243 = vpop.f32.mrf.mxu0
      %v3244 = vadd.f32 0.0, %v3243
      %v3245 = vpop.f32.mrf.mxu0
      %v3246 = vadd.f32 0.0, %v3245
      %3247 = vmatmul.bf16.gmra.mxu0 %v2290
      %v3248 = vpop.f32.mrf.mxu0
      %v3249 = vadd.f32 0.0, %v3248
      %v3250 = vpop.f32.mrf.mxu0
      %v3251 = vadd.f32 0.0, %v3250
      %3252 = vmatmul.bf16.gmra.mxu0 %v2293
      %v3253 = vpop.f32.mrf.mxu0
      %v3254 = vadd.f32 0.0, %v3253
      %v3255 = vpop.f32.mrf.mxu0
      %v3256 = vadd.f32 0.0, %v3255
      %3257 = vmatmul.bf16.gmra.mxu0 %v2296
      %v3258 = vpop.f32.mrf.mxu0
      %v3259 = vadd.f32 0.0, %v3258
      %v3260 = vpop.f32.mrf.mxu0
      %v3261 = vadd.f32 0.0, %v3260
      %3262 = vmatmul.bf16.gmra.mxu0 %v2299
      %v3263 = vpop.f32.mrf.mxu0
      %v3264 = vadd.f32 0.0, %v3263
      %v3265 = vpop.f32.mrf.mxu0
      %v3266 = vadd.f32 0.0, %v3265
      %3267 = vmatmul.bf16.gmra.mxu0 %v2302
      %v3268 = vpop.f32.mrf.mxu0
      %v3269 = vadd.f32 0.0, %v3268
      %v3270 = vpop.f32.mrf.mxu0
      %v3271 = vadd.f32 0.0, %v3270
      %3272 = vmatmul.bf16.gmra.mxu0 %v2305
      %v3273 = vpop.f32.mrf.mxu0
      %v3274 = vadd.f32 0.0, %v3273
      %v3275 = vpop.f32.mrf.mxu0
      %v3276 = vadd.f32 0.0, %v3275
      %3277 = vmatmul.bf16.gmra.mxu0 %v2308
      %v3278 = vpop.f32.mrf.mxu0
      %v3279 = vadd.f32 0.0, %v3278
      %v3280 = vpop.f32.mrf.mxu0
      %v3281 = vadd.f32 0.0, %v3280
      %3282 = vmatmul.bf16.gmra.mxu0 %v2311
      %v3283 = vpop.f32.mrf.mxu0
      %v3284 = vadd.f32 0.0, %v3283
      %v3285 = vpop.f32.mrf.mxu0
      %v3286 = vadd.f32 0.0, %v3285
      %3287 = vmatmul.bf16.gmra.mxu0 %v2314
      %v3288 = vpop.f32.mrf.mxu0
      %v3289 = vadd.f32 0.0, %v3288
      %v3290 = vpop.f32.mrf.mxu0
      %v3291 = vadd.f32 0.0, %v3290
      %3292 = vmatmul.bf16.gmra.mxu0 %v2317
      %v3293 = vpop.f32.mrf.mxu0
      %v3294 = vadd.f32 0.0, %v3293
      %v3295 = vpop.f32.mrf.mxu0
      %v3296 = vadd.f32 0.0, %v3295
      %3297 = vmatmul.bf16.gmra.mxu0 %v2320
      %v3298 = vpop.f32.mrf.mxu0
      %v3299 = vadd.f32 0.0, %v3298
      %v3300 = vpop.f32.mrf.mxu0
      %v3301 = vadd.f32 0.0, %v3300
      %3302 = vmatmul.bf16.gmra.mxu0 %v2323
      %v3303 = vpop.f32.mrf.mxu0
      %v3304 = vadd.f32 0.0, %v3303
      %v3305 = vpop.f32.mrf.mxu0
      %v3306 = vadd.f32 0.0, %v3305
      %3307 = vmatmul.bf16.gmra.mxu0 %v2326
      %v3308 = vpop.f32.mrf.mxu0
      %v3309 = vadd.f32 0.0, %v3308
      %v3310 = vpop.f32.mrf.mxu0
      %v3311 = vadd.f32 0.0, %v3310
      %3312 = vmatmul.bf16.gmra.mxu0 %v2329
      %v3313 = vpop.f32.mrf.mxu0
      %v3314 = vadd.f32 0.0, %v3313
      %v3315 = vpop.f32.mrf.mxu0
      %v3316 = vadd.f32 0.0, %v3315
      %3317 = vmatmul.bf16.gmra.mxu0 %v2332
      %v3318 = vpop.f32.mrf.mxu0
      %v3319 = vadd.f32 0.0, %v3318
      %v3320 = vpop.f32.mrf.mxu0
      %v3321 = vadd.f32 0.0, %v3320
      %3322 = vmatmul.bf16.gmra.mxu0 %v2335
      %v3323 = vpop.f32.mrf.mxu0
      %v3324 = vadd.f32 0.0, %v3323
      %v3325 = vpop.f32.mrf.mxu0
      %v3326 = vadd.f32 0.0, %v3325
      %3327 = vmatmul.bf16.gmra.mxu0 %v2338
      %v3328 = vpop.f32.mrf.mxu0
      %v3329 = vadd.f32 0.0, %v3328
      %v3330 = vpop.f32.mrf.mxu0
      %v3331 = vadd.f32 0.0, %v3330
      %3332 = vmatmul.bf16.gmra.mxu0 %v2341
      %v3333 = vpop.f32.mrf.mxu0
      %v3334 = vadd.f32 0.0, %v3333
      %v3335 = vpop.f32.mrf.mxu0
      %v3336 = vadd.f32 0.0, %v3335
      %3337 = vmatmul.bf16.gmra.mxu0 %v2344
      %v3338 = vpop.f32.mrf.mxu0
      %v3339 = vadd.f32 0.0, %v3338
      %v3340 = vpop.f32.mrf.mxu0
      %v3341 = vadd.f32 0.0, %v3340
      %3342 = vmatmul.bf16.gmra.mxu0 %v2347
      %v3343 = vpop.f32.mrf.mxu0
      %v3344 = vadd.f32 0.0, %v3343
      %v3345 = vpop.f32.mrf.mxu0
      %v3346 = vadd.f32 0.0, %v3345
      %3347 = vmatmul.bf16.gmra.mxu0 %v2350
      %v3348 = vpop.f32.mrf.mxu0
      %v3349 = vadd.f32 0.0, %v3348
      %v3350 = vpop.f32.mrf.mxu0
      %v3351 = vadd.f32 0.0, %v3350
      %3352 = vmatmul.bf16.gmra.mxu0 %v2353
      %v3353 = vpop.f32.mrf.mxu0
      %v3354 = vadd.f32 0.0, %v3353
      %v3355 = vpop.f32.mrf.mxu0
      %v3356 = vadd.f32 0.0, %v3355
      %3357 = vmatmul.bf16.gmra.mxu0 %v2356
      %v3358 = vpop.f32.mrf.mxu0
      %v3359 = vadd.f32 0.0, %v3358
      %v3360 = vpop.f32.mrf.mxu0
      %v3361 = vadd.f32 0.0, %v3360
      %3362 = vmatmul.bf16.gmra.mxu0 %v2359
      %v3363 = vpop.f32.mrf.mxu0
      %v3364 = vadd.f32 0.0, %v3363
      %v3365 = vpop.f32.mrf.mxu0
      %v3366 = vadd.f32 0.0, %v3365
      %3367 = vmatmul.bf16.gmra.mxu0 %v2362
      %v3368 = vpop.f32.mrf.mxu0
      %v3369 = vadd.f32 0.0, %v3368
      %v3370 = vpop.f32.mrf.mxu0
      %v3371 = vadd.f32 0.0, %v3370
      %3372 = vmatmul.bf16.gmra.mxu0 %v2365
      %v3373 = vpop.f32.mrf.mxu0
      %v3374 = vadd.f32 0.0, %v3373
      %v3375 = vpop.f32.mrf.mxu0
      %v3376 = vadd.f32 0.0, %v3375
      %3377 = vmatmul.bf16.gmra.mxu0 %v2368
      %v3378 = vpop.f32.mrf.mxu0
      %v3379 = vadd.f32 0.0, %v3378
      %v3380 = vpop.f32.mrf.mxu0
      %v3381 = vadd.f32 0.0, %v3380
      %3382 = vmatmul.bf16.gmra.mxu0 %v2371
      %v3383 = vpop.f32.mrf.mxu0
      %v3384 = vadd.f32 0.0, %v3383
      %v3385 = vpop.f32.mrf.mxu0
      %v3386 = vadd.f32 0.0, %v3385
      %3387 = vmatmul.bf16.gmra.mxu0 %v2374
      %v3388 = vpop.f32.mrf.mxu0
      %v3389 = vadd.f32 0.0, %v3388
      %v3390 = vpop.f32.mrf.mxu0
      %v3391 = vadd.f32 0.0, %v3390
      %3392 = vmatmul.bf16.gmra.mxu0 %v2377
      %v3393 = vpop.f32.mrf.mxu0
      %v3394 = vadd.f32 0.0, %v3393
      %v3395 = vpop.f32.mrf.mxu0
      %v3396 = vadd.f32 0.0, %v3395
      %3397 = vmatmul.bf16.gmra.mxu0 %v2380
      %v3398 = vpop.f32.mrf.mxu0
      %v3399 = vadd.f32 0.0, %v3398
      %v3400 = vpop.f32.mrf.mxu0
      %v3401 = vadd.f32 0.0, %v3400
      %3402 = vmatmul.bf16.gmra.mxu0 %v2383
      %v3403 = vpop.f32.mrf.mxu0
      %v3404 = vadd.f32 0.0, %v3403
      %v3405 = vpop.f32.mrf.mxu0
      %v3406 = vadd.f32 0.0, %v3405
      %3407 = vmatmul.bf16.gmra.mxu0 %v2386
      %v3408 = vpop.f32.mrf.mxu0
      %v3409 = vadd.f32 0.0, %v3408
      %v3410 = vpop.f32.mrf.mxu0
      %v3411 = vadd.f32 0.0, %v3410
      %3412 = vmatmul.bf16.gmra.mxu0 %v2389
      %v3413 = vpop.f32.mrf.mxu0
      %v3414 = vadd.f32 0.0, %v3413
      %v3415 = vpop.f32.mrf.mxu0
      %v3416 = vadd.f32 0.0, %v3415
      %3417 = vmatmul.bf16.gmra.mxu0 %v2392
      %v3418 = vpop.f32.mrf.mxu0
      %v3419 = vadd.f32 0.0, %v3418
      %v3420 = vpop.f32.mrf.mxu0
      %v3421 = vadd.f32 0.0, %v3420
      %3422 = vmatmul.bf16.gmra.mxu0 %v2395
      %v3423 = vpop.f32.mrf.mxu0
      %v3424 = vadd.f32 0.0, %v3423
      %v3425 = vpop.f32.mrf.mxu0
      %v3426 = vadd.f32 0.0, %v3425
      %3427 = vmatmul.bf16.gmra.mxu0 %v2398
      %v3428 = vpop.f32.mrf.mxu0
      %v3429 = vadd.f32 0.0, %v3428
      %v3430 = vpop.f32.mrf.mxu0
      %v3431 = vadd.f32 0.0, %v3430
      %3432 = vmatmul.bf16.gmra.mxu0 %v2401
      %v3433 = vpop.f32.mrf.mxu0
      %v3434 = vadd.f32 0.0, %v3433
      %v3435 = vpop.f32.mrf.mxu0
      %v3436 = vadd.f32 0.0, %v3435
      %3437 = vmatmul.bf16.gmra.mxu0 %v2404
      %v3438 = vpop.f32.mrf.mxu0
      %v3439 = vadd.f32 0.0, %v3438
      %v3440 = vpop.f32.mrf.mxu0
      %v3441 = vadd.f32 0.0, %v3440
      %3442 = vmatmul.bf16.gmra.mxu0 %v2407
      %v3443 = vpop.f32.mrf.mxu0
      %v3444 = vadd.f32 0.0, %v3443
      %v3445 = vpop.f32.mrf.mxu0
      %v3446 = vadd.f32 0.0, %v3445
      %3447 = vmatmul.bf16.gmra.mxu0 %v2410
      %v3448 = vpop.f32.mrf.mxu0
      %v3449 = vadd.f32 0.0, %v3448
      %v3450 = vpop.f32.mrf.mxu0
      %v3451 = vadd.f32 0.0, %v3450
      %3452 = vmatmul.bf16.gmra.mxu0 %v2413
      %v3453 = vpop.f32.mrf.mxu0
      %v3454 = vadd.f32 0.0, %v3453
      %v3455 = vpop.f32.mrf.mxu0
      %v3456 = vadd.f32 0.0, %v3455
      %3457 = vmatmul.bf16.gmra.mxu0 %v2416
      %v3458 = vpop.f32.mrf.mxu0
      %v3459 = vadd.f32 0.0, %v3458
      %v3460 = vpop.f32.mrf.mxu0
      %v3461 = vadd.f32 0.0, %v3460
      %3462 = vmatmul.bf16.gmra.mxu0 %v2419
      %v3463 = vpop.f32.mrf.mxu0
      %v3464 = vadd.f32 0.0, %v3463
      %v3465 = vpop.f32.mrf.mxu0
      %v3466 = vadd.f32 0.0, %v3465
      %3467 = vmatmul.bf16.gmra.mxu0 %v2422
      %v3468 = vpop.f32.mrf.mxu0
      %v3469 = vadd.f32 0.0, %v3468
      %v3470 = vpop.f32.mrf.mxu0
      %v3471 = vadd.f32 0.0, %v3470
      %3472 = vmatmul.bf16.gmra.mxu0 %v2425
      %v3473 = vpop.f32.mrf.mxu0
      %v3474 = vadd.f32 0.0, %v3473
      %v3475 = vpop.f32.mrf.mxu0
      %v3476 = vadd.f32 0.0, %v3475
      %3477 = vmatmul.bf16.gmra.mxu0 %v2428
      %v3478 = vpop.f32.mrf.mxu0
      %v3479 = vadd.f32 0.0, %v3478
      %v3480 = vpop.f32.mrf.mxu0
      %v3481 = vadd.f32 0.0, %v3480
      %3482 = vmatmul.bf16.gmra.mxu0 %v2431
      %v3483 = vpop.f32.mrf.mxu0
      %v3484 = vadd.f32 0.0, %v3483
      %v3485 = vpop.f32.mrf.mxu0
      %v3486 = vadd.f32 0.0, %v3485
      %3487 = vmatmul.bf16.gmra.mxu0 %v2434
      %v3488 = vpop.f32.mrf.mxu0
      %v3489 = vadd.f32 0.0, %v3488
      %v3490 = vpop.f32.mrf.mxu0
      %v3491 = vadd.f32 0.0, %v3490
      %3492 = vmatmul.bf16.gmra.mxu0 %v2437
      %v3493 = vpop.f32.mrf.mxu0
      %v3494 = vadd.f32 0.0, %v3493
      %v3495 = vpop.f32.mrf.mxu0
      %v3496 = vadd.f32 0.0, %v3495
      %3497 = vmatmul.bf16.gmra.mxu0 %v2440
      %v3498 = vpop.f32.mrf.mxu0
      %v3499 = vadd.f32 0.0, %v3498
      %v3500 = vpop.f32.mrf.mxu0
      %v3501 = vadd.f32 0.0, %v3500
      %3502 = vmatmul.bf16.gmra.mxu0 %v2443
      %v3503 = vpop.f32.mrf.mxu0
      %v3504 = vadd.f32 0.0, %v3503
      %v3505 = vpop.f32.mrf.mxu0
      %v3506 = vadd.f32 0.0, %v3505
      %3507 = vmatmul.bf16.gmra.mxu0 %v2446
      %v3508 = vpop.f32.mrf.mxu0
      %v3509 = vadd.f32 0.0, %v3508
      %v3510 = vpop.f32.mrf.mxu0
      %v3511 = vadd.f32 0.0, %v3510
      %3512 = vmatmul.bf16.gmra.mxu0 %v2449
      %v3513 = vpop.f32.mrf.mxu0
      %v3514 = vadd.f32 0.0, %v3513
      %v3515 = vpop.f32.mrf.mxu0
      %v3516 = vadd.f32 0.0, %v3515
      %3517 = vmatmul.bf16.gmra.mxu0 %v2452
      %v3518 = vpop.f32.mrf.mxu0
      %v3519 = vadd.f32 0.0, %v3518
      %v3520 = vpop.f32.mrf.mxu0
      %v3521 = vadd.f32 0.0, %v3520
      %3522 = vmatmul.bf16.gmra.mxu0 %v2455
      %v3523 = vpop.f32.mrf.mxu0
      %v3524 = vadd.f32 0.0, %v3523
      %v3525 = vpop.f32.mrf.mxu0
      %v3526 = vadd.f32 0.0, %v3525
      %3527 = vmatmul.bf16.gmra.mxu0 %v2458
      %v3528 = vpop.f32.mrf.mxu0
      %v3529 = vadd.f32 0.0, %v3528
      %v3530 = vpop.f32.mrf.mxu0
      %v3531 = vadd.f32 0.0, %v3530
      %3532 = vmatmul.bf16.gmra.mxu0 %v2461
      %v3533 = vpop.f32.mrf.mxu0
      %v3534 = vadd.f32 0.0, %v3533
      %v3535 = vpop.f32.mrf.mxu0
      %v3536 = vadd.f32 0.0, %v3535
      %3537 = vmatmul.bf16.gmra.mxu0 %v2464
      %v3538 = vpop.f32.mrf.mxu0
      %v3539 = vadd.f32 0.0, %v3538
      %v3540 = vpop.f32.mrf.mxu0
      %v3541 = vadd.f32 0.0, %v3540
      %3542 = vmatmul.bf16.gmra.mxu0 %v2467
      %v3543 = vpop.f32.mrf.mxu0
      %v3544 = vadd.f32 0.0, %v3543
      %v3545 = vpop.f32.mrf.mxu0
      %v3546 = vadd.f32 0.0, %v3545
      %3547 = vmatmul.bf16.gmra.mxu0 %v2470
      %v3548 = vpop.f32.mrf.mxu0
      %v3549 = vadd.f32 0.0, %v3548
      %v3550 = vpop.f32.mrf.mxu0
      %v3551 = vadd.f32 0.0, %v3550
      %3552 = vmatmul.bf16.gmra.mxu0 %v2473
      %v3553 = vpop.f32.mrf.mxu0
      %v3554 = vadd.f32 0.0, %v3553
      %v3555 = vpop.f32.mrf.mxu0
      %v3556 = vadd.f32 0.0, %v3555
      %3557 = vmatmul.bf16.gmra.mxu0 %v2476
      %v3558 = vpop.f32.mrf.mxu0
      %v3559 = vadd.f32 0.0, %v3558
      %v3560 = vpop.f32.mrf.mxu0
      %v3561 = vadd.f32 0.0, %v3560
      %3562 = vmatmul.bf16.gmra.mxu0 %v2479
      %v3563 = vpop.f32.mrf.mxu0
      %v3564 = vadd.f32 0.0, %v3563
      %v3565 = vpop.f32.mrf.mxu0
      %v3566 = vadd.f32 0.0, %v3565
      %3567 = vmatmul.bf16.gmra.mxu0 %v2482
      %v3568 = vpop.f32.mrf.mxu0
      %v3569 = vadd.f32 0.0, %v3568
      %v3570 = vpop.f32.mrf.mxu0
      %v3571 = vadd.f32 0.0, %v3570
      %3572 = vmatmul.bf16.gmra.mxu0 %v2485
      %v3573 = vpop.f32.mrf.mxu0
      %v3574 = vadd.f32 0.0, %v3573
      %v3575 = vpop.f32.mrf.mxu0
      %v3576 = vadd.f32 0.0, %v3575
      %3577 = vmatmul.bf16.gmra.mxu0 %v2488
      %v3578 = vpop.f32.mrf.mxu0
      %v3579 = vadd.f32 0.0, %v3578
      %v3580 = vpop.f32.mrf.mxu0
      %v3581 = vadd.f32 0.0, %v3580
      %3582 = vmatmul.bf16.gmra.mxu0 %v2491
      %v3583 = vpop.f32.mrf.mxu0
      %v3584 = vadd.f32 0.0, %v3583
      %v3585 = vpop.f32.mrf.mxu0
      %v3586 = vadd.f32 0.0, %v3585
      %3587 = vmatmul.bf16.gmra.mxu0 %v2494
      %v3588 = vpop.f32.mrf.mxu0
      %v3589 = vadd.f32 0.0, %v3588
      %v3590 = vpop.f32.mrf.mxu0
      %v3591 = vadd.f32 0.0, %v3590
      %3592 = vmatmul.bf16.gmra.mxu0 %v2497
      %v3593 = vpop.f32.mrf.mxu0
      %v3594 = vadd.f32 0.0, %v3593
      %v3595 = vpop.f32.mrf.mxu0
      %v3596 = vadd.f32 0.0, %v3595
      %3597 = vmatmul.bf16.gmra.mxu0 %v2500
      %v3598 = vpop.f32.mrf.mxu0
      %v3599 = vadd.f32 0.0, %v3598
      %v3600 = vpop.f32.mrf.mxu0
      %v3601 = vadd.f32 0.0, %v3600
      %3602 = vmatmul.bf16.gmra.mxu0 %v2503
      %v3603 = vpop.f32.mrf.mxu0
      %v3604 = vadd.f32 0.0, %v3603
      %v3605 = vpop.f32.mrf.mxu0
      %v3606 = vadd.f32 0.0, %v3605
      %3607 = vmatmul.bf16.gmra.mxu0 %v2506
      %v3608 = vpop.f32.mrf.mxu0
      %v3609 = vadd.f32 0.0, %v3608
      %v3610 = vpop.f32.mrf.mxu0
      %v3611 = vadd.f32 0.0, %v3610
      %3612 = vmatmul.bf16.gmra.mxu0 %v2509
      %v3613 = vpop.f32.mrf.mxu0
      %v3614 = vadd.f32 0.0, %v3613
      %v3615 = vpop.f32.mrf.mxu0
      %v3616 = vadd.f32 0.0, %v3615
      %3617 = vmatmul.bf16.gmra.mxu0 %v2512
      %v3618 = vpop.f32.mrf.mxu0
      %v3619 = vadd.f32 0.0, %v3618
      %v3620 = vpop.f32.mrf.mxu0
      %v3621 = vadd.f32 0.0, %v3620
      %3622 = vmatmul.bf16.gmra.mxu0 %v2515
      %v3623 = vpop.f32.mrf.mxu0
      %v3624 = vadd.f32 0.0, %v3623
      %v3625 = vpop.f32.mrf.mxu0
      %v3626 = vadd.f32 0.0, %v3625
      %3627 = vmatmul.bf16.gmra.mxu0 %v2518
      %v3628 = vpop.f32.mrf.mxu0
      %v3629 = vadd.f32 0.0, %v3628
      %v3630 = vpop.f32.mrf.mxu0
      %v3631 = vadd.f32 0.0, %v3630
      %3632 = vmatmul.bf16.gmra.mxu0 %v2521
      %v3633 = vpop.f32.mrf.mxu0
      %v3634 = vadd.f32 0.0, %v3633
      %v3635 = vpop.f32.mrf.mxu0
      %v3636 = vadd.f32 0.0, %v3635
      %3637 = vmatmul.bf16.gmra.mxu0 %v2524
      %v3638 = vpop.f32.mrf.mxu0
      %v3639 = vadd.f32 0.0, %v3638
      %v3640 = vpop.f32.mrf.mxu0
      %v3641 = vadd.f32 0.0, %v3640
      %3642 = vmatmul.bf16.gmra.mxu0 %v2527
      %v3643 = vpop.f32.mrf.mxu0
      %v3644 = vadd.f32 0.0, %v3643
      %v3645 = vpop.f32.mrf.mxu0
      %v3646 = vadd.f32 0.0, %v3645
      %3647 = vmatmul.bf16.gmra.mxu0 %v2530
      %v3648 = vpop.f32.mrf.mxu0
      %v3649 = vadd.f32 0.0, %v3648
      %v3650 = vpop.f32.mrf.mxu0
      %v3651 = vadd.f32 0.0, %v3650
      %3652 = vmatmul.bf16.gmra.mxu0 %v2533
      %v3653 = vpop.f32.mrf.mxu0
      %v3654 = vadd.f32 0.0, %v3653
      %v3655 = vpop.f32.mrf.mxu0
      %v3656 = vadd.f32 0.0, %v3655
      %3657 = vmatmul.bf16.gmra.mxu0 %v2536
      %v3658 = vpop.f32.mrf.mxu0
      %v3659 = vadd.f32 0.0, %v3658
      %v3660 = vpop.f32.mrf.mxu0
      %v3661 = vadd.f32 0.0, %v3660
      %3662 = vmatmul.bf16.gmra.mxu0 %v2539
      %v3663 = vpop.f32.mrf.mxu0
      %v3664 = vadd.f32 0.0, %v3663
      %v3665 = vpop.f32.mrf.mxu0
      %v3666 = vadd.f32 0.0, %v3665
      %3667 = vmatmul.bf16.gmra.mxu0 %v2542
      %v3668 = vpop.f32.mrf.mxu0
      %v3669 = vadd.f32 0.0, %v3668
      %v3670 = vpop.f32.mrf.mxu0
      %v3671 = vadd.f32 0.0, %v3670
      %3672 = vmatmul.bf16.gmra.mxu0 %v2545
      %v3673 = vpop.f32.mrf.mxu0
      %v3674 = vadd.f32 0.0, %v3673
      %v3675 = vpop.f32.mrf.mxu0
      %v3676 = vadd.f32 0.0, %v3675
      %3677 = vmatmul.bf16.gmra.mxu0 %v2548
      %v3678 = vpop.f32.mrf.mxu0
      %v3679 = vadd.f32 0.0, %v3678
      %v3680 = vpop.f32.mrf.mxu0
      %v3681 = vadd.f32 0.0, %v3680
      %3682 = vmatmul.bf16.gmra.mxu0 %v2551
      %v3683 = vpop.f32.mrf.mxu0
      %v3684 = vadd.f32 0.0, %v3683
      %v3685 = vpop.f32.mrf.mxu0
      %v3686 = vadd.f32 0.0, %v3685
      %3687 = vmatmul.bf16.gmra.mxu0 %v2554
      %v3688 = vpop.f32.mrf.mxu0
      %v3689 = vadd.f32 0.0, %v3688
      %v3690 = vpop.f32.mrf.mxu0
      %v3691 = vadd.f32 0.0, %v3690
      %3692 = vmatmul.bf16.gmra.mxu0 %v2557
      %v3693 = vpop.f32.mrf.mxu0
      %v3694 = vadd.f32 0.0, %v3693
      %v3695 = vpop.f32.mrf.mxu0
      %v3696 = vadd.f32 0.0, %v3695
      %3697 = vmatmul.bf16.gmra.mxu0 %v2560
      %v3698 = vpop.f32.mrf.mxu0
      %v3699 = vadd.f32 0.0, %v3698
      %v3700 = vpop.f32.mrf.mxu0
      %v3701 = vadd.f32 0.0, %v3700
      %3702 = vmatmul.bf16.gmra.mxu0 %v2563
      %v3703 = vpop.f32.mrf.mxu0
      %v3704 = vadd.f32 0.0, %v3703
      %v3705 = vpop.f32.mrf.mxu0
      %v3706 = vadd.f32 0.0, %v3705
      %3707 = vmatmul.bf16.gmra.mxu0 %v2566
      %v3708 = vpop.f32.mrf.mxu0
      %v3709 = vadd.f32 0.0, %v3708
      %v3710 = vpop.f32.mrf.mxu0
      %v3711 = vadd.f32 0.0, %v3710
      %3712 = vdwg.mxu0
      %v3717 = vunpack.c.l.b16 %v1321
      %v3718 = vunpack.c.h.b16 %v1321
      %v3719 = vunpack.c.l.b16 %v1322
      %v3720 = vunpack.c.h.b16 %v1322
      %v3721 = vunpack.c.l.b16 %v1323
      %v3722 = vunpack.c.h.b16 %v1323
      %v3723 = vunpack.c.l.b16 %v1324
      %v3724 = vunpack.c.h.b16 %v1324
      %v3725 = vpack.c.b16 %v3719, %v3717
      %v3726 = vpack.c.b16 %v3720, %v3718
      %v3727 = vpack.c.b16 %v3723, %v3721
      %v3728 = vpack.c.b16 %v3724, %v3722
      %v3732 = vsel %vm2231, %v1216, 0
      %v3735 = vsel %vm2231, %v1217, 0
      %v3738 = vsel %vm2231, %v1218, 0
      %v3741 = vsel %vm2231, %v1219, 0
      %v3744 = vsel %vm2231, %v1220, 0
      %v3747 = vsel %vm2231, %v1221, 0
      %v3750 = vsel %vm2231, %v1222, 0
      %v3753 = vsel %vm2231, %v1223, 0
      %v3756 = vsel %vm2231, %v1224, 0
      %v3759 = vsel %vm2231, %v1225, 0
      %v3762 = vsel %vm2231, %v1226, 0
      %v3765 = vsel %vm2231, %v1227, 0
      %v3768 = vsel %vm2231, %v1228, 0
      %v3771 = vsel %vm2231, %v1229, 0
      %v3774 = vsel %vm2231, %v1230, 0
      %v3777 = vsel %vm2231, %v1231, 0
      %v3780 = vsel %vm2231, %v1232, 0
      %v3783 = vsel %vm2231, %v1233, 0
      %v3786 = vsel %vm2231, %v1234, 0
      %v3789 = vsel %vm2231, %v1235, 0
      %v3792 = vsel %vm2231, %v1236, 0
      %v3795 = vsel %vm2231, %v1237, 0
      %v3798 = vsel %vm2231, %v1238, 0
      %v3801 = vsel %vm2231, %v1239, 0
      %v3804 = vsel %vm2231, %v1240, 0
      %v3807 = vsel %vm2231, %v1241, 0
      %v3810 = vsel %vm2231, %v1242, 0
      %v3813 = vsel %vm2231, %v1243, 0
      %v3816 = vsel %vm2231, %v1244, 0
      %v3819 = vsel %vm2231, %v1245, 0
      %v3822 = vsel %vm2231, %v1246, 0
      %v3825 = vsel %vm2231, %v1247, 0
      %v3828 = vsel %vm2231, %v1248, 0
      %v3831 = vsel %vm2231, %v1249, 0
      %v3834 = vsel %vm2231, %v1250, 0
      %v3837 = vsel %vm2231, %v1251, 0
      %v3840 = vsel %vm2231, %v1252, 0
      %v3843 = vsel %vm2231, %v1253, 0
      %v3846 = vsel %vm2231, %v1254, 0
      %v3849 = vsel %vm2231, %v1255, 0
      %v3852 = vsel %vm2231, %v1256, 0
      %v3855 = vsel %vm2231, %v1257, 0
      %v3858 = vsel %vm2231, %v1258, 0
      %v3861 = vsel %vm2231, %v1259, 0
      %v3864 = vsel %vm2231, %v1260, 0
      %v3867 = vsel %vm2231, %v1261, 0
      %v3870 = vsel %vm2231, %v1262, 0
      %v3873 = vsel %vm2231, %v1263, 0
      %v3876 = vsel %vm2231, %v1264, 0
      %v3879 = vsel %vm2231, %v1265, 0
      %v3882 = vsel %vm2231, %v1266, 0
      %v3885 = vsel %vm2231, %v1267, 0
      %v3888 = vsel %vm2231, %v1268, 0
      %v3891 = vsel %vm2231, %v1269, 0
      %v3894 = vsel %vm2231, %v1270, 0
      %v3897 = vsel %vm2231, %v1271, 0
      %v3900 = vsel %vm2231, %v1272, 0
      %v3903 = vsel %vm2231, %v1273, 0
      %v3906 = vsel %vm2231, %v1274, 0
      %v3909 = vsel %vm2231, %v1275, 0
      %v3912 = vsel %vm2231, %v1276, 0
      %v3915 = vsel %vm2231, %v1277, 0
      %v3918 = vsel %vm2231, %v1278, 0
      %v3921 = vsel %vm2231, %v1279, 0
      %v3924 = vsel %vm2231, %v1280, 0
      %v3927 = vsel %vm2231, %v1281, 0
      %v3930 = vsel %vm2231, %v1282, 0
      %v3933 = vsel %vm2231, %v1283, 0
      %v3936 = vsel %vm2231, %v1284, 0
      %v3939 = vsel %vm2231, %v1285, 0
      %v3942 = vsel %vm2231, %v1286, 0
      %v3945 = vsel %vm2231, %v1287, 0
      %v3948 = vsel %vm2231, %v1288, 0
      %v3951 = vsel %vm2231, %v1289, 0
      %v3954 = vsel %vm2231, %v1290, 0
      %v3957 = vsel %vm2231, %v1291, 0
      %v3960 = vsel %vm2231, %v1292, 0
      %v3963 = vsel %vm2231, %v1293, 0
      %v3966 = vsel %vm2231, %v1294, 0
      %v3969 = vsel %vm2231, %v1295, 0
      %v3972 = vsel %vm2231, %v1296, 0
      %v3975 = vsel %vm2231, %v1297, 0
      %v3978 = vsel %vm2231, %v1298, 0
      %v3981 = vsel %vm2231, %v1299, 0
      %v3984 = vsel %vm2231, %v1300, 0
      %v3987 = vsel %vm2231, %v1301, 0
      %v3990 = vsel %vm2231, %v1302, 0
      %v3993 = vsel %vm2231, %v1303, 0
      %v3996 = vsel %vm2231, %v1304, 0
      %v3999 = vsel %vm2231, %v1305, 0
      %v4002 = vsel %vm2231, %v1306, 0
      %v4005 = vsel %vm2231, %v1307, 0
      %v4008 = vsel %vm2231, %v1308, 0
      %v4011 = vsel %vm2231, %v1309, 0
      %v4014 = vsel %vm2231, %v1310, 0
      %v4017 = vsel %vm2231, %v1311, 0
      %v4020 = vsel %vm2231, %v1312, 0
      %v4023 = vsel %vm2231, %v1313, 0
      %v4026 = vsel %vm2231, %v1314, 0
      %v4029 = vsel %vm2231, %v1315, 0
      %v4032 = vsel %vm2231, %v1316, 0
      %v4035 = vsel %vm2231, %v1317, 0
      %v4038 = vsel %vm2231, %v1318, 0
      %v4041 = vsel %vm2231, %v1319, 0
      %v4044 = vsel %vm2231, %v1320, 0
      %v4047 = vsel %vm2568, %v3727, 0
      %v4050 = vsel %vm2568, %v3728, 0
      %4052 = vmatpush.bf16.msra.mxu0 0
      %4053 = vmatpush.bf16.msra.mxu0 0
      %4054 = vmatpush.bf16.msra.mxu0 0
      %4055 = vmatpush.bf16.msra.mxu0 0
      %4056 = vmatpush.bf16.msra.mxu0 0
      %4057 = vmatpush.bf16.msra.mxu0 0
      %4058 = vmatpush.bf16.msra.mxu0 %v4047
      %4059 = vmatpush.bf16.msra.mxu0 %v3725
      %4060 = vmatmul.bf16.gmra.mxu0 %v3732
      %v4061 = vpop.f32.mrf.mxu0
      %v4062 = vadd.f32 %v2585, %v4061
      %v4063 = vpop.f32.mrf.mxu0
      %v4064 = vadd.f32 %v2587, %v4063
      %4065 = vmatmul.bf16.gmra.mxu0 %v3732
      %v4066 = vpop.f32.mrf.mxu0
      %v4067 = vadd.f32 %v2590, %v4066
      %v4068 = vpop.f32.mrf.mxu0
      %v4069 = vadd.f32 %v2592, %v4068
      %4070 = vmatmul.bf16.gmra.mxu0 %v3732
      %v4071 = vpop.f32.mrf.mxu0
      %v4072 = vadd.f32 %v2595, %v4071
      %v4073 = vpop.f32.mrf.mxu0
      %v4074 = vadd.f32 %v2597, %v4073
      %4075 = vmatmul.bf16.gmra.mxu0 %v3732
      %v4076 = vpop.f32.mrf.mxu0
      %v4077 = vadd.f32 %v2600, %v4076
      %v4078 = vpop.f32.mrf.mxu0
      %v4079 = vadd.f32 %v2602, %v4078
      %4080 = vmatmul.bf16.gmra.mxu0 %v3732
      %v4081 = vpop.f32.mrf.mxu0
      %v4082 = vadd.f32 %v2605, %v4081
      %v4083 = vpop.f32.mrf.mxu0
      %v4084 = vadd.f32 %v2607, %v4083
      %4085 = vmatmul.bf16.gmra.mxu0 %v3732
      %v4086 = vpop.f32.mrf.mxu0
      %v4087 = vadd.f32 %v2610, %v4086
      %v4088 = vpop.f32.mrf.mxu0
      %v4089 = vadd.f32 %v2612, %v4088
      %4090 = vmatmul.bf16.gmra.mxu0 %v3732
      %v4091 = vpop.f32.mrf.mxu0
      %v4092 = vadd.f32 %v2615, %v4091
      %v4093 = vpop.f32.mrf.mxu0
      %v4094 = vadd.f32 %v2617, %v4093
      %4095 = vmatmul.bf16.gmra.mxu0 %v3732
      %v4096 = vpop.f32.mrf.mxu0
      %v4097 = vadd.f32 %v2620, %v4096
      %v4098 = vpop.f32.mrf.mxu0
      %v4099 = vadd.f32 %v2622, %v4098
      %4100 = vmatmul.bf16.gmra.mxu0 %v3735
      %v4101 = vpop.f32.mrf.mxu0
      %v4102 = vadd.f32 %v2625, %v4101
      %v4103 = vpop.f32.mrf.mxu0
      %v4104 = vadd.f32 %v2627, %v4103
      %4105 = vmatmul.bf16.gmra.mxu0 %v3738
      %v4106 = vpop.f32.mrf.mxu0
      %v4107 = vadd.f32 %v2630, %v4106
      %v4108 = vpop.f32.mrf.mxu0
      %v4109 = vadd.f32 %v2632, %v4108
      %4110 = vmatmul.bf16.gmra.mxu0 %v3741
      %v4111 = vpop.f32.mrf.mxu0
      %v4112 = vadd.f32 %v2635, %v4111
      %v4113 = vpop.f32.mrf.mxu0
      %v4114 = vadd.f32 %v2637, %v4113
      %4115 = vmatmul.bf16.gmra.mxu0 %v3744
      %v4116 = vpop.f32.mrf.mxu0
      %v4117 = vadd.f32 %v2640, %v4116
      %v4118 = vpop.f32.mrf.mxu0
      %v4119 = vadd.f32 %v2642, %v4118
      %4120 = vmatmul.bf16.gmra.mxu0 %v3747
      %v4121 = vpop.f32.mrf.mxu0
      %v4122 = vadd.f32 %v2645, %v4121
      %v4123 = vpop.f32.mrf.mxu0
      %v4124 = vadd.f32 %v2647, %v4123
      %4125 = vmatmul.bf16.gmra.mxu0 %v3750
      %v4126 = vpop.f32.mrf.mxu0
      %v4127 = vadd.f32 %v2650, %v4126
      %v4128 = vpop.f32.mrf.mxu0
      %v4129 = vadd.f32 %v2652, %v4128
      %4130 = vmatmul.bf16.gmra.mxu0 %v3753
      %v4131 = vpop.f32.mrf.mxu0
      %v4132 = vadd.f32 %v2655, %v4131
      %v4133 = vpop.f32.mrf.mxu0
      %v4134 = vadd.f32 %v2657, %v4133
      %4135 = vmatmul.bf16.gmra.mxu0 %v3756
      %v4136 = vpop.f32.mrf.mxu0
      %v4137 = vadd.f32 %v2660, %v4136
      %v4138 = vpop.f32.mrf.mxu0
      %v4139 = vadd.f32 %v2662, %v4138
      %4140 = vmatmul.bf16.gmra.mxu0 %v3759
      %v4141 = vpop.f32.mrf.mxu0
      %v4142 = vadd.f32 %v2665, %v4141
      %v4143 = vpop.f32.mrf.mxu0
      %v4144 = vadd.f32 %v2667, %v4143
      %4145 = vmatmul.bf16.gmra.mxu0 %v3762
      %v4146 = vpop.f32.mrf.mxu0
      %v4147 = vadd.f32 %v2670, %v4146
      %v4148 = vpop.f32.mrf.mxu0
      %v4149 = vadd.f32 %v2672, %v4148
      %4150 = vmatmul.bf16.gmra.mxu0 %v3765
      %v4151 = vpop.f32.mrf.mxu0
      %v4152 = vadd.f32 %v2675, %v4151
      %v4153 = vpop.f32.mrf.mxu0
      %v4154 = vadd.f32 %v2677, %v4153
      %4155 = vmatmul.bf16.gmra.mxu0 %v3768
      %v4156 = vpop.f32.mrf.mxu0
      %v4157 = vadd.f32 %v2680, %v4156
      %v4158 = vpop.f32.mrf.mxu0
      %v4159 = vadd.f32 %v2682, %v4158
      %4160 = vmatmul.bf16.gmra.mxu0 %v3771
      %v4161 = vpop.f32.mrf.mxu0
      %v4162 = vadd.f32 %v2685, %v4161
      %v4163 = vpop.f32.mrf.mxu0
      %v4164 = vadd.f32 %v2687, %v4163
      %4165 = vmatmul.bf16.gmra.mxu0 %v3774
      %v4166 = vpop.f32.mrf.mxu0
      %v4167 = vadd.f32 %v2690, %v4166
      %v4168 = vpop.f32.mrf.mxu0
      %v4169 = vadd.f32 %v2692, %v4168
      %4170 = vmatmul.bf16.gmra.mxu0 %v3777
      %v4171 = vpop.f32.mrf.mxu0
      %v4172 = vadd.f32 %v2695, %v4171
      %v4173 = vpop.f32.mrf.mxu0
      %v4174 = vadd.f32 %v2697, %v4173
      %4175 = vmatmul.bf16.gmra.mxu0 %v3780
      %v4176 = vpop.f32.mrf.mxu0
      %v4177 = vadd.f32 %v2700, %v4176
      %v4178 = vpop.f32.mrf.mxu0
      %v4179 = vadd.f32 %v2702, %v4178
      %4180 = vmatmul.bf16.gmra.mxu0 %v3783
      %v4181 = vpop.f32.mrf.mxu0
      %v4182 = vadd.f32 %v2705, %v4181
      %v4183 = vpop.f32.mrf.mxu0
      %v4184 = vadd.f32 %v2707, %v4183
      %4185 = vmatmul.bf16.gmra.mxu0 %v3786
      %v4186 = vpop.f32.mrf.mxu0
      %v4187 = vadd.f32 %v2710, %v4186
      %v4188 = vpop.f32.mrf.mxu0
      %v4189 = vadd.f32 %v2712, %v4188
      %4190 = vmatmul.bf16.gmra.mxu0 %v3789
      %v4191 = vpop.f32.mrf.mxu0
      %v4192 = vadd.f32 %v2715, %v4191
      %v4193 = vpop.f32.mrf.mxu0
      %v4194 = vadd.f32 %v2717, %v4193
      %4195 = vmatmul.bf16.gmra.mxu0 %v3792
      %v4196 = vpop.f32.mrf.mxu0
      %v4197 = vadd.f32 %v2720, %v4196
      %v4198 = vpop.f32.mrf.mxu0
      %v4199 = vadd.f32 %v2722, %v4198
      %4200 = vmatmul.bf16.gmra.mxu0 %v3795
      %v4201 = vpop.f32.mrf.mxu0
      %v4202 = vadd.f32 %v2725, %v4201
      %v4203 = vpop.f32.mrf.mxu0
      %v4204 = vadd.f32 %v2727, %v4203
      %4205 = vmatmul.bf16.gmra.mxu0 %v3798
      %v4206 = vpop.f32.mrf.mxu0
      %v4207 = vadd.f32 %v2730, %v4206
      %v4208 = vpop.f32.mrf.mxu0
      %v4209 = vadd.f32 %v2732, %v4208
      %4210 = vmatmul.bf16.gmra.mxu0 %v3801
      %v4211 = vpop.f32.mrf.mxu0
      %v4212 = vadd.f32 %v2735, %v4211
      %v4213 = vpop.f32.mrf.mxu0
      %v4214 = vadd.f32 %v2737, %v4213
      %4215 = vmatmul.bf16.gmra.mxu0 %v3804
      %v4216 = vpop.f32.mrf.mxu0
      %v4217 = vadd.f32 %v2740, %v4216
      %v4218 = vpop.f32.mrf.mxu0
      %v4219 = vadd.f32 %v2742, %v4218
      %4220 = vmatmul.bf16.gmra.mxu0 %v3807
      %v4221 = vpop.f32.mrf.mxu0
      %v4222 = vadd.f32 %v2745, %v4221
      %v4223 = vpop.f32.mrf.mxu0
      %v4224 = vadd.f32 %v2747, %v4223
      %4225 = vmatmul.bf16.gmra.mxu0 %v3810
      %v4226 = vpop.f32.mrf.mxu0
      %v4227 = vadd.f32 %v2750, %v4226
      %v4228 = vpop.f32.mrf.mxu0
      %v4229 = vadd.f32 %v2752, %v4228
      %4230 = vmatmul.bf16.gmra.mxu0 %v3813
      %v4231 = vpop.f32.mrf.mxu0
      %v4232 = vadd.f32 %v2755, %v4231
      %v4233 = vpop.f32.mrf.mxu0
      %v4234 = vadd.f32 %v2757, %v4233
      %4235 = vmatmul.bf16.gmra.mxu0 %v3816
      %v4236 = vpop.f32.mrf.mxu0
      %v4237 = vadd.f32 %v2760, %v4236
      %v4238 = vpop.f32.mrf.mxu0
      %v4239 = vadd.f32 %v2762, %v4238
      %4240 = vmatmul.bf16.gmra.mxu0 %v3819
      %v4241 = vpop.f32.mrf.mxu0
      %v4242 = vadd.f32 %v2765, %v4241
      %v4243 = vpop.f32.mrf.mxu0
      %v4244 = vadd.f32 %v2767, %v4243
      %4245 = vmatmul.bf16.gmra.mxu0 %v3822
      %v4246 = vpop.f32.mrf.mxu0
      %v4247 = vadd.f32 %v2770, %v4246
      %v4248 = vpop.f32.mrf.mxu0
      %v4249 = vadd.f32 %v2772, %v4248
      %4250 = vmatmul.bf16.gmra.mxu0 %v3825
      %v4251 = vpop.f32.mrf.mxu0
      %v4252 = vadd.f32 %v2775, %v4251
      %v4253 = vpop.f32.mrf.mxu0
      %v4254 = vadd.f32 %v2777, %v4253
      %4255 = vmatmul.bf16.gmra.mxu0 %v3828
      %v4256 = vpop.f32.mrf.mxu0
      %v4257 = vadd.f32 %v2780, %v4256
      %v4258 = vpop.f32.mrf.mxu0
      %v4259 = vadd.f32 %v2782, %v4258
      %4260 = vmatmul.bf16.gmra.mxu0 %v3831
      %v4261 = vpop.f32.mrf.mxu0
      %v4262 = vadd.f32 %v2785, %v4261
      %v4263 = vpop.f32.mrf.mxu0
      %v4264 = vadd.f32 %v2787, %v4263
      %4265 = vmatmul.bf16.gmra.mxu0 %v3834
      %v4266 = vpop.f32.mrf.mxu0
      %v4267 = vadd.f32 %v2790, %v4266
      %v4268 = vpop.f32.mrf.mxu0
      %v4269 = vadd.f32 %v2792, %v4268
      %4270 = vmatmul.bf16.gmra.mxu0 %v3837
      %v4271 = vpop.f32.mrf.mxu0
      %v4272 = vadd.f32 %v2795, %v4271
      %v4273 = vpop.f32.mrf.mxu0
      %v4274 = vadd.f32 %v2797, %v4273
      %4275 = vmatmul.bf16.gmra.mxu0 %v3840
      %v4276 = vpop.f32.mrf.mxu0
      %v4277 = vadd.f32 %v2800, %v4276
      %v4278 = vpop.f32.mrf.mxu0
      %v4279 = vadd.f32 %v2802, %v4278
      %4280 = vmatmul.bf16.gmra.mxu0 %v3843
      %v4281 = vpop.f32.mrf.mxu0
      %v4282 = vadd.f32 %v2805, %v4281
      %v4283 = vpop.f32.mrf.mxu0
      %v4284 = vadd.f32 %v2807, %v4283
      %4285 = vmatmul.bf16.gmra.mxu0 %v3846
      %v4286 = vpop.f32.mrf.mxu0
      %v4287 = vadd.f32 %v2810, %v4286
      %v4288 = vpop.f32.mrf.mxu0
      %v4289 = vadd.f32 %v2812, %v4288
      %4290 = vmatmul.bf16.gmra.mxu0 %v3849
      %v4291 = vpop.f32.mrf.mxu0
      %v4292 = vadd.f32 %v2815, %v4291
      %v4293 = vpop.f32.mrf.mxu0
      %v4294 = vadd.f32 %v2817, %v4293
      %4295 = vmatmul.bf16.gmra.mxu0 %v3852
      %v4296 = vpop.f32.mrf.mxu0
      %v4297 = vadd.f32 %v2820, %v4296
      %v4298 = vpop.f32.mrf.mxu0
      %v4299 = vadd.f32 %v2822, %v4298
      %4300 = vmatmul.bf16.gmra.mxu0 %v3855
      %v4301 = vpop.f32.mrf.mxu0
      %v4302 = vadd.f32 %v2825, %v4301
      %v4303 = vpop.f32.mrf.mxu0
      %v4304 = vadd.f32 %v2827, %v4303
      %4305 = vmatmul.bf16.gmra.mxu0 %v3858
      %v4306 = vpop.f32.mrf.mxu0
      %v4307 = vadd.f32 %v2830, %v4306
      %v4308 = vpop.f32.mrf.mxu0
      %v4309 = vadd.f32 %v2832, %v4308
      %4310 = vmatmul.bf16.gmra.mxu0 %v3861
      %v4311 = vpop.f32.mrf.mxu0
      %v4312 = vadd.f32 %v2835, %v4311
      %v4313 = vpop.f32.mrf.mxu0
      %v4314 = vadd.f32 %v2837, %v4313
      %4315 = vmatmul.bf16.gmra.mxu0 %v3864
      %v4316 = vpop.f32.mrf.mxu0
      %v4317 = vadd.f32 %v2840, %v4316
      %v4318 = vpop.f32.mrf.mxu0
      %v4319 = vadd.f32 %v2842, %v4318
      %4320 = vmatmul.bf16.gmra.mxu0 %v3867
      %v4321 = vpop.f32.mrf.mxu0
      %v4322 = vadd.f32 %v2845, %v4321
      %v4323 = vpop.f32.mrf.mxu0
      %v4324 = vadd.f32 %v2847, %v4323
      %4325 = vmatmul.bf16.gmra.mxu0 %v3870
      %v4326 = vpop.f32.mrf.mxu0
      %v4327 = vadd.f32 %v2850, %v4326
      %v4328 = vpop.f32.mrf.mxu0
      %v4329 = vadd.f32 %v2852, %v4328
      %4330 = vmatmul.bf16.gmra.mxu0 %v3873
      %v4331 = vpop.f32.mrf.mxu0
      %v4332 = vadd.f32 %v2855, %v4331
      %v4333 = vpop.f32.mrf.mxu0
      %v4334 = vadd.f32 %v2857, %v4333
      %4335 = vmatmul.bf16.gmra.mxu0 %v3876
      %v4336 = vpop.f32.mrf.mxu0
      %v4337 = vadd.f32 %v2860, %v4336
      %v4338 = vpop.f32.mrf.mxu0
      %v4339 = vadd.f32 %v2862, %v4338
      %4340 = vmatmul.bf16.gmra.mxu0 %v3879
      %v4341 = vpop.f32.mrf.mxu0
      %v4342 = vadd.f32 %v2865, %v4341
      %v4343 = vpop.f32.mrf.mxu0
      %v4344 = vadd.f32 %v2867, %v4343
      %4345 = vmatmul.bf16.gmra.mxu0 %v3882
      %v4346 = vpop.f32.mrf.mxu0
      %v4347 = vadd.f32 %v2870, %v4346
      %v4348 = vpop.f32.mrf.mxu0
      %v4349 = vadd.f32 %v2872, %v4348
      %4350 = vmatmul.bf16.gmra.mxu0 %v3885
      %v4351 = vpop.f32.mrf.mxu0
      %v4352 = vadd.f32 %v2875, %v4351
      %v4353 = vpop.f32.mrf.mxu0
      %v4354 = vadd.f32 %v2877, %v4353
      %4355 = vmatmul.bf16.gmra.mxu0 %v3888
      %v4356 = vpop.f32.mrf.mxu0
      %v4357 = vadd.f32 %v2880, %v4356
      %v4358 = vpop.f32.mrf.mxu0
      %v4359 = vadd.f32 %v2882, %v4358
      %4360 = vmatmul.bf16.gmra.mxu0 %v3891
      %v4361 = vpop.f32.mrf.mxu0
      %v4362 = vadd.f32 %v2885, %v4361
      %v4363 = vpop.f32.mrf.mxu0
      %v4364 = vadd.f32 %v2887, %v4363
      %4365 = vmatmul.bf16.gmra.mxu0 %v3894
      %v4366 = vpop.f32.mrf.mxu0
      %v4367 = vadd.f32 %v2890, %v4366
      %v4368 = vpop.f32.mrf.mxu0
      %v4369 = vadd.f32 %v2892, %v4368
      %4370 = vmatmul.bf16.gmra.mxu0 %v3897
      %v4371 = vpop.f32.mrf.mxu0
      %v4372 = vadd.f32 %v2895, %v4371
      %v4373 = vpop.f32.mrf.mxu0
      %v4374 = vadd.f32 %v2897, %v4373
      %4375 = vmatmul.bf16.gmra.mxu0 %v3900
      %v4376 = vpop.f32.mrf.mxu0
      %v4377 = vadd.f32 %v2900, %v4376
      %v4378 = vpop.f32.mrf.mxu0
      %v4379 = vadd.f32 %v2902, %v4378
      %4380 = vmatmul.bf16.gmra.mxu0 %v3903
      %v4381 = vpop.f32.mrf.mxu0
      %v4382 = vadd.f32 %v2905, %v4381
      %v4383 = vpop.f32.mrf.mxu0
      %v4384 = vadd.f32 %v2907, %v4383
      %4385 = vmatmul.bf16.gmra.mxu0 %v3906
      %v4386 = vpop.f32.mrf.mxu0
      %v4387 = vadd.f32 %v2910, %v4386
      %v4388 = vpop.f32.mrf.mxu0
      %v4389 = vadd.f32 %v2912, %v4388
      %4390 = vmatmul.bf16.gmra.mxu0 %v3909
      %v4391 = vpop.f32.mrf.mxu0
      %v4392 = vadd.f32 %v2915, %v4391
      %v4393 = vpop.f32.mrf.mxu0
      %v4394 = vadd.f32 %v2917, %v4393
      %4395 = vmatmul.bf16.gmra.mxu0 %v3912
      %v4396 = vpop.f32.mrf.mxu0
      %v4397 = vadd.f32 %v2920, %v4396
      %v4398 = vpop.f32.mrf.mxu0
      %v4399 = vadd.f32 %v2922, %v4398
      %4400 = vmatmul.bf16.gmra.mxu0 %v3915
      %v4401 = vpop.f32.mrf.mxu0
      %v4402 = vadd.f32 %v2925, %v4401
      %v4403 = vpop.f32.mrf.mxu0
      %v4404 = vadd.f32 %v2927, %v4403
      %4405 = vmatmul.bf16.gmra.mxu0 %v3918
      %v4406 = vpop.f32.mrf.mxu0
      %v4407 = vadd.f32 %v2930, %v4406
      %v4408 = vpop.f32.mrf.mxu0
      %v4409 = vadd.f32 %v2932, %v4408
      %4410 = vmatmul.bf16.gmra.mxu0 %v3921
      %v4411 = vpop.f32.mrf.mxu0
      %v4412 = vadd.f32 %v2935, %v4411
      %v4413 = vpop.f32.mrf.mxu0
      %v4414 = vadd.f32 %v2937, %v4413
      %4415 = vmatmul.bf16.gmra.mxu0 %v3924
      %v4416 = vpop.f32.mrf.mxu0
      %v4417 = vadd.f32 %v2940, %v4416
      %v4418 = vpop.f32.mrf.mxu0
      %v4419 = vadd.f32 %v2942, %v4418
      %4420 = vmatmul.bf16.gmra.mxu0 %v3927
      %v4421 = vpop.f32.mrf.mxu0
      %v4422 = vadd.f32 %v2945, %v4421
      %v4423 = vpop.f32.mrf.mxu0
      %v4424 = vadd.f32 %v2947, %v4423
      %4425 = vmatmul.bf16.gmra.mxu0 %v3930
      %v4426 = vpop.f32.mrf.mxu0
      %v4427 = vadd.f32 %v2950, %v4426
      %v4428 = vpop.f32.mrf.mxu0
      %v4429 = vadd.f32 %v2952, %v4428
      %4430 = vmatmul.bf16.gmra.mxu0 %v3933
      %v4431 = vpop.f32.mrf.mxu0
      %v4432 = vadd.f32 %v2955, %v4431
      %v4433 = vpop.f32.mrf.mxu0
      %v4434 = vadd.f32 %v2957, %v4433
      %4435 = vmatmul.bf16.gmra.mxu0 %v3936
      %v4436 = vpop.f32.mrf.mxu0
      %v4437 = vadd.f32 %v2960, %v4436
      %v4438 = vpop.f32.mrf.mxu0
      %v4439 = vadd.f32 %v2962, %v4438
      %4440 = vmatmul.bf16.gmra.mxu0 %v3939
      %v4441 = vpop.f32.mrf.mxu0
      %v4442 = vadd.f32 %v2965, %v4441
      %v4443 = vpop.f32.mrf.mxu0
      %v4444 = vadd.f32 %v2967, %v4443
      %4445 = vmatmul.bf16.gmra.mxu0 %v3942
      %v4446 = vpop.f32.mrf.mxu0
      %v4447 = vadd.f32 %v2970, %v4446
      %v4448 = vpop.f32.mrf.mxu0
      %v4449 = vadd.f32 %v2972, %v4448
      %4450 = vmatmul.bf16.gmra.mxu0 %v3945
      %v4451 = vpop.f32.mrf.mxu0
      %v4452 = vadd.f32 %v2975, %v4451
      %v4453 = vpop.f32.mrf.mxu0
      %v4454 = vadd.f32 %v2977, %v4453
      %4455 = vmatmul.bf16.gmra.mxu0 %v3948
      %v4456 = vpop.f32.mrf.mxu0
      %v4457 = vadd.f32 %v2980, %v4456
      %v4458 = vpop.f32.mrf.mxu0
      %v4459 = vadd.f32 %v2982, %v4458
      %4460 = vmatmul.bf16.gmra.mxu0 %v3951
      %v4461 = vpop.f32.mrf.mxu0
      %v4462 = vadd.f32 %v2985, %v4461
      %v4463 = vpop.f32.mrf.mxu0
      %v4464 = vadd.f32 %v2987, %v4463
      %4465 = vmatmul.bf16.gmra.mxu0 %v3954
      %v4466 = vpop.f32.mrf.mxu0
      %v4467 = vadd.f32 %v2990, %v4466
      %v4468 = vpop.f32.mrf.mxu0
      %v4469 = vadd.f32 %v2992, %v4468
      %4470 = vmatmul.bf16.gmra.mxu0 %v3957
      %v4471 = vpop.f32.mrf.mxu0
      %v4472 = vadd.f32 %v2995, %v4471
      %v4473 = vpop.f32.mrf.mxu0
      %v4474 = vadd.f32 %v2997, %v4473
      %4475 = vmatmul.bf16.gmra.mxu0 %v3960
      %v4476 = vpop.f32.mrf.mxu0
      %v4477 = vadd.f32 %v3000, %v4476
      %v4478 = vpop.f32.mrf.mxu0
      %v4479 = vadd.f32 %v3002, %v4478
      %4480 = vmatmul.bf16.gmra.mxu0 %v3963
      %v4481 = vpop.f32.mrf.mxu0
      %v4482 = vadd.f32 %v3005, %v4481
      %v4483 = vpop.f32.mrf.mxu0
      %v4484 = vadd.f32 %v3007, %v4483
      %4485 = vmatmul.bf16.gmra.mxu0 %v3966
      %v4486 = vpop.f32.mrf.mxu0
      %v4487 = vadd.f32 %v3010, %v4486
      %v4488 = vpop.f32.mrf.mxu0
      %v4489 = vadd.f32 %v3012, %v4488
      %4490 = vmatmul.bf16.gmra.mxu0 %v3969
      %v4491 = vpop.f32.mrf.mxu0
      %v4492 = vadd.f32 %v3015, %v4491
      %v4493 = vpop.f32.mrf.mxu0
      %v4494 = vadd.f32 %v3017, %v4493
      %4495 = vmatmul.bf16.gmra.mxu0 %v3972
      %v4496 = vpop.f32.mrf.mxu0
      %v4497 = vadd.f32 %v3020, %v4496
      %v4498 = vpop.f32.mrf.mxu0
      %v4499 = vadd.f32 %v3022, %v4498
      %4500 = vmatmul.bf16.gmra.mxu0 %v3975
      %v4501 = vpop.f32.mrf.mxu0
      %v4502 = vadd.f32 %v3025, %v4501
      %v4503 = vpop.f32.mrf.mxu0
      %v4504 = vadd.f32 %v3027, %v4503
      %4505 = vmatmul.bf16.gmra.mxu0 %v3978
      %v4506 = vpop.f32.mrf.mxu0
      %v4507 = vadd.f32 %v3030, %v4506
      %v4508 = vpop.f32.mrf.mxu0
      %v4509 = vadd.f32 %v3032, %v4508
      %4510 = vmatmul.bf16.gmra.mxu0 %v3981
      %v4511 = vpop.f32.mrf.mxu0
      %v4512 = vadd.f32 %v3035, %v4511
      %v4513 = vpop.f32.mrf.mxu0
      %v4514 = vadd.f32 %v3037, %v4513
      %4515 = vmatmul.bf16.gmra.mxu0 %v3984
      %v4516 = vpop.f32.mrf.mxu0
      %v4517 = vadd.f32 %v3040, %v4516
      %v4518 = vpop.f32.mrf.mxu0
      %v4519 = vadd.f32 %v3042, %v4518
      %4520 = vmatmul.bf16.gmra.mxu0 %v3987
      %v4521 = vpop.f32.mrf.mxu0
      %v4522 = vadd.f32 %v3045, %v4521
      %v4523 = vpop.f32.mrf.mxu0
      %v4524 = vadd.f32 %v3047, %v4523
      %4525 = vmatmul.bf16.gmra.mxu0 %v3990
      %v4526 = vpop.f32.mrf.mxu0
      %v4527 = vadd.f32 %v3050, %v4526
      %v4528 = vpop.f32.mrf.mxu0
      %v4529 = vadd.f32 %v3052, %v4528
      %4530 = vmatmul.bf16.gmra.mxu0 %v3993
      %v4531 = vpop.f32.mrf.mxu0
      %v4532 = vadd.f32 %v3055, %v4531
      %v4533 = vpop.f32.mrf.mxu0
      %v4534 = vadd.f32 %v3057, %v4533
      %4535 = vmatmul.bf16.gmra.mxu0 %v3996
      %v4536 = vpop.f32.mrf.mxu0
      %v4537 = vadd.f32 %v3060, %v4536
      %v4538 = vpop.f32.mrf.mxu0
      %v4539 = vadd.f32 %v3062, %v4538
      %4540 = vmatmul.bf16.gmra.mxu0 %v3999
      %v4541 = vpop.f32.mrf.mxu0
      %v4542 = vadd.f32 %v3065, %v4541
      %v4543 = vpop.f32.mrf.mxu0
      %v4544 = vadd.f32 %v3067, %v4543
      %4545 = vmatmul.bf16.gmra.mxu0 %v4002
      %v4546 = vpop.f32.mrf.mxu0
      %v4547 = vadd.f32 %v3070, %v4546
      %v4548 = vpop.f32.mrf.mxu0
      %v4549 = vadd.f32 %v3072, %v4548
      %4550 = vmatmul.bf16.gmra.mxu0 %v4005
      %v4551 = vpop.f32.mrf.mxu0
      %v4552 = vadd.f32 %v3075, %v4551
      %v4553 = vpop.f32.mrf.mxu0
      %v4554 = vadd.f32 %v3077, %v4553
      %4555 = vmatmul.bf16.gmra.mxu0 %v4008
      %v4556 = vpop.f32.mrf.mxu0
      %v4557 = vadd.f32 %v3080, %v4556
      %v4558 = vpop.f32.mrf.mxu0
      %v4559 = vadd.f32 %v3082, %v4558
      %4560 = vmatmul.bf16.gmra.mxu0 %v4011
      %v4561 = vpop.f32.mrf.mxu0
      %v4562 = vadd.f32 %v3085, %v4561
      %v4563 = vpop.f32.mrf.mxu0
      %v4564 = vadd.f32 %v3087, %v4563
      %4565 = vmatmul.bf16.gmra.mxu0 %v4014
      %v4566 = vpop.f32.mrf.mxu0
      %v4567 = vadd.f32 %v3090, %v4566
      %v4568 = vpop.f32.mrf.mxu0
      %v4569 = vadd.f32 %v3092, %v4568
      %4570 = vmatmul.bf16.gmra.mxu0 %v4017
      %v4571 = vpop.f32.mrf.mxu0
      %v4572 = vadd.f32 %v3095, %v4571
      %v4573 = vpop.f32.mrf.mxu0
      %v4574 = vadd.f32 %v3097, %v4573
      %4575 = vmatmul.bf16.gmra.mxu0 %v4020
      %v4576 = vpop.f32.mrf.mxu0
      %v4577 = vadd.f32 %v3100, %v4576
      %v4578 = vpop.f32.mrf.mxu0
      %v4579 = vadd.f32 %v3102, %v4578
      %4580 = vmatmul.bf16.gmra.mxu0 %v4023
      %v4581 = vpop.f32.mrf.mxu0
      %v4582 = vadd.f32 %v3105, %v4581
      %v4583 = vpop.f32.mrf.mxu0
      %v4584 = vadd.f32 %v3107, %v4583
      %4585 = vmatmul.bf16.gmra.mxu0 %v4026
      %v4586 = vpop.f32.mrf.mxu0
      %v4587 = vadd.f32 %v3110, %v4586
      %v4588 = vpop.f32.mrf.mxu0
      %v4589 = vadd.f32 %v3112, %v4588
      %4590 = vmatmul.bf16.gmra.mxu0 %v4029
      %v4591 = vpop.f32.mrf.mxu0
      %v4592 = vadd.f32 %v3115, %v4591
      %v4593 = vpop.f32.mrf.mxu0
      %v4594 = vadd.f32 %v3117, %v4593
      %4595 = vmatmul.bf16.gmra.mxu0 %v4032
      %v4596 = vpop.f32.mrf.mxu0
      %v4597 = vadd.f32 %v3120, %v4596
      %v4598 = vpop.f32.mrf.mxu0
      %v4599 = vadd.f32 %v3122, %v4598
      %4600 = vmatmul.bf16.gmra.mxu0 %v4035
      %v4601 = vpop.f32.mrf.mxu0
      %v4602 = vadd.f32 %v3125, %v4601
      %v4603 = vpop.f32.mrf.mxu0
      %v4604 = vadd.f32 %v3127, %v4603
      %4605 = vmatmul.bf16.gmra.mxu0 %v4038
      %v4606 = vpop.f32.mrf.mxu0
      %v4607 = vadd.f32 %v3130, %v4606
      %v4608 = vpop.f32.mrf.mxu0
      %v4609 = vadd.f32 %v3132, %v4608
      %4610 = vmatmul.bf16.gmra.mxu0 %v4041
      %v4611 = vpop.f32.mrf.mxu0
      %v4612 = vadd.f32 %v3135, %v4611
      %v4613 = vpop.f32.mrf.mxu0
      %v4614 = vadd.f32 %v3137, %v4613
      %4615 = vmatmul.bf16.gmra.mxu0 %v4044
      %v4616 = vpop.f32.mrf.mxu0
      %v4617 = vadd.f32 %v3140, %v4616
      %v4618 = vpop.f32.mrf.mxu0
      %v4619 = vadd.f32 %v3142, %v4618
      %4620 = vdwg.mxu0
      %4621 = vmatpush.bf16.msra.mxu0 0
      %4622 = vmatpush.bf16.msra.mxu0 0
      %4623 = vmatpush.bf16.msra.mxu0 0
      %4624 = vmatpush.bf16.msra.mxu0 0
      %4625 = vmatpush.bf16.msra.mxu0 0
      %4626 = vmatpush.bf16.msra.mxu0 0
      %4627 = vmatpush.bf16.msra.mxu0 %v4050
      %4628 = vmatpush.bf16.msra.mxu0 %v3726
      %4629 = vmatmul.bf16.gmra.mxu0 %v3732
      %v4630 = vpop.f32.mrf.mxu0
      %v4631 = vadd.f32 %v3154, %v4630
      %v4632 = vpop.f32.mrf.mxu0
      %v4633 = vadd.f32 %v3156, %v4632
      %4634 = vmatmul.bf16.gmra.mxu0 %v3732
      %v4635 = vpop.f32.mrf.mxu0
      %v4636 = vadd.f32 %v3159, %v4635
      %v4637 = vpop.f32.mrf.mxu0
      %v4638 = vadd.f32 %v3161, %v4637
      %4639 = vmatmul.bf16.gmra.mxu0 %v3732
      %v4640 = vpop.f32.mrf.mxu0
      %v4641 = vadd.f32 %v3164, %v4640
      %v4642 = vpop.f32.mrf.mxu0
      %v4643 = vadd.f32 %v3166, %v4642
      %4644 = vmatmul.bf16.gmra.mxu0 %v3732
      %v4645 = vpop.f32.mrf.mxu0
      %v4646 = vadd.f32 %v3169, %v4645
      %v4647 = vpop.f32.mrf.mxu0
      %v4648 = vadd.f32 %v3171, %v4647
      %4649 = vmatmul.bf16.gmra.mxu0 %v3732
      %v4650 = vpop.f32.mrf.mxu0
      %v4651 = vadd.f32 %v3174, %v4650
      %v4652 = vpop.f32.mrf.mxu0
      %v4653 = vadd.f32 %v3176, %v4652
      %4654 = vmatmul.bf16.gmra.mxu0 %v3732
      %v4655 = vpop.f32.mrf.mxu0
      %v4656 = vadd.f32 %v3179, %v4655
      %v4657 = vpop.f32.mrf.mxu0
      %v4658 = vadd.f32 %v3181, %v4657
      %4659 = vmatmul.bf16.gmra.mxu0 %v3732
      %v4660 = vpop.f32.mrf.mxu0
      %v4661 = vadd.f32 %v3184, %v4660
      %v4662 = vpop.f32.mrf.mxu0
      %v4663 = vadd.f32 %v3186, %v4662
      %4664 = vmatmul.bf16.gmra.mxu0 %v3732
      %v4665 = vpop.f32.mrf.mxu0
      %v4666 = vadd.f32 %v3189, %v4665
      %v4667 = vpop.f32.mrf.mxu0
      %v4668 = vadd.f32 %v3191, %v4667
      %4669 = vmatmul.bf16.gmra.mxu0 %v3735
      %v4670 = vpop.f32.mrf.mxu0
      %v4671 = vadd.f32 %v3194, %v4670
      %v4672 = vpop.f32.mrf.mxu0
      %v4673 = vadd.f32 %v3196, %v4672
      %4674 = vmatmul.bf16.gmra.mxu0 %v3738
      %v4675 = vpop.f32.mrf.mxu0
      %v4676 = vadd.f32 %v3199, %v4675
      %v4677 = vpop.f32.mrf.mxu0
      %v4678 = vadd.f32 %v3201, %v4677
      %4679 = vmatmul.bf16.gmra.mxu0 %v3741
      %v4680 = vpop.f32.mrf.mxu0
      %v4681 = vadd.f32 %v3204, %v4680
      %v4682 = vpop.f32.mrf.mxu0
      %v4683 = vadd.f32 %v3206, %v4682
      %4684 = vmatmul.bf16.gmra.mxu0 %v3744
      %v4685 = vpop.f32.mrf.mxu0
      %v4686 = vadd.f32 %v3209, %v4685
      %v4687 = vpop.f32.mrf.mxu0
      %v4688 = vadd.f32 %v3211, %v4687
      %4689 = vmatmul.bf16.gmra.mxu0 %v3747
      %v4690 = vpop.f32.mrf.mxu0
      %v4691 = vadd.f32 %v3214, %v4690
      %v4692 = vpop.f32.mrf.mxu0
      %v4693 = vadd.f32 %v3216, %v4692
      %4694 = vmatmul.bf16.gmra.mxu0 %v3750
      %v4695 = vpop.f32.mrf.mxu0
      %v4696 = vadd.f32 %v3219, %v4695
      %v4697 = vpop.f32.mrf.mxu0
      %v4698 = vadd.f32 %v3221, %v4697
      %4699 = vmatmul.bf16.gmra.mxu0 %v3753
      %v4700 = vpop.f32.mrf.mxu0
      %v4701 = vadd.f32 %v3224, %v4700
      %v4702 = vpop.f32.mrf.mxu0
      %v4703 = vadd.f32 %v3226, %v4702
      %4704 = vmatmul.bf16.gmra.mxu0 %v3756
      %v4705 = vpop.f32.mrf.mxu0
      %v4706 = vadd.f32 %v3229, %v4705
      %v4707 = vpop.f32.mrf.mxu0
      %v4708 = vadd.f32 %v3231, %v4707
      %4709 = vmatmul.bf16.gmra.mxu0 %v3759
      %v4710 = vpop.f32.mrf.mxu0
      %v4711 = vadd.f32 %v3234, %v4710
      %v4712 = vpop.f32.mrf.mxu0
      %v4713 = vadd.f32 %v3236, %v4712
      %4714 = vmatmul.bf16.gmra.mxu0 %v3762
      %v4715 = vpop.f32.mrf.mxu0
      %v4716 = vadd.f32 %v3239, %v4715
      %v4717 = vpop.f32.mrf.mxu0
      %v4718 = vadd.f32 %v3241, %v4717
      %4719 = vmatmul.bf16.gmra.mxu0 %v3765
      %v4720 = vpop.f32.mrf.mxu0
      %v4721 = vadd.f32 %v3244, %v4720
      %v4722 = vpop.f32.mrf.mxu0
      %v4723 = vadd.f32 %v3246, %v4722
      %4724 = vmatmul.bf16.gmra.mxu0 %v3768
      %v4725 = vpop.f32.mrf.mxu0
      %v4726 = vadd.f32 %v3249, %v4725
      %v4727 = vpop.f32.mrf.mxu0
      %v4728 = vadd.f32 %v3251, %v4727
      %4729 = vmatmul.bf16.gmra.mxu0 %v3771
      %v4730 = vpop.f32.mrf.mxu0
      %v4731 = vadd.f32 %v3254, %v4730
      %v4732 = vpop.f32.mrf.mxu0
      %v4733 = vadd.f32 %v3256, %v4732
      %4734 = vmatmul.bf16.gmra.mxu0 %v3774
      %v4735 = vpop.f32.mrf.mxu0
      %v4736 = vadd.f32 %v3259, %v4735
      %v4737 = vpop.f32.mrf.mxu0
      %v4738 = vadd.f32 %v3261, %v4737
      %4739 = vmatmul.bf16.gmra.mxu0 %v3777
      %v4740 = vpop.f32.mrf.mxu0
      %v4741 = vadd.f32 %v3264, %v4740
      %v4742 = vpop.f32.mrf.mxu0
      %v4743 = vadd.f32 %v3266, %v4742
      %4744 = vmatmul.bf16.gmra.mxu0 %v3780
      %v4745 = vpop.f32.mrf.mxu0
      %v4746 = vadd.f32 %v3269, %v4745
      %v4747 = vpop.f32.mrf.mxu0
      %v4748 = vadd.f32 %v3271, %v4747
      %4749 = vmatmul.bf16.gmra.mxu0 %v3783
      %v4750 = vpop.f32.mrf.mxu0
      %v4751 = vadd.f32 %v3274, %v4750
      %v4752 = vpop.f32.mrf.mxu0
      %v4753 = vadd.f32 %v3276, %v4752
      %4754 = vmatmul.bf16.gmra.mxu0 %v3786
      %v4755 = vpop.f32.mrf.mxu0
      %v4756 = vadd.f32 %v3279, %v4755
      %v4757 = vpop.f32.mrf.mxu0
      %v4758 = vadd.f32 %v3281, %v4757
      %4759 = vmatmul.bf16.gmra.mxu0 %v3789
      %v4760 = vpop.f32.mrf.mxu0
      %v4761 = vadd.f32 %v3284, %v4760
      %v4762 = vpop.f32.mrf.mxu0
      %v4763 = vadd.f32 %v3286, %v4762
      %4764 = vmatmul.bf16.gmra.mxu0 %v3792
      %v4765 = vpop.f32.mrf.mxu0
      %v4766 = vadd.f32 %v3289, %v4765
      %v4767 = vpop.f32.mrf.mxu0
      %v4768 = vadd.f32 %v3291, %v4767
      %4769 = vmatmul.bf16.gmra.mxu0 %v3795
      %v4770 = vpop.f32.mrf.mxu0
      %v4771 = vadd.f32 %v3294, %v4770
      %v4772 = vpop.f32.mrf.mxu0
      %v4773 = vadd.f32 %v3296, %v4772
      %4774 = vmatmul.bf16.gmra.mxu0 %v3798
      %v4775 = vpop.f32.mrf.mxu0
      %v4776 = vadd.f32 %v3299, %v4775
      %v4777 = vpop.f32.mrf.mxu0
      %v4778 = vadd.f32 %v3301, %v4777
      %4779 = vmatmul.bf16.gmra.mxu0 %v3801
      %v4780 = vpop.f32.mrf.mxu0
      %v4781 = vadd.f32 %v3304, %v4780
      %v4782 = vpop.f32.mrf.mxu0
      %v4783 = vadd.f32 %v3306, %v4782
      %4784 = vmatmul.bf16.gmra.mxu0 %v3804
      %v4785 = vpop.f32.mrf.mxu0
      %v4786 = vadd.f32 %v3309, %v4785
      %v4787 = vpop.f32.mrf.mxu0
      %v4788 = vadd.f32 %v3311, %v4787
      %4789 = vmatmul.bf16.gmra.mxu0 %v3807
      %v4790 = vpop.f32.mrf.mxu0
      %v4791 = vadd.f32 %v3314, %v4790
      %v4792 = vpop.f32.mrf.mxu0
      %v4793 = vadd.f32 %v3316, %v4792
      %4794 = vmatmul.bf16.gmra.mxu0 %v3810
      %v4795 = vpop.f32.mrf.mxu0
      %v4796 = vadd.f32 %v3319, %v4795
      %v4797 = vpop.f32.mrf.mxu0
      %v4798 = vadd.f32 %v3321, %v4797
      %4799 = vmatmul.bf16.gmra.mxu0 %v3813
      %v4800 = vpop.f32.mrf.mxu0
      %v4801 = vadd.f32 %v3324, %v4800
      %v4802 = vpop.f32.mrf.mxu0
      %v4803 = vadd.f32 %v3326, %v4802
      %4804 = vmatmul.bf16.gmra.mxu0 %v3816
      %v4805 = vpop.f32.mrf.mxu0
      %v4806 = vadd.f32 %v3329, %v4805
      %v4807 = vpop.f32.mrf.mxu0
      %v4808 = vadd.f32 %v3331, %v4807
      %4809 = vmatmul.bf16.gmra.mxu0 %v3819
      %v4810 = vpop.f32.mrf.mxu0
      %v4811 = vadd.f32 %v3334, %v4810
      %v4812 = vpop.f32.mrf.mxu0
      %v4813 = vadd.f32 %v3336, %v4812
      %4814 = vmatmul.bf16.gmra.mxu0 %v3822
      %v4815 = vpop.f32.mrf.mxu0
      %v4816 = vadd.f32 %v3339, %v4815
      %v4817 = vpop.f32.mrf.mxu0
      %v4818 = vadd.f32 %v3341, %v4817
      %4819 = vmatmul.bf16.gmra.mxu0 %v3825
      %v4820 = vpop.f32.mrf.mxu0
      %v4821 = vadd.f32 %v3344, %v4820
      %v4822 = vpop.f32.mrf.mxu0
      %v4823 = vadd.f32 %v3346, %v4822
      %4824 = vmatmul.bf16.gmra.mxu0 %v3828
      %v4825 = vpop.f32.mrf.mxu0
      %v4826 = vadd.f32 %v3349, %v4825
      %v4827 = vpop.f32.mrf.mxu0
      %v4828 = vadd.f32 %v3351, %v4827
      %4829 = vmatmul.bf16.gmra.mxu0 %v3831
      %v4830 = vpop.f32.mrf.mxu0
      %v4831 = vadd.f32 %v3354, %v4830
      %v4832 = vpop.f32.mrf.mxu0
      %v4833 = vadd.f32 %v3356, %v4832
      %4834 = vmatmul.bf16.gmra.mxu0 %v3834
      %v4835 = vpop.f32.mrf.mxu0
      %v4836 = vadd.f32 %v3359, %v4835
      %v4837 = vpop.f32.mrf.mxu0
      %v4838 = vadd.f32 %v3361, %v4837
      %4839 = vmatmul.bf16.gmra.mxu0 %v3837
      %v4840 = vpop.f32.mrf.mxu0
      %v4841 = vadd.f32 %v3364, %v4840
      %v4842 = vpop.f32.mrf.mxu0
      %v4843 = vadd.f32 %v3366, %v4842
      %4844 = vmatmul.bf16.gmra.mxu0 %v3840
      %v4845 = vpop.f32.mrf.mxu0
      %v4846 = vadd.f32 %v3369, %v4845
      %v4847 = vpop.f32.mrf.mxu0
      %v4848 = vadd.f32 %v3371, %v4847
      %4849 = vmatmul.bf16.gmra.mxu0 %v3843
      %v4850 = vpop.f32.mrf.mxu0
      %v4851 = vadd.f32 %v3374, %v4850
      %v4852 = vpop.f32.mrf.mxu0
      %v4853 = vadd.f32 %v3376, %v4852
      %4854 = vmatmul.bf16.gmra.mxu0 %v3846
      %v4855 = vpop.f32.mrf.mxu0
      %v4856 = vadd.f32 %v3379, %v4855
      %v4857 = vpop.f32.mrf.mxu0
      %v4858 = vadd.f32 %v3381, %v4857
      %4859 = vmatmul.bf16.gmra.mxu0 %v3849
      %v4860 = vpop.f32.mrf.mxu0
      %v4861 = vadd.f32 %v3384, %v4860
      %v4862 = vpop.f32.mrf.mxu0
      %v4863 = vadd.f32 %v3386, %v4862
      %4864 = vmatmul.bf16.gmra.mxu0 %v3852
      %v4865 = vpop.f32.mrf.mxu0
      %v4866 = vadd.f32 %v3389, %v4865
      %v4867 = vpop.f32.mrf.mxu0
      %v4868 = vadd.f32 %v3391, %v4867
      %4869 = vmatmul.bf16.gmra.mxu0 %v3855
      %v4870 = vpop.f32.mrf.mxu0
      %v4871 = vadd.f32 %v3394, %v4870
      %v4872 = vpop.f32.mrf.mxu0
      %v4873 = vadd.f32 %v3396, %v4872
      %4874 = vmatmul.bf16.gmra.mxu0 %v3858
      %v4875 = vpop.f32.mrf.mxu0
      %v4876 = vadd.f32 %v3399, %v4875
      %v4877 = vpop.f32.mrf.mxu0
      %v4878 = vadd.f32 %v3401, %v4877
      %4879 = vmatmul.bf16.gmra.mxu0 %v3861
      %v4880 = vpop.f32.mrf.mxu0
      %v4881 = vadd.f32 %v3404, %v4880
      %v4882 = vpop.f32.mrf.mxu0
      %v4883 = vadd.f32 %v3406, %v4882
      %4884 = vmatmul.bf16.gmra.mxu0 %v3864
      %v4885 = vpop.f32.mrf.mxu0
      %v4886 = vadd.f32 %v3409, %v4885
      %v4887 = vpop.f32.mrf.mxu0
      %v4888 = vadd.f32 %v3411, %v4887
      %4889 = vmatmul.bf16.gmra.mxu0 %v3867
      %v4890 = vpop.f32.mrf.mxu0
      %v4891 = vadd.f32 %v3414, %v4890
      %v4892 = vpop.f32.mrf.mxu0
      %v4893 = vadd.f32 %v3416, %v4892
      %4894 = vmatmul.bf16.gmra.mxu0 %v3870
      %v4895 = vpop.f32.mrf.mxu0
      %v4896 = vadd.f32 %v3419, %v4895
      %v4897 = vpop.f32.mrf.mxu0
      %v4898 = vadd.f32 %v3421, %v4897
      %4899 = vmatmul.bf16.gmra.mxu0 %v3873
      %v4900 = vpop.f32.mrf.mxu0
      %v4901 = vadd.f32 %v3424, %v4900
      %v4902 = vpop.f32.mrf.mxu0
      %v4903 = vadd.f32 %v3426, %v4902
      %4904 = vmatmul.bf16.gmra.mxu0 %v3876
      %v4905 = vpop.f32.mrf.mxu0
      %v4906 = vadd.f32 %v3429, %v4905
      %v4907 = vpop.f32.mrf.mxu0
      %v4908 = vadd.f32 %v3431, %v4907
      %4909 = vmatmul.bf16.gmra.mxu0 %v3879
      %v4910 = vpop.f32.mrf.mxu0
      %v4911 = vadd.f32 %v3434, %v4910
      %v4912 = vpop.f32.mrf.mxu0
      %v4913 = vadd.f32 %v3436, %v4912
      %4914 = vmatmul.bf16.gmra.mxu0 %v3882
      %v4915 = vpop.f32.mrf.mxu0
      %v4916 = vadd.f32 %v3439, %v4915
      %v4917 = vpop.f32.mrf.mxu0
      %v4918 = vadd.f32 %v3441, %v4917
      %4919 = vmatmul.bf16.gmra.mxu0 %v3885
      %v4920 = vpop.f32.mrf.mxu0
      %v4921 = vadd.f32 %v3444, %v4920
      %v4922 = vpop.f32.mrf.mxu0
      %v4923 = vadd.f32 %v3446, %v4922
      %4924 = vmatmul.bf16.gmra.mxu0 %v3888
      %v4925 = vpop.f32.mrf.mxu0
      %v4926 = vadd.f32 %v3449, %v4925
      %v4927 = vpop.f32.mrf.mxu0
      %v4928 = vadd.f32 %v3451, %v4927
      %4929 = vmatmul.bf16.gmra.mxu0 %v3891
      %v4930 = vpop.f32.mrf.mxu0
      %v4931 = vadd.f32 %v3454, %v4930
      %v4932 = vpop.f32.mrf.mxu0
      %v4933 = vadd.f32 %v3456, %v4932
      %4934 = vmatmul.bf16.gmra.mxu0 %v3894
      %v4935 = vpop.f32.mrf.mxu0
      %v4936 = vadd.f32 %v3459, %v4935
      %v4937 = vpop.f32.mrf.mxu0
      %v4938 = vadd.f32 %v3461, %v4937
      %4939 = vmatmul.bf16.gmra.mxu0 %v3897
      %v4940 = vpop.f32.mrf.mxu0
      %v4941 = vadd.f32 %v3464, %v4940
      %v4942 = vpop.f32.mrf.mxu0
      %v4943 = vadd.f32 %v3466, %v4942
      %4944 = vmatmul.bf16.gmra.mxu0 %v3900
      %v4945 = vpop.f32.mrf.mxu0
      %v4946 = vadd.f32 %v3469, %v4945
      %v4947 = vpop.f32.mrf.mxu0
      %v4948 = vadd.f32 %v3471, %v4947
      %4949 = vmatmul.bf16.gmra.mxu0 %v3903
      %v4950 = vpop.f32.mrf.mxu0
      %v4951 = vadd.f32 %v3474, %v4950
      %v4952 = vpop.f32.mrf.mxu0
      %v4953 = vadd.f32 %v3476, %v4952
      %4954 = vmatmul.bf16.gmra.mxu0 %v3906
      %v4955 = vpop.f32.mrf.mxu0
      %v4956 = vadd.f32 %v3479, %v4955
      %v4957 = vpop.f32.mrf.mxu0
      %v4958 = vadd.f32 %v3481, %v4957
      %4959 = vmatmul.bf16.gmra.mxu0 %v3909
      %v4960 = vpop.f32.mrf.mxu0
      %v4961 = vadd.f32 %v3484, %v4960
      %v4962 = vpop.f32.mrf.mxu0
      %v4963 = vadd.f32 %v3486, %v4962
      %4964 = vmatmul.bf16.gmra.mxu0 %v3912
      %v4965 = vpop.f32.mrf.mxu0
      %v4966 = vadd.f32 %v3489, %v4965
      %v4967 = vpop.f32.mrf.mxu0
      %v4968 = vadd.f32 %v3491, %v4967
      %4969 = vmatmul.bf16.gmra.mxu0 %v3915
      %v4970 = vpop.f32.mrf.mxu0
      %v4971 = vadd.f32 %v3494, %v4970
      %v4972 = vpop.f32.mrf.mxu0
      %v4973 = vadd.f32 %v3496, %v4972
      %4974 = vmatmul.bf16.gmra.mxu0 %v3918
      %v4975 = vpop.f32.mrf.mxu0
      %v4976 = vadd.f32 %v3499, %v4975
      %v4977 = vpop.f32.mrf.mxu0
      %v4978 = vadd.f32 %v3501, %v4977
      %4979 = vmatmul.bf16.gmra.mxu0 %v3921
      %v4980 = vpop.f32.mrf.mxu0
      %v4981 = vadd.f32 %v3504, %v4980
      %v4982 = vpop.f32.mrf.mxu0
      %v4983 = vadd.f32 %v3506, %v4982
      %4984 = vmatmul.bf16.gmra.mxu0 %v3924
      %v4985 = vpop.f32.mrf.mxu0
      %v4986 = vadd.f32 %v3509, %v4985
      %v4987 = vpop.f32.mrf.mxu0
      %v4988 = vadd.f32 %v3511, %v4987
      %4989 = vmatmul.bf16.gmra.mxu0 %v3927
      %v4990 = vpop.f32.mrf.mxu0
      %v4991 = vadd.f32 %v3514, %v4990
      %v4992 = vpop.f32.mrf.mxu0
      %v4993 = vadd.f32 %v3516, %v4992
      %4994 = vmatmul.bf16.gmra.mxu0 %v3930
      %v4995 = vpop.f32.mrf.mxu0
      %v4996 = vadd.f32 %v3519, %v4995
      %v4997 = vpop.f32.mrf.mxu0
      %v4998 = vadd.f32 %v3521, %v4997
      %4999 = vmatmul.bf16.gmra.mxu0 %v3933
      %v5000 = vpop.f32.mrf.mxu0
      %v5001 = vadd.f32 %v3524, %v5000
      %v5002 = vpop.f32.mrf.mxu0
      %v5003 = vadd.f32 %v3526, %v5002
      %5004 = vmatmul.bf16.gmra.mxu0 %v3936
      %v5005 = vpop.f32.mrf.mxu0
      %v5006 = vadd.f32 %v3529, %v5005
      %v5007 = vpop.f32.mrf.mxu0
      %v5008 = vadd.f32 %v3531, %v5007
      %5009 = vmatmul.bf16.gmra.mxu0 %v3939
      %v5010 = vpop.f32.mrf.mxu0
      %v5011 = vadd.f32 %v3534, %v5010
      %v5012 = vpop.f32.mrf.mxu0
      %v5013 = vadd.f32 %v3536, %v5012
      %5014 = vmatmul.bf16.gmra.mxu0 %v3942
      %v5015 = vpop.f32.mrf.mxu0
      %v5016 = vadd.f32 %v3539, %v5015
      %v5017 = vpop.f32.mrf.mxu0
      %v5018 = vadd.f32 %v3541, %v5017
      %5019 = vmatmul.bf16.gmra.mxu0 %v3945
      %v5020 = vpop.f32.mrf.mxu0
      %v5021 = vadd.f32 %v3544, %v5020
      %v5022 = vpop.f32.mrf.mxu0
      %v5023 = vadd.f32 %v3546, %v5022
      %5024 = vmatmul.bf16.gmra.mxu0 %v3948
      %v5025 = vpop.f32.mrf.mxu0
      %v5026 = vadd.f32 %v3549, %v5025
      %v5027 = vpop.f32.mrf.mxu0
      %v5028 = vadd.f32 %v3551, %v5027
      %5029 = vmatmul.bf16.gmra.mxu0 %v3951
      %v5030 = vpop.f32.mrf.mxu0
      %v5031 = vadd.f32 %v3554, %v5030
      %v5032 = vpop.f32.mrf.mxu0
      %v5033 = vadd.f32 %v3556, %v5032
      %5034 = vmatmul.bf16.gmra.mxu0 %v3954
      %v5035 = vpop.f32.mrf.mxu0
      %v5036 = vadd.f32 %v3559, %v5035
      %v5037 = vpop.f32.mrf.mxu0
      %v5038 = vadd.f32 %v3561, %v5037
      %5039 = vmatmul.bf16.gmra.mxu0 %v3957
      %v5040 = vpop.f32.mrf.mxu0
      %v5041 = vadd.f32 %v3564, %v5040
      %v5042 = vpop.f32.mrf.mxu0
      %v5043 = vadd.f32 %v3566, %v5042
      %5044 = vmatmul.bf16.gmra.mxu0 %v3960
      %v5045 = vpop.f32.mrf.mxu0
      %v5046 = vadd.f32 %v3569, %v5045
      %v5047 = vpop.f32.mrf.mxu0
      %v5048 = vadd.f32 %v3571, %v5047
      %5049 = vmatmul.bf16.gmra.mxu0 %v3963
      %v5050 = vpop.f32.mrf.mxu0
      %v5051 = vadd.f32 %v3574, %v5050
      %v5052 = vpop.f32.mrf.mxu0
      %v5053 = vadd.f32 %v3576, %v5052
      %5054 = vmatmul.bf16.gmra.mxu0 %v3966
      %v5055 = vpop.f32.mrf.mxu0
      %v5056 = vadd.f32 %v3579, %v5055
      %v5057 = vpop.f32.mrf.mxu0
      %v5058 = vadd.f32 %v3581, %v5057
      %5059 = vmatmul.bf16.gmra.mxu0 %v3969
      %v5060 = vpop.f32.mrf.mxu0
      %v5061 = vadd.f32 %v3584, %v5060
      %v5062 = vpop.f32.mrf.mxu0
      %v5063 = vadd.f32 %v3586, %v5062
      %5064 = vmatmul.bf16.gmra.mxu0 %v3972
      %v5065 = vpop.f32.mrf.mxu0
      %v5066 = vadd.f32 %v3589, %v5065
      %v5067 = vpop.f32.mrf.mxu0
      %v5068 = vadd.f32 %v3591, %v5067
      %5069 = vmatmul.bf16.gmra.mxu0 %v3975
      %v5070 = vpop.f32.mrf.mxu0
      %v5071 = vadd.f32 %v3594, %v5070
      %v5072 = vpop.f32.mrf.mxu0
      %v5073 = vadd.f32 %v3596, %v5072
      %5074 = vmatmul.bf16.gmra.mxu0 %v3978
      %v5075 = vpop.f32.mrf.mxu0
      %v5076 = vadd.f32 %v3599, %v5075
      %v5077 = vpop.f32.mrf.mxu0
      %v5078 = vadd.f32 %v3601, %v5077
      %5079 = vmatmul.bf16.gmra.mxu0 %v3981
      %v5080 = vpop.f32.mrf.mxu0
      %v5081 = vadd.f32 %v3604, %v5080
      %v5082 = vpop.f32.mrf.mxu0
      %v5083 = vadd.f32 %v3606, %v5082
      %5084 = vmatmul.bf16.gmra.mxu0 %v3984
      %v5085 = vpop.f32.mrf.mxu0
      %v5086 = vadd.f32 %v3609, %v5085
      %v5087 = vpop.f32.mrf.mxu0
      %v5088 = vadd.f32 %v3611, %v5087
      %5089 = vmatmul.bf16.gmra.mxu0 %v3987
      %v5090 = vpop.f32.mrf.mxu0
      %v5091 = vadd.f32 %v3614, %v5090
      %v5092 = vpop.f32.mrf.mxu0
      %v5093 = vadd.f32 %v3616, %v5092
      %5094 = vmatmul.bf16.gmra.mxu0 %v3990
      %v5095 = vpop.f32.mrf.mxu0
      %v5096 = vadd.f32 %v3619, %v5095
      %v5097 = vpop.f32.mrf.mxu0
      %v5098 = vadd.f32 %v3621, %v5097
      %5099 = vmatmul.bf16.gmra.mxu0 %v3993
      %v5100 = vpop.f32.mrf.mxu0
      %v5101 = vadd.f32 %v3624, %v5100
      %v5102 = vpop.f32.mrf.mxu0
      %v5103 = vadd.f32 %v3626, %v5102
      %5104 = vmatmul.bf16.gmra.mxu0 %v3996
      %v5105 = vpop.f32.mrf.mxu0
      %v5106 = vadd.f32 %v3629, %v5105
      %v5107 = vpop.f32.mrf.mxu0
      %v5108 = vadd.f32 %v3631, %v5107
      %5109 = vmatmul.bf16.gmra.mxu0 %v3999
      %v5110 = vpop.f32.mrf.mxu0
      %v5111 = vadd.f32 %v3634, %v5110
      %v5112 = vpop.f32.mrf.mxu0
      %v5113 = vadd.f32 %v3636, %v5112
      %5114 = vmatmul.bf16.gmra.mxu0 %v4002
      %v5115 = vpop.f32.mrf.mxu0
      %v5116 = vadd.f32 %v3639, %v5115
      %v5117 = vpop.f32.mrf.mxu0
      %v5118 = vadd.f32 %v3641, %v5117
      %5119 = vmatmul.bf16.gmra.mxu0 %v4005
      %v5120 = vpop.f32.mrf.mxu0
      %v5121 = vadd.f32 %v3644, %v5120
      %v5122 = vpop.f32.mrf.mxu0
      %v5123 = vadd.f32 %v3646, %v5122
      %5124 = vmatmul.bf16.gmra.mxu0 %v4008
      %v5125 = vpop.f32.mrf.mxu0
      %v5126 = vadd.f32 %v3649, %v5125
      %v5127 = vpop.f32.mrf.mxu0
      %v5128 = vadd.f32 %v3651, %v5127
      %5129 = vmatmul.bf16.gmra.mxu0 %v4011
      %v5130 = vpop.f32.mrf.mxu0
      %v5131 = vadd.f32 %v3654, %v5130
      %v5132 = vpop.f32.mrf.mxu0
      %v5133 = vadd.f32 %v3656, %v5132
      %5134 = vmatmul.bf16.gmra.mxu0 %v4014
      %v5135 = vpop.f32.mrf.mxu0
      %v5136 = vadd.f32 %v3659, %v5135
      %v5137 = vpop.f32.mrf.mxu0
      %v5138 = vadd.f32 %v3661, %v5137
      %5139 = vmatmul.bf16.gmra.mxu0 %v4017
      %v5140 = vpop.f32.mrf.mxu0
      %v5141 = vadd.f32 %v3664, %v5140
      %v5142 = vpop.f32.mrf.mxu0
      %v5143 = vadd.f32 %v3666, %v5142
      %5144 = vmatmul.bf16.gmra.mxu0 %v4020
      %v5145 = vpop.f32.mrf.mxu0
      %v5146 = vadd.f32 %v3669, %v5145
      %v5147 = vpop.f32.mrf.mxu0
      %v5148 = vadd.f32 %v3671, %v5147
      %5149 = vmatmul.bf16.gmra.mxu0 %v4023
      %v5150 = vpop.f32.mrf.mxu0
      %v5151 = vadd.f32 %v3674, %v5150
      %v5152 = vpop.f32.mrf.mxu0
      %v5153 = vadd.f32 %v3676, %v5152
      %5154 = vmatmul.bf16.gmra.mxu0 %v4026
      %v5155 = vpop.f32.mrf.mxu0
      %v5156 = vadd.f32 %v3679, %v5155
      %v5157 = vpop.f32.mrf.mxu0
      %v5158 = vadd.f32 %v3681, %v5157
      %5159 = vmatmul.bf16.gmra.mxu0 %v4029
      %v5160 = vpop.f32.mrf.mxu0
      %v5161 = vadd.f32 %v3684, %v5160
      %v5162 = vpop.f32.mrf.mxu0
      %v5163 = vadd.f32 %v3686, %v5162
      %5164 = vmatmul.bf16.gmra.mxu0 %v4032
      %v5165 = vpop.f32.mrf.mxu0
      %v5166 = vadd.f32 %v3689, %v5165
      %v5167 = vpop.f32.mrf.mxu0
      %v5168 = vadd.f32 %v3691, %v5167
      %5169 = vmatmul.bf16.gmra.mxu0 %v4035
      %v5170 = vpop.f32.mrf.mxu0
      %v5171 = vadd.f32 %v3694, %v5170
      %v5172 = vpop.f32.mrf.mxu0
      %v5173 = vadd.f32 %v3696, %v5172
      %5174 = vmatmul.bf16.gmra.mxu0 %v4038
      %v5175 = vpop.f32.mrf.mxu0
      %v5176 = vadd.f32 %v3699, %v5175
      %v5177 = vpop.f32.mrf.mxu0
      %v5178 = vadd.f32 %v3701, %v5177
      %5179 = vmatmul.bf16.gmra.mxu0 %v4041
      %v5180 = vpop.f32.mrf.mxu0
      %v5181 = vadd.f32 %v3704, %v5180
      %v5182 = vpop.f32.mrf.mxu0
      %v5183 = vadd.f32 %v3706, %v5182
      %5184 = vmatmul.bf16.gmra.mxu0 %v4044
      %v5185 = vpop.f32.mrf.mxu0
      %v5186 = vadd.f32 %v3709, %v5185
      %v5187 = vpop.f32.mrf.mxu0
      %v5188 = vadd.f32 %v3711, %v5187
      %5189 = vdwg.mxu0
      %5206 = vrot.lane.b32.xlu0 %v288, 32
      %v5207 = vpop.permute.xlu0 %5206
      %5208 = vrot.lane.b32.xlu0 %v295, 32
      %v5209 = vpop.permute.xlu0 %5208
      %5210 = vrot.lane.b32.xlu0 %v302, 32
      %v5211 = vpop.permute.xlu0 %5210
      %5212 = vrot.lane.b32.xlu0 %v309, 32
      %v5213 = vpop.permute.xlu0 %5212
      %5214 = vrot.lane.b32.xlu0 %v316, 32
      %v5215 = vpop.permute.xlu0 %5214
      %5216 = vrot.lane.b32.xlu0 %v323, 32
      %v5217 = vpop.permute.xlu0 %5216
      %5218 = vrot.lane.b32.xlu0 %v330, 32
      %v5219 = vpop.permute.xlu0 %5218
      %5220 = vrot.lane.b32.xlu0 %v337, 32
      %v5221 = vpop.permute.xlu0 %5220
      %5222 = vrot.lane.b32.xlu0 %v344, 32
      %v5223 = vpop.permute.xlu0 %5222
      %5224 = vrot.lane.b32.xlu0 %v351, 32
      %v5225 = vpop.permute.xlu0 %5224
      %5226 = vrot.lane.b32.xlu0 %v358, 32
      %v5227 = vpop.permute.xlu0 %5226
      %5228 = vrot.lane.b32.xlu0 %v365, 32
      %v5229 = vpop.permute.xlu0 %5228
      %5230 = vrot.lane.b32.xlu0 %v372, 32
      %v5231 = vpop.permute.xlu0 %5230
      %5232 = vrot.lane.b32.xlu0 %v379, 32
      %v5233 = vpop.permute.xlu0 %5232
      %5234 = vrot.lane.b32.xlu0 %v386, 32
      %v5235 = vpop.permute.xlu0 %5234
      %5236 = vrot.lane.b32.xlu0 %v393, 32
      %v5237 = vpop.permute.xlu0 %5236
      %vm5238 = vcmask 261120
      %v5239 = vsel %vm5238, %v1519, %v5207
      %v5240 = vsel %vm5238, %v1521, %v5209
      %v5241 = vsel %vm5238, %v1523, %v5211
      %v5242 = vsel %vm5238, %v1525, %v5213
      %v5243 = vsel %vm5238, %v1527, %v5215
      %v5244 = vsel %vm5238, %v1529, %v5217
      %v5245 = vsel %vm5238, %v1531, %v5219
      %v5246 = vsel %vm5238, %v1533, %v5221
      %v5247 = vsel %vm5238, %v1535, %v5223
      %v5248 = vsel %vm5238, %v1537, %v5225
      %v5249 = vsel %vm5238, %v1539, %v5227
      %v5250 = vsel %vm5238, %v1541, %v5229
      %v5251 = vsel %vm5238, %v1543, %v5231
      %v5252 = vsel %vm5238, %v1545, %v5233
      %v5253 = vsel %vm5238, %v1547, %v5235
      %v5254 = vsel %vm5238, %v1549, %v5237
      %5271 = vrot.lane.b32.xlu0 %v289, 48
      %v5272 = vpop.permute.xlu0 %5271
      %5273 = vrot.lane.b32.xlu0 %v296, 48
      %v5274 = vpop.permute.xlu0 %5273
      %5275 = vrot.lane.b32.xlu0 %v303, 48
      %v5276 = vpop.permute.xlu0 %5275
      %5277 = vrot.lane.b32.xlu0 %v310, 48
      %v5278 = vpop.permute.xlu0 %5277
      %5279 = vrot.lane.b32.xlu0 %v317, 48
      %v5280 = vpop.permute.xlu0 %5279
      %5281 = vrot.lane.b32.xlu0 %v324, 48
      %v5282 = vpop.permute.xlu0 %5281
      %5283 = vrot.lane.b32.xlu0 %v331, 48
      %v5284 = vpop.permute.xlu0 %5283
      %5285 = vrot.lane.b32.xlu0 %v338, 48
      %v5286 = vpop.permute.xlu0 %5285
      %5287 = vrot.lane.b32.xlu0 %v345, 48
      %v5288 = vpop.permute.xlu0 %5287
      %5289 = vrot.lane.b32.xlu0 %v352, 48
      %v5290 = vpop.permute.xlu0 %5289
      %5291 = vrot.lane.b32.xlu0 %v359, 48
      %v5292 = vpop.permute.xlu0 %5291
      %5293 = vrot.lane.b32.xlu0 %v366, 48
      %v5294 = vpop.permute.xlu0 %5293
      %5295 = vrot.lane.b32.xlu0 %v373, 48
      %v5296 = vpop.permute.xlu0 %5295
      %5297 = vrot.lane.b32.xlu0 %v380, 48
      %v5298 = vpop.permute.xlu0 %5297
      %5299 = vrot.lane.b32.xlu0 %v387, 48
      %v5300 = vpop.permute.xlu0 %5299
      %5301 = vrot.lane.b32.xlu0 %v394, 48
      %v5302 = vpop.permute.xlu0 %5301
      %vm5303 = vcmask 392192
      %v5304 = vsel %vm5303, %v1615, %v5272
      %v5305 = vsel %vm5303, %v1617, %v5274
      %v5306 = vsel %vm5303, %v1619, %v5276
      %v5307 = vsel %vm5303, %v1621, %v5278
      %v5308 = vsel %vm5303, %v1623, %v5280
      %v5309 = vsel %vm5303, %v1625, %v5282
      %v5310 = vsel %vm5303, %v1627, %v5284
      %v5311 = vsel %vm5303, %v1629, %v5286
      %v5312 = vsel %vm5303, %v1631, %v5288
      %v5313 = vsel %vm5303, %v1633, %v5290
      %v5314 = vsel %vm5303, %v1635, %v5292
      %v5315 = vsel %vm5303, %v1637, %v5294
      %v5316 = vsel %vm5303, %v1639, %v5296
      %v5317 = vsel %vm5303, %v1641, %v5298
      %v5318 = vsel %vm5303, %v1643, %v5300
      %v5319 = vsel %vm5303, %v1645, %v5302
      %5384 = vrot.lane.b32.xlu0 %v292, 40
      %v5385 = vpop.permute.xlu0 %5384
      %5386 = vrot.lane.b32.xlu0 %v299, 40
      %v5387 = vpop.permute.xlu0 %5386
      %5388 = vrot.lane.b32.xlu0 %v306, 40
      %v5389 = vpop.permute.xlu0 %5388
      %5390 = vrot.lane.b32.xlu0 %v313, 40
      %v5391 = vpop.permute.xlu0 %5390
      %5392 = vrot.lane.b32.xlu0 %v320, 40
      %v5393 = vpop.permute.xlu0 %5392
      %5394 = vrot.lane.b32.xlu0 %v327, 40
      %v5395 = vpop.permute.xlu0 %5394
      %5396 = vrot.lane.b32.xlu0 %v334, 40
      %v5397 = vpop.permute.xlu0 %5396
      %5398 = vrot.lane.b32.xlu0 %v341, 40
      %v5399 = vpop.permute.xlu0 %5398
      %5400 = vrot.lane.b32.xlu0 %v348, 40
      %v5401 = vpop.permute.xlu0 %5400
      %5402 = vrot.lane.b32.xlu0 %v355, 40
      %v5403 = vpop.permute.xlu0 %5402
      %5404 = vrot.lane.b32.xlu0 %v362, 40
      %v5405 = vpop.permute.xlu0 %5404
      %5406 = vrot.lane.b32.xlu0 %v369, 40
      %v5407 = vpop.permute.xlu0 %5406
      %5408 = vrot.lane.b32.xlu0 %v376, 40
      %v5409 = vpop.permute.xlu0 %5408
      %5410 = vrot.lane.b32.xlu0 %v383, 40
      %v5411 = vpop.permute.xlu0 %5410
      %5412 = vrot.lane.b32.xlu0 %v390, 40
      %v5413 = vpop.permute.xlu0 %5412
      %5414 = vrot.lane.b32.xlu0 %v397, 40
      %v5415 = vpop.permute.xlu0 %5414
      %vm5416 = vcmask 326656
      %v5417 = vsel %vm5416, %v2049, %v5385
      %v5418 = vsel %vm5416, %v2051, %v5387
      %v5419 = vsel %vm5416, %v2053, %v5389
      %v5420 = vsel %vm5416, %v2055, %v5391
      %v5421 = vsel %vm5416, %v2057, %v5393
      %v5422 = vsel %vm5416, %v2059, %v5395
      %v5423 = vsel %vm5416, %v2061, %v5397
      %v5424 = vsel %vm5416, %v2063, %v5399
      %v5425 = vsel %vm5416, %v2065, %v5401
      %v5426 = vsel %vm5416, %v2067, %v5403
      %v5427 = vsel %vm5416, %v2069, %v5405
      %v5428 = vsel %vm5416, %v2071, %v5407
      %v5429 = vsel %vm5416, %v2073, %v5409
      %v5430 = vsel %vm5416, %v2075, %v5411
      %v5431 = vsel %vm5416, %v2077, %v5413
      %v5432 = vsel %vm5416, %v2079, %v5415
      %v5449 = vpack.c.bf16 %v1380, %v1376
      %v5450 = vpack.c.bf16 %v1388, %v1384
      %v5451 = vpack.c.bf16 %v1396, %v1392
      %v5452 = vpack.c.bf16 %v1404, %v1400
      %v5453 = vpack.c.bf16 %v1412, %v1408
      %v5454 = vpack.c.bf16 %v1420, %v1416
      %v5455 = vpack.c.bf16 %v1428, %v1424
      %v5456 = vpack.c.bf16 %v1436, %v1432
      %v5457 = vpack.c.bf16 %v5240, %v5239
      %v5458 = vpack.c.bf16 %v5242, %v5241
      %v5459 = vpack.c.bf16 %v5244, %v5243
      %v5460 = vpack.c.bf16 %v5246, %v5245
      %v5461 = vpack.c.bf16 %v5248, %v5247
      %v5462 = vpack.c.bf16 %v5250, %v5249
      %v5463 = vpack.c.bf16 %v5252, %v5251
      %v5464 = vpack.c.bf16 %v5254, %v5253
      %v5465 = vpack.c.bf16 %v5305, %v5304
      %v5466 = vpack.c.bf16 %v5307, %v5306
      %v5467 = vpack.c.bf16 %v5309, %v5308
      %v5468 = vpack.c.bf16 %v5311, %v5310
      %v5469 = vpack.c.bf16 %v5313, %v5312
      %v5470 = vpack.c.bf16 %v5315, %v5314
      %v5471 = vpack.c.bf16 %v5317, %v5316
      %v5472 = vpack.c.bf16 %v5319, %v5318
      %v5473 = vpack.c.bf16 %v1765, %v1761
      %v5474 = vpack.c.bf16 %v1773, %v1769
      %v5475 = vpack.c.bf16 %v1781, %v1777
      %v5476 = vpack.c.bf16 %v1789, %v1785
      %v5477 = vpack.c.bf16 %v1797, %v1793
      %v5478 = vpack.c.bf16 %v1805, %v1801
      %v5479 = vpack.c.bf16 %v1813, %v1809
      %v5480 = vpack.c.bf16 %v1821, %v1817
      %v5481 = vpack.c.bf16 %v1910, %v1906
      %v5482 = vpack.c.bf16 %v1918, %v1914
      %v5483 = vpack.c.bf16 %v1926, %v1922
      %v5484 = vpack.c.bf16 %v1934, %v1930
      %v5485 = vpack.c.bf16 %v1942, %v1938
      %v5486 = vpack.c.bf16 %v1950, %v1946
      %v5487 = vpack.c.bf16 %v1958, %v1954
      %v5488 = vpack.c.bf16 %v1966, %v1962
      %v5489 = vpack.c.bf16 %v5418, %v5417
      %v5490 = vpack.c.bf16 %v5420, %v5419
      %v5491 = vpack.c.bf16 %v5422, %v5421
      %v5492 = vpack.c.bf16 %v5424, %v5423
      %v5493 = vpack.c.bf16 %v5426, %v5425
      %v5494 = vpack.c.bf16 %v5428, %v5427
      %v5495 = vpack.c.bf16 %v5430, %v5429
      %v5496 = vpack.c.bf16 %v5432, %v5431
      %s5497 = scalar_lea.vmem %s1, 64
      %v5498 = vld [vmem:[%s5497] sm:$0xff]
      %v5499 = vld [vmem:[%s5497 + $0x8] sm:$0xff]
      %v5500 = vld [vmem:[%s5497 + $0x10] sm:$0xff]
      %v5501 = vld [vmem:[%s5497 + $0x18] sm:$0x33]
      %5614 = vrot.lane.b32.xlu0 %v2096, 100
      %v5615 = vpop.permute.xlu0 %5614
      %5616 = vrot.lane.b32.xlu0 %v2097, 100
      %v5617 = vpop.permute.xlu0 %5616
      %5618 = vrot.lane.b32.xlu0 %v2098, 100
      %v5619 = vpop.permute.xlu0 %5618
      %5620 = vrot.lane.b32.xlu0 %v2099, 100
      %v5621 = vpop.permute.xlu0 %5620
      %5622 = vrot.lane.b32.xlu0 %v2100, 100
      %v5623 = vpop.permute.xlu0 %5622
      %5624 = vrot.lane.b32.xlu0 %v2101, 100
      %v5625 = vpop.permute.xlu0 %5624
      %5626 = vrot.lane.b32.xlu0 %v2102, 100
      %v5627 = vpop.permute.xlu0 %5626
      %5628 = vrot.lane.b32.xlu0 %v2103, 100
      %v5629 = vpop.permute.xlu0 %5628
      %5630 = vrot.lane.b32.xlu0 %v2104, 100
      %v5631 = vpop.permute.xlu0 %5630
      %5632 = vrot.lane.b32.xlu0 %v2105, 100
      %v5633 = vpop.permute.xlu0 %5632
      %5634 = vrot.lane.b32.xlu0 %v2106, 100
      %v5635 = vpop.permute.xlu0 %5634
      %5636 = vrot.lane.b32.xlu0 %v2107, 100
      %v5637 = vpop.permute.xlu0 %5636
      %5638 = vrot.lane.b32.xlu0 %v2108, 100
      %v5639 = vpop.permute.xlu0 %5638
      %5640 = vrot.lane.b32.xlu0 %v2109, 100
      %v5641 = vpop.permute.xlu0 %5640
      %5642 = vrot.lane.b32.xlu0 %v2110, 100
      %v5643 = vpop.permute.xlu0 %5642
      %5644 = vrot.lane.b32.xlu0 %v2111, 100
      %v5645 = vpop.permute.xlu0 %5644
      %5646 = vrot.lane.b32.xlu0 %v5449, 100
      %v5647 = vpop.permute.xlu0 %5646
      %5648 = vrot.lane.b32.xlu0 %v5450, 100
      %v5649 = vpop.permute.xlu0 %5648
      %5650 = vrot.lane.b32.xlu0 %v5451, 100
      %v5651 = vpop.permute.xlu0 %5650
      %5652 = vrot.lane.b32.xlu0 %v5452, 100
      %v5653 = vpop.permute.xlu0 %5652
      %5654 = vrot.lane.b32.xlu0 %v5453, 100
      %v5655 = vpop.permute.xlu0 %5654
      %5656 = vrot.lane.b32.xlu0 %v5454, 100
      %v5657 = vpop.permute.xlu0 %5656
      %5658 = vrot.lane.b32.xlu0 %v5455, 100
      %v5659 = vpop.permute.xlu0 %5658
      %5660 = vrot.lane.b32.xlu0 %v5456, 100
      %v5661 = vpop.permute.xlu0 %5660
      %5662 = vrot.lane.b32.xlu0 %v2120, 100
      %v5663 = vpop.permute.xlu0 %5662
      %5664 = vrot.lane.b32.xlu0 %v2121, 100
      %v5665 = vpop.permute.xlu0 %5664
      %5666 = vrot.lane.b32.xlu0 %v2122, 100
      %v5667 = vpop.permute.xlu0 %5666
      %5668 = vrot.lane.b32.xlu0 %v2123, 100
      %v5669 = vpop.permute.xlu0 %5668
      %5670 = vrot.lane.b32.xlu0 %v2124, 100
      %v5671 = vpop.permute.xlu0 %5670
      %5672 = vrot.lane.b32.xlu0 %v2125, 100
      %v5673 = vpop.permute.xlu0 %5672
      %5674 = vrot.lane.b32.xlu0 %v2126, 100
      %v5675 = vpop.permute.xlu0 %5674
      %5676 = vrot.lane.b32.xlu0 %v2127, 100
      %v5677 = vpop.permute.xlu0 %5676
      %5678 = vrot.lane.b32.xlu0 %v5457, 100
      %v5679 = vpop.permute.xlu0 %5678
      %5680 = vrot.lane.b32.xlu0 %v5458, 100
      %v5681 = vpop.permute.xlu0 %5680
      %5682 = vrot.lane.b32.xlu0 %v5459, 100
      %v5683 = vpop.permute.xlu0 %5682
      %5684 = vrot.lane.b32.xlu0 %v5460, 100
      %v5685 = vpop.permute.xlu0 %5684
      %5686 = vrot.lane.b32.xlu0 %v5461, 100
      %v5687 = vpop.permute.xlu0 %5686
      %5688 = vrot.lane.b32.xlu0 %v5462, 100
      %v5689 = vpop.permute.xlu0 %5688
      %5690 = vrot.lane.b32.xlu0 %v5463, 100
      %v5691 = vpop.permute.xlu0 %5690
      %5692 = vrot.lane.b32.xlu0 %v5464, 100
      %v5693 = vpop.permute.xlu0 %5692
      %5694 = vrot.lane.b32.xlu0 %v2136, 100
      %v5695 = vpop.permute.xlu0 %5694
      %5696 = vrot.lane.b32.xlu0 %v2137, 100
      %v5697 = vpop.permute.xlu0 %5696
      %5698 = vrot.lane.b32.xlu0 %v2138, 100
      %v5699 = vpop.permute.xlu0 %5698
      %5700 = vrot.lane.b32.xlu0 %v2139, 100
      %v5701 = vpop.permute.xlu0 %5700
      %5702 = vrot.lane.b32.xlu0 %v2140, 100
      %v5703 = vpop.permute.xlu0 %5702
      %5704 = vrot.lane.b32.xlu0 %v2141, 100
      %v5705 = vpop.permute.xlu0 %5704
      %5706 = vrot.lane.b32.xlu0 %v2142, 100
      %v5707 = vpop.permute.xlu0 %5706
      %5708 = vrot.lane.b32.xlu0 %v2143, 100
      %v5709 = vpop.permute.xlu0 %5708
      %5710 = vrot.lane.b32.xlu0 %v5465, 100
      %v5711 = vpop.permute.xlu0 %5710
      %5712 = vrot.lane.b32.xlu0 %v5466, 100
      %v5713 = vpop.permute.xlu0 %5712
      %5714 = vrot.lane.b32.xlu0 %v5467, 100
      %v5715 = vpop.permute.xlu0 %5714
      %5716 = vrot.lane.b32.xlu0 %v5468, 100
      %v5717 = vpop.permute.xlu0 %5716
      %5718 = vrot.lane.b32.xlu0 %v5469, 100
      %v5719 = vpop.permute.xlu0 %5718
      %5720 = vrot.lane.b32.xlu0 %v5470, 100
      %v5721 = vpop.permute.xlu0 %5720
      %5722 = vrot.lane.b32.xlu0 %v5471, 100
      %v5723 = vpop.permute.xlu0 %5722
      %5724 = vrot.lane.b32.xlu0 %v5472, 100
      %v5725 = vpop.permute.xlu0 %5724
      %5726 = vrot.lane.b32.xlu0 %v2152, 100
      %v5727 = vpop.permute.xlu0 %5726
      %5728 = vrot.lane.b32.xlu0 %v2153, 100
      %v5729 = vpop.permute.xlu0 %5728
      %5730 = vrot.lane.b32.xlu0 %v2154, 100
      %v5731 = vpop.permute.xlu0 %5730
      %5732 = vrot.lane.b32.xlu0 %v2155, 100
      %v5733 = vpop.permute.xlu0 %5732
      %5734 = vrot.lane.b32.xlu0 %v2156, 100
      %v5735 = vpop.permute.xlu0 %5734
      %5736 = vrot.lane.b32.xlu0 %v2157, 100
      %v5737 = vpop.permute.xlu0 %5736
      %5738 = vrot.lane.b32.xlu0 %v2158, 100
      %v5739 = vpop.permute.xlu0 %5738
      %5740 = vrot.lane.b32.xlu0 %v2159, 100
      %v5741 = vpop.permute.xlu0 %5740
      %5742 = vrot.lane.b32.xlu0 %v2160, 100
      %v5743 = vpop.permute.xlu0 %5742
      %5744 = vrot.lane.b32.xlu0 %v2161, 100
      %v5745 = vpop.permute.xlu0 %5744
      %5746 = vrot.lane.b32.xlu0 %v2162, 100
      %v5747 = vpop.permute.xlu0 %5746
      %5748 = vrot.lane.b32.xlu0 %v2163, 100
      %v5749 = vpop.permute.xlu0 %5748
      %5750 = vrot.lane.b32.xlu0 %v2164, 100
      %v5751 = vpop.permute.xlu0 %5750
      %5752 = vrot.lane.b32.xlu0 %v2165, 100
      %v5753 = vpop.permute.xlu0 %5752
      %5754 = vrot.lane.b32.xlu0 %v2166, 100
      %v5755 = vpop.permute.xlu0 %5754
      %5756 = vrot.lane.b32.xlu0 %v2167, 100
      %v5757 = vpop.permute.xlu0 %5756
      %5758 = vrot.lane.b32.xlu0 %v5473, 100
      %v5759 = vpop.permute.xlu0 %5758
      %5760 = vrot.lane.b32.xlu0 %v5474, 100
      %v5761 = vpop.permute.xlu0 %5760
      %5762 = vrot.lane.b32.xlu0 %v5475, 100
      %v5763 = vpop.permute.xlu0 %5762
      %5764 = vrot.lane.b32.xlu0 %v5476, 100
      %v5765 = vpop.permute.xlu0 %5764
      %5766 = vrot.lane.b32.xlu0 %v5477, 100
      %v5767 = vpop.permute.xlu0 %5766
      %5768 = vrot.lane.b32.xlu0 %v5478, 100
      %v5769 = vpop.permute.xlu0 %5768
      %5770 = vrot.lane.b32.xlu0 %v5479, 100
      %v5771 = vpop.permute.xlu0 %5770
      %5772 = vrot.lane.b32.xlu0 %v5480, 100
      %v5773 = vpop.permute.xlu0 %5772
      %5774 = vrot.lane.b32.xlu0 %v2176, 100
      %v5775 = vpop.permute.xlu0 %5774
      %5776 = vrot.lane.b32.xlu0 %v2177, 100
      %v5777 = vpop.permute.xlu0 %5776
      %5778 = vrot.lane.b32.xlu0 %v2178, 100
      %v5779 = vpop.permute.xlu0 %5778
      %5780 = vrot.lane.b32.xlu0 %v2179, 100
      %v5781 = vpop.permute.xlu0 %5780
      %5782 = vrot.lane.b32.xlu0 %v2180, 100
      %v5783 = vpop.permute.xlu0 %5782
      %5784 = vrot.lane.b32.xlu0 %v2181, 100
      %v5785 = vpop.permute.xlu0 %5784
      %5786 = vrot.lane.b32.xlu0 %v2182, 100
      %v5787 = vpop.permute.xlu0 %5786
      %5788 = vrot.lane.b32.xlu0 %v2183, 100
      %v5789 = vpop.permute.xlu0 %5788
      %5790 = vrot.lane.b32.xlu0 %v5481, 100
      %v5791 = vpop.permute.xlu0 %5790
      %5792 = vrot.lane.b32.xlu0 %v5482, 100
      %v5793 = vpop.permute.xlu0 %5792
      %5794 = vrot.lane.b32.xlu0 %v5483, 100
      %v5795 = vpop.permute.xlu0 %5794
      %5796 = vrot.lane.b32.xlu0 %v5484, 100
      %v5797 = vpop.permute.xlu0 %5796
      %5798 = vrot.lane.b32.xlu0 %v5485, 100
      %v5799 = vpop.permute.xlu0 %5798
      %5800 = vrot.lane.b32.xlu0 %v5486, 100
      %v5801 = vpop.permute.xlu0 %5800
      %5802 = vrot.lane.b32.xlu0 %v5487, 100
      %v5803 = vpop.permute.xlu0 %5802
      %5804 = vrot.lane.b32.xlu0 %v5488, 100
      %v5805 = vpop.permute.xlu0 %5804
      %5806 = vrot.lane.b32.xlu0 %v2192, 100
      %v5807 = vpop.permute.xlu0 %5806
      %5808 = vrot.lane.b32.xlu0 %v2193, 100
      %v5809 = vpop.permute.xlu0 %5808
      %5810 = vrot.lane.b32.xlu0 %v2194, 100
      %v5811 = vpop.permute.xlu0 %5810
      %5812 = vrot.lane.b32.xlu0 %v2195, 100
      %v5813 = vpop.permute.xlu0 %5812
      %5814 = vrot.lane.b32.xlu0 %v2196, 100
      %v5815 = vpop.permute.xlu0 %5814
      %5816 = vrot.lane.b32.xlu0 %v2197, 100
      %v5817 = vpop.permute.xlu0 %5816
      %5818 = vrot.lane.b32.xlu0 %v2198, 100
      %v5819 = vpop.permute.xlu0 %5818
      %5820 = vrot.lane.b32.xlu0 %v2199, 100
      %v5821 = vpop.permute.xlu0 %5820
      %5822 = vrot.lane.b32.xlu0 %v5489, 100
      %v5823 = vpop.permute.xlu0 %5822
      %5824 = vrot.lane.b32.xlu0 %v5490, 100
      %v5825 = vpop.permute.xlu0 %5824
      %5826 = vrot.lane.b32.xlu0 %v5491, 100
      %v5827 = vpop.permute.xlu0 %5826
      %5828 = vrot.lane.b32.xlu0 %v5492, 100
      %v5829 = vpop.permute.xlu0 %5828
      %5830 = vrot.lane.b32.xlu0 %v5493, 100
      %v5831 = vpop.permute.xlu0 %5830
      %5832 = vrot.lane.b32.xlu0 %v5494, 100
      %v5833 = vpop.permute.xlu0 %5832
      %5834 = vrot.lane.b32.xlu0 %v5495, 100
      %v5835 = vpop.permute.xlu0 %5834
      %5836 = vrot.lane.b32.xlu0 %v5496, 100
      %v5837 = vpop.permute.xlu0 %5836
      %v5842 = vunpack.c.l.b16 %v5498
      %v5843 = vunpack.c.h.b16 %v5498
      %v5844 = vunpack.c.l.b16 %v5499
      %v5845 = vunpack.c.h.b16 %v5499
      %v5846 = vunpack.c.l.b16 %v5500
      %v5847 = vunpack.c.h.b16 %v5500
      %v5848 = vunpack.c.l.b16 %v5501
      %v5849 = vunpack.c.h.b16 %v5501
      %v5850 = vpack.c.b16 %v5844, %v5842
      %v5851 = vpack.c.b16 %v5845, %v5843
      %v5852 = vpack.c.b16 %v5848, %v5846
      %v5853 = vpack.c.b16 %v5849, %v5847
      %v5857 = vsel %vm2231, %v5615, 0
      %v5860 = vsel %vm2231, %v5617, 0
      %v5863 = vsel %vm2231, %v5619, 0
      %v5866 = vsel %vm2231, %v5621, 0
      %v5869 = vsel %vm2231, %v5623, 0
      %v5872 = vsel %vm2231, %v5625, 0
      %v5875 = vsel %vm2231, %v5627, 0
      %v5878 = vsel %vm2231, %v5629, 0
      %v5881 = vsel %vm2231, %v5631, 0
      %v5884 = vsel %vm2231, %v5633, 0
      %v5887 = vsel %vm2231, %v5635, 0
      %v5890 = vsel %vm2231, %v5637, 0
      %v5893 = vsel %vm2231, %v5639, 0
      %v5896 = vsel %vm2231, %v5641, 0
      %v5899 = vsel %vm2231, %v5643, 0
      %v5902 = vsel %vm2231, %v5645, 0
      %v5905 = vsel %vm2231, %v5647, 0
      %v5908 = vsel %vm2231, %v5649, 0
      %v5911 = vsel %vm2231, %v5651, 0
      %v5914 = vsel %vm2231, %v5653, 0
      %v5917 = vsel %vm2231, %v5655, 0
      %v5920 = vsel %vm2231, %v5657, 0
      %v5923 = vsel %vm2231, %v5659, 0
      %v5926 = vsel %vm2231, %v5661, 0
      %v5929 = vsel %vm2231, %v5663, 0
      %v5932 = vsel %vm2231, %v5665, 0
      %v5935 = vsel %vm2231, %v5667, 0
      %v5938 = vsel %vm2231, %v5669, 0
      %v5941 = vsel %vm2231, %v5671, 0
      %v5944 = vsel %vm2231, %v5673, 0
      %v5947 = vsel %vm2231, %v5675, 0
      %v5950 = vsel %vm2231, %v5677, 0
      %v5953 = vsel %vm2231, %v5679, 0
      %v5956 = vsel %vm2231, %v5681, 0
      %v5959 = vsel %vm2231, %v5683, 0
      %v5962 = vsel %vm2231, %v5685, 0
      %v5965 = vsel %vm2231, %v5687, 0
      %v5968 = vsel %vm2231, %v5689, 0
      %v5971 = vsel %vm2231, %v5691, 0
      %v5974 = vsel %vm2231, %v5693, 0
      %v5977 = vsel %vm2231, %v5695, 0
      %v5980 = vsel %vm2231, %v5697, 0
      %v5983 = vsel %vm2231, %v5699, 0
      %v5986 = vsel %vm2231, %v5701, 0
      %v5989 = vsel %vm2231, %v5703, 0
      %v5992 = vsel %vm2231, %v5705, 0
      %v5995 = vsel %vm2231, %v5707, 0
      %v5998 = vsel %vm2231, %v5709, 0
      %v6001 = vsel %vm2231, %v5711, 0
      %v6004 = vsel %vm2231, %v5713, 0
      %v6007 = vsel %vm2231, %v5715, 0
      %v6010 = vsel %vm2231, %v5717, 0
      %v6013 = vsel %vm2231, %v5719, 0
      %v6016 = vsel %vm2231, %v5721, 0
      %v6019 = vsel %vm2231, %v5723, 0
      %v6022 = vsel %vm2231, %v5725, 0
      %v6025 = vsel %vm2231, %v5727, 0
      %v6028 = vsel %vm2231, %v5729, 0
      %v6031 = vsel %vm2231, %v5731, 0
      %v6034 = vsel %vm2231, %v5733, 0
      %v6037 = vsel %vm2231, %v5735, 0
      %v6040 = vsel %vm2231, %v5737, 0
      %v6043 = vsel %vm2231, %v5739, 0
      %v6046 = vsel %vm2231, %v5741, 0
      %v6049 = vsel %vm2231, %v5743, 0
      %v6052 = vsel %vm2231, %v5745, 0
      %v6055 = vsel %vm2231, %v5747, 0
      %v6058 = vsel %vm2231, %v5749, 0
      %v6061 = vsel %vm2231, %v5751, 0
      %v6064 = vsel %vm2231, %v5753, 0
      %v6067 = vsel %vm2231, %v5755, 0
      %v6070 = vsel %vm2231, %v5757, 0
      %v6073 = vsel %vm2231, %v5759, 0
      %v6076 = vsel %vm2231, %v5761, 0
      %v6079 = vsel %vm2231, %v5763, 0
      %v6082 = vsel %vm2231, %v5765, 0
      %v6085 = vsel %vm2231, %v5767, 0
      %v6088 = vsel %vm2231, %v5769, 0
      %v6091 = vsel %vm2231, %v5771, 0
      %v6094 = vsel %vm2231, %v5773, 0
      %v6097 = vsel %vm2231, %v5775, 0
      %v6100 = vsel %vm2231, %v5777, 0
      %v6103 = vsel %vm2231, %v5779, 0
      %v6106 = vsel %vm2231, %v5781, 0
      %v6109 = vsel %vm2231, %v5783, 0
      %v6112 = vsel %vm2231, %v5785, 0
      %v6115 = vsel %vm2231, %v5787, 0
      %v6118 = vsel %vm2231, %v5789, 0
      %v6121 = vsel %vm2231, %v5791, 0
      %v6124 = vsel %vm2231, %v5793, 0
      %v6127 = vsel %vm2231, %v5795, 0
      %v6130 = vsel %vm2231, %v5797, 0
      %v6133 = vsel %vm2231, %v5799, 0
      %v6136 = vsel %vm2231, %v5801, 0
      %v6139 = vsel %vm2231, %v5803, 0
      %v6142 = vsel %vm2231, %v5805, 0
      %v6145 = vsel %vm2231, %v5807, 0
      %v6148 = vsel %vm2231, %v5809, 0
      %v6151 = vsel %vm2231, %v5811, 0
      %v6154 = vsel %vm2231, %v5813, 0
      %v6157 = vsel %vm2231, %v5815, 0
      %v6160 = vsel %vm2231, %v5817, 0
      %v6163 = vsel %vm2231, %v5819, 0
      %v6166 = vsel %vm2231, %v5821, 0
      %v6169 = vsel %vm2231, %v5823, 0
      %v6172 = vsel %vm2231, %v5825, 0
      %v6175 = vsel %vm2231, %v5827, 0
      %v6178 = vsel %vm2231, %v5829, 0
      %v6181 = vsel %vm2231, %v5831, 0
      %v6184 = vsel %vm2231, %v5833, 0
      %v6187 = vsel %vm2231, %v5835, 0
      %v6190 = vsel %vm2231, %v5837, 0
      %v6193 = vsel %vm2568, %v5852, 0
      %v6196 = vsel %vm2568, %v5853, 0
      %6198 = vmatpush.bf16.msra.mxu0 0
      %6199 = vmatpush.bf16.msra.mxu0 0
      %6200 = vmatpush.bf16.msra.mxu0 0
      %6201 = vmatpush.bf16.msra.mxu0 0
      %6202 = vmatpush.bf16.msra.mxu0 0
      %6203 = vmatpush.bf16.msra.mxu0 0
      %6204 = vmatpush.bf16.msra.mxu0 %v6193
      %6205 = vmatpush.bf16.msra.mxu0 %v5850
      %6206 = vmatmul.bf16.gmra.mxu0 %v5857
      %v6207 = vpop.f32.mrf.mxu0
      %v6208 = vadd.f32 0.0, %v6207
      %v6209 = vpop.f32.mrf.mxu0
      %v6210 = vadd.f32 0.0, %v6209
      %6211 = vmatmul.bf16.gmra.mxu0 %v5860
      %v6212 = vpop.f32.mrf.mxu0
      %v6213 = vadd.f32 0.0, %v6212
      %v6214 = vpop.f32.mrf.mxu0
      %v6215 = vadd.f32 0.0, %v6214
      %6216 = vmatmul.bf16.gmra.mxu0 %v5863
      %v6217 = vpop.f32.mrf.mxu0
      %v6218 = vadd.f32 0.0, %v6217
      %v6219 = vpop.f32.mrf.mxu0
      %v6220 = vadd.f32 0.0, %v6219
      %6221 = vmatmul.bf16.gmra.mxu0 %v5866
      %v6222 = vpop.f32.mrf.mxu0
      %v6223 = vadd.f32 0.0, %v6222
      %v6224 = vpop.f32.mrf.mxu0
      %v6225 = vadd.f32 0.0, %v6224
      %6226 = vmatmul.bf16.gmra.mxu0 %v5869
      %v6227 = vpop.f32.mrf.mxu0
      %v6228 = vadd.f32 0.0, %v6227
      %v6229 = vpop.f32.mrf.mxu0
      %v6230 = vadd.f32 0.0, %v6229
      %6231 = vmatmul.bf16.gmra.mxu0 %v5872
      %v6232 = vpop.f32.mrf.mxu0
      %v6233 = vadd.f32 0.0, %v6232
      %v6234 = vpop.f32.mrf.mxu0
      %v6235 = vadd.f32 0.0, %v6234
      %6236 = vmatmul.bf16.gmra.mxu0 %v5875
      %v6237 = vpop.f32.mrf.mxu0
      %v6238 = vadd.f32 0.0, %v6237
      %v6239 = vpop.f32.mrf.mxu0
      %v6240 = vadd.f32 0.0, %v6239
      %6241 = vmatmul.bf16.gmra.mxu0 %v5878
      %v6242 = vpop.f32.mrf.mxu0
      %v6243 = vadd.f32 0.0, %v6242
      %v6244 = vpop.f32.mrf.mxu0
      %v6245 = vadd.f32 0.0, %v6244
      %6246 = vmatmul.bf16.gmra.mxu0 %v5881
      %v6247 = vpop.f32.mrf.mxu0
      %v6248 = vadd.f32 0.0, %v6247
      %v6249 = vpop.f32.mrf.mxu0
      %v6250 = vadd.f32 0.0, %v6249
      %6251 = vmatmul.bf16.gmra.mxu0 %v5884
      %v6252 = vpop.f32.mrf.mxu0
      %v6253 = vadd.f32 0.0, %v6252
      %v6254 = vpop.f32.mrf.mxu0
      %v6255 = vadd.f32 0.0, %v6254
      %6256 = vmatmul.bf16.gmra.mxu0 %v5887
      %v6257 = vpop.f32.mrf.mxu0
      %v6258 = vadd.f32 0.0, %v6257
      %v6259 = vpop.f32.mrf.mxu0
      %v6260 = vadd.f32 0.0, %v6259
      %6261 = vmatmul.bf16.gmra.mxu0 %v5890
      %v6262 = vpop.f32.mrf.mxu0
      %v6263 = vadd.f32 0.0, %v6262
      %v6264 = vpop.f32.mrf.mxu0
      %v6265 = vadd.f32 0.0, %v6264
      %6266 = vmatmul.bf16.gmra.mxu0 %v5893
      %v6267 = vpop.f32.mrf.mxu0
      %v6268 = vadd.f32 0.0, %v6267
      %v6269 = vpop.f32.mrf.mxu0
      %v6270 = vadd.f32 0.0, %v6269
      %6271 = vmatmul.bf16.gmra.mxu0 %v5896
      %v6272 = vpop.f32.mrf.mxu0
      %v6273 = vadd.f32 0.0, %v6272
      %v6274 = vpop.f32.mrf.mxu0
      %v6275 = vadd.f32 0.0, %v6274
      %6276 = vmatmul.bf16.gmra.mxu0 %v5899
      %v6277 = vpop.f32.mrf.mxu0
      %v6278 = vadd.f32 0.0, %v6277
      %v6279 = vpop.f32.mrf.mxu0
      %v6280 = vadd.f32 0.0, %v6279
      %6281 = vmatmul.bf16.gmra.mxu0 %v5902
      %v6282 = vpop.f32.mrf.mxu0
      %v6283 = vadd.f32 0.0, %v6282
      %v6284 = vpop.f32.mrf.mxu0
      %v6285 = vadd.f32 0.0, %v6284
      %6286 = vmatmul.bf16.gmra.mxu0 %v5905
      %v6287 = vpop.f32.mrf.mxu0
      %v6288 = vadd.f32 0.0, %v6287
      %v6289 = vpop.f32.mrf.mxu0
      %v6290 = vadd.f32 0.0, %v6289
      %6291 = vmatmul.bf16.gmra.mxu0 %v5908
      %v6292 = vpop.f32.mrf.mxu0
      %v6293 = vadd.f32 0.0, %v6292
      %v6294 = vpop.f32.mrf.mxu0
      %v6295 = vadd.f32 0.0, %v6294
      %6296 = vmatmul.bf16.gmra.mxu0 %v5911
      %v6297 = vpop.f32.mrf.mxu0
      %v6298 = vadd.f32 0.0, %v6297
      %v6299 = vpop.f32.mrf.mxu0
      %v6300 = vadd.f32 0.0, %v6299
      %6301 = vmatmul.bf16.gmra.mxu0 %v5914
      %v6302 = vpop.f32.mrf.mxu0
      %v6303 = vadd.f32 0.0, %v6302
      %v6304 = vpop.f32.mrf.mxu0
      %v6305 = vadd.f32 0.0, %v6304
      %6306 = vmatmul.bf16.gmra.mxu0 %v5917
      %v6307 = vpop.f32.mrf.mxu0
      %v6308 = vadd.f32 0.0, %v6307
      %v6309 = vpop.f32.mrf.mxu0
      %v6310 = vadd.f32 0.0, %v6309
      %6311 = vmatmul.bf16.gmra.mxu0 %v5920
      %v6312 = vpop.f32.mrf.mxu0
      %v6313 = vadd.f32 0.0, %v6312
      %v6314 = vpop.f32.mrf.mxu0
      %v6315 = vadd.f32 0.0, %v6314
      %6316 = vmatmul.bf16.gmra.mxu0 %v5923
      %v6317 = vpop.f32.mrf.mxu0
      %v6318 = vadd.f32 0.0, %v6317
      %v6319 = vpop.f32.mrf.mxu0
      %v6320 = vadd.f32 0.0, %v6319
      %6321 = vmatmul.bf16.gmra.mxu0 %v5926
      %v6322 = vpop.f32.mrf.mxu0
      %v6323 = vadd.f32 0.0, %v6322
      %v6324 = vpop.f32.mrf.mxu0
      %v6325 = vadd.f32 0.0, %v6324
      %6326 = vmatmul.bf16.gmra.mxu0 %v5929
      %v6327 = vpop.f32.mrf.mxu0
      %v6328 = vadd.f32 0.0, %v6327
      %v6329 = vpop.f32.mrf.mxu0
      %v6330 = vadd.f32 0.0, %v6329
      %6331 = vmatmul.bf16.gmra.mxu0 %v5932
      %v6332 = vpop.f32.mrf.mxu0
      %v6333 = vadd.f32 0.0, %v6332
      %v6334 = vpop.f32.mrf.mxu0
      %v6335 = vadd.f32 0.0, %v6334
      %6336 = vmatmul.bf16.gmra.mxu0 %v5935
      %v6337 = vpop.f32.mrf.mxu0
      %v6338 = vadd.f32 0.0, %v6337
      %v6339 = vpop.f32.mrf.mxu0
      %v6340 = vadd.f32 0.0, %v6339
      %6341 = vmatmul.bf16.gmra.mxu0 %v5938
      %v6342 = vpop.f32.mrf.mxu0
      %v6343 = vadd.f32 0.0, %v6342
      %v6344 = vpop.f32.mrf.mxu0
      %v6345 = vadd.f32 0.0, %v6344
      %6346 = vmatmul.bf16.gmra.mxu0 %v5941
      %v6347 = vpop.f32.mrf.mxu0
      %v6348 = vadd.f32 0.0, %v6347
      %v6349 = vpop.f32.mrf.mxu0
      %v6350 = vadd.f32 0.0, %v6349
      %6351 = vmatmul.bf16.gmra.mxu0 %v5944
      %v6352 = vpop.f32.mrf.mxu0
      %v6353 = vadd.f32 0.0, %v6352
      %v6354 = vpop.f32.mrf.mxu0
      %v6355 = vadd.f32 0.0, %v6354
      %6356 = vmatmul.bf16.gmra.mxu0 %v5947
      %v6357 = vpop.f32.mrf.mxu0
      %v6358 = vadd.f32 0.0, %v6357
      %v6359 = vpop.f32.mrf.mxu0
      %v6360 = vadd.f32 0.0, %v6359
      %6361 = vmatmul.bf16.gmra.mxu0 %v5950
      %v6362 = vpop.f32.mrf.mxu0
      %v6363 = vadd.f32 0.0, %v6362
      %v6364 = vpop.f32.mrf.mxu0
      %v6365 = vadd.f32 0.0, %v6364
      %6366 = vmatmul.bf16.gmra.mxu0 %v5953
      %v6367 = vpop.f32.mrf.mxu0
      %v6368 = vadd.f32 0.0, %v6367
      %v6369 = vpop.f32.mrf.mxu0
      %v6370 = vadd.f32 0.0, %v6369
      %6371 = vmatmul.bf16.gmra.mxu0 %v5956
      %v6372 = vpop.f32.mrf.mxu0
      %v6373 = vadd.f32 0.0, %v6372
      %v6374 = vpop.f32.mrf.mxu0
      %v6375 = vadd.f32 0.0, %v6374
      %6376 = vmatmul.bf16.gmra.mxu0 %v5959
      %v6377 = vpop.f32.mrf.mxu0
      %v6378 = vadd.f32 0.0, %v6377
      %v6379 = vpop.f32.mrf.mxu0
      %v6380 = vadd.f32 0.0, %v6379
      %6381 = vmatmul.bf16.gmra.mxu0 %v5962
      %v6382 = vpop.f32.mrf.mxu0
      %v6383 = vadd.f32 0.0, %v6382
      %v6384 = vpop.f32.mrf.mxu0
      %v6385 = vadd.f32 0.0, %v6384
      %6386 = vmatmul.bf16.gmra.mxu0 %v5965
      %v6387 = vpop.f32.mrf.mxu0
      %v6388 = vadd.f32 0.0, %v6387
      %v6389 = vpop.f32.mrf.mxu0
      %v6390 = vadd.f32 0.0, %v6389
      %6391 = vmatmul.bf16.gmra.mxu0 %v5968
      %v6392 = vpop.f32.mrf.mxu0
      %v6393 = vadd.f32 0.0, %v6392
      %v6394 = vpop.f32.mrf.mxu0
      %v6395 = vadd.f32 0.0, %v6394
      %6396 = vmatmul.bf16.gmra.mxu0 %v5971
      %v6397 = vpop.f32.mrf.mxu0
      %v6398 = vadd.f32 0.0, %v6397
      %v6399 = vpop.f32.mrf.mxu0
      %v6400 = vadd.f32 0.0, %v6399
      %6401 = vmatmul.bf16.gmra.mxu0 %v5974
      %v6402 = vpop.f32.mrf.mxu0
      %v6403 = vadd.f32 0.0, %v6402
      %v6404 = vpop.f32.mrf.mxu0
      %v6405 = vadd.f32 0.0, %v6404
      %6406 = vmatmul.bf16.gmra.mxu0 %v5977
      %v6407 = vpop.f32.mrf.mxu0
      %v6408 = vadd.f32 0.0, %v6407
      %v6409 = vpop.f32.mrf.mxu0
      %v6410 = vadd.f32 0.0, %v6409
      %6411 = vmatmul.bf16.gmra.mxu0 %v5980
      %v6412 = vpop.f32.mrf.mxu0
      %v6413 = vadd.f32 0.0, %v6412
      %v6414 = vpop.f32.mrf.mxu0
      %v6415 = vadd.f32 0.0, %v6414
      %6416 = vmatmul.bf16.gmra.mxu0 %v5983
      %v6417 = vpop.f32.mrf.mxu0
      %v6418 = vadd.f32 0.0, %v6417
      %v6419 = vpop.f32.mrf.mxu0
      %v6420 = vadd.f32 0.0, %v6419
      %6421 = vmatmul.bf16.gmra.mxu0 %v5986
      %v6422 = vpop.f32.mrf.mxu0
      %v6423 = vadd.f32 0.0, %v6422
      %v6424 = vpop.f32.mrf.mxu0
      %v6425 = vadd.f32 0.0, %v6424
      %6426 = vmatmul.bf16.gmra.mxu0 %v5989
      %v6427 = vpop.f32.mrf.mxu0
      %v6428 = vadd.f32 0.0, %v6427
      %v6429 = vpop.f32.mrf.mxu0
      %v6430 = vadd.f32 0.0, %v6429
      %6431 = vmatmul.bf16.gmra.mxu0 %v5992
      %v6432 = vpop.f32.mrf.mxu0
      %v6433 = vadd.f32 0.0, %v6432
      %v6434 = vpop.f32.mrf.mxu0
      %v6435 = vadd.f32 0.0, %v6434
      %6436 = vmatmul.bf16.gmra.mxu0 %v5995
      %v6437 = vpop.f32.mrf.mxu0
      %v6438 = vadd.f32 0.0, %v6437
      %v6439 = vpop.f32.mrf.mxu0
      %v6440 = vadd.f32 0.0, %v6439
      %6441 = vmatmul.bf16.gmra.mxu0 %v5998
      %v6442 = vpop.f32.mrf.mxu0
      %v6443 = vadd.f32 0.0, %v6442
      %v6444 = vpop.f32.mrf.mxu0
      %v6445 = vadd.f32 0.0, %v6444
      %6446 = vmatmul.bf16.gmra.mxu0 %v6001
      %v6447 = vpop.f32.mrf.mxu0
      %v6448 = vadd.f32 0.0, %v6447
      %v6449 = vpop.f32.mrf.mxu0
      %v6450 = vadd.f32 0.0, %v6449
      %6451 = vmatmul.bf16.gmra.mxu0 %v6004
      %v6452 = vpop.f32.mrf.mxu0
      %v6453 = vadd.f32 0.0, %v6452
      %v6454 = vpop.f32.mrf.mxu0
      %v6455 = vadd.f32 0.0, %v6454
      %6456 = vmatmul.bf16.gmra.mxu0 %v6007
      %v6457 = vpop.f32.mrf.mxu0
      %v6458 = vadd.f32 0.0, %v6457
      %v6459 = vpop.f32.mrf.mxu0
      %v6460 = vadd.f32 0.0, %v6459
      %6461 = vmatmul.bf16.gmra.mxu0 %v6010
      %v6462 = vpop.f32.mrf.mxu0
      %v6463 = vadd.f32 0.0, %v6462
      %v6464 = vpop.f32.mrf.mxu0
      %v6465 = vadd.f32 0.0, %v6464
      %6466 = vmatmul.bf16.gmra.mxu0 %v6013
      %v6467 = vpop.f32.mrf.mxu0
      %v6468 = vadd.f32 0.0, %v6467
      %v6469 = vpop.f32.mrf.mxu0
      %v6470 = vadd.f32 0.0, %v6469
      %6471 = vmatmul.bf16.gmra.mxu0 %v6016
      %v6472 = vpop.f32.mrf.mxu0
      %v6473 = vadd.f32 0.0, %v6472
      %v6474 = vpop.f32.mrf.mxu0
      %v6475 = vadd.f32 0.0, %v6474
      %6476 = vmatmul.bf16.gmra.mxu0 %v6019
      %v6477 = vpop.f32.mrf.mxu0
      %v6478 = vadd.f32 0.0, %v6477
      %v6479 = vpop.f32.mrf.mxu0
      %v6480 = vadd.f32 0.0, %v6479
      %6481 = vmatmul.bf16.gmra.mxu0 %v6022
      %v6482 = vpop.f32.mrf.mxu0
      %v6483 = vadd.f32 0.0, %v6482
      %v6484 = vpop.f32.mrf.mxu0
      %v6485 = vadd.f32 0.0, %v6484
      %6486 = vmatmul.bf16.gmra.mxu0 %v6025
      %v6487 = vpop.f32.mrf.mxu0
      %v6488 = vadd.f32 0.0, %v6487
      %v6489 = vpop.f32.mrf.mxu0
      %v6490 = vadd.f32 0.0, %v6489
      %6491 = vmatmul.bf16.gmra.mxu0 %v6028
      %v6492 = vpop.f32.mrf.mxu0
      %v6493 = vadd.f32 0.0, %v6492
      %v6494 = vpop.f32.mrf.mxu0
      %v6495 = vadd.f32 0.0, %v6494
      %6496 = vmatmul.bf16.gmra.mxu0 %v6031
      %v6497 = vpop.f32.mrf.mxu0
      %v6498 = vadd.f32 0.0, %v6497
      %v6499 = vpop.f32.mrf.mxu0
      %v6500 = vadd.f32 0.0, %v6499
      %6501 = vmatmul.bf16.gmra.mxu0 %v6034
      %v6502 = vpop.f32.mrf.mxu0
      %v6503 = vadd.f32 0.0, %v6502
      %v6504 = vpop.f32.mrf.mxu0
      %v6505 = vadd.f32 0.0, %v6504
      %6506 = vmatmul.bf16.gmra.mxu0 %v6037
      %v6507 = vpop.f32.mrf.mxu0
      %v6508 = vadd.f32 0.0, %v6507
      %v6509 = vpop.f32.mrf.mxu0
      %v6510 = vadd.f32 0.0, %v6509
      %6511 = vmatmul.bf16.gmra.mxu0 %v6040
      %v6512 = vpop.f32.mrf.mxu0
      %v6513 = vadd.f32 0.0, %v6512
      %v6514 = vpop.f32.mrf.mxu0
      %v6515 = vadd.f32 0.0, %v6514
      %6516 = vmatmul.bf16.gmra.mxu0 %v6043
      %v6517 = vpop.f32.mrf.mxu0
      %v6518 = vadd.f32 0.0, %v6517
      %v6519 = vpop.f32.mrf.mxu0
      %v6520 = vadd.f32 0.0, %v6519
      %6521 = vmatmul.bf16.gmra.mxu0 %v6046
      %v6522 = vpop.f32.mrf.mxu0
      %v6523 = vadd.f32 0.0, %v6522
      %v6524 = vpop.f32.mrf.mxu0
      %v6525 = vadd.f32 0.0, %v6524
      %6526 = vmatmul.bf16.gmra.mxu0 %v6049
      %v6527 = vpop.f32.mrf.mxu0
      %v6528 = vadd.f32 0.0, %v6527
      %v6529 = vpop.f32.mrf.mxu0
      %v6530 = vadd.f32 0.0, %v6529
      %6531 = vmatmul.bf16.gmra.mxu0 %v6052
      %v6532 = vpop.f32.mrf.mxu0
      %v6533 = vadd.f32 0.0, %v6532
      %v6534 = vpop.f32.mrf.mxu0
      %v6535 = vadd.f32 0.0, %v6534
      %6536 = vmatmul.bf16.gmra.mxu0 %v6055
      %v6537 = vpop.f32.mrf.mxu0
      %v6538 = vadd.f32 0.0, %v6537
      %v6539 = vpop.f32.mrf.mxu0
      %v6540 = vadd.f32 0.0, %v6539
      %6541 = vmatmul.bf16.gmra.mxu0 %v6058
      %v6542 = vpop.f32.mrf.mxu0
      %v6543 = vadd.f32 0.0, %v6542
      %v6544 = vpop.f32.mrf.mxu0
      %v6545 = vadd.f32 0.0, %v6544
      %6546 = vmatmul.bf16.gmra.mxu0 %v6061
      %v6547 = vpop.f32.mrf.mxu0
      %v6548 = vadd.f32 0.0, %v6547
      %v6549 = vpop.f32.mrf.mxu0
      %v6550 = vadd.f32 0.0, %v6549
      %6551 = vmatmul.bf16.gmra.mxu0 %v6064
      %v6552 = vpop.f32.mrf.mxu0
      %v6553 = vadd.f32 0.0, %v6552
      %v6554 = vpop.f32.mrf.mxu0
      %v6555 = vadd.f32 0.0, %v6554
      %6556 = vmatmul.bf16.gmra.mxu0 %v6067
      %v6557 = vpop.f32.mrf.mxu0
      %v6558 = vadd.f32 0.0, %v6557
      %v6559 = vpop.f32.mrf.mxu0
      %v6560 = vadd.f32 0.0, %v6559
      %6561 = vmatmul.bf16.gmra.mxu0 %v6070
      %v6562 = vpop.f32.mrf.mxu0
      %v6563 = vadd.f32 0.0, %v6562
      %v6564 = vpop.f32.mrf.mxu0
      %v6565 = vadd.f32 0.0, %v6564
      %6566 = vmatmul.bf16.gmra.mxu0 %v6073
      %v6567 = vpop.f32.mrf.mxu0
      %v6568 = vadd.f32 0.0, %v6567
      %v6569 = vpop.f32.mrf.mxu0
      %v6570 = vadd.f32 0.0, %v6569
      %6571 = vmatmul.bf16.gmra.mxu0 %v6076
      %v6572 = vpop.f32.mrf.mxu0
      %v6573 = vadd.f32 0.0, %v6572
      %v6574 = vpop.f32.mrf.mxu0
      %v6575 = vadd.f32 0.0, %v6574
      %6576 = vmatmul.bf16.gmra.mxu0 %v6079
      %v6577 = vpop.f32.mrf.mxu0
      %v6578 = vadd.f32 0.0, %v6577
      %v6579 = vpop.f32.mrf.mxu0
      %v6580 = vadd.f32 0.0, %v6579
      %6581 = vmatmul.bf16.gmra.mxu0 %v6082
      %v6582 = vpop.f32.mrf.mxu0
      %v6583 = vadd.f32 0.0, %v6582
      %v6584 = vpop.f32.mrf.mxu0
      %v6585 = vadd.f32 0.0, %v6584
      %6586 = vmatmul.bf16.gmra.mxu0 %v6085
      %v6587 = vpop.f32.mrf.mxu0
      %v6588 = vadd.f32 0.0, %v6587
      %v6589 = vpop.f32.mrf.mxu0
      %v6590 = vadd.f32 0.0, %v6589
      %6591 = vmatmul.bf16.gmra.mxu0 %v6088
      %v6592 = vpop.f32.mrf.mxu0
      %v6593 = vadd.f32 0.0, %v6592
      %v6594 = vpop.f32.mrf.mxu0
      %v6595 = vadd.f32 0.0, %v6594
      %6596 = vmatmul.bf16.gmra.mxu0 %v6091
      %v6597 = vpop.f32.mrf.mxu0
      %v6598 = vadd.f32 0.0, %v6597
      %v6599 = vpop.f32.mrf.mxu0
      %v6600 = vadd.f32 0.0, %v6599
      %6601 = vmatmul.bf16.gmra.mxu0 %v6094
      %v6602 = vpop.f32.mrf.mxu0
      %v6603 = vadd.f32 0.0, %v6602
      %v6604 = vpop.f32.mrf.mxu0
      %v6605 = vadd.f32 0.0, %v6604
      %6606 = vmatmul.bf16.gmra.mxu0 %v6097
      %v6607 = vpop.f32.mrf.mxu0
      %v6608 = vadd.f32 0.0, %v6607
      %v6609 = vpop.f32.mrf.mxu0
      %v6610 = vadd.f32 0.0, %v6609
      %6611 = vmatmul.bf16.gmra.mxu0 %v6100
      %v6612 = vpop.f32.mrf.mxu0
      %v6613 = vadd.f32 0.0, %v6612
      %v6614 = vpop.f32.mrf.mxu0
      %v6615 = vadd.f32 0.0, %v6614
      %6616 = vmatmul.bf16.gmra.mxu0 %v6103
      %v6617 = vpop.f32.mrf.mxu0
      %v6618 = vadd.f32 0.0, %v6617
      %v6619 = vpop.f32.mrf.mxu0
      %v6620 = vadd.f32 0.0, %v6619
      %6621 = vmatmul.bf16.gmra.mxu0 %v6106
      %v6622 = vpop.f32.mrf.mxu0
      %v6623 = vadd.f32 0.0, %v6622
      %v6624 = vpop.f32.mrf.mxu0
      %v6625 = vadd.f32 0.0, %v6624
      %6626 = vmatmul.bf16.gmra.mxu0 %v6109
      %v6627 = vpop.f32.mrf.mxu0
      %v6628 = vadd.f32 0.0, %v6627
      %v6629 = vpop.f32.mrf.mxu0
      %v6630 = vadd.f32 0.0, %v6629
      %6631 = vmatmul.bf16.gmra.mxu0 %v6112
      %v6632 = vpop.f32.mrf.mxu0
      %v6633 = vadd.f32 0.0, %v6632
      %v6634 = vpop.f32.mrf.mxu0
      %v6635 = vadd.f32 0.0, %v6634
      %6636 = vmatmul.bf16.gmra.mxu0 %v6115
      %v6637 = vpop.f32.mrf.mxu0
      %v6638 = vadd.f32 0.0, %v6637
      %v6639 = vpop.f32.mrf.mxu0
      %v6640 = vadd.f32 0.0, %v6639
      %6641 = vmatmul.bf16.gmra.mxu0 %v6118
      %v6642 = vpop.f32.mrf.mxu0
      %v6643 = vadd.f32 0.0, %v6642
      %v6644 = vpop.f32.mrf.mxu0
      %v6645 = vadd.f32 0.0, %v6644
      %6646 = vmatmul.bf16.gmra.mxu0 %v6121
      %v6647 = vpop.f32.mrf.mxu0
      %v6648 = vadd.f32 0.0, %v6647
      %v6649 = vpop.f32.mrf.mxu0
      %v6650 = vadd.f32 0.0, %v6649
      %6651 = vmatmul.bf16.gmra.mxu0 %v6124
      %v6652 = vpop.f32.mrf.mxu0
      %v6653 = vadd.f32 0.0, %v6652
      %v6654 = vpop.f32.mrf.mxu0
      %v6655 = vadd.f32 0.0, %v6654
      %6656 = vmatmul.bf16.gmra.mxu0 %v6127
      %v6657 = vpop.f32.mrf.mxu0
      %v6658 = vadd.f32 0.0, %v6657
      %v6659 = vpop.f32.mrf.mxu0
      %v6660 = vadd.f32 0.0, %v6659
      %6661 = vmatmul.bf16.gmra.mxu0 %v6130
      %v6662 = vpop.f32.mrf.mxu0
      %v6663 = vadd.f32 0.0, %v6662
      %v6664 = vpop.f32.mrf.mxu0
      %v6665 = vadd.f32 0.0, %v6664
      %6666 = vmatmul.bf16.gmra.mxu0 %v6133
      %v6667 = vpop.f32.mrf.mxu0
      %v6668 = vadd.f32 0.0, %v6667
      %v6669 = vpop.f32.mrf.mxu0
      %v6670 = vadd.f32 0.0, %v6669
      %6671 = vmatmul.bf16.gmra.mxu0 %v6136
      %v6672 = vpop.f32.mrf.mxu0
      %v6673 = vadd.f32 0.0, %v6672
      %v6674 = vpop.f32.mrf.mxu0
      %v6675 = vadd.f32 0.0, %v6674
      %6676 = vmatmul.bf16.gmra.mxu0 %v6139
      %v6677 = vpop.f32.mrf.mxu0
      %v6678 = vadd.f32 0.0, %v6677
      %v6679 = vpop.f32.mrf.mxu0
      %v6680 = vadd.f32 0.0, %v6679
      %6681 = vmatmul.bf16.gmra.mxu0 %v6142
      %v6682 = vpop.f32.mrf.mxu0
      %v6683 = vadd.f32 0.0, %v6682
      %v6684 = vpop.f32.mrf.mxu0
      %v6685 = vadd.f32 0.0, %v6684
      %6686 = vmatmul.bf16.gmra.mxu0 %v6145
      %v6687 = vpop.f32.mrf.mxu0
      %v6688 = vadd.f32 0.0, %v6687
      %v6689 = vpop.f32.mrf.mxu0
      %v6690 = vadd.f32 0.0, %v6689
      %6691 = vmatmul.bf16.gmra.mxu0 %v6148
      %v6692 = vpop.f32.mrf.mxu0
      %v6693 = vadd.f32 0.0, %v6692
      %v6694 = vpop.f32.mrf.mxu0
      %v6695 = vadd.f32 0.0, %v6694
      %6696 = vmatmul.bf16.gmra.mxu0 %v6151
      %v6697 = vpop.f32.mrf.mxu0
      %v6698 = vadd.f32 0.0, %v6697
      %v6699 = vpop.f32.mrf.mxu0
      %v6700 = vadd.f32 0.0, %v6699
      %6701 = vmatmul.bf16.gmra.mxu0 %v6154
      %v6702 = vpop.f32.mrf.mxu0
      %v6703 = vadd.f32 0.0, %v6702
      %v6704 = vpop.f32.mrf.mxu0
      %v6705 = vadd.f32 0.0, %v6704
      %6706 = vmatmul.bf16.gmra.mxu0 %v6157
      %v6707 = vpop.f32.mrf.mxu0
      %v6708 = vadd.f32 0.0, %v6707
      %v6709 = vpop.f32.mrf.mxu0
      %v6710 = vadd.f32 0.0, %v6709
      %6711 = vmatmul.bf16.gmra.mxu0 %v6160
      %v6712 = vpop.f32.mrf.mxu0
      %v6713 = vadd.f32 0.0, %v6712
      %v6714 = vpop.f32.mrf.mxu0
      %v6715 = vadd.f32 0.0, %v6714
      %6716 = vmatmul.bf16.gmra.mxu0 %v6163
      %v6717 = vpop.f32.mrf.mxu0
      %v6718 = vadd.f32 0.0, %v6717
      %v6719 = vpop.f32.mrf.mxu0
      %v6720 = vadd.f32 0.0, %v6719
      %6721 = vmatmul.bf16.gmra.mxu0 %v6166
      %v6722 = vpop.f32.mrf.mxu0
      %v6723 = vadd.f32 0.0, %v6722
      %v6724 = vpop.f32.mrf.mxu0
      %v6725 = vadd.f32 0.0, %v6724
      %6726 = vmatmul.bf16.gmra.mxu0 %v6169
      %v6727 = vpop.f32.mrf.mxu0
      %v6728 = vadd.f32 0.0, %v6727
      %v6729 = vpop.f32.mrf.mxu0
      %v6730 = vadd.f32 0.0, %v6729
      %6731 = vmatmul.bf16.gmra.mxu0 %v6172
      %v6732 = vpop.f32.mrf.mxu0
      %v6733 = vadd.f32 0.0, %v6732
      %v6734 = vpop.f32.mrf.mxu0
      %v6735 = vadd.f32 0.0, %v6734
      %6736 = vmatmul.bf16.gmra.mxu0 %v6175
      %v6737 = vpop.f32.mrf.mxu0
      %v6738 = vadd.f32 0.0, %v6737
      %v6739 = vpop.f32.mrf.mxu0
      %v6740 = vadd.f32 0.0, %v6739
      %6741 = vmatmul.bf16.gmra.mxu0 %v6178
      %v6742 = vpop.f32.mrf.mxu0
      %v6743 = vadd.f32 0.0, %v6742
      %v6744 = vpop.f32.mrf.mxu0
      %v6745 = vadd.f32 0.0, %v6744
      %6746 = vmatmul.bf16.gmra.mxu0 %v6181
      %v6747 = vpop.f32.mrf.mxu0
      %v6748 = vadd.f32 0.0, %v6747
      %v6749 = vpop.f32.mrf.mxu0
      %v6750 = vadd.f32 0.0, %v6749
      %6751 = vmatmul.bf16.gmra.mxu0 %v6184
      %v6752 = vpop.f32.mrf.mxu0
      %v6753 = vadd.f32 0.0, %v6752
      %v6754 = vpop.f32.mrf.mxu0
      %v6755 = vadd.f32 0.0, %v6754
      %6756 = vmatmul.bf16.gmra.mxu0 %v6187
      %v6757 = vpop.f32.mrf.mxu0
      %v6758 = vadd.f32 0.0, %v6757
      %v6759 = vpop.f32.mrf.mxu0
      %v6760 = vadd.f32 0.0, %v6759
      %6761 = vmatmul.bf16.gmra.mxu0 %v6190
      %v6762 = vpop.f32.mrf.mxu0
      %v6763 = vadd.f32 0.0, %v6762
      %v6764 = vpop.f32.mrf.mxu0
      %v6765 = vadd.f32 0.0, %v6764
      %6766 = vdwg.mxu0
      %6767 = vmatpush.bf16.msra.mxu0 0
      %6768 = vmatpush.bf16.msra.mxu0 0
      %6769 = vmatpush.bf16.msra.mxu0 0
      %6770 = vmatpush.bf16.msra.mxu0 0
      %6771 = vmatpush.bf16.msra.mxu0 0
      %6772 = vmatpush.bf16.msra.mxu0 0
      %6773 = vmatpush.bf16.msra.mxu0 %v6196
      %6774 = vmatpush.bf16.msra.mxu0 %v5851
      %6775 = vmatmul.bf16.gmra.mxu0 %v5857
      %v6776 = vpop.f32.mrf.mxu0
      %v6777 = vadd.f32 0.0, %v6776
      %v6778 = vpop.f32.mrf.mxu0
      %v6779 = vadd.f32 0.0, %v6778
      %6780 = vmatmul.bf16.gmra.mxu0 %v5860
      %v6781 = vpop.f32.mrf.mxu0
      %v6782 = vadd.f32 0.0, %v6781
      %v6783 = vpop.f32.mrf.mxu0
      %v6784 = vadd.f32 0.0, %v6783
      %6785 = vmatmul.bf16.gmra.mxu0 %v5863
      %v6786 = vpop.f32.mrf.mxu0
      %v6787 = vadd.f32 0.0, %v6786
      %v6788 = vpop.f32.mrf.mxu0
      %v6789 = vadd.f32 0.0, %v6788
      %6790 = vmatmul.bf16.gmra.mxu0 %v5866
      %v6791 = vpop.f32.mrf.mxu0
      %v6792 = vadd.f32 0.0, %v6791
      %v6793 = vpop.f32.mrf.mxu0
      %v6794 = vadd.f32 0.0, %v6793
      %6795 = vmatmul.bf16.gmra.mxu0 %v5869
      %v6796 = vpop.f32.mrf.mxu0
      %v6797 = vadd.f32 0.0, %v6796
      %v6798 = vpop.f32.mrf.mxu0
      %v6799 = vadd.f32 0.0, %v6798
      %6800 = vmatmul.bf16.gmra.mxu0 %v5872
      %v6801 = vpop.f32.mrf.mxu0
      %v6802 = vadd.f32 0.0, %v6801
      %v6803 = vpop.f32.mrf.mxu0
      %v6804 = vadd.f32 0.0, %v6803
      %6805 = vmatmul.bf16.gmra.mxu0 %v5875
      %v6806 = vpop.f32.mrf.mxu0
      %v6807 = vadd.f32 0.0, %v6806
      %v6808 = vpop.f32.mrf.mxu0
      %v6809 = vadd.f32 0.0, %v6808
      %6810 = vmatmul.bf16.gmra.mxu0 %v5878
      %v6811 = vpop.f32.mrf.mxu0
      %v6812 = vadd.f32 0.0, %v6811
      %v6813 = vpop.f32.mrf.mxu0
      %v6814 = vadd.f32 0.0, %v6813
      %6815 = vmatmul.bf16.gmra.mxu0 %v5881
      %v6816 = vpop.f32.mrf.mxu0
      %v6817 = vadd.f32 0.0, %v6816
      %v6818 = vpop.f32.mrf.mxu0
      %v6819 = vadd.f32 0.0, %v6818
      %6820 = vmatmul.bf16.gmra.mxu0 %v5884
      %v6821 = vpop.f32.mrf.mxu0
      %v6822 = vadd.f32 0.0, %v6821
      %v6823 = vpop.f32.mrf.mxu0
      %v6824 = vadd.f32 0.0, %v6823
      %6825 = vmatmul.bf16.gmra.mxu0 %v5887
      %v6826 = vpop.f32.mrf.mxu0
      %v6827 = vadd.f32 0.0, %v6826
      %v6828 = vpop.f32.mrf.mxu0
      %v6829 = vadd.f32 0.0, %v6828
      %6830 = vmatmul.bf16.gmra.mxu0 %v5890
      %v6831 = vpop.f32.mrf.mxu0
      %v6832 = vadd.f32 0.0, %v6831
      %v6833 = vpop.f32.mrf.mxu0
      %v6834 = vadd.f32 0.0, %v6833
      %6835 = vmatmul.bf16.gmra.mxu0 %v5893
      %v6836 = vpop.f32.mrf.mxu0
      %v6837 = vadd.f32 0.0, %v6836
      %v6838 = vpop.f32.mrf.mxu0
      %v6839 = vadd.f32 0.0, %v6838
      %6840 = vmatmul.bf16.gmra.mxu0 %v5896
      %v6841 = vpop.f32.mrf.mxu0
      %v6842 = vadd.f32 0.0, %v6841
      %v6843 = vpop.f32.mrf.mxu0
      %v6844 = vadd.f32 0.0, %v6843
      %6845 = vmatmul.bf16.gmra.mxu0 %v5899
      %v6846 = vpop.f32.mrf.mxu0
      %v6847 = vadd.f32 0.0, %v6846
      %v6848 = vpop.f32.mrf.mxu0
      %v6849 = vadd.f32 0.0, %v6848
      %6850 = vmatmul.bf16.gmra.mxu0 %v5902
      %v6851 = vpop.f32.mrf.mxu0
      %v6852 = vadd.f32 0.0, %v6851
      %v6853 = vpop.f32.mrf.mxu0
      %v6854 = vadd.f32 0.0, %v6853
      %6855 = vmatmul.bf16.gmra.mxu0 %v5905
      %v6856 = vpop.f32.mrf.mxu0
      %v6857 = vadd.f32 0.0, %v6856
      %v6858 = vpop.f32.mrf.mxu0
      %v6859 = vadd.f32 0.0, %v6858
      %6860 = vmatmul.bf16.gmra.mxu0 %v5908
      %v6861 = vpop.f32.mrf.mxu0
      %v6862 = vadd.f32 0.0, %v6861
      %v6863 = vpop.f32.mrf.mxu0
      %v6864 = vadd.f32 0.0, %v6863
      %6865 = vmatmul.bf16.gmra.mxu0 %v5911
      %v6866 = vpop.f32.mrf.mxu0
      %v6867 = vadd.f32 0.0, %v6866
      %v6868 = vpop.f32.mrf.mxu0
      %v6869 = vadd.f32 0.0, %v6868
      %6870 = vmatmul.bf16.gmra.mxu0 %v5914
      %v6871 = vpop.f32.mrf.mxu0
      %v6872 = vadd.f32 0.0, %v6871
      %v6873 = vpop.f32.mrf.mxu0
      %v6874 = vadd.f32 0.0, %v6873
      %6875 = vmatmul.bf16.gmra.mxu0 %v5917
      %v6876 = vpop.f32.mrf.mxu0
      %v6877 = vadd.f32 0.0, %v6876
      %v6878 = vpop.f32.mrf.mxu0
      %v6879 = vadd.f32 0.0, %v6878
      %6880 = vmatmul.bf16.gmra.mxu0 %v5920
      %v6881 = vpop.f32.mrf.mxu0
      %v6882 = vadd.f32 0.0, %v6881
      %v6883 = vpop.f32.mrf.mxu0
      %v6884 = vadd.f32 0.0, %v6883
      %6885 = vmatmul.bf16.gmra.mxu0 %v5923
      %v6886 = vpop.f32.mrf.mxu0
      %v6887 = vadd.f32 0.0, %v6886
      %v6888 = vpop.f32.mrf.mxu0
      %v6889 = vadd.f32 0.0, %v6888
      %6890 = vmatmul.bf16.gmra.mxu0 %v5926
      %v6891 = vpop.f32.mrf.mxu0
      %v6892 = vadd.f32 0.0, %v6891
      %v6893 = vpop.f32.mrf.mxu0
      %v6894 = vadd.f32 0.0, %v6893
      %6895 = vmatmul.bf16.gmra.mxu0 %v5929
      %v6896 = vpop.f32.mrf.mxu0
      %v6897 = vadd.f32 0.0, %v6896
      %v6898 = vpop.f32.mrf.mxu0
      %v6899 = vadd.f32 0.0, %v6898
      %6900 = vmatmul.bf16.gmra.mxu0 %v5932
      %v6901 = vpop.f32.mrf.mxu0
      %v6902 = vadd.f32 0.0, %v6901
      %v6903 = vpop.f32.mrf.mxu0
      %v6904 = vadd.f32 0.0, %v6903
      %6905 = vmatmul.bf16.gmra.mxu0 %v5935
      %v6906 = vpop.f32.mrf.mxu0
      %v6907 = vadd.f32 0.0, %v6906
      %v6908 = vpop.f32.mrf.mxu0
      %v6909 = vadd.f32 0.0, %v6908
      %6910 = vmatmul.bf16.gmra.mxu0 %v5938
      %v6911 = vpop.f32.mrf.mxu0
      %v6912 = vadd.f32 0.0, %v6911
      %v6913 = vpop.f32.mrf.mxu0
      %v6914 = vadd.f32 0.0, %v6913
      %6915 = vmatmul.bf16.gmra.mxu0 %v5941
      %v6916 = vpop.f32.mrf.mxu0
      %v6917 = vadd.f32 0.0, %v6916
      %v6918 = vpop.f32.mrf.mxu0
      %v6919 = vadd.f32 0.0, %v6918
      %6920 = vmatmul.bf16.gmra.mxu0 %v5944
      %v6921 = vpop.f32.mrf.mxu0
      %v6922 = vadd.f32 0.0, %v6921
      %v6923 = vpop.f32.mrf.mxu0
      %v6924 = vadd.f32 0.0, %v6923
      %6925 = vmatmul.bf16.gmra.mxu0 %v5947
      %v6926 = vpop.f32.mrf.mxu0
      %v6927 = vadd.f32 0.0, %v6926
      %v6928 = vpop.f32.mrf.mxu0
      %v6929 = vadd.f32 0.0, %v6928
      %6930 = vmatmul.bf16.gmra.mxu0 %v5950
      %v6931 = vpop.f32.mrf.mxu0
      %v6932 = vadd.f32 0.0, %v6931
      %v6933 = vpop.f32.mrf.mxu0
      %v6934 = vadd.f32 0.0, %v6933
      %6935 = vmatmul.bf16.gmra.mxu0 %v5953
      %v6936 = vpop.f32.mrf.mxu0
      %v6937 = vadd.f32 0.0, %v6936
      %v6938 = vpop.f32.mrf.mxu0
      %v6939 = vadd.f32 0.0, %v6938
      %6940 = vmatmul.bf16.gmra.mxu0 %v5956
      %v6941 = vpop.f32.mrf.mxu0
      %v6942 = vadd.f32 0.0, %v6941
      %v6943 = vpop.f32.mrf.mxu0
      %v6944 = vadd.f32 0.0, %v6943
      %6945 = vmatmul.bf16.gmra.mxu0 %v5959
      %v6946 = vpop.f32.mrf.mxu0
      %v6947 = vadd.f32 0.0, %v6946
      %v6948 = vpop.f32.mrf.mxu0
      %v6949 = vadd.f32 0.0, %v6948
      %6950 = vmatmul.bf16.gmra.mxu0 %v5962
      %v6951 = vpop.f32.mrf.mxu0
      %v6952 = vadd.f32 0.0, %v6951
      %v6953 = vpop.f32.mrf.mxu0
      %v6954 = vadd.f32 0.0, %v6953
      %6955 = vmatmul.bf16.gmra.mxu0 %v5965
      %v6956 = vpop.f32.mrf.mxu0
      %v6957 = vadd.f32 0.0, %v6956
      %v6958 = vpop.f32.mrf.mxu0
      %v6959 = vadd.f32 0.0, %v6958
      %6960 = vmatmul.bf16.gmra.mxu0 %v5968
      %v6961 = vpop.f32.mrf.mxu0
      %v6962 = vadd.f32 0.0, %v6961
      %v6963 = vpop.f32.mrf.mxu0
      %v6964 = vadd.f32 0.0, %v6963
      %6965 = vmatmul.bf16.gmra.mxu0 %v5971
      %v6966 = vpop.f32.mrf.mxu0
      %v6967 = vadd.f32 0.0, %v6966
      %v6968 = vpop.f32.mrf.mxu0
      %v6969 = vadd.f32 0.0, %v6968
      %6970 = vmatmul.bf16.gmra.mxu0 %v5974
      %v6971 = vpop.f32.mrf.mxu0
      %v6972 = vadd.f32 0.0, %v6971
      %v6973 = vpop.f32.mrf.mxu0
      %v6974 = vadd.f32 0.0, %v6973
      %6975 = vmatmul.bf16.gmra.mxu0 %v5977
      %v6976 = vpop.f32.mrf.mxu0
      %v6977 = vadd.f32 0.0, %v6976
      %v6978 = vpop.f32.mrf.mxu0
      %v6979 = vadd.f32 0.0, %v6978
      %6980 = vmatmul.bf16.gmra.mxu0 %v5980
      %v6981 = vpop.f32.mrf.mxu0
      %v6982 = vadd.f32 0.0, %v6981
      %v6983 = vpop.f32.mrf.mxu0
      %v6984 = vadd.f32 0.0, %v6983
      %6985 = vmatmul.bf16.gmra.mxu0 %v5983
      %v6986 = vpop.f32.mrf.mxu0
      %v6987 = vadd.f32 0.0, %v6986
      %v6988 = vpop.f32.mrf.mxu0
      %v6989 = vadd.f32 0.0, %v6988
      %6990 = vmatmul.bf16.gmra.mxu0 %v5986
      %v6991 = vpop.f32.mrf.mxu0
      %v6992 = vadd.f32 0.0, %v6991
      %v6993 = vpop.f32.mrf.mxu0
      %v6994 = vadd.f32 0.0, %v6993
      %6995 = vmatmul.bf16.gmra.mxu0 %v5989
      %v6996 = vpop.f32.mrf.mxu0
      %v6997 = vadd.f32 0.0, %v6996
      %v6998 = vpop.f32.mrf.mxu0
      %v6999 = vadd.f32 0.0, %v6998
      %7000 = vmatmul.bf16.gmra.mxu0 %v5992
      %v7001 = vpop.f32.mrf.mxu0
      %v7002 = vadd.f32 0.0, %v7001
      %v7003 = vpop.f32.mrf.mxu0
      %v7004 = vadd.f32 0.0, %v7003
      %7005 = vmatmul.bf16.gmra.mxu0 %v5995
      %v7006 = vpop.f32.mrf.mxu0
      %v7007 = vadd.f32 0.0, %v7006
      %v7008 = vpop.f32.mrf.mxu0
      %v7009 = vadd.f32 0.0, %v7008
      %7010 = vmatmul.bf16.gmra.mxu0 %v5998
      %v7011 = vpop.f32.mrf.mxu0
      %v7012 = vadd.f32 0.0, %v7011
      %v7013 = vpop.f32.mrf.mxu0
      %v7014 = vadd.f32 0.0, %v7013
      %7015 = vmatmul.bf16.gmra.mxu0 %v6001
      %v7016 = vpop.f32.mrf.mxu0
      %v7017 = vadd.f32 0.0, %v7016
      %v7018 = vpop.f32.mrf.mxu0
      %v7019 = vadd.f32 0.0, %v7018
      %7020 = vmatmul.bf16.gmra.mxu0 %v6004
      %v7021 = vpop.f32.mrf.mxu0
      %v7022 = vadd.f32 0.0, %v7021
      %v7023 = vpop.f32.mrf.mxu0
      %v7024 = vadd.f32 0.0, %v7023
      %7025 = vmatmul.bf16.gmra.mxu0 %v6007
      %v7026 = vpop.f32.mrf.mxu0
      %v7027 = vadd.f32 0.0, %v7026
      %v7028 = vpop.f32.mrf.mxu0
      %v7029 = vadd.f32 0.0, %v7028
      %7030 = vmatmul.bf16.gmra.mxu0 %v6010
      %v7031 = vpop.f32.mrf.mxu0
      %v7032 = vadd.f32 0.0, %v7031
      %v7033 = vpop.f32.mrf.mxu0
      %v7034 = vadd.f32 0.0, %v7033
      %7035 = vmatmul.bf16.gmra.mxu0 %v6013
      %v7036 = vpop.f32.mrf.mxu0
      %v7037 = vadd.f32 0.0, %v7036
      %v7038 = vpop.f32.mrf.mxu0
      %v7039 = vadd.f32 0.0, %v7038
      %7040 = vmatmul.bf16.gmra.mxu0 %v6016
      %v7041 = vpop.f32.mrf.mxu0
      %v7042 = vadd.f32 0.0, %v7041
      %v7043 = vpop.f32.mrf.mxu0
      %v7044 = vadd.f32 0.0, %v7043
      %7045 = vmatmul.bf16.gmra.mxu0 %v6019
      %v7046 = vpop.f32.mrf.mxu0
      %v7047 = vadd.f32 0.0, %v7046
      %v7048 = vpop.f32.mrf.mxu0
      %v7049 = vadd.f32 0.0, %v7048
      %7050 = vmatmul.bf16.gmra.mxu0 %v6022
      %v7051 = vpop.f32.mrf.mxu0
      %v7052 = vadd.f32 0.0, %v7051
      %v7053 = vpop.f32.mrf.mxu0
      %v7054 = vadd.f32 0.0, %v7053
      %7055 = vmatmul.bf16.gmra.mxu0 %v6025
      %v7056 = vpop.f32.mrf.mxu0
      %v7057 = vadd.f32 0.0, %v7056
      %v7058 = vpop.f32.mrf.mxu0
      %v7059 = vadd.f32 0.0, %v7058
      %7060 = vmatmul.bf16.gmra.mxu0 %v6028
      %v7061 = vpop.f32.mrf.mxu0
      %v7062 = vadd.f32 0.0, %v7061
      %v7063 = vpop.f32.mrf.mxu0
      %v7064 = vadd.f32 0.0, %v7063
      %7065 = vmatmul.bf16.gmra.mxu0 %v6031
      %v7066 = vpop.f32.mrf.mxu0
      %v7067 = vadd.f32 0.0, %v7066
      %v7068 = vpop.f32.mrf.mxu0
      %v7069 = vadd.f32 0.0, %v7068
      %7070 = vmatmul.bf16.gmra.mxu0 %v6034
      %v7071 = vpop.f32.mrf.mxu0
      %v7072 = vadd.f32 0.0, %v7071
      %v7073 = vpop.f32.mrf.mxu0
      %v7074 = vadd.f32 0.0, %v7073
      %7075 = vmatmul.bf16.gmra.mxu0 %v6037
      %v7076 = vpop.f32.mrf.mxu0
      %v7077 = vadd.f32 0.0, %v7076
      %v7078 = vpop.f32.mrf.mxu0
      %v7079 = vadd.f32 0.0, %v7078
      %7080 = vmatmul.bf16.gmra.mxu0 %v6040
      %v7081 = vpop.f32.mrf.mxu0
      %v7082 = vadd.f32 0.0, %v7081
      %v7083 = vpop.f32.mrf.mxu0
      %v7084 = vadd.f32 0.0, %v7083
      %7085 = vmatmul.bf16.gmra.mxu0 %v6043
      %v7086 = vpop.f32.mrf.mxu0
      %v7087 = vadd.f32 0.0, %v7086
      %v7088 = vpop.f32.mrf.mxu0
      %v7089 = vadd.f32 0.0, %v7088
      %7090 = vmatmul.bf16.gmra.mxu0 %v6046
      %v7091 = vpop.f32.mrf.mxu0
      %v7092 = vadd.f32 0.0, %v7091
      %v7093 = vpop.f32.mrf.mxu0
      %v7094 = vadd.f32 0.0, %v7093
      %7095 = vmatmul.bf16.gmra.mxu0 %v6049
      %v7096 = vpop.f32.mrf.mxu0
      %v7097 = vadd.f32 0.0, %v7096
      %v7098 = vpop.f32.mrf.mxu0
      %v7099 = vadd.f32 0.0, %v7098
      %7100 = vmatmul.bf16.gmra.mxu0 %v6052
      %v7101 = vpop.f32.mrf.mxu0
      %v7102 = vadd.f32 0.0, %v7101
      %v7103 = vpop.f32.mrf.mxu0
      %v7104 = vadd.f32 0.0, %v7103
      %7105 = vmatmul.bf16.gmra.mxu0 %v6055
      %v7106 = vpop.f32.mrf.mxu0
      %v7107 = vadd.f32 0.0, %v7106
      %v7108 = vpop.f32.mrf.mxu0
      %v7109 = vadd.f32 0.0, %v7108
      %7110 = vmatmul.bf16.gmra.mxu0 %v6058
      %v7111 = vpop.f32.mrf.mxu0
      %v7112 = vadd.f32 0.0, %v7111
      %v7113 = vpop.f32.mrf.mxu0
      %v7114 = vadd.f32 0.0, %v7113
      %7115 = vmatmul.bf16.gmra.mxu0 %v6061
      %v7116 = vpop.f32.mrf.mxu0
      %v7117 = vadd.f32 0.0, %v7116
      %v7118 = vpop.f32.mrf.mxu0
      %v7119 = vadd.f32 0.0, %v7118
      %7120 = vmatmul.bf16.gmra.mxu0 %v6064
      %v7121 = vpop.f32.mrf.mxu0
      %v7122 = vadd.f32 0.0, %v7121
      %v7123 = vpop.f32.mrf.mxu0
      %v7124 = vadd.f32 0.0, %v7123
      %7125 = vmatmul.bf16.gmra.mxu0 %v6067
      %v7126 = vpop.f32.mrf.mxu0
      %v7127 = vadd.f32 0.0, %v7126
      %v7128 = vpop.f32.mrf.mxu0
      %v7129 = vadd.f32 0.0, %v7128
      %7130 = vmatmul.bf16.gmra.mxu0 %v6070
      %v7131 = vpop.f32.mrf.mxu0
      %v7132 = vadd.f32 0.0, %v7131
      %v7133 = vpop.f32.mrf.mxu0
      %v7134 = vadd.f32 0.0, %v7133
      %7135 = vmatmul.bf16.gmra.mxu0 %v6073
      %v7136 = vpop.f32.mrf.mxu0
      %v7137 = vadd.f32 0.0, %v7136
      %v7138 = vpop.f32.mrf.mxu0
      %v7139 = vadd.f32 0.0, %v7138
      %7140 = vmatmul.bf16.gmra.mxu0 %v6076
      %v7141 = vpop.f32.mrf.mxu0
      %v7142 = vadd.f32 0.0, %v7141
      %v7143 = vpop.f32.mrf.mxu0
      %v7144 = vadd.f32 0.0, %v7143
      %7145 = vmatmul.bf16.gmra.mxu0 %v6079
      %v7146 = vpop.f32.mrf.mxu0
      %v7147 = vadd.f32 0.0, %v7146
      %v7148 = vpop.f32.mrf.mxu0
      %v7149 = vadd.f32 0.0, %v7148
      %7150 = vmatmul.bf16.gmra.mxu0 %v6082
      %v7151 = vpop.f32.mrf.mxu0
      %v7152 = vadd.f32 0.0, %v7151
      %v7153 = vpop.f32.mrf.mxu0
      %v7154 = vadd.f32 0.0, %v7153
      %7155 = vmatmul.bf16.gmra.mxu0 %v6085
      %v7156 = vpop.f32.mrf.mxu0
      %v7157 = vadd.f32 0.0, %v7156
      %v7158 = vpop.f32.mrf.mxu0
      %v7159 = vadd.f32 0.0, %v7158
      %7160 = vmatmul.bf16.gmra.mxu0 %v6088
      %v7161 = vpop.f32.mrf.mxu0
      %v7162 = vadd.f32 0.0, %v7161
      %v7163 = vpop.f32.mrf.mxu0
      %v7164 = vadd.f32 0.0, %v7163
      %7165 = vmatmul.bf16.gmra.mxu0 %v6091
      %v7166 = vpop.f32.mrf.mxu0
      %v7167 = vadd.f32 0.0, %v7166
      %v7168 = vpop.f32.mrf.mxu0
      %v7169 = vadd.f32 0.0, %v7168
      %7170 = vmatmul.bf16.gmra.mxu0 %v6094
      %v7171 = vpop.f32.mrf.mxu0
      %v7172 = vadd.f32 0.0, %v7171
      %v7173 = vpop.f32.mrf.mxu0
      %v7174 = vadd.f32 0.0, %v7173
      %7175 = vmatmul.bf16.gmra.mxu0 %v6097
      %v7176 = vpop.f32.mrf.mxu0
      %v7177 = vadd.f32 0.0, %v7176
      %v7178 = vpop.f32.mrf.mxu0
      %v7179 = vadd.f32 0.0, %v7178
      %7180 = vmatmul.bf16.gmra.mxu0 %v6100
      %v7181 = vpop.f32.mrf.mxu0
      %v7182 = vadd.f32 0.0, %v7181
      %v7183 = vpop.f32.mrf.mxu0
      %v7184 = vadd.f32 0.0, %v7183
      %7185 = vmatmul.bf16.gmra.mxu0 %v6103
      %v7186 = vpop.f32.mrf.mxu0
      %v7187 = vadd.f32 0.0, %v7186
      %v7188 = vpop.f32.mrf.mxu0
      %v7189 = vadd.f32 0.0, %v7188
      %7190 = vmatmul.bf16.gmra.mxu0 %v6106
      %v7191 = vpop.f32.mrf.mxu0
      %v7192 = vadd.f32 0.0, %v7191
      %v7193 = vpop.f32.mrf.mxu0
      %v7194 = vadd.f32 0.0, %v7193
      %7195 = vmatmul.bf16.gmra.mxu0 %v6109
      %v7196 = vpop.f32.mrf.mxu0
      %v7197 = vadd.f32 0.0, %v7196
      %v7198 = vpop.f32.mrf.mxu0
      %v7199 = vadd.f32 0.0, %v7198
      %7200 = vmatmul.bf16.gmra.mxu0 %v6112
      %v7201 = vpop.f32.mrf.mxu0
      %v7202 = vadd.f32 0.0, %v7201
      %v7203 = vpop.f32.mrf.mxu0
      %v7204 = vadd.f32 0.0, %v7203
      %7205 = vmatmul.bf16.gmra.mxu0 %v6115
      %v7206 = vpop.f32.mrf.mxu0
      %v7207 = vadd.f32 0.0, %v7206
      %v7208 = vpop.f32.mrf.mxu0
      %v7209 = vadd.f32 0.0, %v7208
      %7210 = vmatmul.bf16.gmra.mxu0 %v6118
      %v7211 = vpop.f32.mrf.mxu0
      %v7212 = vadd.f32 0.0, %v7211
      %v7213 = vpop.f32.mrf.mxu0
      %v7214 = vadd.f32 0.0, %v7213
      %7215 = vmatmul.bf16.gmra.mxu0 %v6121
      %v7216 = vpop.f32.mrf.mxu0
      %v7217 = vadd.f32 0.0, %v7216
      %v7218 = vpop.f32.mrf.mxu0
      %v7219 = vadd.f32 0.0, %v7218
      %7220 = vmatmul.bf16.gmra.mxu0 %v6124
      %v7221 = vpop.f32.mrf.mxu0
      %v7222 = vadd.f32 0.0, %v7221
      %v7223 = vpop.f32.mrf.mxu0
      %v7224 = vadd.f32 0.0, %v7223
      %7225 = vmatmul.bf16.gmra.mxu0 %v6127
      %v7226 = vpop.f32.mrf.mxu0
      %v7227 = vadd.f32 0.0, %v7226
      %v7228 = vpop.f32.mrf.mxu0
      %v7229 = vadd.f32 0.0, %v7228
      %7230 = vmatmul.bf16.gmra.mxu0 %v6130
      %v7231 = vpop.f32.mrf.mxu0
      %v7232 = vadd.f32 0.0, %v7231
      %v7233 = vpop.f32.mrf.mxu0
      %v7234 = vadd.f32 0.0, %v7233
      %7235 = vmatmul.bf16.gmra.mxu0 %v6133
      %v7236 = vpop.f32.mrf.mxu0
      %v7237 = vadd.f32 0.0, %v7236
      %v7238 = vpop.f32.mrf.mxu0
      %v7239 = vadd.f32 0.0, %v7238
      %7240 = vmatmul.bf16.gmra.mxu0 %v6136
      %v7241 = vpop.f32.mrf.mxu0
      %v7242 = vadd.f32 0.0, %v7241
      %v7243 = vpop.f32.mrf.mxu0
      %v7244 = vadd.f32 0.0, %v7243
      %7245 = vmatmul.bf16.gmra.mxu0 %v6139
      %v7246 = vpop.f32.mrf.mxu0
      %v7247 = vadd.f32 0.0, %v7246
      %v7248 = vpop.f32.mrf.mxu0
      %v7249 = vadd.f32 0.0, %v7248
      %7250 = vmatmul.bf16.gmra.mxu0 %v6142
      %v7251 = vpop.f32.mrf.mxu0
      %v7252 = vadd.f32 0.0, %v7251
      %v7253 = vpop.f32.mrf.mxu0
      %v7254 = vadd.f32 0.0, %v7253
      %7255 = vmatmul.bf16.gmra.mxu0 %v6145
      %v7256 = vpop.f32.mrf.mxu0
      %v7257 = vadd.f32 0.0, %v7256
      %v7258 = vpop.f32.mrf.mxu0
      %v7259 = vadd.f32 0.0, %v7258
      %7260 = vmatmul.bf16.gmra.mxu0 %v6148
      %v7261 = vpop.f32.mrf.mxu0
      %v7262 = vadd.f32 0.0, %v7261
      %v7263 = vpop.f32.mrf.mxu0
      %v7264 = vadd.f32 0.0, %v7263
      %7265 = vmatmul.bf16.gmra.mxu0 %v6151
      %v7266 = vpop.f32.mrf.mxu0
      %v7267 = vadd.f32 0.0, %v7266
      %v7268 = vpop.f32.mrf.mxu0
      %v7269 = vadd.f32 0.0, %v7268
      %7270 = vmatmul.bf16.gmra.mxu0 %v6154
      %v7271 = vpop.f32.mrf.mxu0
      %v7272 = vadd.f32 0.0, %v7271
      %v7273 = vpop.f32.mrf.mxu0
      %v7274 = vadd.f32 0.0, %v7273
      %7275 = vmatmul.bf16.gmra.mxu0 %v6157
      %v7276 = vpop.f32.mrf.mxu0
      %v7277 = vadd.f32 0.0, %v7276
      %v7278 = vpop.f32.mrf.mxu0
      %v7279 = vadd.f32 0.0, %v7278
      %7280 = vmatmul.bf16.gmra.mxu0 %v6160
      %v7281 = vpop.f32.mrf.mxu0
      %v7282 = vadd.f32 0.0, %v7281
      %v7283 = vpop.f32.mrf.mxu0
      %v7284 = vadd.f32 0.0, %v7283
      %7285 = vmatmul.bf16.gmra.mxu0 %v6163
      %v7286 = vpop.f32.mrf.mxu0
      %v7287 = vadd.f32 0.0, %v7286
      %v7288 = vpop.f32.mrf.mxu0
      %v7289 = vadd.f32 0.0, %v7288
      %7290 = vmatmul.bf16.gmra.mxu0 %v6166
      %v7291 = vpop.f32.mrf.mxu0
      %v7292 = vadd.f32 0.0, %v7291
      %v7293 = vpop.f32.mrf.mxu0
      %v7294 = vadd.f32 0.0, %v7293
      %7295 = vmatmul.bf16.gmra.mxu0 %v6169
      %v7296 = vpop.f32.mrf.mxu0
      %v7297 = vadd.f32 0.0, %v7296
      %v7298 = vpop.f32.mrf.mxu0
      %v7299 = vadd.f32 0.0, %v7298
      %7300 = vmatmul.bf16.gmra.mxu0 %v6172
      %v7301 = vpop.f32.mrf.mxu0
      %v7302 = vadd.f32 0.0, %v7301
      %v7303 = vpop.f32.mrf.mxu0
      %v7304 = vadd.f32 0.0, %v7303
      %7305 = vmatmul.bf16.gmra.mxu0 %v6175
      %v7306 = vpop.f32.mrf.mxu0
      %v7307 = vadd.f32 0.0, %v7306
      %v7308 = vpop.f32.mrf.mxu0
      %v7309 = vadd.f32 0.0, %v7308
      %7310 = vmatmul.bf16.gmra.mxu0 %v6178
      %v7311 = vpop.f32.mrf.mxu0
      %v7312 = vadd.f32 0.0, %v7311
      %v7313 = vpop.f32.mrf.mxu0
      %v7314 = vadd.f32 0.0, %v7313
      %7315 = vmatmul.bf16.gmra.mxu0 %v6181
      %v7316 = vpop.f32.mrf.mxu0
      %v7317 = vadd.f32 0.0, %v7316
      %v7318 = vpop.f32.mrf.mxu0
      %v7319 = vadd.f32 0.0, %v7318
      %7320 = vmatmul.bf16.gmra.mxu0 %v6184
      %v7321 = vpop.f32.mrf.mxu0
      %v7322 = vadd.f32 0.0, %v7321
      %v7323 = vpop.f32.mrf.mxu0
      %v7324 = vadd.f32 0.0, %v7323
      %7325 = vmatmul.bf16.gmra.mxu0 %v6187
      %v7326 = vpop.f32.mrf.mxu0
      %v7327 = vadd.f32 0.0, %v7326
      %v7328 = vpop.f32.mrf.mxu0
      %v7329 = vadd.f32 0.0, %v7328
      %7330 = vmatmul.bf16.gmra.mxu0 %v6190
      %v7331 = vpop.f32.mrf.mxu0
      %v7332 = vadd.f32 0.0, %v7331
      %v7333 = vpop.f32.mrf.mxu0
      %v7334 = vadd.f32 0.0, %v7333
      %7335 = vdwg.mxu0
      %v7336 = vadd.f32 %v4062, %v6208
      %v7337 = vadd.f32 %v4631, %v6777
      %v7338 = vadd.f32 %v4064, %v6210
      %v7339 = vadd.f32 %v4633, %v6779
      %v7340 = vadd.f32 %v4067, %v6213
      %v7341 = vadd.f32 %v4636, %v6782
      %v7342 = vadd.f32 %v4069, %v6215
      %v7343 = vadd.f32 %v4638, %v6784
      %v7344 = vadd.f32 %v4072, %v6218
      %v7345 = vadd.f32 %v4641, %v6787
      %v7346 = vadd.f32 %v4074, %v6220
      %v7347 = vadd.f32 %v4643, %v6789
      %v7348 = vadd.f32 %v4077, %v6223
      %v7349 = vadd.f32 %v4646, %v6792
      %v7350 = vadd.f32 %v4079, %v6225
      %v7351 = vadd.f32 %v4648, %v6794
      %v7352 = vadd.f32 %v4082, %v6228
      %v7353 = vadd.f32 %v4651, %v6797
      %v7354 = vadd.f32 %v4084, %v6230
      %v7355 = vadd.f32 %v4653, %v6799
      %v7356 = vadd.f32 %v4087, %v6233
      %v7357 = vadd.f32 %v4656, %v6802
      %v7358 = vadd.f32 %v4089, %v6235
      %v7359 = vadd.f32 %v4658, %v6804
      %v7360 = vadd.f32 %v4092, %v6238
      %v7361 = vadd.f32 %v4661, %v6807
      %v7362 = vadd.f32 %v4094, %v6240
      %v7363 = vadd.f32 %v4663, %v6809
      %v7364 = vadd.f32 %v4097, %v6243
      %v7365 = vadd.f32 %v4666, %v6812
      %v7366 = vadd.f32 %v4099, %v6245
      %v7367 = vadd.f32 %v4668, %v6814
      %v7368 = vadd.f32 %v4102, %v6248
      %v7369 = vadd.f32 %v4671, %v6817
      %v7370 = vadd.f32 %v4104, %v6250
      %v7371 = vadd.f32 %v4673, %v6819
      %v7372 = vadd.f32 %v4107, %v6253
      %v7373 = vadd.f32 %v4676, %v6822
      %v7374 = vadd.f32 %v4109, %v6255
      %v7375 = vadd.f32 %v4678, %v6824
      %v7376 = vadd.f32 %v4112, %v6258
      %v7377 = vadd.f32 %v4681, %v6827
      %v7378 = vadd.f32 %v4114, %v6260
      %v7379 = vadd.f32 %v4683, %v6829
      %v7380 = vadd.f32 %v4117, %v6263
      %v7381 = vadd.f32 %v4686, %v6832
      %v7382 = vadd.f32 %v4119, %v6265
      %v7383 = vadd.f32 %v4688, %v6834
      %v7384 = vadd.f32 %v4122, %v6268
      %v7385 = vadd.f32 %v4691, %v6837
      %v7386 = vadd.f32 %v4124, %v6270
      %v7387 = vadd.f32 %v4693, %v6839
      %v7388 = vadd.f32 %v4127, %v6273
      %v7389 = vadd.f32 %v4696, %v6842
      %v7390 = vadd.f32 %v4129, %v6275
      %v7391 = vadd.f32 %v4698, %v6844
      %v7392 = vadd.f32 %v4132, %v6278
      %v7393 = vadd.f32 %v4701, %v6847
      %v7394 = vadd.f32 %v4134, %v6280
      %v7395 = vadd.f32 %v4703, %v6849
      %v7396 = vadd.f32 %v4137, %v6283
      %v7397 = vadd.f32 %v4706, %v6852
      %v7398 = vadd.f32 %v4139, %v6285
      %v7399 = vadd.f32 %v4708, %v6854
      %v7400 = vadd.f32 %v4142, %v6288
      %v7401 = vadd.f32 %v4711, %v6857
      %v7402 = vadd.f32 %v4144, %v6290
      %v7403 = vadd.f32 %v4713, %v6859
      %v7404 = vadd.f32 %v4147, %v6293
      %v7405 = vadd.f32 %v4716, %v6862
      %v7406 = vadd.f32 %v4149, %v6295
      %v7407 = vadd.f32 %v4718, %v6864
      %v7408 = vadd.f32 %v4152, %v6298
      %v7409 = vadd.f32 %v4721, %v6867
      %v7410 = vadd.f32 %v4154, %v6300
      %v7411 = vadd.f32 %v4723, %v6869
      %v7412 = vadd.f32 %v4157, %v6303
      %v7413 = vadd.f32 %v4726, %v6872
      %v7414 = vadd.f32 %v4159, %v6305
      %v7415 = vadd.f32 %v4728, %v6874
      %v7416 = vadd.f32 %v4162, %v6308
      %v7417 = vadd.f32 %v4731, %v6877
      %v7418 = vadd.f32 %v4164, %v6310
      %v7419 = vadd.f32 %v4733, %v6879
      %v7420 = vadd.f32 %v4167, %v6313
      %v7421 = vadd.f32 %v4736, %v6882
      %v7422 = vadd.f32 %v4169, %v6315
      %v7423 = vadd.f32 %v4738, %v6884
      %v7424 = vadd.f32 %v4172, %v6318
      %v7425 = vadd.f32 %v4741, %v6887
      %v7426 = vadd.f32 %v4174, %v6320
      %v7427 = vadd.f32 %v4743, %v6889
      %v7428 = vadd.f32 %v4177, %v6323
      %v7429 = vadd.f32 %v4746, %v6892
      %v7430 = vadd.f32 %v4179, %v6325
      %v7431 = vadd.f32 %v4748, %v6894
      %v7432 = vadd.f32 %v4182, %v6328
      %v7433 = vadd.f32 %v4751, %v6897
      %v7434 = vadd.f32 %v4184, %v6330
      %v7435 = vadd.f32 %v4753, %v6899
      %v7436 = vadd.f32 %v4187, %v6333
      %v7437 = vadd.f32 %v4756, %v6902
      %v7438 = vadd.f32 %v4189, %v6335
      %v7439 = vadd.f32 %v4758, %v6904
      %v7440 = vadd.f32 %v4192, %v6338
      %v7441 = vadd.f32 %v4761, %v6907
      %v7442 = vadd.f32 %v4194, %v6340
      %v7443 = vadd.f32 %v4763, %v6909
      %v7444 = vadd.f32 %v4197, %v6343
      %v7445 = vadd.f32 %v4766, %v6912
      %v7446 = vadd.f32 %v4199, %v6345
      %v7447 = vadd.f32 %v4768, %v6914
      %v7448 = vadd.f32 %v4202, %v6348
      %v7449 = vadd.f32 %v4771, %v6917
      %v7450 = vadd.f32 %v4204, %v6350
      %v7451 = vadd.f32 %v4773, %v6919
      %v7452 = vadd.f32 %v4207, %v6353
      %v7453 = vadd.f32 %v4776, %v6922
      %v7454 = vadd.f32 %v4209, %v6355
      %v7455 = vadd.f32 %v4778, %v6924
      %v7456 = vadd.f32 %v4212, %v6358
      %v7457 = vadd.f32 %v4781, %v6927
      %v7458 = vadd.f32 %v4214, %v6360
      %v7459 = vadd.f32 %v4783, %v6929
      %v7460 = vadd.f32 %v4217, %v6363
      %v7461 = vadd.f32 %v4786, %v6932
      %v7462 = vadd.f32 %v4219, %v6365
      %v7463 = vadd.f32 %v4788, %v6934
      %v7464 = vadd.f32 %v4222, %v6368
      %v7465 = vadd.f32 %v4791, %v6937
      %v7466 = vadd.f32 %v4224, %v6370
      %v7467 = vadd.f32 %v4793, %v6939
      %v7468 = vadd.f32 %v4227, %v6373
      %v7469 = vadd.f32 %v4796, %v6942
      %v7470 = vadd.f32 %v4229, %v6375
      %v7471 = vadd.f32 %v4798, %v6944
      %v7472 = vadd.f32 %v4232, %v6378
      %v7473 = vadd.f32 %v4801, %v6947
      %v7474 = vadd.f32 %v4234, %v6380
      %v7475 = vadd.f32 %v4803, %v6949
      %v7476 = vadd.f32 %v4237, %v6383
      %v7477 = vadd.f32 %v4806, %v6952
      %v7478 = vadd.f32 %v4239, %v6385
      %v7479 = vadd.f32 %v4808, %v6954
      %v7480 = vadd.f32 %v4242, %v6388
      %v7481 = vadd.f32 %v4811, %v6957
      %v7482 = vadd.f32 %v4244, %v6390
      %v7483 = vadd.f32 %v4813, %v6959
      %v7484 = vadd.f32 %v4247, %v6393
      %v7485 = vadd.f32 %v4816, %v6962
      %v7486 = vadd.f32 %v4249, %v6395
      %v7487 = vadd.f32 %v4818, %v6964
      %v7488 = vadd.f32 %v4252, %v6398
      %v7489 = vadd.f32 %v4821, %v6967
      %v7490 = vadd.f32 %v4254, %v6400
      %v7491 = vadd.f32 %v4823, %v6969
      %v7492 = vadd.f32 %v4257, %v6403
      %v7493 = vadd.f32 %v4826, %v6972
      %v7494 = vadd.f32 %v4259, %v6405
      %v7495 = vadd.f32 %v4828, %v6974
      %v7496 = vadd.f32 %v4262, %v6408
      %v7497 = vadd.f32 %v4831, %v6977
      %v7498 = vadd.f32 %v4264, %v6410
      %v7499 = vadd.f32 %v4833, %v6979
      %v7500 = vadd.f32 %v4267, %v6413
      %v7501 = vadd.f32 %v4836, %v6982
      %v7502 = vadd.f32 %v4269, %v6415
      %v7503 = vadd.f32 %v4838, %v6984
      %v7504 = vadd.f32 %v4272, %v6418
      %v7505 = vadd.f32 %v4841, %v6987
      %v7506 = vadd.f32 %v4274, %v6420
      %v7507 = vadd.f32 %v4843, %v6989
      %v7508 = vadd.f32 %v4277, %v6423
      %v7509 = vadd.f32 %v4846, %v6992
      %v7510 = vadd.f32 %v4279, %v6425
      %v7511 = vadd.f32 %v4848, %v6994
      %v7512 = vadd.f32 %v4282, %v6428
      %v7513 = vadd.f32 %v4851, %v6997
      %v7514 = vadd.f32 %v4284, %v6430
      %v7515 = vadd.f32 %v4853, %v6999
      %v7516 = vadd.f32 %v4287, %v6433
      %v7517 = vadd.f32 %v4856, %v7002
      %v7518 = vadd.f32 %v4289, %v6435
      %v7519 = vadd.f32 %v4858, %v7004
      %v7520 = vadd.f32 %v4292, %v6438
      %v7521 = vadd.f32 %v4861, %v7007
      %v7522 = vadd.f32 %v4294, %v6440
      %v7523 = vadd.f32 %v4863, %v7009
      %v7524 = vadd.f32 %v4297, %v6443
      %v7525 = vadd.f32 %v4866, %v7012
      %v7526 = vadd.f32 %v4299, %v6445
      %v7527 = vadd.f32 %v4868, %v7014
      %v7528 = vadd.f32 %v4302, %v6448
      %v7529 = vadd.f32 %v4871, %v7017
      %v7530 = vadd.f32 %v4304, %v6450
      %v7531 = vadd.f32 %v4873, %v7019
      %v7532 = vadd.f32 %v4307, %v6453
      %v7533 = vadd.f32 %v4876, %v7022
      %v7534 = vadd.f32 %v4309, %v6455
      %v7535 = vadd.f32 %v4878, %v7024
      %v7536 = vadd.f32 %v4312, %v6458
      %v7537 = vadd.f32 %v4881, %v7027
      %v7538 = vadd.f32 %v4314, %v6460
      %v7539 = vadd.f32 %v4883, %v7029
      %v7540 = vadd.f32 %v4317, %v6463
      %v7541 = vadd.f32 %v4886, %v7032
      %v7542 = vadd.f32 %v4319, %v6465
      %v7543 = vadd.f32 %v4888, %v7034
      %v7544 = vadd.f32 %v4322, %v6468
      %v7545 = vadd.f32 %v4891, %v7037
      %v7546 = vadd.f32 %v4324, %v6470
      %v7547 = vadd.f32 %v4893, %v7039
      %v7548 = vadd.f32 %v4327, %v6473
      %v7549 = vadd.f32 %v4896, %v7042
      %v7550 = vadd.f32 %v4329, %v6475
      %v7551 = vadd.f32 %v4898, %v7044
      %v7552 = vadd.f32 %v4332, %v6478
      %v7553 = vadd.f32 %v4901, %v7047
      %v7554 = vadd.f32 %v4334, %v6480
      %v7555 = vadd.f32 %v4903, %v7049
      %v7556 = vadd.f32 %v4337, %v6483
      %v7557 = vadd.f32 %v4906, %v7052
      %v7558 = vadd.f32 %v4339, %v6485
      %v7559 = vadd.f32 %v4908, %v7054
      %v7560 = vadd.f32 %v4342, %v6488
      %v7561 = vadd.f32 %v4911, %v7057
      %v7562 = vadd.f32 %v4344, %v6490
      %v7563 = vadd.f32 %v4913, %v7059
      %v7564 = vadd.f32 %v4347, %v6493
      %v7565 = vadd.f32 %v4916, %v7062
      %v7566 = vadd.f32 %v4349, %v6495
      %v7567 = vadd.f32 %v4918, %v7064
      %v7568 = vadd.f32 %v4352, %v6498
      %v7569 = vadd.f32 %v4921, %v7067
      %v7570 = vadd.f32 %v4354, %v6500
      %v7571 = vadd.f32 %v4923, %v7069
      %v7572 = vadd.f32 %v4357, %v6503
      %v7573 = vadd.f32 %v4926, %v7072
      %v7574 = vadd.f32 %v4359, %v6505
      %v7575 = vadd.f32 %v4928, %v7074
      %v7576 = vadd.f32 %v4362, %v6508
      %v7577 = vadd.f32 %v4931, %v7077
      %v7578 = vadd.f32 %v4364, %v6510
      %v7579 = vadd.f32 %v4933, %v7079
      %v7580 = vadd.f32 %v4367, %v6513
      %v7581 = vadd.f32 %v4936, %v7082
      %v7582 = vadd.f32 %v4369, %v6515
      %v7583 = vadd.f32 %v4938, %v7084
      %v7584 = vadd.f32 %v4372, %v6518
      %v7585 = vadd.f32 %v4941, %v7087
      %v7586 = vadd.f32 %v4374, %v6520
      %v7587 = vadd.f32 %v4943, %v7089
      %v7588 = vadd.f32 %v4377, %v6523
      %v7589 = vadd.f32 %v4946, %v7092
      %v7590 = vadd.f32 %v4379, %v6525
      %v7591 = vadd.f32 %v4948, %v7094
      %v7592 = vadd.f32 %v4382, %v6528
      %v7593 = vadd.f32 %v4951, %v7097
      %v7594 = vadd.f32 %v4384, %v6530
      %v7595 = vadd.f32 %v4953, %v7099
      %v7596 = vadd.f32 %v4387, %v6533
      %v7597 = vadd.f32 %v4956, %v7102
      %v7598 = vadd.f32 %v4389, %v6535
      %v7599 = vadd.f32 %v4958, %v7104
      %v7600 = vadd.f32 %v4392, %v6538
      %v7601 = vadd.f32 %v4961, %v7107
      %v7602 = vadd.f32 %v4394, %v6540
      %v7603 = vadd.f32 %v4963, %v7109
      %v7604 = vadd.f32 %v4397, %v6543
      %v7605 = vadd.f32 %v4966, %v7112
      %v7606 = vadd.f32 %v4399, %v6545
      %v7607 = vadd.f32 %v4968, %v7114
      %v7608 = vadd.f32 %v4402, %v6548
      %v7609 = vadd.f32 %v4971, %v7117
      %v7610 = vadd.f32 %v4404, %v6550
      %v7611 = vadd.f32 %v4973, %v7119
      %v7612 = vadd.f32 %v4407, %v6553
      %v7613 = vadd.f32 %v4976, %v7122
      %v7614 = vadd.f32 %v4409, %v6555
      %v7615 = vadd.f32 %v4978, %v7124
      %v7616 = vadd.f32 %v4412, %v6558
      %v7617 = vadd.f32 %v4981, %v7127
      %v7618 = vadd.f32 %v4414, %v6560
      %v7619 = vadd.f32 %v4983, %v7129
      %v7620 = vadd.f32 %v4417, %v6563
      %v7621 = vadd.f32 %v4986, %v7132
      %v7622 = vadd.f32 %v4419, %v6565
      %v7623 = vadd.f32 %v4988, %v7134
      %v7624 = vadd.f32 %v4422, %v6568
      %v7625 = vadd.f32 %v4991, %v7137
      %v7626 = vadd.f32 %v4424, %v6570
      %v7627 = vadd.f32 %v4993, %v7139
      %v7628 = vadd.f32 %v4427, %v6573
      %v7629 = vadd.f32 %v4996, %v7142
      %v7630 = vadd.f32 %v4429, %v6575
      %v7631 = vadd.f32 %v4998, %v7144
      %v7632 = vadd.f32 %v4432, %v6578
      %v7633 = vadd.f32 %v5001, %v7147
      %v7634 = vadd.f32 %v4434, %v6580
      %v7635 = vadd.f32 %v5003, %v7149
      %v7636 = vadd.f32 %v4437, %v6583
      %v7637 = vadd.f32 %v5006, %v7152
      %v7638 = vadd.f32 %v4439, %v6585
      %v7639 = vadd.f32 %v5008, %v7154
      %v7640 = vadd.f32 %v4442, %v6588
      %v7641 = vadd.f32 %v5011, %v7157
      %v7642 = vadd.f32 %v4444, %v6590
      %v7643 = vadd.f32 %v5013, %v7159
      %v7644 = vadd.f32 %v4447, %v6593
      %v7645 = vadd.f32 %v5016, %v7162
      %v7646 = vadd.f32 %v4449, %v6595
      %v7647 = vadd.f32 %v5018, %v7164
      %v7648 = vadd.f32 %v4452, %v6598
      %v7649 = vadd.f32 %v5021, %v7167
      %v7650 = vadd.f32 %v4454, %v6600
      %v7651 = vadd.f32 %v5023, %v7169
      %v7652 = vadd.f32 %v4457, %v6603
      %v7653 = vadd.f32 %v5026, %v7172
      %v7654 = vadd.f32 %v4459, %v6605
      %v7655 = vadd.f32 %v5028, %v7174
      %v7656 = vadd.f32 %v4462, %v6608
      %v7657 = vadd.f32 %v5031, %v7177
      %v7658 = vadd.f32 %v4464, %v6610
      %v7659 = vadd.f32 %v5033, %v7179
      %v7660 = vadd.f32 %v4467, %v6613
      %v7661 = vadd.f32 %v5036, %v7182
      %v7662 = vadd.f32 %v4469, %v6615
      %v7663 = vadd.f32 %v5038, %v7184
      %v7664 = vadd.f32 %v4472, %v6618
      %v7665 = vadd.f32 %v5041, %v7187
      %v7666 = vadd.f32 %v4474, %v6620
      %v7667 = vadd.f32 %v5043, %v7189
      %v7668 = vadd.f32 %v4477, %v6623
      %v7669 = vadd.f32 %v5046, %v7192
      %v7670 = vadd.f32 %v4479, %v6625
      %v7671 = vadd.f32 %v5048, %v7194
      %v7672 = vadd.f32 %v4482, %v6628
      %v7673 = vadd.f32 %v5051, %v7197
      %v7674 = vadd.f32 %v4484, %v6630
      %v7675 = vadd.f32 %v5053, %v7199
      %v7676 = vadd.f32 %v4487, %v6633
      %v7677 = vadd.f32 %v5056, %v7202
      %v7678 = vadd.f32 %v4489, %v6635
      %v7679 = vadd.f32 %v5058, %v7204
      %v7680 = vadd.f32 %v4492, %v6638
      %v7681 = vadd.f32 %v5061, %v7207
      %v7682 = vadd.f32 %v4494, %v6640
      %v7683 = vadd.f32 %v5063, %v7209
      %v7684 = vadd.f32 %v4497, %v6643
      %v7685 = vadd.f32 %v5066, %v7212
      %v7686 = vadd.f32 %v4499, %v6645
      %v7687 = vadd.f32 %v5068, %v7214
      %v7688 = vadd.f32 %v4502, %v6648
      %v7689 = vadd.f32 %v5071, %v7217
      %v7690 = vadd.f32 %v4504, %v6650
      %v7691 = vadd.f32 %v5073, %v7219
      %v7692 = vadd.f32 %v4507, %v6653
      %v7693 = vadd.f32 %v5076, %v7222
      %v7694 = vadd.f32 %v4509, %v6655
      %v7695 = vadd.f32 %v5078, %v7224
      %v7696 = vadd.f32 %v4512, %v6658
      %v7697 = vadd.f32 %v5081, %v7227
      %v7698 = vadd.f32 %v4514, %v6660
      %v7699 = vadd.f32 %v5083, %v7229
      %v7700 = vadd.f32 %v4517, %v6663
      %v7701 = vadd.f32 %v5086, %v7232
      %v7702 = vadd.f32 %v4519, %v6665
      %v7703 = vadd.f32 %v5088, %v7234
      %v7704 = vadd.f32 %v4522, %v6668
      %v7705 = vadd.f32 %v5091, %v7237
      %v7706 = vadd.f32 %v4524, %v6670
      %v7707 = vadd.f32 %v5093, %v7239
      %v7708 = vadd.f32 %v4527, %v6673
      %v7709 = vadd.f32 %v5096, %v7242
      %v7710 = vadd.f32 %v4529, %v6675
      %v7711 = vadd.f32 %v5098, %v7244
      %v7712 = vadd.f32 %v4532, %v6678
      %v7713 = vadd.f32 %v5101, %v7247
      %v7714 = vadd.f32 %v4534, %v6680
      %v7715 = vadd.f32 %v5103, %v7249
      %v7716 = vadd.f32 %v4537, %v6683
      %v7717 = vadd.f32 %v5106, %v7252
      %v7718 = vadd.f32 %v4539, %v6685
      %v7719 = vadd.f32 %v5108, %v7254
      %v7720 = vadd.f32 %v4542, %v6688
      %v7721 = vadd.f32 %v5111, %v7257
      %v7722 = vadd.f32 %v4544, %v6690
      %v7723 = vadd.f32 %v5113, %v7259
      %v7724 = vadd.f32 %v4547, %v6693
      %v7725 = vadd.f32 %v5116, %v7262
      %v7726 = vadd.f32 %v4549, %v6695
      %v7727 = vadd.f32 %v5118, %v7264
      %v7728 = vadd.f32 %v4552, %v6698
      %v7729 = vadd.f32 %v5121, %v7267
      %v7730 = vadd.f32 %v4554, %v6700
      %v7731 = vadd.f32 %v5123, %v7269
      %v7732 = vadd.f32 %v4557, %v6703
      %v7733 = vadd.f32 %v5126, %v7272
      %v7734 = vadd.f32 %v4559, %v6705
      %v7735 = vadd.f32 %v5128, %v7274
      %v7736 = vadd.f32 %v4562, %v6708
      %v7737 = vadd.f32 %v5131, %v7277
      %v7738 = vadd.f32 %v4564, %v6710
      %v7739 = vadd.f32 %v5133, %v7279
      %v7740 = vadd.f32 %v4567, %v6713
      %v7741 = vadd.f32 %v5136, %v7282
      %v7742 = vadd.f32 %v4569, %v6715
      %v7743 = vadd.f32 %v5138, %v7284
      %v7744 = vadd.f32 %v4572, %v6718
      %v7745 = vadd.f32 %v5141, %v7287
      %v7746 = vadd.f32 %v4574, %v6720
      %v7747 = vadd.f32 %v5143, %v7289
      %v7748 = vadd.f32 %v4577, %v6723
      %v7749 = vadd.f32 %v5146, %v7292
      %v7750 = vadd.f32 %v4579, %v6725
      %v7751 = vadd.f32 %v5148, %v7294
      %v7752 = vadd.f32 %v4582, %v6728
      %v7753 = vadd.f32 %v5151, %v7297
      %v7754 = vadd.f32 %v4584, %v6730
      %v7755 = vadd.f32 %v5153, %v7299
      %v7756 = vadd.f32 %v4587, %v6733
      %v7757 = vadd.f32 %v5156, %v7302
      %v7758 = vadd.f32 %v4589, %v6735
      %v7759 = vadd.f32 %v5158, %v7304
      %v7760 = vadd.f32 %v4592, %v6738
      %v7761 = vadd.f32 %v5161, %v7307
      %v7762 = vadd.f32 %v4594, %v6740
      %v7763 = vadd.f32 %v5163, %v7309
      %v7764 = vadd.f32 %v4597, %v6743
      %v7765 = vadd.f32 %v5166, %v7312
      %v7766 = vadd.f32 %v4599, %v6745
      %v7767 = vadd.f32 %v5168, %v7314
      %v7768 = vadd.f32 %v4602, %v6748
      %v7769 = vadd.f32 %v5171, %v7317
      %v7770 = vadd.f32 %v4604, %v6750
      %v7771 = vadd.f32 %v5173, %v7319
      %v7772 = vadd.f32 %v4607, %v6753
      %v7773 = vadd.f32 %v5176, %v7322
      %v7774 = vadd.f32 %v4609, %v6755
      %v7775 = vadd.f32 %v5178, %v7324
      %v7776 = vadd.f32 %v4612, %v6758
      %v7777 = vadd.f32 %v5181, %v7327
      %v7778 = vadd.f32 %v4614, %v6760
      %v7779 = vadd.f32 %v5183, %v7329
      %v7780 = vadd.f32 %v4617, %v6763
      %v7781 = vadd.f32 %v5186, %v7332
      %v7782 = vadd.f32 %v4619, %v6765
      %v7783 = vadd.f32 %v5188, %v7334
      %v7784 = vld [vmem:[%s4] sm:$0x3]
      %v7786 = vperm.slane %v7784, 0
      %v7787 = vperm.slane %v7784, 1
      %v7790 = vadd.f32 %v7336, %v7786
      %v7791 = vadd.f32 %v7337, %v7787
      %v7792 = vadd.f32 %v7338, %v7786
      %v7793 = vadd.f32 %v7339, %v7787
      %v7794 = vadd.f32 %v7340, %v7786
      %v7795 = vadd.f32 %v7341, %v7787
      %v7796 = vadd.f32 %v7342, %v7786
      %v7797 = vadd.f32 %v7343, %v7787
      %v7798 = vadd.f32 %v7344, %v7786
      %v7799 = vadd.f32 %v7345, %v7787
      %v7800 = vadd.f32 %v7346, %v7786
      %v7801 = vadd.f32 %v7347, %v7787
      %v7802 = vadd.f32 %v7348, %v7786
      %v7803 = vadd.f32 %v7349, %v7787
      %v7804 = vadd.f32 %v7350, %v7786
      %v7805 = vadd.f32 %v7351, %v7787
      %v7806 = vadd.f32 %v7352, %v7786
      %v7807 = vadd.f32 %v7353, %v7787
      %v7808 = vadd.f32 %v7354, %v7786
      %v7809 = vadd.f32 %v7355, %v7787
      %v7810 = vadd.f32 %v7356, %v7786
      %v7811 = vadd.f32 %v7357, %v7787
      %v7812 = vadd.f32 %v7358, %v7786
      %v7813 = vadd.f32 %v7359, %v7787
      %v7814 = vadd.f32 %v7360, %v7786
      %v7815 = vadd.f32 %v7361, %v7787
      %v7816 = vadd.f32 %v7362, %v7786
      %v7817 = vadd.f32 %v7363, %v7787
      %v7818 = vadd.f32 %v7364, %v7786
      %v7819 = vadd.f32 %v7365, %v7787
      %v7820 = vadd.f32 %v7366, %v7786
      %v7821 = vadd.f32 %v7367, %v7787
      %v7822 = vadd.f32 %v7368, %v7786
      %v7823 = vadd.f32 %v7369, %v7787
      %v7824 = vadd.f32 %v7370, %v7786
      %v7825 = vadd.f32 %v7371, %v7787
      %v7826 = vadd.f32 %v7372, %v7786
      %v7827 = vadd.f32 %v7373, %v7787
      %v7828 = vadd.f32 %v7374, %v7786
      %v7829 = vadd.f32 %v7375, %v7787
      %v7830 = vadd.f32 %v7376, %v7786
      %v7831 = vadd.f32 %v7377, %v7787
      %v7832 = vadd.f32 %v7378, %v7786
      %v7833 = vadd.f32 %v7379, %v7787
      %v7834 = vadd.f32 %v7380, %v7786
      %v7835 = vadd.f32 %v7381, %v7787
      %v7836 = vadd.f32 %v7382, %v7786
      %v7837 = vadd.f32 %v7383, %v7787
      %v7838 = vadd.f32 %v7384, %v7786
      %v7839 = vadd.f32 %v7385, %v7787
      %v7840 = vadd.f32 %v7386, %v7786
      %v7841 = vadd.f32 %v7387, %v7787
      %v7842 = vadd.f32 %v7388, %v7786
      %v7843 = vadd.f32 %v7389, %v7787
      %v7844 = vadd.f32 %v7390, %v7786
      %v7845 = vadd.f32 %v7391, %v7787
      %v7846 = vadd.f32 %v7392, %v7786
      %v7847 = vadd.f32 %v7393, %v7787
      %v7848 = vadd.f32 %v7394, %v7786
      %v7849 = vadd.f32 %v7395, %v7787
      %v7850 = vadd.f32 %v7396, %v7786
      %v7851 = vadd.f32 %v7397, %v7787
      %v7852 = vadd.f32 %v7398, %v7786
      %v7853 = vadd.f32 %v7399, %v7787
      %v7854 = vadd.f32 %v7400, %v7786
      %v7855 = vadd.f32 %v7401, %v7787
      %v7856 = vadd.f32 %v7402, %v7786
      %v7857 = vadd.f32 %v7403, %v7787
      %v7858 = vadd.f32 %v7404, %v7786
      %v7859 = vadd.f32 %v7405, %v7787
      %v7860 = vadd.f32 %v7406, %v7786
      %v7861 = vadd.f32 %v7407, %v7787
      %v7862 = vadd.f32 %v7408, %v7786
      %v7863 = vadd.f32 %v7409, %v7787
      %v7864 = vadd.f32 %v7410, %v7786
      %v7865 = vadd.f32 %v7411, %v7787
      %v7866 = vadd.f32 %v7412, %v7786
      %v7867 = vadd.f32 %v7413, %v7787
      %v7868 = vadd.f32 %v7414, %v7786
      %v7869 = vadd.f32 %v7415, %v7787
      %v7870 = vadd.f32 %v7416, %v7786
      %v7871 = vadd.f32 %v7417, %v7787
      %v7872 = vadd.f32 %v7418, %v7786
      %v7873 = vadd.f32 %v7419, %v7787
      %v7874 = vadd.f32 %v7420, %v7786
      %v7875 = vadd.f32 %v7421, %v7787
      %v7876 = vadd.f32 %v7422, %v7786
      %v7877 = vadd.f32 %v7423, %v7787
      %v7878 = vadd.f32 %v7424, %v7786
      %v7879 = vadd.f32 %v7425, %v7787
      %v7880 = vadd.f32 %v7426, %v7786
      %v7881 = vadd.f32 %v7427, %v7787
      %v7882 = vadd.f32 %v7428, %v7786
      %v7883 = vadd.f32 %v7429, %v7787
      %v7884 = vadd.f32 %v7430, %v7786
      %v7885 = vadd.f32 %v7431, %v7787
      %v7886 = vadd.f32 %v7432, %v7786
      %v7887 = vadd.f32 %v7433, %v7787
      %v7888 = vadd.f32 %v7434, %v7786
      %v7889 = vadd.f32 %v7435, %v7787
      %v7890 = vadd.f32 %v7436, %v7786
      %v7891 = vadd.f32 %v7437, %v7787
      %v7892 = vadd.f32 %v7438, %v7786
      %v7893 = vadd.f32 %v7439, %v7787
      %v7894 = vadd.f32 %v7440, %v7786
      %v7895 = vadd.f32 %v7441, %v7787
      %v7896 = vadd.f32 %v7442, %v7786
      %v7897 = vadd.f32 %v7443, %v7787
      %v7898 = vadd.f32 %v7444, %v7786
      %v7899 = vadd.f32 %v7445, %v7787
      %v7900 = vadd.f32 %v7446, %v7786
      %v7901 = vadd.f32 %v7447, %v7787
      %v7902 = vadd.f32 %v7448, %v7786
      %v7903 = vadd.f32 %v7449, %v7787
      %v7904 = vadd.f32 %v7450, %v7786
      %v7905 = vadd.f32 %v7451, %v7787
      %v7906 = vadd.f32 %v7452, %v7786
      %v7907 = vadd.f32 %v7453, %v7787
      %v7908 = vadd.f32 %v7454, %v7786
      %v7909 = vadd.f32 %v7455, %v7787
      %v7910 = vadd.f32 %v7456, %v7786
      %v7911 = vadd.f32 %v7457, %v7787
      %v7912 = vadd.f32 %v7458, %v7786
      %v7913 = vadd.f32 %v7459, %v7787
      %v7914 = vadd.f32 %v7460, %v7786
      %v7915 = vadd.f32 %v7461, %v7787
      %v7916 = vadd.f32 %v7462, %v7786
      %v7917 = vadd.f32 %v7463, %v7787
      %v7918 = vadd.f32 %v7464, %v7786
      %v7919 = vadd.f32 %v7465, %v7787
      %v7920 = vadd.f32 %v7466, %v7786
      %v7921 = vadd.f32 %v7467, %v7787
      %v7922 = vadd.f32 %v7468, %v7786
      %v7923 = vadd.f32 %v7469, %v7787
      %v7924 = vadd.f32 %v7470, %v7786
      %v7925 = vadd.f32 %v7471, %v7787
      %v7926 = vadd.f32 %v7472, %v7786
      %v7927 = vadd.f32 %v7473, %v7787
      %v7928 = vadd.f32 %v7474, %v7786
      %v7929 = vadd.f32 %v7475, %v7787
      %v7930 = vadd.f32 %v7476, %v7786
      %v7931 = vadd.f32 %v7477, %v7787
      %v7932 = vadd.f32 %v7478, %v7786
      %v7933 = vadd.f32 %v7479, %v7787
      %v7934 = vadd.f32 %v7480, %v7786
      %v7935 = vadd.f32 %v7481, %v7787
      %v7936 = vadd.f32 %v7482, %v7786
      %v7937 = vadd.f32 %v7483, %v7787
      %v7938 = vadd.f32 %v7484, %v7786
      %v7939 = vadd.f32 %v7485, %v7787
      %v7940 = vadd.f32 %v7486, %v7786
      %v7941 = vadd.f32 %v7487, %v7787
      %v7942 = vadd.f32 %v7488, %v7786
      %v7943 = vadd.f32 %v7489, %v7787
      %v7944 = vadd.f32 %v7490, %v7786
      %v7945 = vadd.f32 %v7491, %v7787
      %v7946 = vadd.f32 %v7492, %v7786
      %v7947 = vadd.f32 %v7493, %v7787
      %v7948 = vadd.f32 %v7494, %v7786
      %v7949 = vadd.f32 %v7495, %v7787
      %v7950 = vadd.f32 %v7496, %v7786
      %v7951 = vadd.f32 %v7497, %v7787
      %v7952 = vadd.f32 %v7498, %v7786
      %v7953 = vadd.f32 %v7499, %v7787
      %v7954 = vadd.f32 %v7500, %v7786
      %v7955 = vadd.f32 %v7501, %v7787
      %v7956 = vadd.f32 %v7502, %v7786
      %v7957 = vadd.f32 %v7503, %v7787
      %v7958 = vadd.f32 %v7504, %v7786
      %v7959 = vadd.f32 %v7505, %v7787
      %v7960 = vadd.f32 %v7506, %v7786
      %v7961 = vadd.f32 %v7507, %v7787
      %v7962 = vadd.f32 %v7508, %v7786
      %v7963 = vadd.f32 %v7509, %v7787
      %v7964 = vadd.f32 %v7510, %v7786
      %v7965 = vadd.f32 %v7511, %v7787
      %v7966 = vadd.f32 %v7512, %v7786
      %v7967 = vadd.f32 %v7513, %v7787
      %v7968 = vadd.f32 %v7514, %v7786
      %v7969 = vadd.f32 %v7515, %v7787
      %v7970 = vadd.f32 %v7516, %v7786
      %v7971 = vadd.f32 %v7517, %v7787
      %v7972 = vadd.f32 %v7518, %v7786
      %v7973 = vadd.f32 %v7519, %v7787
      %v7974 = vadd.f32 %v7520, %v7786
      %v7975 = vadd.f32 %v7521, %v7787
      %v7976 = vadd.f32 %v7522, %v7786
      %v7977 = vadd.f32 %v7523, %v7787
      %v7978 = vadd.f32 %v7524, %v7786
      %v7979 = vadd.f32 %v7525, %v7787
      %v7980 = vadd.f32 %v7526, %v7786
      %v7981 = vadd.f32 %v7527, %v7787
      %v7982 = vadd.f32 %v7528, %v7786
      %v7983 = vadd.f32 %v7529, %v7787
      %v7984 = vadd.f32 %v7530, %v7786
      %v7985 = vadd.f32 %v7531, %v7787
      %v7986 = vadd.f32 %v7532, %v7786
      %v7987 = vadd.f32 %v7533, %v7787
      %v7988 = vadd.f32 %v7534, %v7786
      %v7989 = vadd.f32 %v7535, %v7787
      %v7990 = vadd.f32 %v7536, %v7786
      %v7991 = vadd.f32 %v7537, %v7787
      %v7992 = vadd.f32 %v7538, %v7786
      %v7993 = vadd.f32 %v7539, %v7787
      %v7994 = vadd.f32 %v7540, %v7786
      %v7995 = vadd.f32 %v7541, %v7787
      %v7996 = vadd.f32 %v7542, %v7786
      %v7997 = vadd.f32 %v7543, %v7787
      %v7998 = vadd.f32 %v7544, %v7786
      %v7999 = vadd.f32 %v7545, %v7787
      %v8000 = vadd.f32 %v7546, %v7786
      %v8001 = vadd.f32 %v7547, %v7787
      %v8002 = vadd.f32 %v7548, %v7786
      %v8003 = vadd.f32 %v7549, %v7787
      %v8004 = vadd.f32 %v7550, %v7786
      %v8005 = vadd.f32 %v7551, %v7787
      %v8006 = vadd.f32 %v7552, %v7786
      %v8007 = vadd.f32 %v7553, %v7787
      %v8008 = vadd.f32 %v7554, %v7786
      %v8009 = vadd.f32 %v7555, %v7787
      %v8010 = vadd.f32 %v7556, %v7786
      %v8011 = vadd.f32 %v7557, %v7787
      %v8012 = vadd.f32 %v7558, %v7786
      %v8013 = vadd.f32 %v7559, %v7787
      %v8014 = vadd.f32 %v7560, %v7786
      %v8015 = vadd.f32 %v7561, %v7787
      %v8016 = vadd.f32 %v7562, %v7786
      %v8017 = vadd.f32 %v7563, %v7787
      %v8018 = vadd.f32 %v7564, %v7786
      %v8019 = vadd.f32 %v7565, %v7787
      %v8020 = vadd.f32 %v7566, %v7786
      %v8021 = vadd.f32 %v7567, %v7787
      %v8022 = vadd.f32 %v7568, %v7786
      %v8023 = vadd.f32 %v7569, %v7787
      %v8024 = vadd.f32 %v7570, %v7786
      %v8025 = vadd.f32 %v7571, %v7787
      %v8026 = vadd.f32 %v7572, %v7786
      %v8027 = vadd.f32 %v7573, %v7787
      %v8028 = vadd.f32 %v7574, %v7786
      %v8029 = vadd.f32 %v7575, %v7787
      %v8030 = vadd.f32 %v7576, %v7786
      %v8031 = vadd.f32 %v7577, %v7787
      %v8032 = vadd.f32 %v7578, %v7786
      %v8033 = vadd.f32 %v7579, %v7787
      %v8034 = vadd.f32 %v7580, %v7786
      %v8035 = vadd.f32 %v7581, %v7787
      %v8036 = vadd.f32 %v7582, %v7786
      %v8037 = vadd.f32 %v7583, %v7787
      %v8038 = vadd.f32 %v7584, %v7786
      %v8039 = vadd.f32 %v7585, %v7787
      %v8040 = vadd.f32 %v7586, %v7786
      %v8041 = vadd.f32 %v7587, %v7787
      %v8042 = vadd.f32 %v7588, %v7786
      %v8043 = vadd.f32 %v7589, %v7787
      %v8044 = vadd.f32 %v7590, %v7786
      %v8045 = vadd.f32 %v7591, %v7787
      %v8046 = vadd.f32 %v7592, %v7786
      %v8047 = vadd.f32 %v7593, %v7787
      %v8048 = vadd.f32 %v7594, %v7786
      %v8049 = vadd.f32 %v7595, %v7787
      %v8050 = vadd.f32 %v7596, %v7786
      %v8051 = vadd.f32 %v7597, %v7787
      %v8052 = vadd.f32 %v7598, %v7786
      %v8053 = vadd.f32 %v7599, %v7787
      %v8054 = vadd.f32 %v7600, %v7786
      %v8055 = vadd.f32 %v7601, %v7787
      %v8056 = vadd.f32 %v7602, %v7786
      %v8057 = vadd.f32 %v7603, %v7787
      %v8058 = vadd.f32 %v7604, %v7786
      %v8059 = vadd.f32 %v7605, %v7787
      %v8060 = vadd.f32 %v7606, %v7786
      %v8061 = vadd.f32 %v7607, %v7787
      %v8062 = vadd.f32 %v7608, %v7786
      %v8063 = vadd.f32 %v7609, %v7787
      %v8064 = vadd.f32 %v7610, %v7786
      %v8065 = vadd.f32 %v7611, %v7787
      %v8066 = vadd.f32 %v7612, %v7786
      %v8067 = vadd.f32 %v7613, %v7787
      %v8068 = vadd.f32 %v7614, %v7786
      %v8069 = vadd.f32 %v7615, %v7787
      %v8070 = vadd.f32 %v7616, %v7786
      %v8071 = vadd.f32 %v7617, %v7787
      %v8072 = vadd.f32 %v7618, %v7786
      %v8073 = vadd.f32 %v7619, %v7787
      %v8074 = vadd.f32 %v7620, %v7786
      %v8075 = vadd.f32 %v7621, %v7787
      %v8076 = vadd.f32 %v7622, %v7786
      %v8077 = vadd.f32 %v7623, %v7787
      %v8078 = vadd.f32 %v7624, %v7786
      %v8079 = vadd.f32 %v7625, %v7787
      %v8080 = vadd.f32 %v7626, %v7786
      %v8081 = vadd.f32 %v7627, %v7787
      %v8082 = vadd.f32 %v7628, %v7786
      %v8083 = vadd.f32 %v7629, %v7787
      %v8084 = vadd.f32 %v7630, %v7786
      %v8085 = vadd.f32 %v7631, %v7787
      %v8086 = vadd.f32 %v7632, %v7786
      %v8087 = vadd.f32 %v7633, %v7787
      %v8088 = vadd.f32 %v7634, %v7786
      %v8089 = vadd.f32 %v7635, %v7787
      %v8090 = vadd.f32 %v7636, %v7786
      %v8091 = vadd.f32 %v7637, %v7787
      %v8092 = vadd.f32 %v7638, %v7786
      %v8093 = vadd.f32 %v7639, %v7787
      %v8094 = vadd.f32 %v7640, %v7786
      %v8095 = vadd.f32 %v7641, %v7787
      %v8096 = vadd.f32 %v7642, %v7786
      %v8097 = vadd.f32 %v7643, %v7787
      %v8098 = vadd.f32 %v7644, %v7786
      %v8099 = vadd.f32 %v7645, %v7787
      %v8100 = vadd.f32 %v7646, %v7786
      %v8101 = vadd.f32 %v7647, %v7787
      %v8102 = vadd.f32 %v7648, %v7786
      %v8103 = vadd.f32 %v7649, %v7787
      %v8104 = vadd.f32 %v7650, %v7786
      %v8105 = vadd.f32 %v7651, %v7787
      %v8106 = vadd.f32 %v7652, %v7786
      %v8107 = vadd.f32 %v7653, %v7787
      %v8108 = vadd.f32 %v7654, %v7786
      %v8109 = vadd.f32 %v7655, %v7787
      %v8110 = vadd.f32 %v7656, %v7786
      %v8111 = vadd.f32 %v7657, %v7787
      %v8112 = vadd.f32 %v7658, %v7786
      %v8113 = vadd.f32 %v7659, %v7787
      %v8114 = vadd.f32 %v7660, %v7786
      %v8115 = vadd.f32 %v7661, %v7787
      %v8116 = vadd.f32 %v7662, %v7786
      %v8117 = vadd.f32 %v7663, %v7787
      %v8118 = vadd.f32 %v7664, %v7786
      %v8119 = vadd.f32 %v7665, %v7787
      %v8120 = vadd.f32 %v7666, %v7786
      %v8121 = vadd.f32 %v7667, %v7787
      %v8122 = vadd.f32 %v7668, %v7786
      %v8123 = vadd.f32 %v7669, %v7787
      %v8124 = vadd.f32 %v7670, %v7786
      %v8125 = vadd.f32 %v7671, %v7787
      %v8126 = vadd.f32 %v7672, %v7786
      %v8127 = vadd.f32 %v7673, %v7787
      %v8128 = vadd.f32 %v7674, %v7786
      %v8129 = vadd.f32 %v7675, %v7787
      %v8130 = vadd.f32 %v7676, %v7786
      %v8131 = vadd.f32 %v7677, %v7787
      %v8132 = vadd.f32 %v7678, %v7786
      %v8133 = vadd.f32 %v7679, %v7787
      %v8134 = vadd.f32 %v7680, %v7786
      %v8135 = vadd.f32 %v7681, %v7787
      %v8136 = vadd.f32 %v7682, %v7786
      %v8137 = vadd.f32 %v7683, %v7787
      %v8138 = vadd.f32 %v7684, %v7786
      %v8139 = vadd.f32 %v7685, %v7787
      %v8140 = vadd.f32 %v7686, %v7786
      %v8141 = vadd.f32 %v7687, %v7787
      %v8142 = vadd.f32 %v7688, %v7786
      %v8143 = vadd.f32 %v7689, %v7787
      %v8144 = vadd.f32 %v7690, %v7786
      %v8145 = vadd.f32 %v7691, %v7787
      %v8146 = vadd.f32 %v7692, %v7786
      %v8147 = vadd.f32 %v7693, %v7787
      %v8148 = vadd.f32 %v7694, %v7786
      %v8149 = vadd.f32 %v7695, %v7787
      %v8150 = vadd.f32 %v7696, %v7786
      %v8151 = vadd.f32 %v7697, %v7787
      %v8152 = vadd.f32 %v7698, %v7786
      %v8153 = vadd.f32 %v7699, %v7787
      %v8154 = vadd.f32 %v7700, %v7786
      %v8155 = vadd.f32 %v7701, %v7787
      %v8156 = vadd.f32 %v7702, %v7786
      %v8157 = vadd.f32 %v7703, %v7787
      %v8158 = vadd.f32 %v7704, %v7786
      %v8159 = vadd.f32 %v7705, %v7787
      %v8160 = vadd.f32 %v7706, %v7786
      %v8161 = vadd.f32 %v7707, %v7787
      %v8162 = vadd.f32 %v7708, %v7786
      %v8163 = vadd.f32 %v7709, %v7787
      %v8164 = vadd.f32 %v7710, %v7786
      %v8165 = vadd.f32 %v7711, %v7787
      %v8166 = vadd.f32 %v7712, %v7786
      %v8167 = vadd.f32 %v7713, %v7787
      %v8168 = vadd.f32 %v7714, %v7786
      %v8169 = vadd.f32 %v7715, %v7787
      %v8170 = vadd.f32 %v7716, %v7786
      %v8171 = vadd.f32 %v7717, %v7787
      %v8172 = vadd.f32 %v7718, %v7786
      %v8173 = vadd.f32 %v7719, %v7787
      %v8174 = vadd.f32 %v7720, %v7786
      %v8175 = vadd.f32 %v7721, %v7787
      %v8176 = vadd.f32 %v7722, %v7786
      %v8177 = vadd.f32 %v7723, %v7787
      %v8178 = vadd.f32 %v7724, %v7786
      %v8179 = vadd.f32 %v7725, %v7787
      %v8180 = vadd.f32 %v7726, %v7786
      %v8181 = vadd.f32 %v7727, %v7787
      %v8182 = vadd.f32 %v7728, %v7786
      %v8183 = vadd.f32 %v7729, %v7787
      %v8184 = vadd.f32 %v7730, %v7786
      %v8185 = vadd.f32 %v7731, %v7787
      %v8186 = vadd.f32 %v7732, %v7786
      %v8187 = vadd.f32 %v7733, %v7787
      %v8188 = vadd.f32 %v7734, %v7786
      %v8189 = vadd.f32 %v7735, %v7787
      %v8190 = vadd.f32 %v7736, %v7786
      %v8191 = vadd.f32 %v7737, %v7787
      %v8192 = vadd.f32 %v7738, %v7786
      %v8193 = vadd.f32 %v7739, %v7787
      %v8194 = vadd.f32 %v7740, %v7786
      %v8195 = vadd.f32 %v7741, %v7787
      %v8196 = vadd.f32 %v7742, %v7786
      %v8197 = vadd.f32 %v7743, %v7787
      %v8198 = vadd.f32 %v7744, %v7786
      %v8199 = vadd.f32 %v7745, %v7787
      %v8200 = vadd.f32 %v7746, %v7786
      %v8201 = vadd.f32 %v7747, %v7787
      %v8202 = vadd.f32 %v7748, %v7786
      %v8203 = vadd.f32 %v7749, %v7787
      %v8204 = vadd.f32 %v7750, %v7786
      %v8205 = vadd.f32 %v7751, %v7787
      %v8206 = vadd.f32 %v7752, %v7786
      %v8207 = vadd.f32 %v7753, %v7787
      %v8208 = vadd.f32 %v7754, %v7786
      %v8209 = vadd.f32 %v7755, %v7787
      %v8210 = vadd.f32 %v7756, %v7786
      %v8211 = vadd.f32 %v7757, %v7787
      %v8212 = vadd.f32 %v7758, %v7786
      %v8213 = vadd.f32 %v7759, %v7787
      %v8214 = vadd.f32 %v7760, %v7786
      %v8215 = vadd.f32 %v7761, %v7787
      %v8216 = vadd.f32 %v7762, %v7786
      %v8217 = vadd.f32 %v7763, %v7787
      %v8218 = vadd.f32 %v7764, %v7786
      %v8219 = vadd.f32 %v7765, %v7787
      %v8220 = vadd.f32 %v7766, %v7786
      %v8221 = vadd.f32 %v7767, %v7787
      %v8222 = vadd.f32 %v7768, %v7786
      %v8223 = vadd.f32 %v7769, %v7787
      %v8224 = vadd.f32 %v7770, %v7786
      %v8225 = vadd.f32 %v7771, %v7787
      %v8226 = vadd.f32 %v7772, %v7786
      %v8227 = vadd.f32 %v7773, %v7787
      %v8228 = vadd.f32 %v7774, %v7786
      %v8229 = vadd.f32 %v7775, %v7787
      %v8230 = vadd.f32 %v7776, %v7786
      %v8231 = vadd.f32 %v7777, %v7787
      %v8232 = vadd.f32 %v7778, %v7786
      %v8233 = vadd.f32 %v7779, %v7787
      %v8234 = vadd.f32 %v7780, %v7786
      %v8235 = vadd.f32 %v7781, %v7787
      %v8236 = vadd.f32 %v7782, %v7786
      %v8237 = vadd.f32 %v7783, %v7787
      %v8238 = vmax.f32 %v7790, 0.0
      %v8239 = vmax.f32 %v7791, 0.0
      %v8240 = vmax.f32 %v7792, 0.0
      %v8241 = vmax.f32 %v7793, 0.0
      %v8242 = vmax.f32 %v7794, 0.0
      %v8243 = vmax.f32 %v7795, 0.0
      %v8244 = vmax.f32 %v7796, 0.0
      %v8245 = vmax.f32 %v7797, 0.0
      %v8246 = vmax.f32 %v7798, 0.0
      %v8247 = vmax.f32 %v7799, 0.0
      %v8248 = vmax.f32 %v7800, 0.0
      %v8249 = vmax.f32 %v7801, 0.0
      %v8250 = vmax.f32 %v7802, 0.0
      %v8251 = vmax.f32 %v7803, 0.0
      %v8252 = vmax.f32 %v7804, 0.0
      %v8253 = vmax.f32 %v7805, 0.0
      %v8254 = vmax.f32 %v7806, 0.0
      %v8255 = vmax.f32 %v7807, 0.0
      %v8256 = vmax.f32 %v7808, 0.0
      %v8257 = vmax.f32 %v7809, 0.0
      %v8258 = vmax.f32 %v7810, 0.0
      %v8259 = vmax.f32 %v7811, 0.0
      %v8260 = vmax.f32 %v7812, 0.0
      %v8261 = vmax.f32 %v7813, 0.0
      %v8262 = vmax.f32 %v7814, 0.0
      %v8263 = vmax.f32 %v7815, 0.0
      %v8264 = vmax.f32 %v7816, 0.0
      %v8265 = vmax.f32 %v7817, 0.0
      %v8266 = vmax.f32 %v7818, 0.0
      %v8267 = vmax.f32 %v7819, 0.0
      %v8268 = vmax.f32 %v7820, 0.0
      %v8269 = vmax.f32 %v7821, 0.0
      %v8270 = vmax.f32 %v7822, 0.0
      %v8271 = vmax.f32 %v7823, 0.0
      %v8272 = vmax.f32 %v7824, 0.0
      %v8273 = vmax.f32 %v7825, 0.0
      %v8274 = vmax.f32 %v7826, 0.0
      %v8275 = vmax.f32 %v7827, 0.0
      %v8276 = vmax.f32 %v7828, 0.0
      %v8277 = vmax.f32 %v7829, 0.0
      %v8278 = vmax.f32 %v7830, 0.0
      %v8279 = vmax.f32 %v7831, 0.0
      %v8280 = vmax.f32 %v7832, 0.0
      %v8281 = vmax.f32 %v7833, 0.0
      %v8282 = vmax.f32 %v7834, 0.0
      %v8283 = vmax.f32 %v7835, 0.0
      %v8284 = vmax.f32 %v7836, 0.0
      %v8285 = vmax.f32 %v7837, 0.0
      %v8286 = vmax.f32 %v7838, 0.0
      %v8287 = vmax.f32 %v7839, 0.0
      %v8288 = vmax.f32 %v7840, 0.0
      %v8289 = vmax.f32 %v7841, 0.0
      %v8290 = vmax.f32 %v7842, 0.0
      %v8291 = vmax.f32 %v7843, 0.0
      %v8292 = vmax.f32 %v7844, 0.0
      %v8293 = vmax.f32 %v7845, 0.0
      %v8294 = vmax.f32 %v7846, 0.0
      %v8295 = vmax.f32 %v7847, 0.0
      %v8296 = vmax.f32 %v7848, 0.0
      %v8297 = vmax.f32 %v7849, 0.0
      %v8298 = vmax.f32 %v7850, 0.0
      %v8299 = vmax.f32 %v7851, 0.0
      %v8300 = vmax.f32 %v7852, 0.0
      %v8301 = vmax.f32 %v7853, 0.0
      %v8302 = vmax.f32 %v7854, 0.0
      %v8303 = vmax.f32 %v7855, 0.0
      %v8304 = vmax.f32 %v7856, 0.0
      %v8305 = vmax.f32 %v7857, 0.0
      %v8306 = vmax.f32 %v7858, 0.0
      %v8307 = vmax.f32 %v7859, 0.0
      %v8308 = vmax.f32 %v7860, 0.0
      %v8309 = vmax.f32 %v7861, 0.0
      %v8310 = vmax.f32 %v7862, 0.0
      %v8311 = vmax.f32 %v7863, 0.0
      %v8312 = vmax.f32 %v7864, 0.0
      %v8313 = vmax.f32 %v7865, 0.0
      %v8314 = vmax.f32 %v7866, 0.0
      %v8315 = vmax.f32 %v7867, 0.0
      %v8316 = vmax.f32 %v7868, 0.0
      %v8317 = vmax.f32 %v7869, 0.0
      %v8318 = vmax.f32 %v7870, 0.0
      %v8319 = vmax.f32 %v7871, 0.0
      %v8320 = vmax.f32 %v7872, 0.0
      %v8321 = vmax.f32 %v7873, 0.0
      %v8322 = vmax.f32 %v7874, 0.0
      %v8323 = vmax.f32 %v7875, 0.0
      %v8324 = vmax.f32 %v7876, 0.0
      %v8325 = vmax.f32 %v7877, 0.0
      %v8326 = vmax.f32 %v7878, 0.0
      %v8327 = vmax.f32 %v7879, 0.0
      %v8328 = vmax.f32 %v7880, 0.0
      %v8329 = vmax.f32 %v7881, 0.0
      %v8330 = vmax.f32 %v7882, 0.0
      %v8331 = vmax.f32 %v7883, 0.0
      %v8332 = vmax.f32 %v7884, 0.0
      %v8333 = vmax.f32 %v7885, 0.0
      %v8334 = vmax.f32 %v7886, 0.0
      %v8335 = vmax.f32 %v7887, 0.0
      %v8336 = vmax.f32 %v7888, 0.0
      %v8337 = vmax.f32 %v7889, 0.0
      %v8338 = vmax.f32 %v7890, 0.0
      %v8339 = vmax.f32 %v7891, 0.0
      %v8340 = vmax.f32 %v7892, 0.0
      %v8341 = vmax.f32 %v7893, 0.0
      %v8342 = vmax.f32 %v7894, 0.0
      %v8343 = vmax.f32 %v7895, 0.0
      %v8344 = vmax.f32 %v7896, 0.0
      %v8345 = vmax.f32 %v7897, 0.0
      %v8346 = vmax.f32 %v7898, 0.0
      %v8347 = vmax.f32 %v7899, 0.0
      %v8348 = vmax.f32 %v7900, 0.0
      %v8349 = vmax.f32 %v7901, 0.0
      %v8350 = vmax.f32 %v7902, 0.0
      %v8351 = vmax.f32 %v7903, 0.0
      %v8352 = vmax.f32 %v7904, 0.0
      %v8353 = vmax.f32 %v7905, 0.0
      %v8354 = vmax.f32 %v7906, 0.0
      %v8355 = vmax.f32 %v7907, 0.0
      %v8356 = vmax.f32 %v7908, 0.0
      %v8357 = vmax.f32 %v7909, 0.0
      %v8358 = vmax.f32 %v7910, 0.0
      %v8359 = vmax.f32 %v7911, 0.0
      %v8360 = vmax.f32 %v7912, 0.0
      %v8361 = vmax.f32 %v7913, 0.0
      %v8362 = vmax.f32 %v7914, 0.0
      %v8363 = vmax.f32 %v7915, 0.0
      %v8364 = vmax.f32 %v7916, 0.0
      %v8365 = vmax.f32 %v7917, 0.0
      %v8366 = vmax.f32 %v7918, 0.0
      %v8367 = vmax.f32 %v7919, 0.0
      %v8368 = vmax.f32 %v7920, 0.0
      %v8369 = vmax.f32 %v7921, 0.0
      %v8370 = vmax.f32 %v7922, 0.0
      %v8371 = vmax.f32 %v7923, 0.0
      %v8372 = vmax.f32 %v7924, 0.0
      %v8373 = vmax.f32 %v7925, 0.0
      %v8374 = vmax.f32 %v7926, 0.0
      %v8375 = vmax.f32 %v7927, 0.0
      %v8376 = vmax.f32 %v7928, 0.0
      %v8377 = vmax.f32 %v7929, 0.0
      %v8378 = vmax.f32 %v7930, 0.0
      %v8379 = vmax.f32 %v7931, 0.0
      %v8380 = vmax.f32 %v7932, 0.0
      %v8381 = vmax.f32 %v7933, 0.0
      %v8382 = vmax.f32 %v7934, 0.0
      %v8383 = vmax.f32 %v7935, 0.0
      %v8384 = vmax.f32 %v7936, 0.0
      %v8385 = vmax.f32 %v7937, 0.0
      %v8386 = vmax.f32 %v7938, 0.0
      %v8387 = vmax.f32 %v7939, 0.0
      %v8388 = vmax.f32 %v7940, 0.0
      %v8389 = vmax.f32 %v7941, 0.0
      %v8390 = vmax.f32 %v7942, 0.0
      %v8391 = vmax.f32 %v7943, 0.0
      %v8392 = vmax.f32 %v7944, 0.0
      %v8393 = vmax.f32 %v7945, 0.0
      %v8394 = vmax.f32 %v7946, 0.0
      %v8395 = vmax.f32 %v7947, 0.0
      %v8396 = vmax.f32 %v7948, 0.0
      %v8397 = vmax.f32 %v7949, 0.0
      %v8398 = vmax.f32 %v7950, 0.0
      %v8399 = vmax.f32 %v7951, 0.0
      %v8400 = vmax.f32 %v7952, 0.0
      %v8401 = vmax.f32 %v7953, 0.0
      %v8402 = vmax.f32 %v7954, 0.0
      %v8403 = vmax.f32 %v7955, 0.0
      %v8404 = vmax.f32 %v7956, 0.0
      %v8405 = vmax.f32 %v7957, 0.0
      %v8406 = vmax.f32 %v7958, 0.0
      %v8407 = vmax.f32 %v7959, 0.0
      %v8408 = vmax.f32 %v7960, 0.0
      %v8409 = vmax.f32 %v7961, 0.0
      %v8410 = vmax.f32 %v7962, 0.0
      %v8411 = vmax.f32 %v7963, 0.0
      %v8412 = vmax.f32 %v7964, 0.0
      %v8413 = vmax.f32 %v7965, 0.0
      %v8414 = vmax.f32 %v7966, 0.0
      %v8415 = vmax.f32 %v7967, 0.0
      %v8416 = vmax.f32 %v7968, 0.0
      %v8417 = vmax.f32 %v7969, 0.0
      %v8418 = vmax.f32 %v7970, 0.0
      %v8419 = vmax.f32 %v7971, 0.0
      %v8420 = vmax.f32 %v7972, 0.0
      %v8421 = vmax.f32 %v7973, 0.0
      %v8422 = vmax.f32 %v7974, 0.0
      %v8423 = vmax.f32 %v7975, 0.0
      %v8424 = vmax.f32 %v7976, 0.0
      %v8425 = vmax.f32 %v7977, 0.0
      %v8426 = vmax.f32 %v7978, 0.0
      %v8427 = vmax.f32 %v7979, 0.0
      %v8428 = vmax.f32 %v7980, 0.0
      %v8429 = vmax.f32 %v7981, 0.0
      %v8430 = vmax.f32 %v7982, 0.0
      %v8431 = vmax.f32 %v7983, 0.0
      %v8432 = vmax.f32 %v7984, 0.0
      %v8433 = vmax.f32 %v7985, 0.0
      %v8434 = vmax.f32 %v7986, 0.0
      %v8435 = vmax.f32 %v7987, 0.0
      %v8436 = vmax.f32 %v7988, 0.0
      %v8437 = vmax.f32 %v7989, 0.0
      %v8438 = vmax.f32 %v7990, 0.0
      %v8439 = vmax.f32 %v7991, 0.0
      %v8440 = vmax.f32 %v7992, 0.0
      %v8441 = vmax.f32 %v7993, 0.0
      %v8442 = vmax.f32 %v7994, 0.0
      %v8443 = vmax.f32 %v7995, 0.0
      %v8444 = vmax.f32 %v7996, 0.0
      %v8445 = vmax.f32 %v7997, 0.0
      %v8446 = vmax.f32 %v7998, 0.0
      %v8447 = vmax.f32 %v7999, 0.0
      %v8448 = vmax.f32 %v8000, 0.0
      %v8449 = vmax.f32 %v8001, 0.0
      %v8450 = vmax.f32 %v8002, 0.0
      %v8451 = vmax.f32 %v8003, 0.0
      %v8452 = vmax.f32 %v8004, 0.0
      %v8453 = vmax.f32 %v8005, 0.0
      %v8454 = vmax.f32 %v8006, 0.0
      %v8455 = vmax.f32 %v8007, 0.0
      %v8456 = vmax.f32 %v8008, 0.0
      %v8457 = vmax.f32 %v8009, 0.0
      %v8458 = vmax.f32 %v8010, 0.0
      %v8459 = vmax.f32 %v8011, 0.0
      %v8460 = vmax.f32 %v8012, 0.0
      %v8461 = vmax.f32 %v8013, 0.0
      %v8462 = vmax.f32 %v8014, 0.0
      %v8463 = vmax.f32 %v8015, 0.0
      %v8464 = vmax.f32 %v8016, 0.0
      %v8465 = vmax.f32 %v8017, 0.0
      %v8466 = vmax.f32 %v8018, 0.0
      %v8467 = vmax.f32 %v8019, 0.0
      %v8468 = vmax.f32 %v8020, 0.0
      %v8469 = vmax.f32 %v8021, 0.0
      %v8470 = vmax.f32 %v8022, 0.0
      %v8471 = vmax.f32 %v8023, 0.0
      %v8472 = vmax.f32 %v8024, 0.0
      %v8473 = vmax.f32 %v8025, 0.0
      %v8474 = vmax.f32 %v8026, 0.0
      %v8475 = vmax.f32 %v8027, 0.0
      %v8476 = vmax.f32 %v8028, 0.0
      %v8477 = vmax.f32 %v8029, 0.0
      %v8478 = vmax.f32 %v8030, 0.0
      %v8479 = vmax.f32 %v8031, 0.0
      %v8480 = vmax.f32 %v8032, 0.0
      %v8481 = vmax.f32 %v8033, 0.0
      %v8482 = vmax.f32 %v8034, 0.0
      %v8483 = vmax.f32 %v8035, 0.0
      %v8484 = vmax.f32 %v8036, 0.0
      %v8485 = vmax.f32 %v8037, 0.0
      %v8486 = vmax.f32 %v8038, 0.0
      %v8487 = vmax.f32 %v8039, 0.0
      %v8488 = vmax.f32 %v8040, 0.0
      %v8489 = vmax.f32 %v8041, 0.0
      %v8490 = vmax.f32 %v8042, 0.0
      %v8491 = vmax.f32 %v8043, 0.0
      %v8492 = vmax.f32 %v8044, 0.0
      %v8493 = vmax.f32 %v8045, 0.0
      %v8494 = vmax.f32 %v8046, 0.0
      %v8495 = vmax.f32 %v8047, 0.0
      %v8496 = vmax.f32 %v8048, 0.0
      %v8497 = vmax.f32 %v8049, 0.0
      %v8498 = vmax.f32 %v8050, 0.0
      %v8499 = vmax.f32 %v8051, 0.0
      %v8500 = vmax.f32 %v8052, 0.0
      %v8501 = vmax.f32 %v8053, 0.0
      %v8502 = vmax.f32 %v8054, 0.0
      %v8503 = vmax.f32 %v8055, 0.0
      %v8504 = vmax.f32 %v8056, 0.0
      %v8505 = vmax.f32 %v8057, 0.0
      %v8506 = vmax.f32 %v8058, 0.0
      %v8507 = vmax.f32 %v8059, 0.0
      %v8508 = vmax.f32 %v8060, 0.0
      %v8509 = vmax.f32 %v8061, 0.0
      %v8510 = vmax.f32 %v8062, 0.0
      %v8511 = vmax.f32 %v8063, 0.0
      %v8512 = vmax.f32 %v8064, 0.0
      %v8513 = vmax.f32 %v8065, 0.0
      %v8514 = vmax.f32 %v8066, 0.0
      %v8515 = vmax.f32 %v8067, 0.0
      %v8516 = vmax.f32 %v8068, 0.0
      %v8517 = vmax.f32 %v8069, 0.0
      %v8518 = vmax.f32 %v8070, 0.0
      %v8519 = vmax.f32 %v8071, 0.0
      %v8520 = vmax.f32 %v8072, 0.0
      %v8521 = vmax.f32 %v8073, 0.0
      %v8522 = vmax.f32 %v8074, 0.0
      %v8523 = vmax.f32 %v8075, 0.0
      %v8524 = vmax.f32 %v8076, 0.0
      %v8525 = vmax.f32 %v8077, 0.0
      %v8526 = vmax.f32 %v8078, 0.0
      %v8527 = vmax.f32 %v8079, 0.0
      %v8528 = vmax.f32 %v8080, 0.0
      %v8529 = vmax.f32 %v8081, 0.0
      %v8530 = vmax.f32 %v8082, 0.0
      %v8531 = vmax.f32 %v8083, 0.0
      %v8532 = vmax.f32 %v8084, 0.0
      %v8533 = vmax.f32 %v8085, 0.0
      %v8534 = vmax.f32 %v8086, 0.0
      %v8535 = vmax.f32 %v8087, 0.0
      %v8536 = vmax.f32 %v8088, 0.0
      %v8537 = vmax.f32 %v8089, 0.0
      %v8538 = vmax.f32 %v8090, 0.0
      %v8539 = vmax.f32 %v8091, 0.0
      %v8540 = vmax.f32 %v8092, 0.0
      %v8541 = vmax.f32 %v8093, 0.0
      %v8542 = vmax.f32 %v8094, 0.0
      %v8543 = vmax.f32 %v8095, 0.0
      %v8544 = vmax.f32 %v8096, 0.0
      %v8545 = vmax.f32 %v8097, 0.0
      %v8546 = vmax.f32 %v8098, 0.0
      %v8547 = vmax.f32 %v8099, 0.0
      %v8548 = vmax.f32 %v8100, 0.0
      %v8549 = vmax.f32 %v8101, 0.0
      %v8550 = vmax.f32 %v8102, 0.0
      %v8551 = vmax.f32 %v8103, 0.0
      %v8552 = vmax.f32 %v8104, 0.0
      %v8553 = vmax.f32 %v8105, 0.0
      %v8554 = vmax.f32 %v8106, 0.0
      %v8555 = vmax.f32 %v8107, 0.0
      %v8556 = vmax.f32 %v8108, 0.0
      %v8557 = vmax.f32 %v8109, 0.0
      %v8558 = vmax.f32 %v8110, 0.0
      %v8559 = vmax.f32 %v8111, 0.0
      %v8560 = vmax.f32 %v8112, 0.0
      %v8561 = vmax.f32 %v8113, 0.0
      %v8562 = vmax.f32 %v8114, 0.0
      %v8563 = vmax.f32 %v8115, 0.0
      %v8564 = vmax.f32 %v8116, 0.0
      %v8565 = vmax.f32 %v8117, 0.0
      %v8566 = vmax.f32 %v8118, 0.0
      %v8567 = vmax.f32 %v8119, 0.0
      %v8568 = vmax.f32 %v8120, 0.0
      %v8569 = vmax.f32 %v8121, 0.0
      %v8570 = vmax.f32 %v8122, 0.0
      %v8571 = vmax.f32 %v8123, 0.0
      %v8572 = vmax.f32 %v8124, 0.0
      %v8573 = vmax.f32 %v8125, 0.0
      %v8574 = vmax.f32 %v8126, 0.0
      %v8575 = vmax.f32 %v8127, 0.0
      %v8576 = vmax.f32 %v8128, 0.0
      %v8577 = vmax.f32 %v8129, 0.0
      %v8578 = vmax.f32 %v8130, 0.0
      %v8579 = vmax.f32 %v8131, 0.0
      %v8580 = vmax.f32 %v8132, 0.0
      %v8581 = vmax.f32 %v8133, 0.0
      %v8582 = vmax.f32 %v8134, 0.0
      %v8583 = vmax.f32 %v8135, 0.0
      %v8584 = vmax.f32 %v8136, 0.0
      %v8585 = vmax.f32 %v8137, 0.0
      %v8586 = vmax.f32 %v8138, 0.0
      %v8587 = vmax.f32 %v8139, 0.0
      %v8588 = vmax.f32 %v8140, 0.0
      %v8589 = vmax.f32 %v8141, 0.0
      %v8590 = vmax.f32 %v8142, 0.0
      %v8591 = vmax.f32 %v8143, 0.0
      %v8592 = vmax.f32 %v8144, 0.0
      %v8593 = vmax.f32 %v8145, 0.0
      %v8594 = vmax.f32 %v8146, 0.0
      %v8595 = vmax.f32 %v8147, 0.0
      %v8596 = vmax.f32 %v8148, 0.0
      %v8597 = vmax.f32 %v8149, 0.0
      %v8598 = vmax.f32 %v8150, 0.0
      %v8599 = vmax.f32 %v8151, 0.0
      %v8600 = vmax.f32 %v8152, 0.0
      %v8601 = vmax.f32 %v8153, 0.0
      %v8602 = vmax.f32 %v8154, 0.0
      %v8603 = vmax.f32 %v8155, 0.0
      %v8604 = vmax.f32 %v8156, 0.0
      %v8605 = vmax.f32 %v8157, 0.0
      %v8606 = vmax.f32 %v8158, 0.0
      %v8607 = vmax.f32 %v8159, 0.0
      %v8608 = vmax.f32 %v8160, 0.0
      %v8609 = vmax.f32 %v8161, 0.0
      %v8610 = vmax.f32 %v8162, 0.0
      %v8611 = vmax.f32 %v8163, 0.0
      %v8612 = vmax.f32 %v8164, 0.0
      %v8613 = vmax.f32 %v8165, 0.0
      %v8614 = vmax.f32 %v8166, 0.0
      %v8615 = vmax.f32 %v8167, 0.0
      %v8616 = vmax.f32 %v8168, 0.0
      %v8617 = vmax.f32 %v8169, 0.0
      %v8618 = vmax.f32 %v8170, 0.0
      %v8619 = vmax.f32 %v8171, 0.0
      %v8620 = vmax.f32 %v8172, 0.0
      %v8621 = vmax.f32 %v8173, 0.0
      %v8622 = vmax.f32 %v8174, 0.0
      %v8623 = vmax.f32 %v8175, 0.0
      %v8624 = vmax.f32 %v8176, 0.0
      %v8625 = vmax.f32 %v8177, 0.0
      %v8626 = vmax.f32 %v8178, 0.0
      %v8627 = vmax.f32 %v8179, 0.0
      %v8628 = vmax.f32 %v8180, 0.0
      %v8629 = vmax.f32 %v8181, 0.0
      %v8630 = vmax.f32 %v8182, 0.0
      %v8631 = vmax.f32 %v8183, 0.0
      %v8632 = vmax.f32 %v8184, 0.0
      %v8633 = vmax.f32 %v8185, 0.0
      %v8634 = vmax.f32 %v8186, 0.0
      %v8635 = vmax.f32 %v8187, 0.0
      %v8636 = vmax.f32 %v8188, 0.0
      %v8637 = vmax.f32 %v8189, 0.0
      %v8638 = vmax.f32 %v8190, 0.0
      %v8639 = vmax.f32 %v8191, 0.0
      %v8640 = vmax.f32 %v8192, 0.0
      %v8641 = vmax.f32 %v8193, 0.0
      %v8642 = vmax.f32 %v8194, 0.0
      %v8643 = vmax.f32 %v8195, 0.0
      %v8644 = vmax.f32 %v8196, 0.0
      %v8645 = vmax.f32 %v8197, 0.0
      %v8646 = vmax.f32 %v8198, 0.0
      %v8647 = vmax.f32 %v8199, 0.0
      %v8648 = vmax.f32 %v8200, 0.0
      %v8649 = vmax.f32 %v8201, 0.0
      %v8650 = vmax.f32 %v8202, 0.0
      %v8651 = vmax.f32 %v8203, 0.0
      %v8652 = vmax.f32 %v8204, 0.0
      %v8653 = vmax.f32 %v8205, 0.0
      %v8654 = vmax.f32 %v8206, 0.0
      %v8655 = vmax.f32 %v8207, 0.0
      %v8656 = vmax.f32 %v8208, 0.0
      %v8657 = vmax.f32 %v8209, 0.0
      %v8658 = vmax.f32 %v8210, 0.0
      %v8659 = vmax.f32 %v8211, 0.0
      %v8660 = vmax.f32 %v8212, 0.0
      %v8661 = vmax.f32 %v8213, 0.0
      %v8662 = vmax.f32 %v8214, 0.0
      %v8663 = vmax.f32 %v8215, 0.0
      %v8664 = vmax.f32 %v8216, 0.0
      %v8665 = vmax.f32 %v8217, 0.0
      %v8666 = vmax.f32 %v8218, 0.0
      %v8667 = vmax.f32 %v8219, 0.0
      %v8668 = vmax.f32 %v8220, 0.0
      %v8669 = vmax.f32 %v8221, 0.0
      %v8670 = vmax.f32 %v8222, 0.0
      %v8671 = vmax.f32 %v8223, 0.0
      %v8672 = vmax.f32 %v8224, 0.0
      %v8673 = vmax.f32 %v8225, 0.0
      %v8674 = vmax.f32 %v8226, 0.0
      %v8675 = vmax.f32 %v8227, 0.0
      %v8676 = vmax.f32 %v8228, 0.0
      %v8677 = vmax.f32 %v8229, 0.0
      %v8678 = vmax.f32 %v8230, 0.0
      %v8679 = vmax.f32 %v8231, 0.0
      %v8680 = vmax.f32 %v8232, 0.0
      %v8681 = vmax.f32 %v8233, 0.0
      %v8682 = vmax.f32 %v8234, 0.0
      %v8683 = vmax.f32 %v8235, 0.0
      %v8684 = vmax.f32 %v8236, 0.0
      %v8685 = vmax.f32 %v8237, 0.0
      %v8686 = vpack.c.bf16 %v8272, %v8270
      %v8687 = vpack.c.bf16 %v8273, %v8271
      %v8688 = vpack.c.bf16 %v8276, %v8274
      %v8689 = vpack.c.bf16 %v8277, %v8275
      %v8690 = vpack.c.bf16 %v8280, %v8278
      %v8691 = vpack.c.bf16 %v8281, %v8279
      %v8692 = vpack.c.bf16 %v8284, %v8282
      %v8693 = vpack.c.bf16 %v8285, %v8283
      %v8694 = vpack.c.bf16 %v8288, %v8286
      %v8695 = vpack.c.bf16 %v8289, %v8287
      %v8696 = vpack.c.bf16 %v8292, %v8290
      %v8697 = vpack.c.bf16 %v8293, %v8291
      %v8698 = vpack.c.bf16 %v8296, %v8294
      %v8699 = vpack.c.bf16 %v8297, %v8295
      %v8700 = vpack.c.bf16 %v8300, %v8298
      %v8701 = vpack.c.bf16 %v8301, %v8299
      %v8702 = vpack.c.bf16 %v8336, %v8334
      %v8703 = vpack.c.bf16 %v8337, %v8335
      %v8704 = vpack.c.bf16 %v8340, %v8338
      %v8705 = vpack.c.bf16 %v8341, %v8339
      %v8706 = vpack.c.bf16 %v8344, %v8342
      %v8707 = vpack.c.bf16 %v8345, %v8343
      %v8708 = vpack.c.bf16 %v8348, %v8346
      %v8709 = vpack.c.bf16 %v8349, %v8347
      %v8710 = vpack.c.bf16 %v8352, %v8350
      %v8711 = vpack.c.bf16 %v8353, %v8351
      %v8712 = vpack.c.bf16 %v8356, %v8354
      %v8713 = vpack.c.bf16 %v8357, %v8355
      %v8714 = vpack.c.bf16 %v8360, %v8358
      %v8715 = vpack.c.bf16 %v8361, %v8359
      %v8716 = vpack.c.bf16 %v8364, %v8362
      %v8717 = vpack.c.bf16 %v8365, %v8363
      %v8718 = vpack.c.bf16 %v8400, %v8398
      %v8719 = vpack.c.bf16 %v8401, %v8399
      %v8720 = vpack.c.bf16 %v8404, %v8402
      %v8721 = vpack.c.bf16 %v8405, %v8403
      %v8722 = vpack.c.bf16 %v8408, %v8406
      %v8723 = vpack.c.bf16 %v8409, %v8407
      %v8724 = vpack.c.bf16 %v8412, %v8410
      %v8725 = vpack.c.bf16 %v8413, %v8411
      %v8726 = vpack.c.bf16 %v8416, %v8414
      %v8727 = vpack.c.bf16 %v8417, %v8415
      %v8728 = vpack.c.bf16 %v8420, %v8418
      %v8729 = vpack.c.bf16 %v8421, %v8419
      %v8730 = vpack.c.bf16 %v8424, %v8422
      %v8731 = vpack.c.bf16 %v8425, %v8423
      %v8732 = vpack.c.bf16 %v8428, %v8426
      %v8733 = vpack.c.bf16 %v8429, %v8427
      %v8734 = vpack.c.bf16 %v8464, %v8462
      %v8735 = vpack.c.bf16 %v8465, %v8463
      %v8736 = vpack.c.bf16 %v8468, %v8466
      %v8737 = vpack.c.bf16 %v8469, %v8467
      %v8738 = vpack.c.bf16 %v8472, %v8470
      %v8739 = vpack.c.bf16 %v8473, %v8471
      %v8740 = vpack.c.bf16 %v8476, %v8474
      %v8741 = vpack.c.bf16 %v8477, %v8475
      %v8742 = vpack.c.bf16 %v8480, %v8478
      %v8743 = vpack.c.bf16 %v8481, %v8479
      %v8744 = vpack.c.bf16 %v8484, %v8482
      %v8745 = vpack.c.bf16 %v8485, %v8483
      %v8746 = vpack.c.bf16 %v8488, %v8486
      %v8747 = vpack.c.bf16 %v8489, %v8487
      %v8748 = vpack.c.bf16 %v8492, %v8490
      %v8749 = vpack.c.bf16 %v8493, %v8491
      %v8750 = vpack.c.bf16 %v8528, %v8526
      %v8751 = vpack.c.bf16 %v8529, %v8527
      %v8752 = vpack.c.bf16 %v8532, %v8530
      %v8753 = vpack.c.bf16 %v8533, %v8531
      %v8754 = vpack.c.bf16 %v8536, %v8534
      %v8755 = vpack.c.bf16 %v8537, %v8535
      %v8756 = vpack.c.bf16 %v8540, %v8538
      %v8757 = vpack.c.bf16 %v8541, %v8539
      %v8758 = vpack.c.bf16 %v8544, %v8542
      %v8759 = vpack.c.bf16 %v8545, %v8543
      %v8760 = vpack.c.bf16 %v8548, %v8546
      %v8761 = vpack.c.bf16 %v8549, %v8547
      %v8762 = vpack.c.bf16 %v8552, %v8550
      %v8763 = vpack.c.bf16 %v8553, %v8551
      %v8764 = vpack.c.bf16 %v8556, %v8554
      %v8765 = vpack.c.bf16 %v8557, %v8555
      %v8766 = vpack.c.bf16 %v8592, %v8590
      %v8767 = vpack.c.bf16 %v8593, %v8591
      %v8768 = vpack.c.bf16 %v8596, %v8594
      %v8769 = vpack.c.bf16 %v8597, %v8595
      %v8770 = vpack.c.bf16 %v8600, %v8598
      %v8771 = vpack.c.bf16 %v8601, %v8599
      %v8772 = vpack.c.bf16 %v8604, %v8602
      %v8773 = vpack.c.bf16 %v8605, %v8603
      %v8774 = vpack.c.bf16 %v8608, %v8606
      %v8775 = vpack.c.bf16 %v8609, %v8607
      %v8776 = vpack.c.bf16 %v8612, %v8610
      %v8777 = vpack.c.bf16 %v8613, %v8611
      %v8778 = vpack.c.bf16 %v8616, %v8614
      %v8779 = vpack.c.bf16 %v8617, %v8615
      %v8780 = vpack.c.bf16 %v8620, %v8618
      %v8781 = vpack.c.bf16 %v8621, %v8619
      %v8782 = vld [vmem:[%s2] sm:$0xf]
      %v8783 = vld [vmem:[%s2 + $0x4] sm:$0xf]
      %v8784 = vld [vmem:[%s2 + $0x8] sm:$0xf]
      %v8785 = vld [vmem:[%s2 + $0xc] sm:$0xf]
      %v8786 = vld [vmem:[%s2 + $0x10] sm:$0xf]
      %v8787 = vld [vmem:[%s2 + $0x14] sm:$0xf]
      %v8788 = vld [vmem:[%s2 + $0x18] sm:$0xf]
      %v8789 = vld [vmem:[%s2 + $0x1c] sm:$0xf]
      %v8790 = vld [vmem:[%s2 + $0x20] sm:$0xf]
      %v8791 = vld [vmem:[%s2 + $0x24] sm:$0xf]
      %v8792 = vld [vmem:[%s2 + $0x28] sm:$0xf]
      %v8793 = vld [vmem:[%s2 + $0x2c] sm:$0xf]
      %v8794 = vld [vmem:[%s2 + $0x30] sm:$0xf]
      %v8795 = vld [vmem:[%s2 + $0x34] sm:$0xf]
      %v8796 = vld [vmem:[%s2 + $0x38] sm:$0xf]
      %v8797 = vld [vmem:[%s2 + $0x3c] sm:$0xf]
      %v8798 = vld [vmem:[%s2 + $0x40] sm:$0xf]
      %v8799 = vld [vmem:[%s2 + $0x44] sm:$0xf]
      %v8800 = vld [vmem:[%s2 + $0x48] sm:$0xf]
      %v8801 = vld [vmem:[%s2 + $0x4c] sm:$0xf]
      %v8802 = vld [vmem:[%s2 + $0x50] sm:$0xf]
      %v8803 = vld [vmem:[%s2 + $0x54] sm:$0xf]
      %v8804 = vld [vmem:[%s2 + $0x58] sm:$0xf]
      %v8805 = vld [vmem:[%s2 + $0x5c] sm:$0xf]
      %v8806 = vld [vmem:[%s2 + $0x60] sm:$0xf]
      %v8807 = vld [vmem:[%s2 + $0x64] sm:$0xf]
      %v8808 = vld [vmem:[%s2 + $0x68] sm:$0xf]
      %v8809 = vld [vmem:[%s2 + $0x6c] sm:$0xf]
      %v8810 = vpack.c.bf16 %v8240, %v8238
      %v8811 = vpack.c.bf16 %v8241, %v8239
      %v8812 = vpack.c.bf16 %v8244, %v8242
      %v8813 = vpack.c.bf16 %v8245, %v8243
      %v8814 = vpack.c.bf16 %v8248, %v8246
      %v8815 = vpack.c.bf16 %v8249, %v8247
      %v8816 = vpack.c.bf16 %v8252, %v8250
      %v8817 = vpack.c.bf16 %v8253, %v8251
      %v8818 = vpack.c.bf16 %v8256, %v8254
      %v8819 = vpack.c.bf16 %v8257, %v8255
      %v8820 = vpack.c.bf16 %v8260, %v8258
      %v8821 = vpack.c.bf16 %v8261, %v8259
      %v8822 = vpack.c.bf16 %v8264, %v8262
      %v8823 = vpack.c.bf16 %v8265, %v8263
      %v8824 = vpack.c.bf16 %v8268, %v8266
      %v8825 = vpack.c.bf16 %v8269, %v8267
      %v8826 = vpack.c.bf16 %v8304, %v8302
      %v8827 = vpack.c.bf16 %v8305, %v8303
      %v8828 = vpack.c.bf16 %v8308, %v8306
      %v8829 = vpack.c.bf16 %v8309, %v8307
      %v8830 = vpack.c.bf16 %v8312, %v8310
      %v8831 = vpack.c.bf16 %v8313, %v8311
      %v8832 = vpack.c.bf16 %v8316, %v8314
      %v8833 = vpack.c.bf16 %v8317, %v8315
      %v8834 = vpack.c.bf16 %v8320, %v8318
      %v8835 = vpack.c.bf16 %v8321, %v8319
      %v8836 = vpack.c.bf16 %v8324, %v8322
      %v8837 = vpack.c.bf16 %v8325, %v8323
      %v8838 = vpack.c.bf16 %v8328, %v8326
      %v8839 = vpack.c.bf16 %v8329, %v8327
      %v8840 = vpack.c.bf16 %v8332, %v8330
      %v8841 = vpack.c.bf16 %v8333, %v8331
      %v8842 = vpack.c.bf16 %v8368, %v8366
      %v8843 = vpack.c.bf16 %v8369, %v8367
      %v8844 = vpack.c.bf16 %v8372, %v8370
      %v8845 = vpack.c.bf16 %v8373, %v8371
      %v8846 = vpack.c.bf16 %v8376, %v8374
      %v8847 = vpack.c.bf16 %v8377, %v8375
      %v8848 = vpack.c.bf16 %v8380, %v8378
      %v8849 = vpack.c.bf16 %v8381, %v8379
      %v8850 = vpack.c.bf16 %v8384, %v8382
      %v8851 = vpack.c.bf16 %v8385, %v8383
      %v8852 = vpack.c.bf16 %v8388, %v8386
      %v8853 = vpack.c.bf16 %v8389, %v8387
      %v8854 = vpack.c.bf16 %v8392, %v8390
      %v8855 = vpack.c.bf16 %v8393, %v8391
      %v8856 = vpack.c.bf16 %v8396, %v8394
      %v8857 = vpack.c.bf16 %v8397, %v8395
      %v8858 = vpack.c.bf16 %v8432, %v8430
      %v8859 = vpack.c.bf16 %v8433, %v8431
      %v8860 = vpack.c.bf16 %v8436, %v8434
      %v8861 = vpack.c.bf16 %v8437, %v8435
      %v8862 = vpack.c.bf16 %v8440, %v8438
      %v8863 = vpack.c.bf16 %v8441, %v8439
      %v8864 = vpack.c.bf16 %v8444, %v8442
      %v8865 = vpack.c.bf16 %v8445, %v8443
      %v8866 = vpack.c.bf16 %v8448, %v8446
      %v8867 = vpack.c.bf16 %v8449, %v8447
      %v8868 = vpack.c.bf16 %v8452, %v8450
      %v8869 = vpack.c.bf16 %v8453, %v8451
      %v8870 = vpack.c.bf16 %v8456, %v8454
      %v8871 = vpack.c.bf16 %v8457, %v8455
      %v8872 = vpack.c.bf16 %v8460, %v8458
      %v8873 = vpack.c.bf16 %v8461, %v8459
      %v8874 = vpack.c.bf16 %v8496, %v8494
      %v8875 = vpack.c.bf16 %v8497, %v8495
      %v8876 = vpack.c.bf16 %v8500, %v8498
      %v8877 = vpack.c.bf16 %v8501, %v8499
      %v8878 = vpack.c.bf16 %v8504, %v8502
      %v8879 = vpack.c.bf16 %v8505, %v8503
      %v8880 = vpack.c.bf16 %v8508, %v8506
      %v8881 = vpack.c.bf16 %v8509, %v8507
      %v8882 = vpack.c.bf16 %v8512, %v8510
      %v8883 = vpack.c.bf16 %v8513, %v8511
      %v8884 = vpack.c.bf16 %v8516, %v8514
      %v8885 = vpack.c.bf16 %v8517, %v8515
      %v8886 = vpack.c.bf16 %v8520, %v8518
      %v8887 = vpack.c.bf16 %v8521, %v8519
      %v8888 = vpack.c.bf16 %v8524, %v8522
      %v8889 = vpack.c.bf16 %v8525, %v8523
      %v8890 = vpack.c.bf16 %v8560, %v8558
      %v8891 = vpack.c.bf16 %v8561, %v8559
      %v8892 = vpack.c.bf16 %v8564, %v8562
      %v8893 = vpack.c.bf16 %v8565, %v8563
      %v8894 = vpack.c.bf16 %v8568, %v8566
      %v8895 = vpack.c.bf16 %v8569, %v8567
      %v8896 = vpack.c.bf16 %v8572, %v8570
      %v8897 = vpack.c.bf16 %v8573, %v8571
      %v8898 = vpack.c.bf16 %v8576, %v8574
      %v8899 = vpack.c.bf16 %v8577, %v8575
      %v8900 = vpack.c.bf16 %v8580, %v8578
      %v8901 = vpack.c.bf16 %v8581, %v8579
      %v8902 = vpack.c.bf16 %v8584, %v8582
      %v8903 = vpack.c.bf16 %v8585, %v8583
      %v8904 = vpack.c.bf16 %v8588, %v8586
      %v8905 = vpack.c.bf16 %v8589, %v8587
      %v8906 = vpack.c.bf16 %v8624, %v8622
      %v8907 = vpack.c.bf16 %v8625, %v8623
      %v8908 = vpack.c.bf16 %v8628, %v8626
      %v8909 = vpack.c.bf16 %v8629, %v8627
      %v8910 = vpack.c.bf16 %v8632, %v8630
      %v8911 = vpack.c.bf16 %v8633, %v8631
      %v8912 = vpack.c.bf16 %v8636, %v8634
      %v8913 = vpack.c.bf16 %v8637, %v8635
      %v8914 = vpack.c.bf16 %v8640, %v8638
      %v8915 = vpack.c.bf16 %v8641, %v8639
      %v8916 = vpack.c.bf16 %v8644, %v8642
      %v8917 = vpack.c.bf16 %v8645, %v8643
      %v8918 = vpack.c.bf16 %v8648, %v8646
      %v8919 = vpack.c.bf16 %v8649, %v8647
      %v8920 = vpack.c.bf16 %v8652, %v8650
      %v8921 = vpack.c.bf16 %v8653, %v8651
      %s8922 = scalar_lea.vmem %s2, 112
      %v8923 = vld [vmem:[%s8922] sm:$0xf]
      %v8924 = vld [vmem:[%s8922 + $0x4] sm:$0xf]
      %v8925 = vld [vmem:[%s8922 + $0x8] sm:$0xf]
      %v8926 = vld [vmem:[%s8922 + $0xc] sm:$0xf]
      %v8927 = vld [vmem:[%s8922 + $0x10] sm:$0xf]
      %v8928 = vld [vmem:[%s8922 + $0x14] sm:$0xf]
      %v8929 = vld [vmem:[%s8922 + $0x18] sm:$0xf]
      %v8930 = vld [vmem:[%s8922 + $0x1c] sm:$0xf]
      %v8931 = vld [vmem:[%s8922 + $0x20] sm:$0xf]
      %v8932 = vld [vmem:[%s8922 + $0x24] sm:$0xf]
      %v8933 = vld [vmem:[%s8922 + $0x28] sm:$0xf]
      %v8934 = vld [vmem:[%s8922 + $0x2c] sm:$0xf]
      %v8935 = vld [vmem:[%s8922 + $0x30] sm:$0xf]
      %v8936 = vld [vmem:[%s8922 + $0x34] sm:$0xf]
      %v8937 = vld [vmem:[%s8922 + $0x38] sm:$0xf]
      %v8938 = vld [vmem:[%s8922 + $0x3c] sm:$0xf]
      %v8939 = vld [vmem:[%s8922 + $0x40] sm:$0xf]
      %v8940 = vld [vmem:[%s8922 + $0x44] sm:$0xf]
      %v8941 = vld [vmem:[%s8922 + $0x48] sm:$0xf]
      %v8942 = vld [vmem:[%s8922 + $0x4c] sm:$0xf]
      %v8943 = vld [vmem:[%s8922 + $0x50] sm:$0xf]
      %v8944 = vld [vmem:[%s8922 + $0x54] sm:$0xf]
      %v8945 = vld [vmem:[%s8922 + $0x58] sm:$0xf]
      %v8946 = vld [vmem:[%s8922 + $0x5c] sm:$0xf]
      %v8947 = vld [vmem:[%s8922 + $0x60] sm:$0xf]
      %v8948 = vld [vmem:[%s8922 + $0x64] sm:$0xf]
      %v8949 = vld [vmem:[%s8922 + $0x68] sm:$0xf]
      %v8950 = vld [vmem:[%s8922 + $0x6c] sm:$0xf]
      %v8979 = vunpack.c.l.b16 %v8923
      %v8980 = vunpack.c.l.b16 %v8924
      %v8981 = vunpack.c.l.b16 %v8925
      %v8982 = vunpack.c.l.b16 %v8926
      %v8983 = vunpack.c.l.b16 %v8927
      %v8984 = vunpack.c.l.b16 %v8928
      %v8985 = vunpack.c.l.b16 %v8929
      %v8986 = vunpack.c.l.b16 %v8930
      %v8987 = vunpack.c.l.b16 %v8931
      %v8988 = vunpack.c.l.b16 %v8932
      %v8989 = vunpack.c.l.b16 %v8933
      %v8990 = vunpack.c.l.b16 %v8934
      %v8991 = vunpack.c.l.b16 %v8935
      %v8992 = vunpack.c.l.b16 %v8936
      %v8993 = vunpack.c.l.b16 %v8937
      %v8994 = vunpack.c.l.b16 %v8938
      %v8995 = vunpack.c.l.b16 %v8939
      %v8996 = vunpack.c.l.b16 %v8940
      %v8997 = vunpack.c.l.b16 %v8941
      %v8998 = vunpack.c.l.b16 %v8942
      %v8999 = vunpack.c.l.b16 %v8943
      %v9000 = vunpack.c.l.b16 %v8944
      %v9001 = vunpack.c.l.b16 %v8945
      %v9002 = vunpack.c.l.b16 %v8946
      %v9003 = vunpack.c.l.b16 %v8947
      %v9004 = vunpack.c.l.b16 %v8948
      %v9005 = vunpack.c.l.b16 %v8949
      %v9006 = vunpack.c.l.b16 %v8950
      %v9007 = vpack.c.b16 %v8980, %v8979
      %v9008 = vpack.c.b16 %v8982, %v8981
      %v9009 = vpack.c.b16 %v8984, %v8983
      %v9010 = vpack.c.b16 %v8986, %v8985
      %v9011 = vpack.c.b16 %v8988, %v8987
      %v9012 = vpack.c.b16 %v8990, %v8989
      %v9013 = vpack.c.b16 %v8992, %v8991
      %v9014 = vpack.c.b16 %v8994, %v8993
      %v9015 = vpack.c.b16 %v8996, %v8995
      %v9016 = vpack.c.b16 %v8998, %v8997
      %v9017 = vpack.c.b16 %v9000, %v8999
      %v9018 = vpack.c.b16 %v9002, %v9001
      %v9019 = vpack.c.b16 %v9004, %v9003
      %v9020 = vpack.c.b16 %v9006, %v9005
      %vm9035 = vcmask 785408
      %v9037 = vsel %vm9035, %v8811, 0
      %v9040 = vsel %vm9035, %v8813, 0
      %v9043 = vsel %vm9035, %v8815, 0
      %v9046 = vsel %vm9035, %v8817, 0
      %v9049 = vsel %vm9035, %v8819, 0
      %v9052 = vsel %vm9035, %v8821, 0
      %v9055 = vsel %vm9035, %v8823, 0
      %v9058 = vsel %vm9035, %v8825, 0
      %v9061 = vsel %vm9035, %v8827, 0
      %v9064 = vsel %vm9035, %v8829, 0
      %v9067 = vsel %vm9035, %v8831, 0
      %v9070 = vsel %vm9035, %v8833, 0
      %v9073 = vsel %vm9035, %v8835, 0
      %v9076 = vsel %vm9035, %v8837, 0
      %v9079 = vsel %vm9035, %v8839, 0
      %v9082 = vsel %vm9035, %v8841, 0
      %v9085 = vsel %vm9035, %v8843, 0
      %v9088 = vsel %vm9035, %v8845, 0
      %v9091 = vsel %vm9035, %v8847, 0
      %v9094 = vsel %vm9035, %v8849, 0
      %v9097 = vsel %vm9035, %v8851, 0
      %v9100 = vsel %vm9035, %v8853, 0
      %v9103 = vsel %vm9035, %v8855, 0
      %v9106 = vsel %vm9035, %v8857, 0
      %v9109 = vsel %vm9035, %v8859, 0
      %v9112 = vsel %vm9035, %v8861, 0
      %v9115 = vsel %vm9035, %v8863, 0
      %v9118 = vsel %vm9035, %v8865, 0
      %v9121 = vsel %vm9035, %v8867, 0
      %v9124 = vsel %vm9035, %v8869, 0
      %v9127 = vsel %vm9035, %v8871, 0
      %v9130 = vsel %vm9035, %v8873, 0
      %v9133 = vsel %vm9035, %v8875, 0
      %v9136 = vsel %vm9035, %v8877, 0
      %v9139 = vsel %vm9035, %v8879, 0
      %v9142 = vsel %vm9035, %v8881, 0
      %v9145 = vsel %vm9035, %v8883, 0
      %v9148 = vsel %vm9035, %v8885, 0
      %v9151 = vsel %vm9035, %v8887, 0
      %v9154 = vsel %vm9035, %v8889, 0
      %v9157 = vsel %vm9035, %v8891, 0
      %v9160 = vsel %vm9035, %v8893, 0
      %v9163 = vsel %vm9035, %v8895, 0
      %v9166 = vsel %vm9035, %v8897, 0
      %v9169 = vsel %vm9035, %v8899, 0
      %v9172 = vsel %vm9035, %v8901, 0
      %v9175 = vsel %vm9035, %v8903, 0
      %v9178 = vsel %vm9035, %v8905, 0
      %v9181 = vsel %vm9035, %v8907, 0
      %v9184 = vsel %vm9035, %v8909, 0
      %v9187 = vsel %vm9035, %v8911, 0
      %v9190 = vsel %vm9035, %v8913, 0
      %v9193 = vsel %vm9035, %v8915, 0
      %v9196 = vsel %vm9035, %v8917, 0
      %v9199 = vsel %vm9035, %v8919, 0
      %v9202 = vsel %vm9035, %v8921, 0
      %9204 = vmatpush.bf16.msra.mxu0 %v9014
      %9205 = vmatpush.bf16.msra.mxu0 %v9013
      %9206 = vmatpush.bf16.msra.mxu0 %v9012
      %9207 = vmatpush.bf16.msra.mxu0 %v9011
      %9208 = vmatpush.bf16.msra.mxu0 %v9010
      %9209 = vmatpush.bf16.msra.mxu0 %v9009
      %9210 = vmatpush.bf16.msra.mxu0 %v9008
      %9211 = vmatpush.bf16.msra.mxu0 %v9007
      %9212 = vmatmul.bf16.gmra.mxu0 %v8810
      %v9213 = vpop.f32.mrf.mxu0
      %v9214 = vadd.f32 0.0, %v9213
      %v9215 = vpop.f32.mrf.mxu0
      %v9216 = vadd.f32 0.0, %v9215
      %9217 = vmatmul.bf16.gmra.mxu0 %v8812
      %v9218 = vpop.f32.mrf.mxu0
      %v9219 = vadd.f32 0.0, %v9218
      %v9220 = vpop.f32.mrf.mxu0
      %v9221 = vadd.f32 0.0, %v9220
      %9222 = vmatmul.bf16.gmra.mxu0 %v8814
      %v9223 = vpop.f32.mrf.mxu0
      %v9224 = vadd.f32 0.0, %v9223
      %v9225 = vpop.f32.mrf.mxu0
      %v9226 = vadd.f32 0.0, %v9225
      %9227 = vmatmul.bf16.gmra.mxu0 %v8816
      %v9228 = vpop.f32.mrf.mxu0
      %v9229 = vadd.f32 0.0, %v9228
      %v9230 = vpop.f32.mrf.mxu0
      %v9231 = vadd.f32 0.0, %v9230
      %9232 = vmatmul.bf16.gmra.mxu0 %v8818
      %v9233 = vpop.f32.mrf.mxu0
      %v9234 = vadd.f32 0.0, %v9233
      %v9235 = vpop.f32.mrf.mxu0
      %v9236 = vadd.f32 0.0, %v9235
      %9237 = vmatmul.bf16.gmra.mxu0 %v8820
      %v9238 = vpop.f32.mrf.mxu0
      %v9239 = vadd.f32 0.0, %v9238
      %v9240 = vpop.f32.mrf.mxu0
      %v9241 = vadd.f32 0.0, %v9240
      %9242 = vmatmul.bf16.gmra.mxu0 %v8822
      %v9243 = vpop.f32.mrf.mxu0
      %v9244 = vadd.f32 0.0, %v9243
      %v9245 = vpop.f32.mrf.mxu0
      %v9246 = vadd.f32 0.0, %v9245
      %9247 = vmatmul.bf16.gmra.mxu0 %v8824
      %v9248 = vpop.f32.mrf.mxu0
      %v9249 = vadd.f32 0.0, %v9248
      %v9250 = vpop.f32.mrf.mxu0
      %v9251 = vadd.f32 0.0, %v9250
      %9252 = vmatmul.bf16.gmra.mxu0 %v8826
      %v9253 = vpop.f32.mrf.mxu0
      %v9254 = vadd.f32 0.0, %v9253
      %v9255 = vpop.f32.mrf.mxu0
      %v9256 = vadd.f32 0.0, %v9255
      %9257 = vmatmul.bf16.gmra.mxu0 %v8828
      %v9258 = vpop.f32.mrf.mxu0
      %v9259 = vadd.f32 0.0, %v9258
      %v9260 = vpop.f32.mrf.mxu0
      %v9261 = vadd.f32 0.0, %v9260
      %9262 = vmatmul.bf16.gmra.mxu0 %v8830
      %v9263 = vpop.f32.mrf.mxu0
      %v9264 = vadd.f32 0.0, %v9263
      %v9265 = vpop.f32.mrf.mxu0
      %v9266 = vadd.f32 0.0, %v9265
      %9267 = vmatmul.bf16.gmra.mxu0 %v8832
      %v9268 = vpop.f32.mrf.mxu0
      %v9269 = vadd.f32 0.0, %v9268
      %v9270 = vpop.f32.mrf.mxu0
      %v9271 = vadd.f32 0.0, %v9270
      %9272 = vmatmul.bf16.gmra.mxu0 %v8834
      %v9273 = vpop.f32.mrf.mxu0
      %v9274 = vadd.f32 0.0, %v9273
      %v9275 = vpop.f32.mrf.mxu0
      %v9276 = vadd.f32 0.0, %v9275
      %9277 = vmatmul.bf16.gmra.mxu0 %v8836
      %v9278 = vpop.f32.mrf.mxu0
      %v9279 = vadd.f32 0.0, %v9278
      %v9280 = vpop.f32.mrf.mxu0
      %v9281 = vadd.f32 0.0, %v9280
      %9282 = vmatmul.bf16.gmra.mxu0 %v8838
      %v9283 = vpop.f32.mrf.mxu0
      %v9284 = vadd.f32 0.0, %v9283
      %v9285 = vpop.f32.mrf.mxu0
      %v9286 = vadd.f32 0.0, %v9285
      %9287 = vmatmul.bf16.gmra.mxu0 %v8840
      %v9288 = vpop.f32.mrf.mxu0
      %v9289 = vadd.f32 0.0, %v9288
      %v9290 = vpop.f32.mrf.mxu0
      %v9291 = vadd.f32 0.0, %v9290
      %9292 = vmatmul.bf16.gmra.mxu0 %v8842
      %v9293 = vpop.f32.mrf.mxu0
      %v9294 = vadd.f32 0.0, %v9293
      %v9295 = vpop.f32.mrf.mxu0
      %v9296 = vadd.f32 0.0, %v9295
      %9297 = vmatmul.bf16.gmra.mxu0 %v8844
      %v9298 = vpop.f32.mrf.mxu0
      %v9299 = vadd.f32 0.0, %v9298
      %v9300 = vpop.f32.mrf.mxu0
      %v9301 = vadd.f32 0.0, %v9300
      %9302 = vmatmul.bf16.gmra.mxu0 %v8846
      %v9303 = vpop.f32.mrf.mxu0
      %v9304 = vadd.f32 0.0, %v9303
      %v9305 = vpop.f32.mrf.mxu0
      %v9306 = vadd.f32 0.0, %v9305
      %9307 = vmatmul.bf16.gmra.mxu0 %v8848
      %v9308 = vpop.f32.mrf.mxu0
      %v9309 = vadd.f32 0.0, %v9308
      %v9310 = vpop.f32.mrf.mxu0
      %v9311 = vadd.f32 0.0, %v9310
      %9312 = vmatmul.bf16.gmra.mxu0 %v8850
      %v9313 = vpop.f32.mrf.mxu0
      %v9314 = vadd.f32 0.0, %v9313
      %v9315 = vpop.f32.mrf.mxu0
      %v9316 = vadd.f32 0.0, %v9315
      %9317 = vmatmul.bf16.gmra.mxu0 %v8852
      %v9318 = vpop.f32.mrf.mxu0
      %v9319 = vadd.f32 0.0, %v9318
      %v9320 = vpop.f32.mrf.mxu0
      %v9321 = vadd.f32 0.0, %v9320
      %9322 = vmatmul.bf16.gmra.mxu0 %v8854
      %v9323 = vpop.f32.mrf.mxu0
      %v9324 = vadd.f32 0.0, %v9323
      %v9325 = vpop.f32.mrf.mxu0
      %v9326 = vadd.f32 0.0, %v9325
      %9327 = vmatmul.bf16.gmra.mxu0 %v8856
      %v9328 = vpop.f32.mrf.mxu0
      %v9329 = vadd.f32 0.0, %v9328
      %v9330 = vpop.f32.mrf.mxu0
      %v9331 = vadd.f32 0.0, %v9330
      %9332 = vmatmul.bf16.gmra.mxu0 %v8858
      %v9333 = vpop.f32.mrf.mxu0
      %v9334 = vadd.f32 0.0, %v9333
      %v9335 = vpop.f32.mrf.mxu0
      %v9336 = vadd.f32 0.0, %v9335
      %9337 = vmatmul.bf16.gmra.mxu0 %v8860
      %v9338 = vpop.f32.mrf.mxu0
      %v9339 = vadd.f32 0.0, %v9338
      %v9340 = vpop.f32.mrf.mxu0
      %v9341 = vadd.f32 0.0, %v9340
      %9342 = vmatmul.bf16.gmra.mxu0 %v8862
      %v9343 = vpop.f32.mrf.mxu0
      %v9344 = vadd.f32 0.0, %v9343
      %v9345 = vpop.f32.mrf.mxu0
      %v9346 = vadd.f32 0.0, %v9345
      %9347 = vmatmul.bf16.gmra.mxu0 %v8864
      %v9348 = vpop.f32.mrf.mxu0
      %v9349 = vadd.f32 0.0, %v9348
      %v9350 = vpop.f32.mrf.mxu0
      %v9351 = vadd.f32 0.0, %v9350
      %9352 = vmatmul.bf16.gmra.mxu0 %v8866
      %v9353 = vpop.f32.mrf.mxu0
      %v9354 = vadd.f32 0.0, %v9353
      %v9355 = vpop.f32.mrf.mxu0
      %v9356 = vadd.f32 0.0, %v9355
      %9357 = vmatmul.bf16.gmra.mxu0 %v8868
      %v9358 = vpop.f32.mrf.mxu0
      %v9359 = vadd.f32 0.0, %v9358
      %v9360 = vpop.f32.mrf.mxu0
      %v9361 = vadd.f32 0.0, %v9360
      %9362 = vmatmul.bf16.gmra.mxu0 %v8870
      %v9363 = vpop.f32.mrf.mxu0
      %v9364 = vadd.f32 0.0, %v9363
      %v9365 = vpop.f32.mrf.mxu0
      %v9366 = vadd.f32 0.0, %v9365
      %9367 = vmatmul.bf16.gmra.mxu0 %v8872
      %v9368 = vpop.f32.mrf.mxu0
      %v9369 = vadd.f32 0.0, %v9368
      %v9370 = vpop.f32.mrf.mxu0
      %v9371 = vadd.f32 0.0, %v9370
      %9372 = vmatmul.bf16.gmra.mxu0 %v8874
      %v9373 = vpop.f32.mrf.mxu0
      %v9374 = vadd.f32 0.0, %v9373
      %v9375 = vpop.f32.mrf.mxu0
      %v9376 = vadd.f32 0.0, %v9375
      %9377 = vmatmul.bf16.gmra.mxu0 %v8876
      %v9378 = vpop.f32.mrf.mxu0
      %v9379 = vadd.f32 0.0, %v9378
      %v9380 = vpop.f32.mrf.mxu0
      %v9381 = vadd.f32 0.0, %v9380
      %9382 = vmatmul.bf16.gmra.mxu0 %v8878
      %v9383 = vpop.f32.mrf.mxu0
      %v9384 = vadd.f32 0.0, %v9383
      %v9385 = vpop.f32.mrf.mxu0
      %v9386 = vadd.f32 0.0, %v9385
      %9387 = vmatmul.bf16.gmra.mxu0 %v8880
      %v9388 = vpop.f32.mrf.mxu0
      %v9389 = vadd.f32 0.0, %v9388
      %v9390 = vpop.f32.mrf.mxu0
      %v9391 = vadd.f32 0.0, %v9390
      %9392 = vmatmul.bf16.gmra.mxu0 %v8882
      %v9393 = vpop.f32.mrf.mxu0
      %v9394 = vadd.f32 0.0, %v9393
      %v9395 = vpop.f32.mrf.mxu0
      %v9396 = vadd.f32 0.0, %v9395
      %9397 = vmatmul.bf16.gmra.mxu0 %v8884
      %v9398 = vpop.f32.mrf.mxu0
      %v9399 = vadd.f32 0.0, %v9398
      %v9400 = vpop.f32.mrf.mxu0
      %v9401 = vadd.f32 0.0, %v9400
      %9402 = vmatmul.bf16.gmra.mxu0 %v8886
      %v9403 = vpop.f32.mrf.mxu0
      %v9404 = vadd.f32 0.0, %v9403
      %v9405 = vpop.f32.mrf.mxu0
      %v9406 = vadd.f32 0.0, %v9405
      %9407 = vmatmul.bf16.gmra.mxu0 %v8888
      %v9408 = vpop.f32.mrf.mxu0
      %v9409 = vadd.f32 0.0, %v9408
      %v9410 = vpop.f32.mrf.mxu0
      %v9411 = vadd.f32 0.0, %v9410
      %9412 = vmatmul.bf16.gmra.mxu0 %v8890
      %v9413 = vpop.f32.mrf.mxu0
      %v9414 = vadd.f32 0.0, %v9413
      %v9415 = vpop.f32.mrf.mxu0
      %v9416 = vadd.f32 0.0, %v9415
      %9417 = vmatmul.bf16.gmra.mxu0 %v8892
      %v9418 = vpop.f32.mrf.mxu0
      %v9419 = vadd.f32 0.0, %v9418
      %v9420 = vpop.f32.mrf.mxu0
      %v9421 = vadd.f32 0.0, %v9420
      %9422 = vmatmul.bf16.gmra.mxu0 %v8894
      %v9423 = vpop.f32.mrf.mxu0
      %v9424 = vadd.f32 0.0, %v9423
      %v9425 = vpop.f32.mrf.mxu0
      %v9426 = vadd.f32 0.0, %v9425
      %9427 = vmatmul.bf16.gmra.mxu0 %v8896
      %v9428 = vpop.f32.mrf.mxu0
      %v9429 = vadd.f32 0.0, %v9428
      %v9430 = vpop.f32.mrf.mxu0
      %v9431 = vadd.f32 0.0, %v9430
      %9432 = vmatmul.bf16.gmra.mxu0 %v8898
      %v9433 = vpop.f32.mrf.mxu0
      %v9434 = vadd.f32 0.0, %v9433
      %v9435 = vpop.f32.mrf.mxu0
      %v9436 = vadd.f32 0.0, %v9435
      %9437 = vmatmul.bf16.gmra.mxu0 %v8900
      %v9438 = vpop.f32.mrf.mxu0
      %v9439 = vadd.f32 0.0, %v9438
      %v9440 = vpop.f32.mrf.mxu0
      %v9441 = vadd.f32 0.0, %v9440
      %9442 = vmatmul.bf16.gmra.mxu0 %v8902
      %v9443 = vpop.f32.mrf.mxu0
      %v9444 = vadd.f32 0.0, %v9443
      %v9445 = vpop.f32.mrf.mxu0
      %v9446 = vadd.f32 0.0, %v9445
      %9447 = vmatmul.bf16.gmra.mxu0 %v8904
      %v9448 = vpop.f32.mrf.mxu0
      %v9449 = vadd.f32 0.0, %v9448
      %v9450 = vpop.f32.mrf.mxu0
      %v9451 = vadd.f32 0.0, %v9450
      %9452 = vmatmul.bf16.gmra.mxu0 %v8906
      %v9453 = vpop.f32.mrf.mxu0
      %v9454 = vadd.f32 0.0, %v9453
      %v9455 = vpop.f32.mrf.mxu0
      %v9456 = vadd.f32 0.0, %v9455
      %9457 = vmatmul.bf16.gmra.mxu0 %v8908
      %v9458 = vpop.f32.mrf.mxu0
      %v9459 = vadd.f32 0.0, %v9458
      %v9460 = vpop.f32.mrf.mxu0
      %v9461 = vadd.f32 0.0, %v9460
      %9462 = vmatmul.bf16.gmra.mxu0 %v8910
      %v9463 = vpop.f32.mrf.mxu0
      %v9464 = vadd.f32 0.0, %v9463
      %v9465 = vpop.f32.mrf.mxu0
      %v9466 = vadd.f32 0.0, %v9465
      %9467 = vmatmul.bf16.gmra.mxu0 %v8912
      %v9468 = vpop.f32.mrf.mxu0
      %v9469 = vadd.f32 0.0, %v9468
      %v9470 = vpop.f32.mrf.mxu0
      %v9471 = vadd.f32 0.0, %v9470
      %9472 = vmatmul.bf16.gmra.mxu0 %v8914
      %v9473 = vpop.f32.mrf.mxu0
      %v9474 = vadd.f32 0.0, %v9473
      %v9475 = vpop.f32.mrf.mxu0
      %v9476 = vadd.f32 0.0, %v9475
      %9477 = vmatmul.bf16.gmra.mxu0 %v8916
      %v9478 = vpop.f32.mrf.mxu0
      %v9479 = vadd.f32 0.0, %v9478
      %v9480 = vpop.f32.mrf.mxu0
      %v9481 = vadd.f32 0.0, %v9480
      %9482 = vmatmul.bf16.gmra.mxu0 %v8918
      %v9483 = vpop.f32.mrf.mxu0
      %v9484 = vadd.f32 0.0, %v9483
      %v9485 = vpop.f32.mrf.mxu0
      %v9486 = vadd.f32 0.0, %v9485
      %9487 = vmatmul.bf16.gmra.mxu0 %v8920
      %v9488 = vpop.f32.mrf.mxu0
      %v9489 = vadd.f32 0.0, %v9488
      %v9490 = vpop.f32.mrf.mxu0
      %v9491 = vadd.f32 0.0, %v9490
      %9492 = vdwg.mxu0
      %9493 = vmatpush.bf16.msra.mxu0 0
      %9494 = vmatpush.bf16.msra.mxu0 0
      %9495 = vmatpush.bf16.msra.mxu0 %v9020
      %9496 = vmatpush.bf16.msra.mxu0 %v9019
      %9497 = vmatpush.bf16.msra.mxu0 %v9018
      %9498 = vmatpush.bf16.msra.mxu0 %v9017
      %9499 = vmatpush.bf16.msra.mxu0 %v9016
      %9500 = vmatpush.bf16.msra.mxu0 %v9015
      %9501 = vmatmul.bf16.gmra.mxu0 %v9037
      %v9502 = vpop.f32.mrf.mxu0
      %v9503 = vadd.f32 %v9214, %v9502
      %v9504 = vpop.f32.mrf.mxu0
      %v9505 = vadd.f32 %v9216, %v9504
      %9506 = vmatmul.bf16.gmra.mxu0 %v9040
      %v9507 = vpop.f32.mrf.mxu0
      %v9508 = vadd.f32 %v9219, %v9507
      %v9509 = vpop.f32.mrf.mxu0
      %v9510 = vadd.f32 %v9221, %v9509
      %9511 = vmatmul.bf16.gmra.mxu0 %v9043
      %v9512 = vpop.f32.mrf.mxu0
      %v9513 = vadd.f32 %v9224, %v9512
      %v9514 = vpop.f32.mrf.mxu0
      %v9515 = vadd.f32 %v9226, %v9514
      %9516 = vmatmul.bf16.gmra.mxu0 %v9046
      %v9517 = vpop.f32.mrf.mxu0
      %v9518 = vadd.f32 %v9229, %v9517
      %v9519 = vpop.f32.mrf.mxu0
      %v9520 = vadd.f32 %v9231, %v9519
      %9521 = vmatmul.bf16.gmra.mxu0 %v9049
      %v9522 = vpop.f32.mrf.mxu0
      %v9523 = vadd.f32 %v9234, %v9522
      %v9524 = vpop.f32.mrf.mxu0
      %v9525 = vadd.f32 %v9236, %v9524
      %9526 = vmatmul.bf16.gmra.mxu0 %v9052
      %v9527 = vpop.f32.mrf.mxu0
      %v9528 = vadd.f32 %v9239, %v9527
      %v9529 = vpop.f32.mrf.mxu0
      %v9530 = vadd.f32 %v9241, %v9529
      %9531 = vmatmul.bf16.gmra.mxu0 %v9055
      %v9532 = vpop.f32.mrf.mxu0
      %v9533 = vadd.f32 %v9244, %v9532
      %v9534 = vpop.f32.mrf.mxu0
      %v9535 = vadd.f32 %v9246, %v9534
      %9536 = vmatmul.bf16.gmra.mxu0 %v9058
      %v9537 = vpop.f32.mrf.mxu0
      %v9538 = vadd.f32 %v9249, %v9537
      %v9539 = vpop.f32.mrf.mxu0
      %v9540 = vadd.f32 %v9251, %v9539
      %9541 = vmatmul.bf16.gmra.mxu0 %v9061
      %v9542 = vpop.f32.mrf.mxu0
      %v9543 = vadd.f32 %v9254, %v9542
      %v9544 = vpop.f32.mrf.mxu0
      %v9545 = vadd.f32 %v9256, %v9544
      %9546 = vmatmul.bf16.gmra.mxu0 %v9064
      %v9547 = vpop.f32.mrf.mxu0
      %v9548 = vadd.f32 %v9259, %v9547
      %v9549 = vpop.f32.mrf.mxu0
      %v9550 = vadd.f32 %v9261, %v9549
      %9551 = vmatmul.bf16.gmra.mxu0 %v9067
      %v9552 = vpop.f32.mrf.mxu0
      %v9553 = vadd.f32 %v9264, %v9552
      %v9554 = vpop.f32.mrf.mxu0
      %v9555 = vadd.f32 %v9266, %v9554
      %9556 = vmatmul.bf16.gmra.mxu0 %v9070
      %v9557 = vpop.f32.mrf.mxu0
      %v9558 = vadd.f32 %v9269, %v9557
      %v9559 = vpop.f32.mrf.mxu0
      %v9560 = vadd.f32 %v9271, %v9559
      %9561 = vmatmul.bf16.gmra.mxu0 %v9073
      %v9562 = vpop.f32.mrf.mxu0
      %v9563 = vadd.f32 %v9274, %v9562
      %v9564 = vpop.f32.mrf.mxu0
      %v9565 = vadd.f32 %v9276, %v9564
      %9566 = vmatmul.bf16.gmra.mxu0 %v9076
      %v9567 = vpop.f32.mrf.mxu0
      %v9568 = vadd.f32 %v9279, %v9567
      %v9569 = vpop.f32.mrf.mxu0
      %v9570 = vadd.f32 %v9281, %v9569
      %9571 = vmatmul.bf16.gmra.mxu0 %v9079
      %v9572 = vpop.f32.mrf.mxu0
      %v9573 = vadd.f32 %v9284, %v9572
      %v9574 = vpop.f32.mrf.mxu0
      %v9575 = vadd.f32 %v9286, %v9574
      %9576 = vmatmul.bf16.gmra.mxu0 %v9082
      %v9577 = vpop.f32.mrf.mxu0
      %v9578 = vadd.f32 %v9289, %v9577
      %v9579 = vpop.f32.mrf.mxu0
      %v9580 = vadd.f32 %v9291, %v9579
      %9581 = vmatmul.bf16.gmra.mxu0 %v9085
      %v9582 = vpop.f32.mrf.mxu0
      %v9583 = vadd.f32 %v9294, %v9582
      %v9584 = vpop.f32.mrf.mxu0
      %v9585 = vadd.f32 %v9296, %v9584
      %9586 = vmatmul.bf16.gmra.mxu0 %v9088
      %v9587 = vpop.f32.mrf.mxu0
      %v9588 = vadd.f32 %v9299, %v9587
      %v9589 = vpop.f32.mrf.mxu0
      %v9590 = vadd.f32 %v9301, %v9589
      %9591 = vmatmul.bf16.gmra.mxu0 %v9091
      %v9592 = vpop.f32.mrf.mxu0
      %v9593 = vadd.f32 %v9304, %v9592
      %v9594 = vpop.f32.mrf.mxu0
      %v9595 = vadd.f32 %v9306, %v9594
      %9596 = vmatmul.bf16.gmra.mxu0 %v9094
      %v9597 = vpop.f32.mrf.mxu0
      %v9598 = vadd.f32 %v9309, %v9597
      %v9599 = vpop.f32.mrf.mxu0
      %v9600 = vadd.f32 %v9311, %v9599
      %9601 = vmatmul.bf16.gmra.mxu0 %v9097
      %v9602 = vpop.f32.mrf.mxu0
      %v9603 = vadd.f32 %v9314, %v9602
      %v9604 = vpop.f32.mrf.mxu0
      %v9605 = vadd.f32 %v9316, %v9604
      %9606 = vmatmul.bf16.gmra.mxu0 %v9100
      %v9607 = vpop.f32.mrf.mxu0
      %v9608 = vadd.f32 %v9319, %v9607
      %v9609 = vpop.f32.mrf.mxu0
      %v9610 = vadd.f32 %v9321, %v9609
      %9611 = vmatmul.bf16.gmra.mxu0 %v9103
      %v9612 = vpop.f32.mrf.mxu0
      %v9613 = vadd.f32 %v9324, %v9612
      %v9614 = vpop.f32.mrf.mxu0
      %v9615 = vadd.f32 %v9326, %v9614
      %9616 = vmatmul.bf16.gmra.mxu0 %v9106
      %v9617 = vpop.f32.mrf.mxu0
      %v9618 = vadd.f32 %v9329, %v9617
      %v9619 = vpop.f32.mrf.mxu0
      %v9620 = vadd.f32 %v9331, %v9619
      %9621 = vmatmul.bf16.gmra.mxu0 %v9109
      %v9622 = vpop.f32.mrf.mxu0
      %v9623 = vadd.f32 %v9334, %v9622
      %v9624 = vpop.f32.mrf.mxu0
      %v9625 = vadd.f32 %v9336, %v9624
      %9626 = vmatmul.bf16.gmra.mxu0 %v9112
      %v9627 = vpop.f32.mrf.mxu0
      %v9628 = vadd.f32 %v9339, %v9627
      %v9629 = vpop.f32.mrf.mxu0
      %v9630 = vadd.f32 %v9341, %v9629
      %9631 = vmatmul.bf16.gmra.mxu0 %v9115
      %v9632 = vpop.f32.mrf.mxu0
      %v9633 = vadd.f32 %v9344, %v9632
      %v9634 = vpop.f32.mrf.mxu0
      %v9635 = vadd.f32 %v9346, %v9634
      %9636 = vmatmul.bf16.gmra.mxu0 %v9118
      %v9637 = vpop.f32.mrf.mxu0
      %v9638 = vadd.f32 %v9349, %v9637
      %v9639 = vpop.f32.mrf.mxu0
      %v9640 = vadd.f32 %v9351, %v9639
      %9641 = vmatmul.bf16.gmra.mxu0 %v9121
      %v9642 = vpop.f32.mrf.mxu0
      %v9643 = vadd.f32 %v9354, %v9642
      %v9644 = vpop.f32.mrf.mxu0
      %v9645 = vadd.f32 %v9356, %v9644
      %9646 = vmatmul.bf16.gmra.mxu0 %v9124
      %v9647 = vpop.f32.mrf.mxu0
      %v9648 = vadd.f32 %v9359, %v9647
      %v9649 = vpop.f32.mrf.mxu0
      %v9650 = vadd.f32 %v9361, %v9649
      %9651 = vmatmul.bf16.gmra.mxu0 %v9127
      %v9652 = vpop.f32.mrf.mxu0
      %v9653 = vadd.f32 %v9364, %v9652
      %v9654 = vpop.f32.mrf.mxu0
      %v9655 = vadd.f32 %v9366, %v9654
      %9656 = vmatmul.bf16.gmra.mxu0 %v9130
      %v9657 = vpop.f32.mrf.mxu0
      %v9658 = vadd.f32 %v9369, %v9657
      %v9659 = vpop.f32.mrf.mxu0
      %v9660 = vadd.f32 %v9371, %v9659
      %9661 = vmatmul.bf16.gmra.mxu0 %v9133
      %v9662 = vpop.f32.mrf.mxu0
      %v9663 = vadd.f32 %v9374, %v9662
      %v9664 = vpop.f32.mrf.mxu0
      %v9665 = vadd.f32 %v9376, %v9664
      %9666 = vmatmul.bf16.gmra.mxu0 %v9136
      %v9667 = vpop.f32.mrf.mxu0
      %v9668 = vadd.f32 %v9379, %v9667
      %v9669 = vpop.f32.mrf.mxu0
      %v9670 = vadd.f32 %v9381, %v9669
      %9671 = vmatmul.bf16.gmra.mxu0 %v9139
      %v9672 = vpop.f32.mrf.mxu0
      %v9673 = vadd.f32 %v9384, %v9672
      %v9674 = vpop.f32.mrf.mxu0
      %v9675 = vadd.f32 %v9386, %v9674
      %9676 = vmatmul.bf16.gmra.mxu0 %v9142
      %v9677 = vpop.f32.mrf.mxu0
      %v9678 = vadd.f32 %v9389, %v9677
      %v9679 = vpop.f32.mrf.mxu0
      %v9680 = vadd.f32 %v9391, %v9679
      %9681 = vmatmul.bf16.gmra.mxu0 %v9145
      %v9682 = vpop.f32.mrf.mxu0
      %v9683 = vadd.f32 %v9394, %v9682
      %v9684 = vpop.f32.mrf.mxu0
      %v9685 = vadd.f32 %v9396, %v9684
      %9686 = vmatmul.bf16.gmra.mxu0 %v9148
      %v9687 = vpop.f32.mrf.mxu0
      %v9688 = vadd.f32 %v9399, %v9687
      %v9689 = vpop.f32.mrf.mxu0
      %v9690 = vadd.f32 %v9401, %v9689
      %9691 = vmatmul.bf16.gmra.mxu0 %v9151
      %v9692 = vpop.f32.mrf.mxu0
      %v9693 = vadd.f32 %v9404, %v9692
      %v9694 = vpop.f32.mrf.mxu0
      %v9695 = vadd.f32 %v9406, %v9694
      %9696 = vmatmul.bf16.gmra.mxu0 %v9154
      %v9697 = vpop.f32.mrf.mxu0
      %v9698 = vadd.f32 %v9409, %v9697
      %v9699 = vpop.f32.mrf.mxu0
      %v9700 = vadd.f32 %v9411, %v9699
      %9701 = vmatmul.bf16.gmra.mxu0 %v9157
      %v9702 = vpop.f32.mrf.mxu0
      %v9703 = vadd.f32 %v9414, %v9702
      %v9704 = vpop.f32.mrf.mxu0
      %v9705 = vadd.f32 %v9416, %v9704
      %9706 = vmatmul.bf16.gmra.mxu0 %v9160
      %v9707 = vpop.f32.mrf.mxu0
      %v9708 = vadd.f32 %v9419, %v9707
      %v9709 = vpop.f32.mrf.mxu0
      %v9710 = vadd.f32 %v9421, %v9709
      %9711 = vmatmul.bf16.gmra.mxu0 %v9163
      %v9712 = vpop.f32.mrf.mxu0
      %v9713 = vadd.f32 %v9424, %v9712
      %v9714 = vpop.f32.mrf.mxu0
      %v9715 = vadd.f32 %v9426, %v9714
      %9716 = vmatmul.bf16.gmra.mxu0 %v9166
      %v9717 = vpop.f32.mrf.mxu0
      %v9718 = vadd.f32 %v9429, %v9717
      %v9719 = vpop.f32.mrf.mxu0
      %v9720 = vadd.f32 %v9431, %v9719
      %9721 = vmatmul.bf16.gmra.mxu0 %v9169
      %v9722 = vpop.f32.mrf.mxu0
      %v9723 = vadd.f32 %v9434, %v9722
      %v9724 = vpop.f32.mrf.mxu0
      %v9725 = vadd.f32 %v9436, %v9724
      %9726 = vmatmul.bf16.gmra.mxu0 %v9172
      %v9727 = vpop.f32.mrf.mxu0
      %v9728 = vadd.f32 %v9439, %v9727
      %v9729 = vpop.f32.mrf.mxu0
      %v9730 = vadd.f32 %v9441, %v9729
      %9731 = vmatmul.bf16.gmra.mxu0 %v9175
      %v9732 = vpop.f32.mrf.mxu0
      %v9733 = vadd.f32 %v9444, %v9732
      %v9734 = vpop.f32.mrf.mxu0
      %v9735 = vadd.f32 %v9446, %v9734
      %9736 = vmatmul.bf16.gmra.mxu0 %v9178
      %v9737 = vpop.f32.mrf.mxu0
      %v9738 = vadd.f32 %v9449, %v9737
      %v9739 = vpop.f32.mrf.mxu0
      %v9740 = vadd.f32 %v9451, %v9739
      %9741 = vmatmul.bf16.gmra.mxu0 %v9181
      %v9742 = vpop.f32.mrf.mxu0
      %v9743 = vadd.f32 %v9454, %v9742
      %v9744 = vpop.f32.mrf.mxu0
      %v9745 = vadd.f32 %v9456, %v9744
      %9746 = vmatmul.bf16.gmra.mxu0 %v9184
      %v9747 = vpop.f32.mrf.mxu0
      %v9748 = vadd.f32 %v9459, %v9747
      %v9749 = vpop.f32.mrf.mxu0
      %v9750 = vadd.f32 %v9461, %v9749
      %9751 = vmatmul.bf16.gmra.mxu0 %v9187
      %v9752 = vpop.f32.mrf.mxu0
      %v9753 = vadd.f32 %v9464, %v9752
      %v9754 = vpop.f32.mrf.mxu0
      %v9755 = vadd.f32 %v9466, %v9754
      %9756 = vmatmul.bf16.gmra.mxu0 %v9190
      %v9757 = vpop.f32.mrf.mxu0
      %v9758 = vadd.f32 %v9469, %v9757
      %v9759 = vpop.f32.mrf.mxu0
      %v9760 = vadd.f32 %v9471, %v9759
      %9761 = vmatmul.bf16.gmra.mxu0 %v9193
      %v9762 = vpop.f32.mrf.mxu0
      %v9763 = vadd.f32 %v9474, %v9762
      %v9764 = vpop.f32.mrf.mxu0
      %v9765 = vadd.f32 %v9476, %v9764
      %9766 = vmatmul.bf16.gmra.mxu0 %v9196
      %v9767 = vpop.f32.mrf.mxu0
      %v9768 = vadd.f32 %v9479, %v9767
      %v9769 = vpop.f32.mrf.mxu0
      %v9770 = vadd.f32 %v9481, %v9769
      %9771 = vmatmul.bf16.gmra.mxu0 %v9199
      %v9772 = vpop.f32.mrf.mxu0
      %v9773 = vadd.f32 %v9484, %v9772
      %v9774 = vpop.f32.mrf.mxu0
      %v9775 = vadd.f32 %v9486, %v9774
      %9776 = vmatmul.bf16.gmra.mxu0 %v9202
      %v9777 = vpop.f32.mrf.mxu0
      %v9778 = vadd.f32 %v9489, %v9777
      %v9779 = vpop.f32.mrf.mxu0
      %v9780 = vadd.f32 %v9491, %v9779
      %9781 = vdwg.mxu0
      %v9810 = vunpack.c.l.b16 %v8782
      %v9811 = vunpack.c.l.b16 %v8783
      %v9812 = vunpack.c.l.b16 %v8784
      %v9813 = vunpack.c.l.b16 %v8785
      %v9814 = vunpack.c.l.b16 %v8786
      %v9815 = vunpack.c.l.b16 %v8787
      %v9816 = vunpack.c.l.b16 %v8788
      %v9817 = vunpack.c.l.b16 %v8789
      %v9818 = vunpack.c.l.b16 %v8790
      %v9819 = vunpack.c.l.b16 %v8791
      %v9820 = vunpack.c.l.b16 %v8792
      %v9821 = vunpack.c.l.b16 %v8793
      %v9822 = vunpack.c.l.b16 %v8794
      %v9823 = vunpack.c.l.b16 %v8795
      %v9824 = vunpack.c.l.b16 %v8796
      %v9825 = vunpack.c.l.b16 %v8797
      %v9826 = vunpack.c.l.b16 %v8798
      %v9827 = vunpack.c.l.b16 %v8799
      %v9828 = vunpack.c.l.b16 %v8800
      %v9829 = vunpack.c.l.b16 %v8801
      %v9830 = vunpack.c.l.b16 %v8802
      %v9831 = vunpack.c.l.b16 %v8803
      %v9832 = vunpack.c.l.b16 %v8804
      %v9833 = vunpack.c.l.b16 %v8805
      %v9834 = vunpack.c.l.b16 %v8806
      %v9835 = vunpack.c.l.b16 %v8807
      %v9836 = vunpack.c.l.b16 %v8808
      %v9837 = vunpack.c.l.b16 %v8809
      %v9838 = vpack.c.b16 %v9811, %v9810
      %v9839 = vpack.c.b16 %v9813, %v9812
      %v9840 = vpack.c.b16 %v9815, %v9814
      %v9841 = vpack.c.b16 %v9817, %v9816
      %v9842 = vpack.c.b16 %v9819, %v9818
      %v9843 = vpack.c.b16 %v9821, %v9820
      %v9844 = vpack.c.b16 %v9823, %v9822
      %v9845 = vpack.c.b16 %v9825, %v9824
      %v9846 = vpack.c.b16 %v9827, %v9826
      %v9847 = vpack.c.b16 %v9829, %v9828
      %v9848 = vpack.c.b16 %v9831, %v9830
      %v9849 = vpack.c.b16 %v9833, %v9832
      %v9850 = vpack.c.b16 %v9835, %v9834
      %v9851 = vpack.c.b16 %v9837, %v9836
      %v9866 = vsel %vm9035, %v1216, 0
      %v9869 = vsel %vm9035, %v8687, 0
      %v9872 = vsel %vm9035, %v8689, 0
      %v9875 = vsel %vm9035, %v8691, 0
      %v9878 = vsel %vm9035, %v8693, 0
      %v9881 = vsel %vm9035, %v8695, 0
      %v9884 = vsel %vm9035, %v8697, 0
      %v9887 = vsel %vm9035, %v8699, 0
      %v9890 = vsel %vm9035, %v8701, 0
      %v9893 = vsel %vm9035, %v8703, 0
      %v9896 = vsel %vm9035, %v8705, 0
      %v9899 = vsel %vm9035, %v8707, 0
      %v9902 = vsel %vm9035, %v8709, 0
      %v9905 = vsel %vm9035, %v8711, 0
      %v9908 = vsel %vm9035, %v8713, 0
      %v9911 = vsel %vm9035, %v8715, 0
      %v9914 = vsel %vm9035, %v8717, 0
      %v9917 = vsel %vm9035, %v8719, 0
      %v9920 = vsel %vm9035, %v8721, 0
      %v9923 = vsel %vm9035, %v8723, 0
      %v9926 = vsel %vm9035, %v8725, 0
      %v9929 = vsel %vm9035, %v8727, 0
      %v9932 = vsel %vm9035, %v8729, 0
      %v9935 = vsel %vm9035, %v8731, 0
      %v9938 = vsel %vm9035, %v8733, 0
      %v9941 = vsel %vm9035, %v8735, 0
      %v9944 = vsel %vm9035, %v8737, 0
      %v9947 = vsel %vm9035, %v8739, 0
      %v9950 = vsel %vm9035, %v8741, 0
      %v9953 = vsel %vm9035, %v8743, 0
      %v9956 = vsel %vm9035, %v8745, 0
      %v9959 = vsel %vm9035, %v8747, 0
      %v9962 = vsel %vm9035, %v8749, 0
      %v9965 = vsel %vm9035, %v8751, 0
      %v9968 = vsel %vm9035, %v8753, 0
      %v9971 = vsel %vm9035, %v8755, 0
      %v9974 = vsel %vm9035, %v8757, 0
      %v9977 = vsel %vm9035, %v8759, 0
      %v9980 = vsel %vm9035, %v8761, 0
      %v9983 = vsel %vm9035, %v8763, 0
      %v9986 = vsel %vm9035, %v8765, 0
      %v9989 = vsel %vm9035, %v8767, 0
      %v9992 = vsel %vm9035, %v8769, 0
      %v9995 = vsel %vm9035, %v8771, 0
      %v9998 = vsel %vm9035, %v8773, 0
      %v10001 = vsel %vm9035, %v8775, 0
      %v10004 = vsel %vm9035, %v8777, 0
      %v10007 = vsel %vm9035, %v8779, 0
      %v10010 = vsel %vm9035, %v8781, 0
      %10012 = vmatpush.bf16.msra.mxu0 %v9845
      %10013 = vmatpush.bf16.msra.mxu0 %v9844
      %10014 = vmatpush.bf16.msra.mxu0 %v9843
      %10015 = vmatpush.bf16.msra.mxu0 %v9842
      %10016 = vmatpush.bf16.msra.mxu0 %v9841
      %10017 = vmatpush.bf16.msra.mxu0 %v9840
      %10018 = vmatpush.bf16.msra.mxu0 %v9839
      %10019 = vmatpush.bf16.msra.mxu0 %v9838
      %10020 = vmatmul.bf16.gmra.mxu0 %v1216
      %v10021 = vpop.f32.mrf.mxu0
      %v10022 = vadd.f32 %v9503, %v10021
      %v10023 = vpop.f32.mrf.mxu0
      %v10024 = vadd.f32 %v9505, %v10023
      %10025 = vmatmul.bf16.gmra.mxu0 %v1216
      %v10026 = vpop.f32.mrf.mxu0
      %v10027 = vadd.f32 %v9508, %v10026
      %v10028 = vpop.f32.mrf.mxu0
      %v10029 = vadd.f32 %v9510, %v10028
      %10030 = vmatmul.bf16.gmra.mxu0 %v1216
      %v10031 = vpop.f32.mrf.mxu0
      %v10032 = vadd.f32 %v9513, %v10031
      %v10033 = vpop.f32.mrf.mxu0
      %v10034 = vadd.f32 %v9515, %v10033
      %10035 = vmatmul.bf16.gmra.mxu0 %v1216
      %v10036 = vpop.f32.mrf.mxu0
      %v10037 = vadd.f32 %v9518, %v10036
      %v10038 = vpop.f32.mrf.mxu0
      %v10039 = vadd.f32 %v9520, %v10038
      %10040 = vmatmul.bf16.gmra.mxu0 %v1216
      %v10041 = vpop.f32.mrf.mxu0
      %v10042 = vadd.f32 %v9523, %v10041
      %v10043 = vpop.f32.mrf.mxu0
      %v10044 = vadd.f32 %v9525, %v10043
      %10045 = vmatmul.bf16.gmra.mxu0 %v1216
      %v10046 = vpop.f32.mrf.mxu0
      %v10047 = vadd.f32 %v9528, %v10046
      %v10048 = vpop.f32.mrf.mxu0
      %v10049 = vadd.f32 %v9530, %v10048
      %10050 = vmatmul.bf16.gmra.mxu0 %v1216
      %v10051 = vpop.f32.mrf.mxu0
      %v10052 = vadd.f32 %v9533, %v10051
      %v10053 = vpop.f32.mrf.mxu0
      %v10054 = vadd.f32 %v9535, %v10053
      %10055 = vmatmul.bf16.gmra.mxu0 %v1216
      %v10056 = vpop.f32.mrf.mxu0
      %v10057 = vadd.f32 %v9538, %v10056
      %v10058 = vpop.f32.mrf.mxu0
      %v10059 = vadd.f32 %v9540, %v10058
      %10060 = vmatmul.bf16.gmra.mxu0 %v8686
      %v10061 = vpop.f32.mrf.mxu0
      %v10062 = vadd.f32 %v9543, %v10061
      %v10063 = vpop.f32.mrf.mxu0
      %v10064 = vadd.f32 %v9545, %v10063
      %10065 = vmatmul.bf16.gmra.mxu0 %v8688
      %v10066 = vpop.f32.mrf.mxu0
      %v10067 = vadd.f32 %v9548, %v10066
      %v10068 = vpop.f32.mrf.mxu0
      %v10069 = vadd.f32 %v9550, %v10068
      %10070 = vmatmul.bf16.gmra.mxu0 %v8690
      %v10071 = vpop.f32.mrf.mxu0
      %v10072 = vadd.f32 %v9553, %v10071
      %v10073 = vpop.f32.mrf.mxu0
      %v10074 = vadd.f32 %v9555, %v10073
      %10075 = vmatmul.bf16.gmra.mxu0 %v8692
      %v10076 = vpop.f32.mrf.mxu0
      %v10077 = vadd.f32 %v9558, %v10076
      %v10078 = vpop.f32.mrf.mxu0
      %v10079 = vadd.f32 %v9560, %v10078
      %10080 = vmatmul.bf16.gmra.mxu0 %v8694
      %v10081 = vpop.f32.mrf.mxu0
      %v10082 = vadd.f32 %v9563, %v10081
      %v10083 = vpop.f32.mrf.mxu0
      %v10084 = vadd.f32 %v9565, %v10083
      %10085 = vmatmul.bf16.gmra.mxu0 %v8696
      %v10086 = vpop.f32.mrf.mxu0
      %v10087 = vadd.f32 %v9568, %v10086
      %v10088 = vpop.f32.mrf.mxu0
      %v10089 = vadd.f32 %v9570, %v10088
      %10090 = vmatmul.bf16.gmra.mxu0 %v8698
      %v10091 = vpop.f32.mrf.mxu0
      %v10092 = vadd.f32 %v9573, %v10091
      %v10093 = vpop.f32.mrf.mxu0
      %v10094 = vadd.f32 %v9575, %v10093
      %10095 = vmatmul.bf16.gmra.mxu0 %v8700
      %v10096 = vpop.f32.mrf.mxu0
      %v10097 = vadd.f32 %v9578, %v10096
      %v10098 = vpop.f32.mrf.mxu0
      %v10099 = vadd.f32 %v9580, %v10098
      %10100 = vmatmul.bf16.gmra.mxu0 %v8702
      %v10101 = vpop.f32.mrf.mxu0
      %v10102 = vadd.f32 %v9583, %v10101
      %v10103 = vpop.f32.mrf.mxu0
      %v10104 = vadd.f32 %v9585, %v10103
      %10105 = vmatmul.bf16.gmra.mxu0 %v8704
      %v10106 = vpop.f32.mrf.mxu0
      %v10107 = vadd.f32 %v9588, %v10106
      %v10108 = vpop.f32.mrf.mxu0
      %v10109 = vadd.f32 %v9590, %v10108
      %10110 = vmatmul.bf16.gmra.mxu0 %v8706
      %v10111 = vpop.f32.mrf.mxu0
      %v10112 = vadd.f32 %v9593, %v10111
      %v10113 = vpop.f32.mrf.mxu0
      %v10114 = vadd.f32 %v9595, %v10113
      %10115 = vmatmul.bf16.gmra.mxu0 %v8708
      %v10116 = vpop.f32.mrf.mxu0
      %v10117 = vadd.f32 %v9598, %v10116
      %v10118 = vpop.f32.mrf.mxu0
      %v10119 = vadd.f32 %v9600, %v10118
      %10120 = vmatmul.bf16.gmra.mxu0 %v8710
      %v10121 = vpop.f32.mrf.mxu0
      %v10122 = vadd.f32 %v9603, %v10121
      %v10123 = vpop.f32.mrf.mxu0
      %v10124 = vadd.f32 %v9605, %v10123
      %10125 = vmatmul.bf16.gmra.mxu0 %v8712
      %v10126 = vpop.f32.mrf.mxu0
      %v10127 = vadd.f32 %v9608, %v10126
      %v10128 = vpop.f32.mrf.mxu0
      %v10129 = vadd.f32 %v9610, %v10128
      %10130 = vmatmul.bf16.gmra.mxu0 %v8714
      %v10131 = vpop.f32.mrf.mxu0
      %v10132 = vadd.f32 %v9613, %v10131
      %v10133 = vpop.f32.mrf.mxu0
      %v10134 = vadd.f32 %v9615, %v10133
      %10135 = vmatmul.bf16.gmra.mxu0 %v8716
      %v10136 = vpop.f32.mrf.mxu0
      %v10137 = vadd.f32 %v9618, %v10136
      %v10138 = vpop.f32.mrf.mxu0
      %v10139 = vadd.f32 %v9620, %v10138
      %10140 = vmatmul.bf16.gmra.mxu0 %v8718
      %v10141 = vpop.f32.mrf.mxu0
      %v10142 = vadd.f32 %v9623, %v10141
      %v10143 = vpop.f32.mrf.mxu0
      %v10144 = vadd.f32 %v9625, %v10143
      %10145 = vmatmul.bf16.gmra.mxu0 %v8720
      %v10146 = vpop.f32.mrf.mxu0
      %v10147 = vadd.f32 %v9628, %v10146
      %v10148 = vpop.f32.mrf.mxu0
      %v10149 = vadd.f32 %v9630, %v10148
      %10150 = vmatmul.bf16.gmra.mxu0 %v8722
      %v10151 = vpop.f32.mrf.mxu0
      %v10152 = vadd.f32 %v9633, %v10151
      %v10153 = vpop.f32.mrf.mxu0
      %v10154 = vadd.f32 %v9635, %v10153
      %10155 = vmatmul.bf16.gmra.mxu0 %v8724
      %v10156 = vpop.f32.mrf.mxu0
      %v10157 = vadd.f32 %v9638, %v10156
      %v10158 = vpop.f32.mrf.mxu0
      %v10159 = vadd.f32 %v9640, %v10158
      %10160 = vmatmul.bf16.gmra.mxu0 %v8726
      %v10161 = vpop.f32.mrf.mxu0
      %v10162 = vadd.f32 %v9643, %v10161
      %v10163 = vpop.f32.mrf.mxu0
      %v10164 = vadd.f32 %v9645, %v10163
      %10165 = vmatmul.bf16.gmra.mxu0 %v8728
      %v10166 = vpop.f32.mrf.mxu0
      %v10167 = vadd.f32 %v9648, %v10166
      %v10168 = vpop.f32.mrf.mxu0
      %v10169 = vadd.f32 %v9650, %v10168
      %10170 = vmatmul.bf16.gmra.mxu0 %v8730
      %v10171 = vpop.f32.mrf.mxu0
      %v10172 = vadd.f32 %v9653, %v10171
      %v10173 = vpop.f32.mrf.mxu0
      %v10174 = vadd.f32 %v9655, %v10173
      %10175 = vmatmul.bf16.gmra.mxu0 %v8732
      %v10176 = vpop.f32.mrf.mxu0
      %v10177 = vadd.f32 %v9658, %v10176
      %v10178 = vpop.f32.mrf.mxu0
      %v10179 = vadd.f32 %v9660, %v10178
      %10180 = vmatmul.bf16.gmra.mxu0 %v8734
      %v10181 = vpop.f32.mrf.mxu0
      %v10182 = vadd.f32 %v9663, %v10181
      %v10183 = vpop.f32.mrf.mxu0
      %v10184 = vadd.f32 %v9665, %v10183
      %10185 = vmatmul.bf16.gmra.mxu0 %v8736
      %v10186 = vpop.f32.mrf.mxu0
      %v10187 = vadd.f32 %v9668, %v10186
      %v10188 = vpop.f32.mrf.mxu0
      %v10189 = vadd.f32 %v9670, %v10188
      %10190 = vmatmul.bf16.gmra.mxu0 %v8738
      %v10191 = vpop.f32.mrf.mxu0
      %v10192 = vadd.f32 %v9673, %v10191
      %v10193 = vpop.f32.mrf.mxu0
      %v10194 = vadd.f32 %v9675, %v10193
      %10195 = vmatmul.bf16.gmra.mxu0 %v8740
      %v10196 = vpop.f32.mrf.mxu0
      %v10197 = vadd.f32 %v9678, %v10196
      %v10198 = vpop.f32.mrf.mxu0
      %v10199 = vadd.f32 %v9680, %v10198
      %10200 = vmatmul.bf16.gmra.mxu0 %v8742
      %v10201 = vpop.f32.mrf.mxu0
      %v10202 = vadd.f32 %v9683, %v10201
      %v10203 = vpop.f32.mrf.mxu0
      %v10204 = vadd.f32 %v9685, %v10203
      %10205 = vmatmul.bf16.gmra.mxu0 %v8744
      %v10206 = vpop.f32.mrf.mxu0
      %v10207 = vadd.f32 %v9688, %v10206
      %v10208 = vpop.f32.mrf.mxu0
      %v10209 = vadd.f32 %v9690, %v10208
      %10210 = vmatmul.bf16.gmra.mxu0 %v8746
      %v10211 = vpop.f32.mrf.mxu0
      %v10212 = vadd.f32 %v9693, %v10211
      %v10213 = vpop.f32.mrf.mxu0
      %v10214 = vadd.f32 %v9695, %v10213
      %10215 = vmatmul.bf16.gmra.mxu0 %v8748
      %v10216 = vpop.f32.mrf.mxu0
      %v10217 = vadd.f32 %v9698, %v10216
      %v10218 = vpop.f32.mrf.mxu0
      %v10219 = vadd.f32 %v9700, %v10218
      %10220 = vmatmul.bf16.gmra.mxu0 %v8750
      %v10221 = vpop.f32.mrf.mxu0
      %v10222 = vadd.f32 %v9703, %v10221
      %v10223 = vpop.f32.mrf.mxu0
      %v10224 = vadd.f32 %v9705, %v10223
      %10225 = vmatmul.bf16.gmra.mxu0 %v8752
      %v10226 = vpop.f32.mrf.mxu0
      %v10227 = vadd.f32 %v9708, %v10226
      %v10228 = vpop.f32.mrf.mxu0
      %v10229 = vadd.f32 %v9710, %v10228
      %10230 = vmatmul.bf16.gmra.mxu0 %v8754
      %v10231 = vpop.f32.mrf.mxu0
      %v10232 = vadd.f32 %v9713, %v10231
      %v10233 = vpop.f32.mrf.mxu0
      %v10234 = vadd.f32 %v9715, %v10233
      %10235 = vmatmul.bf16.gmra.mxu0 %v8756
      %v10236 = vpop.f32.mrf.mxu0
      %v10237 = vadd.f32 %v9718, %v10236
      %v10238 = vpop.f32.mrf.mxu0
      %v10239 = vadd.f32 %v9720, %v10238
      %10240 = vmatmul.bf16.gmra.mxu0 %v8758
      %v10241 = vpop.f32.mrf.mxu0
      %v10242 = vadd.f32 %v9723, %v10241
      %v10243 = vpop.f32.mrf.mxu0
      %v10244 = vadd.f32 %v9725, %v10243
      %10245 = vmatmul.bf16.gmra.mxu0 %v8760
      %v10246 = vpop.f32.mrf.mxu0
      %v10247 = vadd.f32 %v9728, %v10246
      %v10248 = vpop.f32.mrf.mxu0
      %v10249 = vadd.f32 %v9730, %v10248
      %10250 = vmatmul.bf16.gmra.mxu0 %v8762
      %v10251 = vpop.f32.mrf.mxu0
      %v10252 = vadd.f32 %v9733, %v10251
      %v10253 = vpop.f32.mrf.mxu0
      %v10254 = vadd.f32 %v9735, %v10253
      %10255 = vmatmul.bf16.gmra.mxu0 %v8764
      %v10256 = vpop.f32.mrf.mxu0
      %v10257 = vadd.f32 %v9738, %v10256
      %v10258 = vpop.f32.mrf.mxu0
      %v10259 = vadd.f32 %v9740, %v10258
      %10260 = vmatmul.bf16.gmra.mxu0 %v8766
      %v10261 = vpop.f32.mrf.mxu0
      %v10262 = vadd.f32 %v9743, %v10261
      %v10263 = vpop.f32.mrf.mxu0
      %v10264 = vadd.f32 %v9745, %v10263
      %10265 = vmatmul.bf16.gmra.mxu0 %v8768
      %v10266 = vpop.f32.mrf.mxu0
      %v10267 = vadd.f32 %v9748, %v10266
      %v10268 = vpop.f32.mrf.mxu0
      %v10269 = vadd.f32 %v9750, %v10268
      %10270 = vmatmul.bf16.gmra.mxu0 %v8770
      %v10271 = vpop.f32.mrf.mxu0
      %v10272 = vadd.f32 %v9753, %v10271
      %v10273 = vpop.f32.mrf.mxu0
      %v10274 = vadd.f32 %v9755, %v10273
      %10275 = vmatmul.bf16.gmra.mxu0 %v8772
      %v10276 = vpop.f32.mrf.mxu0
      %v10277 = vadd.f32 %v9758, %v10276
      %v10278 = vpop.f32.mrf.mxu0
      %v10279 = vadd.f32 %v9760, %v10278
      %10280 = vmatmul.bf16.gmra.mxu0 %v8774
      %v10281 = vpop.f32.mrf.mxu0
      %v10282 = vadd.f32 %v9763, %v10281
      %v10283 = vpop.f32.mrf.mxu0
      %v10284 = vadd.f32 %v9765, %v10283
      %10285 = vmatmul.bf16.gmra.mxu0 %v8776
      %v10286 = vpop.f32.mrf.mxu0
      %v10287 = vadd.f32 %v9768, %v10286
      %v10288 = vpop.f32.mrf.mxu0
      %v10289 = vadd.f32 %v9770, %v10288
      %10290 = vmatmul.bf16.gmra.mxu0 %v8778
      %v10291 = vpop.f32.mrf.mxu0
      %v10292 = vadd.f32 %v9773, %v10291
      %v10293 = vpop.f32.mrf.mxu0
      %v10294 = vadd.f32 %v9775, %v10293
      %10295 = vmatmul.bf16.gmra.mxu0 %v8780
      %v10296 = vpop.f32.mrf.mxu0
      %v10297 = vadd.f32 %v9778, %v10296
      %v10298 = vpop.f32.mrf.mxu0
      %v10299 = vadd.f32 %v9780, %v10298
      %10300 = vdwg.mxu0
      %10301 = vmatpush.bf16.msra.mxu0 0
      %10302 = vmatpush.bf16.msra.mxu0 0
      %10303 = vmatpush.bf16.msra.mxu0 %v9851
      %10304 = vmatpush.bf16.msra.mxu0 %v9850
      %10305 = vmatpush.bf16.msra.mxu0 %v9849
      %10306 = vmatpush.bf16.msra.mxu0 %v9848
      %10307 = vmatpush.bf16.msra.mxu0 %v9847
      %10308 = vmatpush.bf16.msra.mxu0 %v9846
      %10309 = vmatmul.bf16.gmra.mxu0 %v9866
      %v10310 = vpop.f32.mrf.mxu0
      %v10311 = vadd.f32 %v10022, %v10310
      %v10312 = vpop.f32.mrf.mxu0
      %v10313 = vadd.f32 %v10024, %v10312
      %10314 = vmatmul.bf16.gmra.mxu0 %v9866
      %v10315 = vpop.f32.mrf.mxu0
      %v10316 = vadd.f32 %v10027, %v10315
      %v10317 = vpop.f32.mrf.mxu0
      %v10318 = vadd.f32 %v10029, %v10317
      %10319 = vmatmul.bf16.gmra.mxu0 %v9866
      %v10320 = vpop.f32.mrf.mxu0
      %v10321 = vadd.f32 %v10032, %v10320
      %v10322 = vpop.f32.mrf.mxu0
      %v10323 = vadd.f32 %v10034, %v10322
      %10324 = vmatmul.bf16.gmra.mxu0 %v9866
      %v10325 = vpop.f32.mrf.mxu0
      %v10326 = vadd.f32 %v10037, %v10325
      %v10327 = vpop.f32.mrf.mxu0
      %v10328 = vadd.f32 %v10039, %v10327
      %10329 = vmatmul.bf16.gmra.mxu0 %v9866
      %v10330 = vpop.f32.mrf.mxu0
      %v10331 = vadd.f32 %v10042, %v10330
      %v10332 = vpop.f32.mrf.mxu0
      %v10333 = vadd.f32 %v10044, %v10332
      %10334 = vmatmul.bf16.gmra.mxu0 %v9866
      %v10335 = vpop.f32.mrf.mxu0
      %v10336 = vadd.f32 %v10047, %v10335
      %v10337 = vpop.f32.mrf.mxu0
      %v10338 = vadd.f32 %v10049, %v10337
      %10339 = vmatmul.bf16.gmra.mxu0 %v9866
      %v10340 = vpop.f32.mrf.mxu0
      %v10341 = vadd.f32 %v10052, %v10340
      %v10342 = vpop.f32.mrf.mxu0
      %v10343 = vadd.f32 %v10054, %v10342
      %10344 = vmatmul.bf16.gmra.mxu0 %v9866
      %v10345 = vpop.f32.mrf.mxu0
      %v10346 = vadd.f32 %v10057, %v10345
      %v10347 = vpop.f32.mrf.mxu0
      %v10348 = vadd.f32 %v10059, %v10347
      %10349 = vmatmul.bf16.gmra.mxu0 %v9869
      %v10350 = vpop.f32.mrf.mxu0
      %v10351 = vadd.f32 %v10062, %v10350
      %v10352 = vpop.f32.mrf.mxu0
      %v10353 = vadd.f32 %v10064, %v10352
      %10354 = vmatmul.bf16.gmra.mxu0 %v9872
      %v10355 = vpop.f32.mrf.mxu0
      %v10356 = vadd.f32 %v10067, %v10355
      %v10357 = vpop.f32.mrf.mxu0
      %v10358 = vadd.f32 %v10069, %v10357
      %10359 = vmatmul.bf16.gmra.mxu0 %v9875
      %v10360 = vpop.f32.mrf.mxu0
      %v10361 = vadd.f32 %v10072, %v10360
      %v10362 = vpop.f32.mrf.mxu0
      %v10363 = vadd.f32 %v10074, %v10362
      %10364 = vmatmul.bf16.gmra.mxu0 %v9878
      %v10365 = vpop.f32.mrf.mxu0
      %v10366 = vadd.f32 %v10077, %v10365
      %v10367 = vpop.f32.mrf.mxu0
      %v10368 = vadd.f32 %v10079, %v10367
      %10369 = vmatmul.bf16.gmra.mxu0 %v9881
      %v10370 = vpop.f32.mrf.mxu0
      %v10371 = vadd.f32 %v10082, %v10370
      %v10372 = vpop.f32.mrf.mxu0
      %v10373 = vadd.f32 %v10084, %v10372
      %10374 = vmatmul.bf16.gmra.mxu0 %v9884
      %v10375 = vpop.f32.mrf.mxu0
      %v10376 = vadd.f32 %v10087, %v10375
      %v10377 = vpop.f32.mrf.mxu0
      %v10378 = vadd.f32 %v10089, %v10377
      %10379 = vmatmul.bf16.gmra.mxu0 %v9887
      %v10380 = vpop.f32.mrf.mxu0
      %v10381 = vadd.f32 %v10092, %v10380
      %v10382 = vpop.f32.mrf.mxu0
      %v10383 = vadd.f32 %v10094, %v10382
      %10384 = vmatmul.bf16.gmra.mxu0 %v9890
      %v10385 = vpop.f32.mrf.mxu0
      %v10386 = vadd.f32 %v10097, %v10385
      %v10387 = vpop.f32.mrf.mxu0
      %v10388 = vadd.f32 %v10099, %v10387
      %10389 = vmatmul.bf16.gmra.mxu0 %v9893
      %v10390 = vpop.f32.mrf.mxu0
      %v10391 = vadd.f32 %v10102, %v10390
      %v10392 = vpop.f32.mrf.mxu0
      %v10393 = vadd.f32 %v10104, %v10392
      %10394 = vmatmul.bf16.gmra.mxu0 %v9896
      %v10395 = vpop.f32.mrf.mxu0
      %v10396 = vadd.f32 %v10107, %v10395
      %v10397 = vpop.f32.mrf.mxu0
      %v10398 = vadd.f32 %v10109, %v10397
      %10399 = vmatmul.bf16.gmra.mxu0 %v9899
      %v10400 = vpop.f32.mrf.mxu0
      %v10401 = vadd.f32 %v10112, %v10400
      %v10402 = vpop.f32.mrf.mxu0
      %v10403 = vadd.f32 %v10114, %v10402
      %10404 = vmatmul.bf16.gmra.mxu0 %v9902
      %v10405 = vpop.f32.mrf.mxu0
      %v10406 = vadd.f32 %v10117, %v10405
      %v10407 = vpop.f32.mrf.mxu0
      %v10408 = vadd.f32 %v10119, %v10407
      %10409 = vmatmul.bf16.gmra.mxu0 %v9905
      %v10410 = vpop.f32.mrf.mxu0
      %v10411 = vadd.f32 %v10122, %v10410
      %v10412 = vpop.f32.mrf.mxu0
      %v10413 = vadd.f32 %v10124, %v10412
      %10414 = vmatmul.bf16.gmra.mxu0 %v9908
      %v10415 = vpop.f32.mrf.mxu0
      %v10416 = vadd.f32 %v10127, %v10415
      %v10417 = vpop.f32.mrf.mxu0
      %v10418 = vadd.f32 %v10129, %v10417
      %10419 = vmatmul.bf16.gmra.mxu0 %v9911
      %v10420 = vpop.f32.mrf.mxu0
      %v10421 = vadd.f32 %v10132, %v10420
      %v10422 = vpop.f32.mrf.mxu0
      %v10423 = vadd.f32 %v10134, %v10422
      %10424 = vmatmul.bf16.gmra.mxu0 %v9914
      %v10425 = vpop.f32.mrf.mxu0
      %v10426 = vadd.f32 %v10137, %v10425
      %v10427 = vpop.f32.mrf.mxu0
      %v10428 = vadd.f32 %v10139, %v10427
      %10429 = vmatmul.bf16.gmra.mxu0 %v9917
      %v10430 = vpop.f32.mrf.mxu0
      %v10431 = vadd.f32 %v10142, %v10430
      %v10432 = vpop.f32.mrf.mxu0
      %v10433 = vadd.f32 %v10144, %v10432
      %10434 = vmatmul.bf16.gmra.mxu0 %v9920
      %v10435 = vpop.f32.mrf.mxu0
      %v10436 = vadd.f32 %v10147, %v10435
      %v10437 = vpop.f32.mrf.mxu0
      %v10438 = vadd.f32 %v10149, %v10437
      %10439 = vmatmul.bf16.gmra.mxu0 %v9923
      %v10440 = vpop.f32.mrf.mxu0
      %v10441 = vadd.f32 %v10152, %v10440
      %v10442 = vpop.f32.mrf.mxu0
      %v10443 = vadd.f32 %v10154, %v10442
      %10444 = vmatmul.bf16.gmra.mxu0 %v9926
      %v10445 = vpop.f32.mrf.mxu0
      %v10446 = vadd.f32 %v10157, %v10445
      %v10447 = vpop.f32.mrf.mxu0
      %v10448 = vadd.f32 %v10159, %v10447
      %10449 = vmatmul.bf16.gmra.mxu0 %v9929
      %v10450 = vpop.f32.mrf.mxu0
      %v10451 = vadd.f32 %v10162, %v10450
      %v10452 = vpop.f32.mrf.mxu0
      %v10453 = vadd.f32 %v10164, %v10452
      %10454 = vmatmul.bf16.gmra.mxu0 %v9932
      %v10455 = vpop.f32.mrf.mxu0
      %v10456 = vadd.f32 %v10167, %v10455
      %v10457 = vpop.f32.mrf.mxu0
      %v10458 = vadd.f32 %v10169, %v10457
      %10459 = vmatmul.bf16.gmra.mxu0 %v9935
      %v10460 = vpop.f32.mrf.mxu0
      %v10461 = vadd.f32 %v10172, %v10460
      %v10462 = vpop.f32.mrf.mxu0
      %v10463 = vadd.f32 %v10174, %v10462
      %10464 = vmatmul.bf16.gmra.mxu0 %v9938
      %v10465 = vpop.f32.mrf.mxu0
      %v10466 = vadd.f32 %v10177, %v10465
      %v10467 = vpop.f32.mrf.mxu0
      %v10468 = vadd.f32 %v10179, %v10467
      %10469 = vmatmul.bf16.gmra.mxu0 %v9941
      %v10470 = vpop.f32.mrf.mxu0
      %v10471 = vadd.f32 %v10182, %v10470
      %v10472 = vpop.f32.mrf.mxu0
      %v10473 = vadd.f32 %v10184, %v10472
      %10474 = vmatmul.bf16.gmra.mxu0 %v9944
      %v10475 = vpop.f32.mrf.mxu0
      %v10476 = vadd.f32 %v10187, %v10475
      %v10477 = vpop.f32.mrf.mxu0
      %v10478 = vadd.f32 %v10189, %v10477
      %10479 = vmatmul.bf16.gmra.mxu0 %v9947
      %v10480 = vpop.f32.mrf.mxu0
      %v10481 = vadd.f32 %v10192, %v10480
      %v10482 = vpop.f32.mrf.mxu0
      %v10483 = vadd.f32 %v10194, %v10482
      %10484 = vmatmul.bf16.gmra.mxu0 %v9950
      %v10485 = vpop.f32.mrf.mxu0
      %v10486 = vadd.f32 %v10197, %v10485
      %v10487 = vpop.f32.mrf.mxu0
      %v10488 = vadd.f32 %v10199, %v10487
      %10489 = vmatmul.bf16.gmra.mxu0 %v9953
      %v10490 = vpop.f32.mrf.mxu0
      %v10491 = vadd.f32 %v10202, %v10490
      %v10492 = vpop.f32.mrf.mxu0
      %v10493 = vadd.f32 %v10204, %v10492
      %10494 = vmatmul.bf16.gmra.mxu0 %v9956
      %v10495 = vpop.f32.mrf.mxu0
      %v10496 = vadd.f32 %v10207, %v10495
      %v10497 = vpop.f32.mrf.mxu0
      %v10498 = vadd.f32 %v10209, %v10497
      %10499 = vmatmul.bf16.gmra.mxu0 %v9959
      %v10500 = vpop.f32.mrf.mxu0
      %v10501 = vadd.f32 %v10212, %v10500
      %v10502 = vpop.f32.mrf.mxu0
      %v10503 = vadd.f32 %v10214, %v10502
      %10504 = vmatmul.bf16.gmra.mxu0 %v9962
      %v10505 = vpop.f32.mrf.mxu0
      %v10506 = vadd.f32 %v10217, %v10505
      %v10507 = vpop.f32.mrf.mxu0
      %v10508 = vadd.f32 %v10219, %v10507
      %10509 = vmatmul.bf16.gmra.mxu0 %v9965
      %v10510 = vpop.f32.mrf.mxu0
      %v10511 = vadd.f32 %v10222, %v10510
      %v10512 = vpop.f32.mrf.mxu0
      %v10513 = vadd.f32 %v10224, %v10512
      %10514 = vmatmul.bf16.gmra.mxu0 %v9968
      %v10515 = vpop.f32.mrf.mxu0
      %v10516 = vadd.f32 %v10227, %v10515
      %v10517 = vpop.f32.mrf.mxu0
      %v10518 = vadd.f32 %v10229, %v10517
      %10519 = vmatmul.bf16.gmra.mxu0 %v9971
      %v10520 = vpop.f32.mrf.mxu0
      %v10521 = vadd.f32 %v10232, %v10520
      %v10522 = vpop.f32.mrf.mxu0
      %v10523 = vadd.f32 %v10234, %v10522
      %10524 = vmatmul.bf16.gmra.mxu0 %v9974
      %v10525 = vpop.f32.mrf.mxu0
      %v10526 = vadd.f32 %v10237, %v10525
      %v10527 = vpop.f32.mrf.mxu0
      %v10528 = vadd.f32 %v10239, %v10527
      %10529 = vmatmul.bf16.gmra.mxu0 %v9977
      %v10530 = vpop.f32.mrf.mxu0
      %v10531 = vadd.f32 %v10242, %v10530
      %v10532 = vpop.f32.mrf.mxu0
      %v10533 = vadd.f32 %v10244, %v10532
      %10534 = vmatmul.bf16.gmra.mxu0 %v9980
      %v10535 = vpop.f32.mrf.mxu0
      %v10536 = vadd.f32 %v10247, %v10535
      %v10537 = vpop.f32.mrf.mxu0
      %v10538 = vadd.f32 %v10249, %v10537
      %10539 = vmatmul.bf16.gmra.mxu0 %v9983
      %v10540 = vpop.f32.mrf.mxu0
      %v10541 = vadd.f32 %v10252, %v10540
      %v10542 = vpop.f32.mrf.mxu0
      %v10543 = vadd.f32 %v10254, %v10542
      %10544 = vmatmul.bf16.gmra.mxu0 %v9986
      %v10545 = vpop.f32.mrf.mxu0
      %v10546 = vadd.f32 %v10257, %v10545
      %v10547 = vpop.f32.mrf.mxu0
      %v10548 = vadd.f32 %v10259, %v10547
      %10549 = vmatmul.bf16.gmra.mxu0 %v9989
      %v10550 = vpop.f32.mrf.mxu0
      %v10551 = vadd.f32 %v10262, %v10550
      %v10552 = vpop.f32.mrf.mxu0
      %v10553 = vadd.f32 %v10264, %v10552
      %10554 = vmatmul.bf16.gmra.mxu0 %v9992
      %v10555 = vpop.f32.mrf.mxu0
      %v10556 = vadd.f32 %v10267, %v10555
      %v10557 = vpop.f32.mrf.mxu0
      %v10558 = vadd.f32 %v10269, %v10557
      %10559 = vmatmul.bf16.gmra.mxu0 %v9995
      %v10560 = vpop.f32.mrf.mxu0
      %v10561 = vadd.f32 %v10272, %v10560
      %v10562 = vpop.f32.mrf.mxu0
      %v10563 = vadd.f32 %v10274, %v10562
      %10564 = vmatmul.bf16.gmra.mxu0 %v9998
      %v10565 = vpop.f32.mrf.mxu0
      %v10566 = vadd.f32 %v10277, %v10565
      %v10567 = vpop.f32.mrf.mxu0
      %v10568 = vadd.f32 %v10279, %v10567
      %10569 = vmatmul.bf16.gmra.mxu0 %v10001
      %v10570 = vpop.f32.mrf.mxu0
      %v10571 = vadd.f32 %v10282, %v10570
      %v10572 = vpop.f32.mrf.mxu0
      %v10573 = vadd.f32 %v10284, %v10572
      %10574 = vmatmul.bf16.gmra.mxu0 %v10004
      %v10575 = vpop.f32.mrf.mxu0
      %v10576 = vadd.f32 %v10287, %v10575
      %v10577 = vpop.f32.mrf.mxu0
      %v10578 = vadd.f32 %v10289, %v10577
      %10579 = vmatmul.bf16.gmra.mxu0 %v10007
      %v10580 = vpop.f32.mrf.mxu0
      %v10581 = vadd.f32 %v10292, %v10580
      %v10582 = vpop.f32.mrf.mxu0
      %v10583 = vadd.f32 %v10294, %v10582
      %10584 = vmatmul.bf16.gmra.mxu0 %v10010
      %v10585 = vpop.f32.mrf.mxu0
      %v10586 = vadd.f32 %v10297, %v10585
      %v10587 = vpop.f32.mrf.mxu0
      %v10588 = vadd.f32 %v10299, %v10587
      %10589 = vdwg.mxu0
      %v10590 = vpack.c.bf16 %v8656, %v8654
      %v10591 = vpack.c.bf16 %v8657, %v8655
      %v10592 = vpack.c.bf16 %v8660, %v8658
      %v10593 = vpack.c.bf16 %v8661, %v8659
      %v10594 = vpack.c.bf16 %v8664, %v8662
      %v10595 = vpack.c.bf16 %v8665, %v8663
      %v10596 = vpack.c.bf16 %v8668, %v8666
      %v10597 = vpack.c.bf16 %v8669, %v8667
      %v10598 = vpack.c.bf16 %v8672, %v8670
      %v10599 = vpack.c.bf16 %v8673, %v8671
      %v10600 = vpack.c.bf16 %v8676, %v8674
      %v10601 = vpack.c.bf16 %v8677, %v8675
      %v10602 = vpack.c.bf16 %v8680, %v8678
      %v10603 = vpack.c.bf16 %v8681, %v8679
      %v10604 = vpack.c.bf16 %v8684, %v8682
      %v10605 = vpack.c.bf16 %v8685, %v8683
      %s10606 = scalar_lea.vmem %s2, 224
      %v10607 = vld [vmem:[%s10606] sm:$0xf]
      %v10608 = vld [vmem:[%s10606 + $0x4] sm:$0xf]
      %v10609 = vld [vmem:[%s10606 + $0x8] sm:$0xf]
      %v10610 = vld [vmem:[%s10606 + $0xc] sm:$0xf]
      %v10611 = vld [vmem:[%s10606 + $0x10] sm:$0xf]
      %v10612 = vld [vmem:[%s10606 + $0x14] sm:$0xf]
      %v10613 = vld [vmem:[%s10606 + $0x18] sm:$0xf]
      %v10614 = vld [vmem:[%s10606 + $0x1c] sm:$0xf]
      %v10615 = vld [vmem:[%s10606 + $0x20] sm:$0xf]
      %v10616 = vld [vmem:[%s10606 + $0x24] sm:$0xf]
      %v10617 = vld [vmem:[%s10606 + $0x28] sm:$0xf]
      %v10618 = vld [vmem:[%s10606 + $0x2c] sm:$0xf]
      %v10619 = vld [vmem:[%s10606 + $0x30] sm:$0xf]
      %v10620 = vld [vmem:[%s10606 + $0x34] sm:$0xf]
      %v10621 = vld [vmem:[%s10606 + $0x38] sm:$0xf]
      %v10622 = vld [vmem:[%s10606 + $0x3c] sm:$0xf]
      %v10623 = vld [vmem:[%s10606 + $0x40] sm:$0xf]
      %v10624 = vld [vmem:[%s10606 + $0x44] sm:$0xf]
      %v10625 = vld [vmem:[%s10606 + $0x48] sm:$0xf]
      %v10626 = vld [vmem:[%s10606 + $0x4c] sm:$0xf]
      %v10627 = vld [vmem:[%s10606 + $0x50] sm:$0xf]
      %v10628 = vld [vmem:[%s10606 + $0x54] sm:$0xf]
      %v10629 = vld [vmem:[%s10606 + $0x58] sm:$0xf]
      %v10630 = vld [vmem:[%s10606 + $0x5c] sm:$0xf]
      %v10631 = vld [vmem:[%s10606 + $0x60] sm:$0xf]
      %v10632 = vld [vmem:[%s10606 + $0x64] sm:$0xf]
      %v10633 = vld [vmem:[%s10606 + $0x68] sm:$0xf]
      %v10634 = vld [vmem:[%s10606 + $0x6c] sm:$0xf]
      %v10663 = vunpack.c.l.b16 %v10607
      %v10664 = vunpack.c.l.b16 %v10608
      %v10665 = vunpack.c.l.b16 %v10609
      %v10666 = vunpack.c.l.b16 %v10610
      %v10667 = vunpack.c.l.b16 %v10611
      %v10668 = vunpack.c.l.b16 %v10612
      %v10669 = vunpack.c.l.b16 %v10613
      %v10670 = vunpack.c.l.b16 %v10614
      %v10671 = vunpack.c.l.b16 %v10615
      %v10672 = vunpack.c.l.b16 %v10616
      %v10673 = vunpack.c.l.b16 %v10617
      %v10674 = vunpack.c.l.b16 %v10618
      %v10675 = vunpack.c.l.b16 %v10619
      %v10676 = vunpack.c.l.b16 %v10620
      %v10677 = vunpack.c.l.b16 %v10621
      %v10678 = vunpack.c.l.b16 %v10622
      %v10679 = vunpack.c.l.b16 %v10623
      %v10680 = vunpack.c.l.b16 %v10624
      %v10681 = vunpack.c.l.b16 %v10625
      %v10682 = vunpack.c.l.b16 %v10626
      %v10683 = vunpack.c.l.b16 %v10627
      %v10684 = vunpack.c.l.b16 %v10628
      %v10685 = vunpack.c.l.b16 %v10629
      %v10686 = vunpack.c.l.b16 %v10630
      %v10687 = vunpack.c.l.b16 %v10631
      %v10688 = vunpack.c.l.b16 %v10632
      %v10689 = vunpack.c.l.b16 %v10633
      %v10690 = vunpack.c.l.b16 %v10634
      %v10691 = vpack.c.b16 %v10664, %v10663
      %v10692 = vpack.c.b16 %v10666, %v10665
      %v10693 = vpack.c.b16 %v10668, %v10667
      %v10694 = vpack.c.b16 %v10670, %v10669
      %v10695 = vpack.c.b16 %v10672, %v10671
      %v10696 = vpack.c.b16 %v10674, %v10673
      %v10697 = vpack.c.b16 %v10676, %v10675
      %v10698 = vpack.c.b16 %v10678, %v10677
      %v10699 = vpack.c.b16 %v10680, %v10679
      %v10700 = vpack.c.b16 %v10682, %v10681
      %v10701 = vpack.c.b16 %v10684, %v10683
      %v10702 = vpack.c.b16 %v10686, %v10685
      %v10703 = vpack.c.b16 %v10688, %v10687
      %v10704 = vpack.c.b16 %v10690, %v10689
      %v10720 = vsel %vm9035, %v10591, 0
      %v10723 = vsel %vm9035, %v10593, 0
      %v10726 = vsel %vm9035, %v10595, 0
      %v10729 = vsel %vm9035, %v10597, 0
      %v10732 = vsel %vm9035, %v10599, 0
      %v10735 = vsel %vm9035, %v10601, 0
      %v10738 = vsel %vm9035, %v10603, 0
      %v10741 = vsel %vm9035, %v10605, 0
      %10743 = vmatpush.bf16.msra.mxu0 %v10698
      %10744 = vmatpush.bf16.msra.mxu0 %v10697
      %10745 = vmatpush.bf16.msra.mxu0 %v10696
      %10746 = vmatpush.bf16.msra.mxu0 %v10695
      %10747 = vmatpush.bf16.msra.mxu0 %v10694
      %10748 = vmatpush.bf16.msra.mxu0 %v10693
      %10749 = vmatpush.bf16.msra.mxu0 %v10692
      %10750 = vmatpush.bf16.msra.mxu0 %v10691
      %10751 = vmatmul.bf16.gmra.mxu0 %v8686
      %v10752 = vpop.f32.mrf.mxu0
      %v10753 = vadd.f32 0.0, %v10752
      %v10754 = vpop.f32.mrf.mxu0
      %v10755 = vadd.f32 0.0, %v10754
      %10756 = vmatmul.bf16.gmra.mxu0 %v8688
      %v10757 = vpop.f32.mrf.mxu0
      %v10758 = vadd.f32 0.0, %v10757
      %v10759 = vpop.f32.mrf.mxu0
      %v10760 = vadd.f32 0.0, %v10759
      %10761 = vmatmul.bf16.gmra.mxu0 %v8690
      %v10762 = vpop.f32.mrf.mxu0
      %v10763 = vadd.f32 0.0, %v10762
      %v10764 = vpop.f32.mrf.mxu0
      %v10765 = vadd.f32 0.0, %v10764
      %10766 = vmatmul.bf16.gmra.mxu0 %v8692
      %v10767 = vpop.f32.mrf.mxu0
      %v10768 = vadd.f32 0.0, %v10767
      %v10769 = vpop.f32.mrf.mxu0
      %v10770 = vadd.f32 0.0, %v10769
      %10771 = vmatmul.bf16.gmra.mxu0 %v8694
      %v10772 = vpop.f32.mrf.mxu0
      %v10773 = vadd.f32 0.0, %v10772
      %v10774 = vpop.f32.mrf.mxu0
      %v10775 = vadd.f32 0.0, %v10774
      %10776 = vmatmul.bf16.gmra.mxu0 %v8696
      %v10777 = vpop.f32.mrf.mxu0
      %v10778 = vadd.f32 0.0, %v10777
      %v10779 = vpop.f32.mrf.mxu0
      %v10780 = vadd.f32 0.0, %v10779
      %10781 = vmatmul.bf16.gmra.mxu0 %v8698
      %v10782 = vpop.f32.mrf.mxu0
      %v10783 = vadd.f32 0.0, %v10782
      %v10784 = vpop.f32.mrf.mxu0
      %v10785 = vadd.f32 0.0, %v10784
      %10786 = vmatmul.bf16.gmra.mxu0 %v8700
      %v10787 = vpop.f32.mrf.mxu0
      %v10788 = vadd.f32 0.0, %v10787
      %v10789 = vpop.f32.mrf.mxu0
      %v10790 = vadd.f32 0.0, %v10789
      %10791 = vmatmul.bf16.gmra.mxu0 %v8702
      %v10792 = vpop.f32.mrf.mxu0
      %v10793 = vadd.f32 0.0, %v10792
      %v10794 = vpop.f32.mrf.mxu0
      %v10795 = vadd.f32 0.0, %v10794
      %10796 = vmatmul.bf16.gmra.mxu0 %v8704
      %v10797 = vpop.f32.mrf.mxu0
      %v10798 = vadd.f32 0.0, %v10797
      %v10799 = vpop.f32.mrf.mxu0
      %v10800 = vadd.f32 0.0, %v10799
      %10801 = vmatmul.bf16.gmra.mxu0 %v8706
      %v10802 = vpop.f32.mrf.mxu0
      %v10803 = vadd.f32 0.0, %v10802
      %v10804 = vpop.f32.mrf.mxu0
      %v10805 = vadd.f32 0.0, %v10804
      %10806 = vmatmul.bf16.gmra.mxu0 %v8708
      %v10807 = vpop.f32.mrf.mxu0
      %v10808 = vadd.f32 0.0, %v10807
      %v10809 = vpop.f32.mrf.mxu0
      %v10810 = vadd.f32 0.0, %v10809
      %10811 = vmatmul.bf16.gmra.mxu0 %v8710
      %v10812 = vpop.f32.mrf.mxu0
      %v10813 = vadd.f32 0.0, %v10812
      %v10814 = vpop.f32.mrf.mxu0
      %v10815 = vadd.f32 0.0, %v10814
      %10816 = vmatmul.bf16.gmra.mxu0 %v8712
      %v10817 = vpop.f32.mrf.mxu0
      %v10818 = vadd.f32 0.0, %v10817
      %v10819 = vpop.f32.mrf.mxu0
      %v10820 = vadd.f32 0.0, %v10819
      %10821 = vmatmul.bf16.gmra.mxu0 %v8714
      %v10822 = vpop.f32.mrf.mxu0
      %v10823 = vadd.f32 0.0, %v10822
      %v10824 = vpop.f32.mrf.mxu0
      %v10825 = vadd.f32 0.0, %v10824
      %10826 = vmatmul.bf16.gmra.mxu0 %v8716
      %v10827 = vpop.f32.mrf.mxu0
      %v10828 = vadd.f32 0.0, %v10827
      %v10829 = vpop.f32.mrf.mxu0
      %v10830 = vadd.f32 0.0, %v10829
      %10831 = vmatmul.bf16.gmra.mxu0 %v8718
      %v10832 = vpop.f32.mrf.mxu0
      %v10833 = vadd.f32 0.0, %v10832
      %v10834 = vpop.f32.mrf.mxu0
      %v10835 = vadd.f32 0.0, %v10834
      %10836 = vmatmul.bf16.gmra.mxu0 %v8720
      %v10837 = vpop.f32.mrf.mxu0
      %v10838 = vadd.f32 0.0, %v10837
      %v10839 = vpop.f32.mrf.mxu0
      %v10840 = vadd.f32 0.0, %v10839
      %10841 = vmatmul.bf16.gmra.mxu0 %v8722
      %v10842 = vpop.f32.mrf.mxu0
      %v10843 = vadd.f32 0.0, %v10842
      %v10844 = vpop.f32.mrf.mxu0
      %v10845 = vadd.f32 0.0, %v10844
      %10846 = vmatmul.bf16.gmra.mxu0 %v8724
      %v10847 = vpop.f32.mrf.mxu0
      %v10848 = vadd.f32 0.0, %v10847
      %v10849 = vpop.f32.mrf.mxu0
      %v10850 = vadd.f32 0.0, %v10849
      %10851 = vmatmul.bf16.gmra.mxu0 %v8726
      %v10852 = vpop.f32.mrf.mxu0
      %v10853 = vadd.f32 0.0, %v10852
      %v10854 = vpop.f32.mrf.mxu0
      %v10855 = vadd.f32 0.0, %v10854
      %10856 = vmatmul.bf16.gmra.mxu0 %v8728
      %v10857 = vpop.f32.mrf.mxu0
      %v10858 = vadd.f32 0.0, %v10857
      %v10859 = vpop.f32.mrf.mxu0
      %v10860 = vadd.f32 0.0, %v10859
      %10861 = vmatmul.bf16.gmra.mxu0 %v8730
      %v10862 = vpop.f32.mrf.mxu0
      %v10863 = vadd.f32 0.0, %v10862
      %v10864 = vpop.f32.mrf.mxu0
      %v10865 = vadd.f32 0.0, %v10864
      %10866 = vmatmul.bf16.gmra.mxu0 %v8732
      %v10867 = vpop.f32.mrf.mxu0
      %v10868 = vadd.f32 0.0, %v10867
      %v10869 = vpop.f32.mrf.mxu0
      %v10870 = vadd.f32 0.0, %v10869
      %10871 = vmatmul.bf16.gmra.mxu0 %v8734
      %v10872 = vpop.f32.mrf.mxu0
      %v10873 = vadd.f32 0.0, %v10872
      %v10874 = vpop.f32.mrf.mxu0
      %v10875 = vadd.f32 0.0, %v10874
      %10876 = vmatmul.bf16.gmra.mxu0 %v8736
      %v10877 = vpop.f32.mrf.mxu0
      %v10878 = vadd.f32 0.0, %v10877
      %v10879 = vpop.f32.mrf.mxu0
      %v10880 = vadd.f32 0.0, %v10879
      %10881 = vmatmul.bf16.gmra.mxu0 %v8738
      %v10882 = vpop.f32.mrf.mxu0
      %v10883 = vadd.f32 0.0, %v10882
      %v10884 = vpop.f32.mrf.mxu0
      %v10885 = vadd.f32 0.0, %v10884
      %10886 = vmatmul.bf16.gmra.mxu0 %v8740
      %v10887 = vpop.f32.mrf.mxu0
      %v10888 = vadd.f32 0.0, %v10887
      %v10889 = vpop.f32.mrf.mxu0
      %v10890 = vadd.f32 0.0, %v10889
      %10891 = vmatmul.bf16.gmra.mxu0 %v8742
      %v10892 = vpop.f32.mrf.mxu0
      %v10893 = vadd.f32 0.0, %v10892
      %v10894 = vpop.f32.mrf.mxu0
      %v10895 = vadd.f32 0.0, %v10894
      %10896 = vmatmul.bf16.gmra.mxu0 %v8744
      %v10897 = vpop.f32.mrf.mxu0
      %v10898 = vadd.f32 0.0, %v10897
      %v10899 = vpop.f32.mrf.mxu0
      %v10900 = vadd.f32 0.0, %v10899
      %10901 = vmatmul.bf16.gmra.mxu0 %v8746
      %v10902 = vpop.f32.mrf.mxu0
      %v10903 = vadd.f32 0.0, %v10902
      %v10904 = vpop.f32.mrf.mxu0
      %v10905 = vadd.f32 0.0, %v10904
      %10906 = vmatmul.bf16.gmra.mxu0 %v8748
      %v10907 = vpop.f32.mrf.mxu0
      %v10908 = vadd.f32 0.0, %v10907
      %v10909 = vpop.f32.mrf.mxu0
      %v10910 = vadd.f32 0.0, %v10909
      %10911 = vmatmul.bf16.gmra.mxu0 %v8750
      %v10912 = vpop.f32.mrf.mxu0
      %v10913 = vadd.f32 0.0, %v10912
      %v10914 = vpop.f32.mrf.mxu0
      %v10915 = vadd.f32 0.0, %v10914
      %10916 = vmatmul.bf16.gmra.mxu0 %v8752
      %v10917 = vpop.f32.mrf.mxu0
      %v10918 = vadd.f32 0.0, %v10917
      %v10919 = vpop.f32.mrf.mxu0
      %v10920 = vadd.f32 0.0, %v10919
      %10921 = vmatmul.bf16.gmra.mxu0 %v8754
      %v10922 = vpop.f32.mrf.mxu0
      %v10923 = vadd.f32 0.0, %v10922
      %v10924 = vpop.f32.mrf.mxu0
      %v10925 = vadd.f32 0.0, %v10924
      %10926 = vmatmul.bf16.gmra.mxu0 %v8756
      %v10927 = vpop.f32.mrf.mxu0
      %v10928 = vadd.f32 0.0, %v10927
      %v10929 = vpop.f32.mrf.mxu0
      %v10930 = vadd.f32 0.0, %v10929
      %10931 = vmatmul.bf16.gmra.mxu0 %v8758
      %v10932 = vpop.f32.mrf.mxu0
      %v10933 = vadd.f32 0.0, %v10932
      %v10934 = vpop.f32.mrf.mxu0
      %v10935 = vadd.f32 0.0, %v10934
      %10936 = vmatmul.bf16.gmra.mxu0 %v8760
      %v10937 = vpop.f32.mrf.mxu0
      %v10938 = vadd.f32 0.0, %v10937
      %v10939 = vpop.f32.mrf.mxu0
      %v10940 = vadd.f32 0.0, %v10939
      %10941 = vmatmul.bf16.gmra.mxu0 %v8762
      %v10942 = vpop.f32.mrf.mxu0
      %v10943 = vadd.f32 0.0, %v10942
      %v10944 = vpop.f32.mrf.mxu0
      %v10945 = vadd.f32 0.0, %v10944
      %10946 = vmatmul.bf16.gmra.mxu0 %v8764
      %v10947 = vpop.f32.mrf.mxu0
      %v10948 = vadd.f32 0.0, %v10947
      %v10949 = vpop.f32.mrf.mxu0
      %v10950 = vadd.f32 0.0, %v10949
      %10951 = vmatmul.bf16.gmra.mxu0 %v8766
      %v10952 = vpop.f32.mrf.mxu0
      %v10953 = vadd.f32 0.0, %v10952
      %v10954 = vpop.f32.mrf.mxu0
      %v10955 = vadd.f32 0.0, %v10954
      %10956 = vmatmul.bf16.gmra.mxu0 %v8768
      %v10957 = vpop.f32.mrf.mxu0
      %v10958 = vadd.f32 0.0, %v10957
      %v10959 = vpop.f32.mrf.mxu0
      %v10960 = vadd.f32 0.0, %v10959
      %10961 = vmatmul.bf16.gmra.mxu0 %v8770
      %v10962 = vpop.f32.mrf.mxu0
      %v10963 = vadd.f32 0.0, %v10962
      %v10964 = vpop.f32.mrf.mxu0
      %v10965 = vadd.f32 0.0, %v10964
      %10966 = vmatmul.bf16.gmra.mxu0 %v8772
      %v10967 = vpop.f32.mrf.mxu0
      %v10968 = vadd.f32 0.0, %v10967
      %v10969 = vpop.f32.mrf.mxu0
      %v10970 = vadd.f32 0.0, %v10969
      %10971 = vmatmul.bf16.gmra.mxu0 %v8774
      %v10972 = vpop.f32.mrf.mxu0
      %v10973 = vadd.f32 0.0, %v10972
      %v10974 = vpop.f32.mrf.mxu0
      %v10975 = vadd.f32 0.0, %v10974
      %10976 = vmatmul.bf16.gmra.mxu0 %v8776
      %v10977 = vpop.f32.mrf.mxu0
      %v10978 = vadd.f32 0.0, %v10977
      %v10979 = vpop.f32.mrf.mxu0
      %v10980 = vadd.f32 0.0, %v10979
      %10981 = vmatmul.bf16.gmra.mxu0 %v8778
      %v10982 = vpop.f32.mrf.mxu0
      %v10983 = vadd.f32 0.0, %v10982
      %v10984 = vpop.f32.mrf.mxu0
      %v10985 = vadd.f32 0.0, %v10984
      %10986 = vmatmul.bf16.gmra.mxu0 %v8780
      %v10987 = vpop.f32.mrf.mxu0
      %v10988 = vadd.f32 0.0, %v10987
      %v10989 = vpop.f32.mrf.mxu0
      %v10990 = vadd.f32 0.0, %v10989
      %10991 = vmatmul.bf16.gmra.mxu0 %v10590
      %v10992 = vpop.f32.mrf.mxu0
      %v10993 = vadd.f32 0.0, %v10992
      %v10994 = vpop.f32.mrf.mxu0
      %v10995 = vadd.f32 0.0, %v10994
      %10996 = vmatmul.bf16.gmra.mxu0 %v10592
      %v10997 = vpop.f32.mrf.mxu0
      %v10998 = vadd.f32 0.0, %v10997
      %v10999 = vpop.f32.mrf.mxu0
      %v11000 = vadd.f32 0.0, %v10999
      %11001 = vmatmul.bf16.gmra.mxu0 %v10594
      %v11002 = vpop.f32.mrf.mxu0
      %v11003 = vadd.f32 0.0, %v11002
      %v11004 = vpop.f32.mrf.mxu0
      %v11005 = vadd.f32 0.0, %v11004
      %11006 = vmatmul.bf16.gmra.mxu0 %v10596
      %v11007 = vpop.f32.mrf.mxu0
      %v11008 = vadd.f32 0.0, %v11007
      %v11009 = vpop.f32.mrf.mxu0
      %v11010 = vadd.f32 0.0, %v11009
      %11011 = vmatmul.bf16.gmra.mxu0 %v10598
      %v11012 = vpop.f32.mrf.mxu0
      %v11013 = vadd.f32 0.0, %v11012
      %v11014 = vpop.f32.mrf.mxu0
      %v11015 = vadd.f32 0.0, %v11014
      %11016 = vmatmul.bf16.gmra.mxu0 %v10600
      %v11017 = vpop.f32.mrf.mxu0
      %v11018 = vadd.f32 0.0, %v11017
      %v11019 = vpop.f32.mrf.mxu0
      %v11020 = vadd.f32 0.0, %v11019
      %11021 = vmatmul.bf16.gmra.mxu0 %v10602
      %v11022 = vpop.f32.mrf.mxu0
      %v11023 = vadd.f32 0.0, %v11022
      %v11024 = vpop.f32.mrf.mxu0
      %v11025 = vadd.f32 0.0, %v11024
      %11026 = vmatmul.bf16.gmra.mxu0 %v10604
      %v11027 = vpop.f32.mrf.mxu0
      %v11028 = vadd.f32 0.0, %v11027
      %v11029 = vpop.f32.mrf.mxu0
      %v11030 = vadd.f32 0.0, %v11029
      %11031 = vdwg.mxu0
      %11032 = vmatpush.bf16.msra.mxu0 0
      %11033 = vmatpush.bf16.msra.mxu0 0
      %11034 = vmatpush.bf16.msra.mxu0 %v10704
      %11035 = vmatpush.bf16.msra.mxu0 %v10703
      %11036 = vmatpush.bf16.msra.mxu0 %v10702
      %11037 = vmatpush.bf16.msra.mxu0 %v10701
      %11038 = vmatpush.bf16.msra.mxu0 %v10700
      %11039 = vmatpush.bf16.msra.mxu0 %v10699
      %11040 = vmatmul.bf16.gmra.mxu0 %v9869
      %v11041 = vpop.f32.mrf.mxu0
      %v11042 = vadd.f32 %v10753, %v11041
      %v11043 = vpop.f32.mrf.mxu0
      %v11044 = vadd.f32 %v10755, %v11043
      %11045 = vmatmul.bf16.gmra.mxu0 %v9872
      %v11046 = vpop.f32.mrf.mxu0
      %v11047 = vadd.f32 %v10758, %v11046
      %v11048 = vpop.f32.mrf.mxu0
      %v11049 = vadd.f32 %v10760, %v11048
      %11050 = vmatmul.bf16.gmra.mxu0 %v9875
      %v11051 = vpop.f32.mrf.mxu0
      %v11052 = vadd.f32 %v10763, %v11051
      %v11053 = vpop.f32.mrf.mxu0
      %v11054 = vadd.f32 %v10765, %v11053
      %11055 = vmatmul.bf16.gmra.mxu0 %v9878
      %v11056 = vpop.f32.mrf.mxu0
      %v11057 = vadd.f32 %v10768, %v11056
      %v11058 = vpop.f32.mrf.mxu0
      %v11059 = vadd.f32 %v10770, %v11058
      %11060 = vmatmul.bf16.gmra.mxu0 %v9881
      %v11061 = vpop.f32.mrf.mxu0
      %v11062 = vadd.f32 %v10773, %v11061
      %v11063 = vpop.f32.mrf.mxu0
      %v11064 = vadd.f32 %v10775, %v11063
      %11065 = vmatmul.bf16.gmra.mxu0 %v9884
      %v11066 = vpop.f32.mrf.mxu0
      %v11067 = vadd.f32 %v10778, %v11066
      %v11068 = vpop.f32.mrf.mxu0
      %v11069 = vadd.f32 %v10780, %v11068
      %11070 = vmatmul.bf16.gmra.mxu0 %v9887
      %v11071 = vpop.f32.mrf.mxu0
      %v11072 = vadd.f32 %v10783, %v11071
      %v11073 = vpop.f32.mrf.mxu0
      %v11074 = vadd.f32 %v10785, %v11073
      %11075 = vmatmul.bf16.gmra.mxu0 %v9890
      %v11076 = vpop.f32.mrf.mxu0
      %v11077 = vadd.f32 %v10788, %v11076
      %v11078 = vpop.f32.mrf.mxu0
      %v11079 = vadd.f32 %v10790, %v11078
      %11080 = vmatmul.bf16.gmra.mxu0 %v9893
      %v11081 = vpop.f32.mrf.mxu0
      %v11082 = vadd.f32 %v10793, %v11081
      %v11083 = vpop.f32.mrf.mxu0
      %v11084 = vadd.f32 %v10795, %v11083
      %11085 = vmatmul.bf16.gmra.mxu0 %v9896
      %v11086 = vpop.f32.mrf.mxu0
      %v11087 = vadd.f32 %v10798, %v11086
      %v11088 = vpop.f32.mrf.mxu0
      %v11089 = vadd.f32 %v10800, %v11088
      %11090 = vmatmul.bf16.gmra.mxu0 %v9899
      %v11091 = vpop.f32.mrf.mxu0
      %v11092 = vadd.f32 %v10803, %v11091
      %v11093 = vpop.f32.mrf.mxu0
      %v11094 = vadd.f32 %v10805, %v11093
      %11095 = vmatmul.bf16.gmra.mxu0 %v9902
      %v11096 = vpop.f32.mrf.mxu0
      %v11097 = vadd.f32 %v10808, %v11096
      %v11098 = vpop.f32.mrf.mxu0
      %v11099 = vadd.f32 %v10810, %v11098
      %11100 = vmatmul.bf16.gmra.mxu0 %v9905
      %v11101 = vpop.f32.mrf.mxu0
      %v11102 = vadd.f32 %v10813, %v11101
      %v11103 = vpop.f32.mrf.mxu0
      %v11104 = vadd.f32 %v10815, %v11103
      %11105 = vmatmul.bf16.gmra.mxu0 %v9908
      %v11106 = vpop.f32.mrf.mxu0
      %v11107 = vadd.f32 %v10818, %v11106
      %v11108 = vpop.f32.mrf.mxu0
      %v11109 = vadd.f32 %v10820, %v11108
      %11110 = vmatmul.bf16.gmra.mxu0 %v9911
      %v11111 = vpop.f32.mrf.mxu0
      %v11112 = vadd.f32 %v10823, %v11111
      %v11113 = vpop.f32.mrf.mxu0
      %v11114 = vadd.f32 %v10825, %v11113
      %11115 = vmatmul.bf16.gmra.mxu0 %v9914
      %v11116 = vpop.f32.mrf.mxu0
      %v11117 = vadd.f32 %v10828, %v11116
      %v11118 = vpop.f32.mrf.mxu0
      %v11119 = vadd.f32 %v10830, %v11118
      %11120 = vmatmul.bf16.gmra.mxu0 %v9917
      %v11121 = vpop.f32.mrf.mxu0
      %v11122 = vadd.f32 %v10833, %v11121
      %v11123 = vpop.f32.mrf.mxu0
      %v11124 = vadd.f32 %v10835, %v11123
      %11125 = vmatmul.bf16.gmra.mxu0 %v9920
      %v11126 = vpop.f32.mrf.mxu0
      %v11127 = vadd.f32 %v10838, %v11126
      %v11128 = vpop.f32.mrf.mxu0
      %v11129 = vadd.f32 %v10840, %v11128
      %11130 = vmatmul.bf16.gmra.mxu0 %v9923
      %v11131 = vpop.f32.mrf.mxu0
      %v11132 = vadd.f32 %v10843, %v11131
      %v11133 = vpop.f32.mrf.mxu0
      %v11134 = vadd.f32 %v10845, %v11133
      %11135 = vmatmul.bf16.gmra.mxu0 %v9926
      %v11136 = vpop.f32.mrf.mxu0
      %v11137 = vadd.f32 %v10848, %v11136
      %v11138 = vpop.f32.mrf.mxu0
      %v11139 = vadd.f32 %v10850, %v11138
      %11140 = vmatmul.bf16.gmra.mxu0 %v9929
      %v11141 = vpop.f32.mrf.mxu0
      %v11142 = vadd.f32 %v10853, %v11141
      %v11143 = vpop.f32.mrf.mxu0
      %v11144 = vadd.f32 %v10855, %v11143
      %11145 = vmatmul.bf16.gmra.mxu0 %v9932
      %v11146 = vpop.f32.mrf.mxu0
      %v11147 = vadd.f32 %v10858, %v11146
      %v11148 = vpop.f32.mrf.mxu0
      %v11149 = vadd.f32 %v10860, %v11148
      %11150 = vmatmul.bf16.gmra.mxu0 %v9935
      %v11151 = vpop.f32.mrf.mxu0
      %v11152 = vadd.f32 %v10863, %v11151
      %v11153 = vpop.f32.mrf.mxu0
      %v11154 = vadd.f32 %v10865, %v11153
      %11155 = vmatmul.bf16.gmra.mxu0 %v9938
      %v11156 = vpop.f32.mrf.mxu0
      %v11157 = vadd.f32 %v10868, %v11156
      %v11158 = vpop.f32.mrf.mxu0
      %v11159 = vadd.f32 %v10870, %v11158
      %11160 = vmatmul.bf16.gmra.mxu0 %v9941
      %v11161 = vpop.f32.mrf.mxu0
      %v11162 = vadd.f32 %v10873, %v11161
      %v11163 = vpop.f32.mrf.mxu0
      %v11164 = vadd.f32 %v10875, %v11163
      %11165 = vmatmul.bf16.gmra.mxu0 %v9944
      %v11166 = vpop.f32.mrf.mxu0
      %v11167 = vadd.f32 %v10878, %v11166
      %v11168 = vpop.f32.mrf.mxu0
      %v11169 = vadd.f32 %v10880, %v11168
      %11170 = vmatmul.bf16.gmra.mxu0 %v9947
      %v11171 = vpop.f32.mrf.mxu0
      %v11172 = vadd.f32 %v10883, %v11171
      %v11173 = vpop.f32.mrf.mxu0
      %v11174 = vadd.f32 %v10885, %v11173
      %11175 = vmatmul.bf16.gmra.mxu0 %v9950
      %v11176 = vpop.f32.mrf.mxu0
      %v11177 = vadd.f32 %v10888, %v11176
      %v11178 = vpop.f32.mrf.mxu0
      %v11179 = vadd.f32 %v10890, %v11178
      %11180 = vmatmul.bf16.gmra.mxu0 %v9953
      %v11181 = vpop.f32.mrf.mxu0
      %v11182 = vadd.f32 %v10893, %v11181
      %v11183 = vpop.f32.mrf.mxu0
      %v11184 = vadd.f32 %v10895, %v11183
      %11185 = vmatmul.bf16.gmra.mxu0 %v9956
      %v11186 = vpop.f32.mrf.mxu0
      %v11187 = vadd.f32 %v10898, %v11186
      %v11188 = vpop.f32.mrf.mxu0
      %v11189 = vadd.f32 %v10900, %v11188
      %11190 = vmatmul.bf16.gmra.mxu0 %v9959
      %v11191 = vpop.f32.mrf.mxu0
      %v11192 = vadd.f32 %v10903, %v11191
      %v11193 = vpop.f32.mrf.mxu0
      %v11194 = vadd.f32 %v10905, %v11193
      %11195 = vmatmul.bf16.gmra.mxu0 %v9962
      %v11196 = vpop.f32.mrf.mxu0
      %v11197 = vadd.f32 %v10908, %v11196
      %v11198 = vpop.f32.mrf.mxu0
      %v11199 = vadd.f32 %v10910, %v11198
      %11200 = vmatmul.bf16.gmra.mxu0 %v9965
      %v11201 = vpop.f32.mrf.mxu0
      %v11202 = vadd.f32 %v10913, %v11201
      %v11203 = vpop.f32.mrf.mxu0
      %v11204 = vadd.f32 %v10915, %v11203
      %11205 = vmatmul.bf16.gmra.mxu0 %v9968
      %v11206 = vpop.f32.mrf.mxu0
      %v11207 = vadd.f32 %v10918, %v11206
      %v11208 = vpop.f32.mrf.mxu0
      %v11209 = vadd.f32 %v10920, %v11208
      %11210 = vmatmul.bf16.gmra.mxu0 %v9971
      %v11211 = vpop.f32.mrf.mxu0
      %v11212 = vadd.f32 %v10923, %v11211
      %v11213 = vpop.f32.mrf.mxu0
      %v11214 = vadd.f32 %v10925, %v11213
      %11215 = vmatmul.bf16.gmra.mxu0 %v9974
      %v11216 = vpop.f32.mrf.mxu0
      %v11217 = vadd.f32 %v10928, %v11216
      %v11218 = vpop.f32.mrf.mxu0
      %v11219 = vadd.f32 %v10930, %v11218
      %11220 = vmatmul.bf16.gmra.mxu0 %v9977
      %v11221 = vpop.f32.mrf.mxu0
      %v11222 = vadd.f32 %v10933, %v11221
      %v11223 = vpop.f32.mrf.mxu0
      %v11224 = vadd.f32 %v10935, %v11223
      %11225 = vmatmul.bf16.gmra.mxu0 %v9980
      %v11226 = vpop.f32.mrf.mxu0
      %v11227 = vadd.f32 %v10938, %v11226
      %v11228 = vpop.f32.mrf.mxu0
      %v11229 = vadd.f32 %v10940, %v11228
      %11230 = vmatmul.bf16.gmra.mxu0 %v9983
      %v11231 = vpop.f32.mrf.mxu0
      %v11232 = vadd.f32 %v10943, %v11231
      %v11233 = vpop.f32.mrf.mxu0
      %v11234 = vadd.f32 %v10945, %v11233
      %11235 = vmatmul.bf16.gmra.mxu0 %v9986
      %v11236 = vpop.f32.mrf.mxu0
      %v11237 = vadd.f32 %v10948, %v11236
      %v11238 = vpop.f32.mrf.mxu0
      %v11239 = vadd.f32 %v10950, %v11238
      %11240 = vmatmul.bf16.gmra.mxu0 %v9989
      %v11241 = vpop.f32.mrf.mxu0
      %v11242 = vadd.f32 %v10953, %v11241
      %v11243 = vpop.f32.mrf.mxu0
      %v11244 = vadd.f32 %v10955, %v11243
      %11245 = vmatmul.bf16.gmra.mxu0 %v9992
      %v11246 = vpop.f32.mrf.mxu0
      %v11247 = vadd.f32 %v10958, %v11246
      %v11248 = vpop.f32.mrf.mxu0
      %v11249 = vadd.f32 %v10960, %v11248
      %11250 = vmatmul.bf16.gmra.mxu0 %v9995
      %v11251 = vpop.f32.mrf.mxu0
      %v11252 = vadd.f32 %v10963, %v11251
      %v11253 = vpop.f32.mrf.mxu0
      %v11254 = vadd.f32 %v10965, %v11253
      %11255 = vmatmul.bf16.gmra.mxu0 %v9998
      %v11256 = vpop.f32.mrf.mxu0
      %v11257 = vadd.f32 %v10968, %v11256
      %v11258 = vpop.f32.mrf.mxu0
      %v11259 = vadd.f32 %v10970, %v11258
      %11260 = vmatmul.bf16.gmra.mxu0 %v10001
      %v11261 = vpop.f32.mrf.mxu0
      %v11262 = vadd.f32 %v10973, %v11261
      %v11263 = vpop.f32.mrf.mxu0
      %v11264 = vadd.f32 %v10975, %v11263
      %11265 = vmatmul.bf16.gmra.mxu0 %v10004
      %v11266 = vpop.f32.mrf.mxu0
      %v11267 = vadd.f32 %v10978, %v11266
      %v11268 = vpop.f32.mrf.mxu0
      %v11269 = vadd.f32 %v10980, %v11268
      %11270 = vmatmul.bf16.gmra.mxu0 %v10007
      %v11271 = vpop.f32.mrf.mxu0
      %v11272 = vadd.f32 %v10983, %v11271
      %v11273 = vpop.f32.mrf.mxu0
      %v11274 = vadd.f32 %v10985, %v11273
      %11275 = vmatmul.bf16.gmra.mxu0 %v10010
      %v11276 = vpop.f32.mrf.mxu0
      %v11277 = vadd.f32 %v10988, %v11276
      %v11278 = vpop.f32.mrf.mxu0
      %v11279 = vadd.f32 %v10990, %v11278
      %11280 = vmatmul.bf16.gmra.mxu0 %v10720
      %v11281 = vpop.f32.mrf.mxu0
      %v11282 = vadd.f32 %v10993, %v11281
      %v11283 = vpop.f32.mrf.mxu0
      %v11284 = vadd.f32 %v10995, %v11283
      %11285 = vmatmul.bf16.gmra.mxu0 %v10723
      %v11286 = vpop.f32.mrf.mxu0
      %v11287 = vadd.f32 %v10998, %v11286
      %v11288 = vpop.f32.mrf.mxu0
      %v11289 = vadd.f32 %v11000, %v11288
      %11290 = vmatmul.bf16.gmra.mxu0 %v10726
      %v11291 = vpop.f32.mrf.mxu0
      %v11292 = vadd.f32 %v11003, %v11291
      %v11293 = vpop.f32.mrf.mxu0
      %v11294 = vadd.f32 %v11005, %v11293
      %11295 = vmatmul.bf16.gmra.mxu0 %v10729
      %v11296 = vpop.f32.mrf.mxu0
      %v11297 = vadd.f32 %v11008, %v11296
      %v11298 = vpop.f32.mrf.mxu0
      %v11299 = vadd.f32 %v11010, %v11298
      %11300 = vmatmul.bf16.gmra.mxu0 %v10732
      %v11301 = vpop.f32.mrf.mxu0
      %v11302 = vadd.f32 %v11013, %v11301
      %v11303 = vpop.f32.mrf.mxu0
      %v11304 = vadd.f32 %v11015, %v11303
      %11305 = vmatmul.bf16.gmra.mxu0 %v10735
      %v11306 = vpop.f32.mrf.mxu0
      %v11307 = vadd.f32 %v11018, %v11306
      %v11308 = vpop.f32.mrf.mxu0
      %v11309 = vadd.f32 %v11020, %v11308
      %11310 = vmatmul.bf16.gmra.mxu0 %v10738
      %v11311 = vpop.f32.mrf.mxu0
      %v11312 = vadd.f32 %v11023, %v11311
      %v11313 = vpop.f32.mrf.mxu0
      %v11314 = vadd.f32 %v11025, %v11313
      %11315 = vmatmul.bf16.gmra.mxu0 %v10741
      %v11316 = vpop.f32.mrf.mxu0
      %v11317 = vadd.f32 %v11028, %v11316
      %v11318 = vpop.f32.mrf.mxu0
      %v11319 = vadd.f32 %v11030, %v11318
      %11320 = vdwg.mxu0
      %v11321 = vadd.f32 %v10311, %v11042
      %v11322 = vadd.f32 %v10313, %v11044
      %v11323 = vadd.f32 %v10316, %v11047
      %v11324 = vadd.f32 %v10318, %v11049
      %v11325 = vadd.f32 %v10321, %v11052
      %v11326 = vadd.f32 %v10323, %v11054
      %v11327 = vadd.f32 %v10326, %v11057
      %v11328 = vadd.f32 %v10328, %v11059
      %v11329 = vadd.f32 %v10331, %v11062
      %v11330 = vadd.f32 %v10333, %v11064
      %v11331 = vadd.f32 %v10336, %v11067
      %v11332 = vadd.f32 %v10338, %v11069
      %v11333 = vadd.f32 %v10341, %v11072
      %v11334 = vadd.f32 %v10343, %v11074
      %v11335 = vadd.f32 %v10346, %v11077
      %v11336 = vadd.f32 %v10348, %v11079
      %v11337 = vadd.f32 %v10351, %v11082
      %v11338 = vadd.f32 %v10353, %v11084
      %v11339 = vadd.f32 %v10356, %v11087
      %v11340 = vadd.f32 %v10358, %v11089
      %v11341 = vadd.f32 %v10361, %v11092
      %v11342 = vadd.f32 %v10363, %v11094
      %v11343 = vadd.f32 %v10366, %v11097
      %v11344 = vadd.f32 %v10368, %v11099
      %v11345 = vadd.f32 %v10371, %v11102
      %v11346 = vadd.f32 %v10373, %v11104
      %v11347 = vadd.f32 %v10376, %v11107
      %v11348 = vadd.f32 %v10378, %v11109
      %v11349 = vadd.f32 %v10381, %v11112
      %v11350 = vadd.f32 %v10383, %v11114
      %v11351 = vadd.f32 %v10386, %v11117
      %v11352 = vadd.f32 %v10388, %v11119
      %v11353 = vadd.f32 %v10391, %v11122
      %v11354 = vadd.f32 %v10393, %v11124
      %v11355 = vadd.f32 %v10396, %v11127
      %v11356 = vadd.f32 %v10398, %v11129
      %v11357 = vadd.f32 %v10401, %v11132
      %v11358 = vadd.f32 %v10403, %v11134
      %v11359 = vadd.f32 %v10406, %v11137
      %v11360 = vadd.f32 %v10408, %v11139
      %v11361 = vadd.f32 %v10411, %v11142
      %v11362 = vadd.f32 %v10413, %v11144
      %v11363 = vadd.f32 %v10416, %v11147
      %v11364 = vadd.f32 %v10418, %v11149
      %v11365 = vadd.f32 %v10421, %v11152
      %v11366 = vadd.f32 %v10423, %v11154
      %v11367 = vadd.f32 %v10426, %v11157
      %v11368 = vadd.f32 %v10428, %v11159
      %v11369 = vadd.f32 %v10431, %v11162
      %v11370 = vadd.f32 %v10433, %v11164
      %v11371 = vadd.f32 %v10436, %v11167
      %v11372 = vadd.f32 %v10438, %v11169
      %v11373 = vadd.f32 %v10441, %v11172
      %v11374 = vadd.f32 %v10443, %v11174
      %v11375 = vadd.f32 %v10446, %v11177
      %v11376 = vadd.f32 %v10448, %v11179
      %v11377 = vadd.f32 %v10451, %v11182
      %v11378 = vadd.f32 %v10453, %v11184
      %v11379 = vadd.f32 %v10456, %v11187
      %v11380 = vadd.f32 %v10458, %v11189
      %v11381 = vadd.f32 %v10461, %v11192
      %v11382 = vadd.f32 %v10463, %v11194
      %v11383 = vadd.f32 %v10466, %v11197
      %v11384 = vadd.f32 %v10468, %v11199
      %v11385 = vadd.f32 %v10471, %v11202
      %v11386 = vadd.f32 %v10473, %v11204
      %v11387 = vadd.f32 %v10476, %v11207
      %v11388 = vadd.f32 %v10478, %v11209
      %v11389 = vadd.f32 %v10481, %v11212
      %v11390 = vadd.f32 %v10483, %v11214
      %v11391 = vadd.f32 %v10486, %v11217
      %v11392 = vadd.f32 %v10488, %v11219
      %v11393 = vadd.f32 %v10491, %v11222
      %v11394 = vadd.f32 %v10493, %v11224
      %v11395 = vadd.f32 %v10496, %v11227
      %v11396 = vadd.f32 %v10498, %v11229
      %v11397 = vadd.f32 %v10501, %v11232
      %v11398 = vadd.f32 %v10503, %v11234
      %v11399 = vadd.f32 %v10506, %v11237
      %v11400 = vadd.f32 %v10508, %v11239
      %v11401 = vadd.f32 %v10511, %v11242
      %v11402 = vadd.f32 %v10513, %v11244
      %v11403 = vadd.f32 %v10516, %v11247
      %v11404 = vadd.f32 %v10518, %v11249
      %v11405 = vadd.f32 %v10521, %v11252
      %v11406 = vadd.f32 %v10523, %v11254
      %v11407 = vadd.f32 %v10526, %v11257
      %v11408 = vadd.f32 %v10528, %v11259
      %v11409 = vadd.f32 %v10531, %v11262
      %v11410 = vadd.f32 %v10533, %v11264
      %v11411 = vadd.f32 %v10536, %v11267
      %v11412 = vadd.f32 %v10538, %v11269
      %v11413 = vadd.f32 %v10541, %v11272
      %v11414 = vadd.f32 %v10543, %v11274
      %v11415 = vadd.f32 %v10546, %v11277
      %v11416 = vadd.f32 %v10548, %v11279
      %v11417 = vadd.f32 %v10551, %v11282
      %v11418 = vadd.f32 %v10553, %v11284
      %v11419 = vadd.f32 %v10556, %v11287
      %v11420 = vadd.f32 %v10558, %v11289
      %v11421 = vadd.f32 %v10561, %v11292
      %v11422 = vadd.f32 %v10563, %v11294
      %v11423 = vadd.f32 %v10566, %v11297
      %v11424 = vadd.f32 %v10568, %v11299
      %v11425 = vadd.f32 %v10571, %v11302
      %v11426 = vadd.f32 %v10573, %v11304
      %v11427 = vadd.f32 %v10576, %v11307
      %v11428 = vadd.f32 %v10578, %v11309
      %v11429 = vadd.f32 %v10581, %v11312
      %v11430 = vadd.f32 %v10583, %v11314
      %v11431 = vadd.f32 %v10586, %v11317
      %v11432 = vadd.f32 %v10588, %v11319
      %v11433 = vld [vmem:[%s5] sm:$0x1]
      %v11435 = vperm.slane %v11433, 0
      %v11437 = vadd.f32 %v11321, %v11435
      %v11438 = vadd.f32 %v11322, %v11435
      %v11439 = vadd.f32 %v11323, %v11435
      %v11440 = vadd.f32 %v11324, %v11435
      %v11441 = vadd.f32 %v11325, %v11435
      %v11442 = vadd.f32 %v11326, %v11435
      %v11443 = vadd.f32 %v11327, %v11435
      %v11444 = vadd.f32 %v11328, %v11435
      %v11445 = vadd.f32 %v11329, %v11435
      %v11446 = vadd.f32 %v11330, %v11435
      %v11447 = vadd.f32 %v11331, %v11435
      %v11448 = vadd.f32 %v11332, %v11435
      %v11449 = vadd.f32 %v11333, %v11435
      %v11450 = vadd.f32 %v11334, %v11435
      %v11451 = vadd.f32 %v11335, %v11435
      %v11452 = vadd.f32 %v11336, %v11435
      %v11453 = vadd.f32 %v11337, %v11435
      %v11454 = vadd.f32 %v11338, %v11435
      %v11455 = vadd.f32 %v11339, %v11435
      %v11456 = vadd.f32 %v11340, %v11435
      %v11457 = vadd.f32 %v11341, %v11435
      %v11458 = vadd.f32 %v11342, %v11435
      %v11459 = vadd.f32 %v11343, %v11435
      %v11460 = vadd.f32 %v11344, %v11435
      %v11461 = vadd.f32 %v11345, %v11435
      %v11462 = vadd.f32 %v11346, %v11435
      %v11463 = vadd.f32 %v11347, %v11435
      %v11464 = vadd.f32 %v11348, %v11435
      %v11465 = vadd.f32 %v11349, %v11435
      %v11466 = vadd.f32 %v11350, %v11435
      %v11467 = vadd.f32 %v11351, %v11435
      %v11468 = vadd.f32 %v11352, %v11435
      %v11469 = vadd.f32 %v11353, %v11435
      %v11470 = vadd.f32 %v11354, %v11435
      %v11471 = vadd.f32 %v11355, %v11435
      %v11472 = vadd.f32 %v11356, %v11435
      %v11473 = vadd.f32 %v11357, %v11435
      %v11474 = vadd.f32 %v11358, %v11435
      %v11475 = vadd.f32 %v11359, %v11435
      %v11476 = vadd.f32 %v11360, %v11435
      %v11477 = vadd.f32 %v11361, %v11435
      %v11478 = vadd.f32 %v11362, %v11435
      %v11479 = vadd.f32 %v11363, %v11435
      %v11480 = vadd.f32 %v11364, %v11435
      %v11481 = vadd.f32 %v11365, %v11435
      %v11482 = vadd.f32 %v11366, %v11435
      %v11483 = vadd.f32 %v11367, %v11435
      %v11484 = vadd.f32 %v11368, %v11435
      %v11485 = vadd.f32 %v11369, %v11435
      %v11486 = vadd.f32 %v11370, %v11435
      %v11487 = vadd.f32 %v11371, %v11435
      %v11488 = vadd.f32 %v11372, %v11435
      %v11489 = vadd.f32 %v11373, %v11435
      %v11490 = vadd.f32 %v11374, %v11435
      %v11491 = vadd.f32 %v11375, %v11435
      %v11492 = vadd.f32 %v11376, %v11435
      %v11493 = vadd.f32 %v11377, %v11435
      %v11494 = vadd.f32 %v11378, %v11435
      %v11495 = vadd.f32 %v11379, %v11435
      %v11496 = vadd.f32 %v11380, %v11435
      %v11497 = vadd.f32 %v11381, %v11435
      %v11498 = vadd.f32 %v11382, %v11435
      %v11499 = vadd.f32 %v11383, %v11435
      %v11500 = vadd.f32 %v11384, %v11435
      %v11501 = vadd.f32 %v11385, %v11435
      %v11502 = vadd.f32 %v11386, %v11435
      %v11503 = vadd.f32 %v11387, %v11435
      %v11504 = vadd.f32 %v11388, %v11435
      %v11505 = vadd.f32 %v11389, %v11435
      %v11506 = vadd.f32 %v11390, %v11435
      %v11507 = vadd.f32 %v11391, %v11435
      %v11508 = vadd.f32 %v11392, %v11435
      %v11509 = vadd.f32 %v11393, %v11435
      %v11510 = vadd.f32 %v11394, %v11435
      %v11511 = vadd.f32 %v11395, %v11435
      %v11512 = vadd.f32 %v11396, %v11435
      %v11513 = vadd.f32 %v11397, %v11435
      %v11514 = vadd.f32 %v11398, %v11435
      %v11515 = vadd.f32 %v11399, %v11435
      %v11516 = vadd.f32 %v11400, %v11435
      %v11517 = vadd.f32 %v11401, %v11435
      %v11518 = vadd.f32 %v11402, %v11435
      %v11519 = vadd.f32 %v11403, %v11435
      %v11520 = vadd.f32 %v11404, %v11435
      %v11521 = vadd.f32 %v11405, %v11435
      %v11522 = vadd.f32 %v11406, %v11435
      %v11523 = vadd.f32 %v11407, %v11435
      %v11524 = vadd.f32 %v11408, %v11435
      %v11525 = vadd.f32 %v11409, %v11435
      %v11526 = vadd.f32 %v11410, %v11435
      %v11527 = vadd.f32 %v11411, %v11435
      %v11528 = vadd.f32 %v11412, %v11435
      %v11529 = vadd.f32 %v11413, %v11435
      %v11530 = vadd.f32 %v11414, %v11435
      %v11531 = vadd.f32 %v11415, %v11435
      %v11532 = vadd.f32 %v11416, %v11435
      %v11533 = vadd.f32 %v11417, %v11435
      %v11534 = vadd.f32 %v11418, %v11435
      %v11535 = vadd.f32 %v11419, %v11435
      %v11536 = vadd.f32 %v11420, %v11435
      %v11537 = vadd.f32 %v11421, %v11435
      %v11538 = vadd.f32 %v11422, %v11435
      %v11539 = vadd.f32 %v11423, %v11435
      %v11540 = vadd.f32 %v11424, %v11435
      %v11541 = vadd.f32 %v11425, %v11435
      %v11542 = vadd.f32 %v11426, %v11435
      %v11543 = vadd.f32 %v11427, %v11435
      %v11544 = vadd.f32 %v11428, %v11435
      %v11545 = vadd.f32 %v11429, %v11435
      %v11546 = vadd.f32 %v11430, %v11435
      %v11547 = vadd.f32 %v11431, %v11435
      %v11548 = vadd.f32 %v11432, %v11435
      %v11549 = vmax.f32 %v11437, 0.0
      %v11550 = vmax.f32 %v11438, 0.0
      %v11551 = vmax.f32 %v11439, 0.0
      %v11552 = vmax.f32 %v11440, 0.0
      %v11553 = vmax.f32 %v11441, 0.0
      %v11554 = vmax.f32 %v11442, 0.0
      %v11555 = vmax.f32 %v11443, 0.0
      %v11556 = vmax.f32 %v11444, 0.0
      %v11557 = vmax.f32 %v11445, 0.0
      %v11558 = vmax.f32 %v11446, 0.0
      %v11559 = vmax.f32 %v11447, 0.0
      %v11560 = vmax.f32 %v11448, 0.0
      %v11561 = vmax.f32 %v11449, 0.0
      %v11562 = vmax.f32 %v11450, 0.0
      %v11563 = vmax.f32 %v11451, 0.0
      %v11564 = vmax.f32 %v11452, 0.0
      %v11565 = vmax.f32 %v11453, 0.0
      %v11566 = vmax.f32 %v11454, 0.0
      %v11567 = vmax.f32 %v11455, 0.0
      %v11568 = vmax.f32 %v11456, 0.0
      %v11569 = vmax.f32 %v11457, 0.0
      %v11570 = vmax.f32 %v11458, 0.0
      %v11571 = vmax.f32 %v11459, 0.0
      %v11572 = vmax.f32 %v11460, 0.0
      %v11573 = vmax.f32 %v11461, 0.0
      %v11574 = vmax.f32 %v11462, 0.0
      %v11575 = vmax.f32 %v11463, 0.0
      %v11576 = vmax.f32 %v11464, 0.0
      %v11577 = vmax.f32 %v11465, 0.0
      %v11578 = vmax.f32 %v11466, 0.0
      %v11579 = vmax.f32 %v11467, 0.0
      %v11580 = vmax.f32 %v11468, 0.0
      %v11581 = vmax.f32 %v11469, 0.0
      %v11582 = vmax.f32 %v11470, 0.0
      %v11583 = vmax.f32 %v11471, 0.0
      %v11584 = vmax.f32 %v11472, 0.0
      %v11585 = vmax.f32 %v11473, 0.0
      %v11586 = vmax.f32 %v11474, 0.0
      %v11587 = vmax.f32 %v11475, 0.0
      %v11588 = vmax.f32 %v11476, 0.0
      %v11589 = vmax.f32 %v11477, 0.0
      %v11590 = vmax.f32 %v11478, 0.0
      %v11591 = vmax.f32 %v11479, 0.0
      %v11592 = vmax.f32 %v11480, 0.0
      %v11593 = vmax.f32 %v11481, 0.0
      %v11594 = vmax.f32 %v11482, 0.0
      %v11595 = vmax.f32 %v11483, 0.0
      %v11596 = vmax.f32 %v11484, 0.0
      %v11597 = vmax.f32 %v11485, 0.0
      %v11598 = vmax.f32 %v11486, 0.0
      %v11599 = vmax.f32 %v11487, 0.0
      %v11600 = vmax.f32 %v11488, 0.0
      %v11601 = vmax.f32 %v11489, 0.0
      %v11602 = vmax.f32 %v11490, 0.0
      %v11603 = vmax.f32 %v11491, 0.0
      %v11604 = vmax.f32 %v11492, 0.0
      %v11605 = vmax.f32 %v11493, 0.0
      %v11606 = vmax.f32 %v11494, 0.0
      %v11607 = vmax.f32 %v11495, 0.0
      %v11608 = vmax.f32 %v11496, 0.0
      %v11609 = vmax.f32 %v11497, 0.0
      %v11610 = vmax.f32 %v11498, 0.0
      %v11611 = vmax.f32 %v11499, 0.0
      %v11612 = vmax.f32 %v11500, 0.0
      %v11613 = vmax.f32 %v11501, 0.0
      %v11614 = vmax.f32 %v11502, 0.0
      %v11615 = vmax.f32 %v11503, 0.0
      %v11616 = vmax.f32 %v11504, 0.0
      %v11617 = vmax.f32 %v11505, 0.0
      %v11618 = vmax.f32 %v11506, 0.0
      %v11619 = vmax.f32 %v11507, 0.0
      %v11620 = vmax.f32 %v11508, 0.0
      %v11621 = vmax.f32 %v11509, 0.0
      %v11622 = vmax.f32 %v11510, 0.0
      %v11623 = vmax.f32 %v11511, 0.0
      %v11624 = vmax.f32 %v11512, 0.0
      %v11625 = vmax.f32 %v11513, 0.0
      %v11626 = vmax.f32 %v11514, 0.0
      %v11627 = vmax.f32 %v11515, 0.0
      %v11628 = vmax.f32 %v11516, 0.0
      %v11629 = vmax.f32 %v11517, 0.0
      %v11630 = vmax.f32 %v11518, 0.0
      %v11631 = vmax.f32 %v11519, 0.0
      %v11632 = vmax.f32 %v11520, 0.0
      %v11633 = vmax.f32 %v11521, 0.0
      %v11634 = vmax.f32 %v11522, 0.0
      %v11635 = vmax.f32 %v11523, 0.0
      %v11636 = vmax.f32 %v11524, 0.0
      %v11637 = vmax.f32 %v11525, 0.0
      %v11638 = vmax.f32 %v11526, 0.0
      %v11639 = vmax.f32 %v11527, 0.0
      %v11640 = vmax.f32 %v11528, 0.0
      %v11641 = vmax.f32 %v11529, 0.0
      %v11642 = vmax.f32 %v11530, 0.0
      %v11643 = vmax.f32 %v11531, 0.0
      %v11644 = vmax.f32 %v11532, 0.0
      %v11645 = vmax.f32 %v11533, 0.0
      %v11646 = vmax.f32 %v11534, 0.0
      %v11647 = vmax.f32 %v11535, 0.0
      %v11648 = vmax.f32 %v11536, 0.0
      %v11649 = vmax.f32 %v11537, 0.0
      %v11650 = vmax.f32 %v11538, 0.0
      %v11651 = vmax.f32 %v11539, 0.0
      %v11652 = vmax.f32 %v11540, 0.0
      %v11653 = vmax.f32 %v11541, 0.0
      %v11654 = vmax.f32 %v11542, 0.0
      %v11655 = vmax.f32 %v11543, 0.0
      %v11656 = vmax.f32 %v11544, 0.0
      %v11657 = vmax.f32 %v11545, 0.0
      %v11658 = vmax.f32 %v11546, 0.0
      %v11659 = vmax.f32 %v11547, 0.0
      %v11660 = vmax.f32 %v11548, 0.0
      %v11661 = vpack.c.bf16 %v11566, %v11565
      %v11662 = vpack.c.bf16 %v11568, %v11567
      %v11663 = vpack.c.bf16 %v11570, %v11569
      %v11664 = vpack.c.bf16 %v11572, %v11571
      %v11665 = vpack.c.bf16 %v11574, %v11573
      %v11666 = vpack.c.bf16 %v11576, %v11575
      %v11667 = vpack.c.bf16 %v11578, %v11577
      %v11668 = vpack.c.bf16 %v11580, %v11579
      %v11669 = vpack.c.bf16 %v11598, %v11597
      %v11670 = vpack.c.bf16 %v11600, %v11599
      %v11671 = vpack.c.bf16 %v11602, %v11601
      %v11672 = vpack.c.bf16 %v11604, %v11603
      %v11673 = vpack.c.bf16 %v11606, %v11605
      %v11674 = vpack.c.bf16 %v11608, %v11607
      %v11675 = vpack.c.bf16 %v11610, %v11609
      %v11676 = vpack.c.bf16 %v11612, %v11611
      %v11677 = vpack.c.bf16 %v11630, %v11629
      %v11678 = vpack.c.bf16 %v11632, %v11631
      %v11679 = vpack.c.bf16 %v11634, %v11633
      %v11680 = vpack.c.bf16 %v11636, %v11635
      %v11681 = vpack.c.bf16 %v11638, %v11637
      %v11682 = vpack.c.bf16 %v11640, %v11639
      %v11683 = vpack.c.bf16 %v11642, %v11641
      %v11684 = vpack.c.bf16 %v11644, %v11643
      %v11685 = vld [vmem:[%s3] sm:$0xf]
      %v11686 = vld [vmem:[%s3 + $0x4] sm:$0xf]
      %v11687 = vld [vmem:[%s3 + $0x8] sm:$0xf]
      %v11688 = vld [vmem:[%s3 + $0xc] sm:$0xf]
      %v11689 = vld [vmem:[%s3 + $0x10] sm:$0xf]
      %v11690 = vld [vmem:[%s3 + $0x14] sm:$0xf]
      %v11691 = vld [vmem:[%s3 + $0x18] sm:$0xf]
      %v11692 = vld [vmem:[%s3 + $0x1c] sm:$0xf]
      %v11693 = vld [vmem:[%s3 + $0x20] sm:$0xf]
      %v11694 = vld [vmem:[%s3 + $0x24] sm:$0xf]
      %v11695 = vld [vmem:[%s3 + $0x28] sm:$0xf]
      %v11696 = vld [vmem:[%s3 + $0x2c] sm:$0xf]
      %v11697 = vld [vmem:[%s3 + $0x30] sm:$0xf]
      %v11698 = vld [vmem:[%s3 + $0x34] sm:$0xf]
      %v11699 = vpack.c.bf16 %v11550, %v11549
      %v11700 = vpack.c.bf16 %v11552, %v11551
      %v11701 = vpack.c.bf16 %v11554, %v11553
      %v11702 = vpack.c.bf16 %v11556, %v11555
      %v11703 = vpack.c.bf16 %v11558, %v11557
      %v11704 = vpack.c.bf16 %v11560, %v11559
      %v11705 = vpack.c.bf16 %v11562, %v11561
      %v11706 = vpack.c.bf16 %v11564, %v11563
      %v11707 = vpack.c.bf16 %v11582, %v11581
      %v11708 = vpack.c.bf16 %v11584, %v11583
      %v11709 = vpack.c.bf16 %v11586, %v11585
      %v11710 = vpack.c.bf16 %v11588, %v11587
      %v11711 = vpack.c.bf16 %v11590, %v11589
      %v11712 = vpack.c.bf16 %v11592, %v11591
      %v11713 = vpack.c.bf16 %v11594, %v11593
      %v11714 = vpack.c.bf16 %v11596, %v11595
      %v11715 = vpack.c.bf16 %v11614, %v11613
      %v11716 = vpack.c.bf16 %v11616, %v11615
      %v11717 = vpack.c.bf16 %v11618, %v11617
      %v11718 = vpack.c.bf16 %v11620, %v11619
      %v11719 = vpack.c.bf16 %v11622, %v11621
      %v11720 = vpack.c.bf16 %v11624, %v11623
      %v11721 = vpack.c.bf16 %v11626, %v11625
      %v11722 = vpack.c.bf16 %v11628, %v11627
      %v11723 = vpack.c.bf16 %v11646, %v11645
      %v11724 = vpack.c.bf16 %v11648, %v11647
      %v11725 = vpack.c.bf16 %v11650, %v11649
      %v11726 = vpack.c.bf16 %v11652, %v11651
      %v11727 = vpack.c.bf16 %v11654, %v11653
      %v11728 = vpack.c.bf16 %v11656, %v11655
      %v11729 = vpack.c.bf16 %v11658, %v11657
      %v11730 = vpack.c.bf16 %v11660, %v11659
      %s11731 = scalar_lea.vmem %s3, 56
      %v11732 = vld [vmem:[%s11731] sm:$0xf]
      %v11733 = vld [vmem:[%s11731 + $0x4] sm:$0xf]
      %v11734 = vld [vmem:[%s11731 + $0x8] sm:$0xf]
      %v11735 = vld [vmem:[%s11731 + $0xc] sm:$0xf]
      %v11736 = vld [vmem:[%s11731 + $0x10] sm:$0xf]
      %v11737 = vld [vmem:[%s11731 + $0x14] sm:$0xf]
      %v11738 = vld [vmem:[%s11731 + $0x18] sm:$0xf]
      %v11739 = vld [vmem:[%s11731 + $0x1c] sm:$0xf]
      %v11740 = vld [vmem:[%s11731 + $0x20] sm:$0xf]
      %v11741 = vld [vmem:[%s11731 + $0x24] sm:$0xf]
      %v11742 = vld [vmem:[%s11731 + $0x28] sm:$0xf]
      %v11743 = vld [vmem:[%s11731 + $0x2c] sm:$0xf]
      %v11744 = vld [vmem:[%s11731 + $0x30] sm:$0xf]
      %v11745 = vld [vmem:[%s11731 + $0x34] sm:$0xf]
      %v11760 = vunpack.c.l.b16 %v11732
      %v11761 = vunpack.c.l.b16 %v11733
      %v11762 = vunpack.c.l.b16 %v11734
      %v11763 = vunpack.c.l.b16 %v11735
      %v11764 = vunpack.c.l.b16 %v11736
      %v11765 = vunpack.c.l.b16 %v11737
      %v11766 = vunpack.c.l.b16 %v11738
      %v11767 = vunpack.c.l.b16 %v11739
      %v11768 = vunpack.c.l.b16 %v11740
      %v11769 = vunpack.c.l.b16 %v11741
      %v11770 = vunpack.c.l.b16 %v11742
      %v11771 = vunpack.c.l.b16 %v11743
      %v11772 = vunpack.c.l.b16 %v11744
      %v11773 = vunpack.c.l.b16 %v11745
      %v11774 = vpack.c.b16 %v11761, %v11760
      %v11775 = vpack.c.b16 %v11763, %v11762
      %v11776 = vpack.c.b16 %v11765, %v11764
      %v11777 = vpack.c.b16 %v11767, %v11766
      %v11778 = vpack.c.b16 %v11769, %v11768
      %v11779 = vpack.c.b16 %v11771, %v11770
      %v11780 = vpack.c.b16 %v11773, %v11772
      %vm11788 = vcmask 916480
      %v11790 = vsel %vm11788, %v11699, 0
      %v11793 = vsel %vm11788, %v11700, 0
      %v11796 = vsel %vm11788, %v11701, 0
      %v11799 = vsel %vm11788, %v11702, 0
      %v11802 = vsel %vm11788, %v11703, 0
      %v11805 = vsel %vm11788, %v11704, 0
      %v11808 = vsel %vm11788, %v11705, 0
      %v11811 = vsel %vm11788, %v11706, 0
      %v11814 = vsel %vm11788, %v11707, 0
      %v11817 = vsel %vm11788, %v11708, 0
      %v11820 = vsel %vm11788, %v11709, 0
      %v11823 = vsel %vm11788, %v11710, 0
      %v11826 = vsel %vm11788, %v11711, 0
      %v11829 = vsel %vm11788, %v11712, 0
      %v11832 = vsel %vm11788, %v11713, 0
      %v11835 = vsel %vm11788, %v11714, 0
      %v11838 = vsel %vm11788, %v11715, 0
      %v11841 = vsel %vm11788, %v11716, 0
      %v11844 = vsel %vm11788, %v11717, 0
      %v11847 = vsel %vm11788, %v11718, 0
      %v11850 = vsel %vm11788, %v11719, 0
      %v11853 = vsel %vm11788, %v11720, 0
      %v11856 = vsel %vm11788, %v11721, 0
      %v11859 = vsel %vm11788, %v11722, 0
      %v11862 = vsel %vm11788, %v11723, 0
      %v11865 = vsel %vm11788, %v11724, 0
      %v11868 = vsel %vm11788, %v11725, 0
      %v11871 = vsel %vm11788, %v11726, 0
      %v11874 = vsel %vm11788, %v11727, 0
      %v11877 = vsel %vm11788, %v11728, 0
      %v11880 = vsel %vm11788, %v11729, 0
      %v11883 = vsel %vm11788, %v11730, 0
      %11885 = vmatpush.bf16.msra.mxu0 0
      %11886 = vmatpush.bf16.msra.mxu0 %v11780
      %11887 = vmatpush.bf16.msra.mxu0 %v11779
      %11888 = vmatpush.bf16.msra.mxu0 %v11778
      %11889 = vmatpush.bf16.msra.mxu0 %v11777
      %11890 = vmatpush.bf16.msra.mxu0 %v11776
      %11891 = vmatpush.bf16.msra.mxu0 %v11775
      %11892 = vmatpush.bf16.msra.mxu0 %v11774
      %11893 = vmatmul.bf16.gmra.mxu0 %v11790
      %v11894 = vpop.f32.mrf.mxu0
      %v11895 = vadd.f32 0.0, %v11894
      %v11896 = vpop.f32.mrf.mxu0
      %v11897 = vadd.f32 0.0, %v11896
      %11898 = vmatmul.bf16.gmra.mxu0 %v11793
      %v11899 = vpop.f32.mrf.mxu0
      %v11900 = vadd.f32 0.0, %v11899
      %v11901 = vpop.f32.mrf.mxu0
      %v11902 = vadd.f32 0.0, %v11901
      %11903 = vmatmul.bf16.gmra.mxu0 %v11796
      %v11904 = vpop.f32.mrf.mxu0
      %v11905 = vadd.f32 0.0, %v11904
      %v11906 = vpop.f32.mrf.mxu0
      %v11907 = vadd.f32 0.0, %v11906
      %11908 = vmatmul.bf16.gmra.mxu0 %v11799
      %v11909 = vpop.f32.mrf.mxu0
      %v11910 = vadd.f32 0.0, %v11909
      %v11911 = vpop.f32.mrf.mxu0
      %v11912 = vadd.f32 0.0, %v11911
      %11913 = vmatmul.bf16.gmra.mxu0 %v11802
      %v11914 = vpop.f32.mrf.mxu0
      %v11915 = vadd.f32 0.0, %v11914
      %v11916 = vpop.f32.mrf.mxu0
      %v11917 = vadd.f32 0.0, %v11916
      %11918 = vmatmul.bf16.gmra.mxu0 %v11805
      %v11919 = vpop.f32.mrf.mxu0
      %v11920 = vadd.f32 0.0, %v11919
      %v11921 = vpop.f32.mrf.mxu0
      %v11922 = vadd.f32 0.0, %v11921
      %11923 = vmatmul.bf16.gmra.mxu0 %v11808
      %v11924 = vpop.f32.mrf.mxu0
      %v11925 = vadd.f32 0.0, %v11924
      %v11926 = vpop.f32.mrf.mxu0
      %v11927 = vadd.f32 0.0, %v11926
      %11928 = vmatmul.bf16.gmra.mxu0 %v11811
      %v11929 = vpop.f32.mrf.mxu0
      %v11930 = vadd.f32 0.0, %v11929
      %v11931 = vpop.f32.mrf.mxu0
      %v11932 = vadd.f32 0.0, %v11931
      %11933 = vmatmul.bf16.gmra.mxu0 %v11814
      %v11934 = vpop.f32.mrf.mxu0
      %v11935 = vadd.f32 0.0, %v11934
      %v11936 = vpop.f32.mrf.mxu0
      %v11937 = vadd.f32 0.0, %v11936
      %11938 = vmatmul.bf16.gmra.mxu0 %v11817
      %v11939 = vpop.f32.mrf.mxu0
      %v11940 = vadd.f32 0.0, %v11939
      %v11941 = vpop.f32.mrf.mxu0
      %v11942 = vadd.f32 0.0, %v11941
      %11943 = vmatmul.bf16.gmra.mxu0 %v11820
      %v11944 = vpop.f32.mrf.mxu0
      %v11945 = vadd.f32 0.0, %v11944
      %v11946 = vpop.f32.mrf.mxu0
      %v11947 = vadd.f32 0.0, %v11946
      %11948 = vmatmul.bf16.gmra.mxu0 %v11823
      %v11949 = vpop.f32.mrf.mxu0
      %v11950 = vadd.f32 0.0, %v11949
      %v11951 = vpop.f32.mrf.mxu0
      %v11952 = vadd.f32 0.0, %v11951
      %11953 = vmatmul.bf16.gmra.mxu0 %v11826
      %v11954 = vpop.f32.mrf.mxu0
      %v11955 = vadd.f32 0.0, %v11954
      %v11956 = vpop.f32.mrf.mxu0
      %v11957 = vadd.f32 0.0, %v11956
      %11958 = vmatmul.bf16.gmra.mxu0 %v11829
      %v11959 = vpop.f32.mrf.mxu0
      %v11960 = vadd.f32 0.0, %v11959
      %v11961 = vpop.f32.mrf.mxu0
      %v11962 = vadd.f32 0.0, %v11961
      %11963 = vmatmul.bf16.gmra.mxu0 %v11832
      %v11964 = vpop.f32.mrf.mxu0
      %v11965 = vadd.f32 0.0, %v11964
      %v11966 = vpop.f32.mrf.mxu0
      %v11967 = vadd.f32 0.0, %v11966
      %11968 = vmatmul.bf16.gmra.mxu0 %v11835
      %v11969 = vpop.f32.mrf.mxu0
      %v11970 = vadd.f32 0.0, %v11969
      %v11971 = vpop.f32.mrf.mxu0
      %v11972 = vadd.f32 0.0, %v11971
      %11973 = vmatmul.bf16.gmra.mxu0 %v11838
      %v11974 = vpop.f32.mrf.mxu0
      %v11975 = vadd.f32 0.0, %v11974
      %v11976 = vpop.f32.mrf.mxu0
      %v11977 = vadd.f32 0.0, %v11976
      %11978 = vmatmul.bf16.gmra.mxu0 %v11841
      %v11979 = vpop.f32.mrf.mxu0
      %v11980 = vadd.f32 0.0, %v11979
      %v11981 = vpop.f32.mrf.mxu0
      %v11982 = vadd.f32 0.0, %v11981
      %11983 = vmatmul.bf16.gmra.mxu0 %v11844
      %v11984 = vpop.f32.mrf.mxu0
      %v11985 = vadd.f32 0.0, %v11984
      %v11986 = vpop.f32.mrf.mxu0
      %v11987 = vadd.f32 0.0, %v11986
      %11988 = vmatmul.bf16.gmra.mxu0 %v11847
      %v11989 = vpop.f32.mrf.mxu0
      %v11990 = vadd.f32 0.0, %v11989
      %v11991 = vpop.f32.mrf.mxu0
      %v11992 = vadd.f32 0.0, %v11991
      %11993 = vmatmul.bf16.gmra.mxu0 %v11850
      %v11994 = vpop.f32.mrf.mxu0
      %v11995 = vadd.f32 0.0, %v11994
      %v11996 = vpop.f32.mrf.mxu0
      %v11997 = vadd.f32 0.0, %v11996
      %11998 = vmatmul.bf16.gmra.mxu0 %v11853
      %v11999 = vpop.f32.mrf.mxu0
      %v12000 = vadd.f32 0.0, %v11999
      %v12001 = vpop.f32.mrf.mxu0
      %v12002 = vadd.f32 0.0, %v12001
      %12003 = vmatmul.bf16.gmra.mxu0 %v11856
      %v12004 = vpop.f32.mrf.mxu0
      %v12005 = vadd.f32 0.0, %v12004
      %v12006 = vpop.f32.mrf.mxu0
      %v12007 = vadd.f32 0.0, %v12006
      %12008 = vmatmul.bf16.gmra.mxu0 %v11859
      %v12009 = vpop.f32.mrf.mxu0
      %v12010 = vadd.f32 0.0, %v12009
      %v12011 = vpop.f32.mrf.mxu0
      %v12012 = vadd.f32 0.0, %v12011
      %12013 = vmatmul.bf16.gmra.mxu0 %v11862
      %v12014 = vpop.f32.mrf.mxu0
      %v12015 = vadd.f32 0.0, %v12014
      %v12016 = vpop.f32.mrf.mxu0
      %v12017 = vadd.f32 0.0, %v12016
      %12018 = vmatmul.bf16.gmra.mxu0 %v11865
      %v12019 = vpop.f32.mrf.mxu0
      %v12020 = vadd.f32 0.0, %v12019
      %v12021 = vpop.f32.mrf.mxu0
      %v12022 = vadd.f32 0.0, %v12021
      %12023 = vmatmul.bf16.gmra.mxu0 %v11868
      %v12024 = vpop.f32.mrf.mxu0
      %v12025 = vadd.f32 0.0, %v12024
      %v12026 = vpop.f32.mrf.mxu0
      %v12027 = vadd.f32 0.0, %v12026
      %12028 = vmatmul.bf16.gmra.mxu0 %v11871
      %v12029 = vpop.f32.mrf.mxu0
      %v12030 = vadd.f32 0.0, %v12029
      %v12031 = vpop.f32.mrf.mxu0
      %v12032 = vadd.f32 0.0, %v12031
      %12033 = vmatmul.bf16.gmra.mxu0 %v11874
      %v12034 = vpop.f32.mrf.mxu0
      %v12035 = vadd.f32 0.0, %v12034
      %v12036 = vpop.f32.mrf.mxu0
      %v12037 = vadd.f32 0.0, %v12036
      %12038 = vmatmul.bf16.gmra.mxu0 %v11877
      %v12039 = vpop.f32.mrf.mxu0
      %v12040 = vadd.f32 0.0, %v12039
      %v12041 = vpop.f32.mrf.mxu0
      %v12042 = vadd.f32 0.0, %v12041
      %12043 = vmatmul.bf16.gmra.mxu0 %v11880
      %v12044 = vpop.f32.mrf.mxu0
      %v12045 = vadd.f32 0.0, %v12044
      %v12046 = vpop.f32.mrf.mxu0
      %v12047 = vadd.f32 0.0, %v12046
      %12048 = vmatmul.bf16.gmra.mxu0 %v11883
      %v12049 = vpop.f32.mrf.mxu0
      %v12050 = vadd.f32 0.0, %v12049
      %v12051 = vpop.f32.mrf.mxu0
      %v12052 = vadd.f32 0.0, %v12051
      %12053 = vdwg.mxu0
      %v12068 = vunpack.c.l.b16 %v11685
      %v12069 = vunpack.c.l.b16 %v11686
      %v12070 = vunpack.c.l.b16 %v11687
      %v12071 = vunpack.c.l.b16 %v11688
      %v12072 = vunpack.c.l.b16 %v11689
      %v12073 = vunpack.c.l.b16 %v11690
      %v12074 = vunpack.c.l.b16 %v11691
      %v12075 = vunpack.c.l.b16 %v11692
      %v12076 = vunpack.c.l.b16 %v11693
      %v12077 = vunpack.c.l.b16 %v11694
      %v12078 = vunpack.c.l.b16 %v11695
      %v12079 = vunpack.c.l.b16 %v11696
      %v12080 = vunpack.c.l.b16 %v11697
      %v12081 = vunpack.c.l.b16 %v11698
      %v12082 = vpack.c.b16 %v12069, %v12068
      %v12083 = vpack.c.b16 %v12071, %v12070
      %v12084 = vpack.c.b16 %v12073, %v12072
      %v12085 = vpack.c.b16 %v12075, %v12074
      %v12086 = vpack.c.b16 %v12077, %v12076
      %v12087 = vpack.c.b16 %v12079, %v12078
      %v12088 = vpack.c.b16 %v12081, %v12080
      %v12096 = vsel %vm11788, %v1216, 0
      %v12099 = vsel %vm11788, %v11661, 0
      %v12102 = vsel %vm11788, %v11662, 0
      %v12105 = vsel %vm11788, %v11663, 0
      %v12108 = vsel %vm11788, %v11664, 0
      %v12111 = vsel %vm11788, %v11665, 0
      %v12114 = vsel %vm11788, %v11666, 0
      %v12117 = vsel %vm11788, %v11667, 0
      %v12120 = vsel %vm11788, %v11668, 0
      %v12123 = vsel %vm11788, %v11669, 0
      %v12126 = vsel %vm11788, %v11670, 0
      %v12129 = vsel %vm11788, %v11671, 0
      %v12132 = vsel %vm11788, %v11672, 0
      %v12135 = vsel %vm11788, %v11673, 0
      %v12138 = vsel %vm11788, %v11674, 0
      %v12141 = vsel %vm11788, %v11675, 0
      %v12144 = vsel %vm11788, %v11676, 0
      %v12147 = vsel %vm11788, %v11677, 0
      %v12150 = vsel %vm11788, %v11678, 0
      %v12153 = vsel %vm11788, %v11679, 0
      %v12156 = vsel %vm11788, %v11680, 0
      %v12159 = vsel %vm11788, %v11681, 0
      %v12162 = vsel %vm11788, %v11682, 0
      %v12165 = vsel %vm11788, %v11683, 0
      %v12168 = vsel %vm11788, %v11684, 0
      %12170 = vmatpush.bf16.msra.mxu0 0
      %12171 = vmatpush.bf16.msra.mxu0 %v12088
      %12172 = vmatpush.bf16.msra.mxu0 %v12087
      %12173 = vmatpush.bf16.msra.mxu0 %v12086
      %12174 = vmatpush.bf16.msra.mxu0 %v12085
      %12175 = vmatpush.bf16.msra.mxu0 %v12084
      %12176 = vmatpush.bf16.msra.mxu0 %v12083
      %12177 = vmatpush.bf16.msra.mxu0 %v12082
      %12178 = vmatmul.bf16.gmra.mxu0 %v12096
      %v12179 = vpop.f32.mrf.mxu0
      %v12180 = vadd.f32 %v11895, %v12179
      %v12181 = vpop.f32.mrf.mxu0
      %v12182 = vadd.f32 %v11897, %v12181
      %12183 = vmatmul.bf16.gmra.mxu0 %v12096
      %v12184 = vpop.f32.mrf.mxu0
      %v12185 = vadd.f32 %v11900, %v12184
      %v12186 = vpop.f32.mrf.mxu0
      %v12187 = vadd.f32 %v11902, %v12186
      %12188 = vmatmul.bf16.gmra.mxu0 %v12096
      %v12189 = vpop.f32.mrf.mxu0
      %v12190 = vadd.f32 %v11905, %v12189
      %v12191 = vpop.f32.mrf.mxu0
      %v12192 = vadd.f32 %v11907, %v12191
      %12193 = vmatmul.bf16.gmra.mxu0 %v12096
      %v12194 = vpop.f32.mrf.mxu0
      %v12195 = vadd.f32 %v11910, %v12194
      %v12196 = vpop.f32.mrf.mxu0
      %v12197 = vadd.f32 %v11912, %v12196
      %12198 = vmatmul.bf16.gmra.mxu0 %v12096
      %v12199 = vpop.f32.mrf.mxu0
      %v12200 = vadd.f32 %v11915, %v12199
      %v12201 = vpop.f32.mrf.mxu0
      %v12202 = vadd.f32 %v11917, %v12201
      %12203 = vmatmul.bf16.gmra.mxu0 %v12096
      %v12204 = vpop.f32.mrf.mxu0
      %v12205 = vadd.f32 %v11920, %v12204
      %v12206 = vpop.f32.mrf.mxu0
      %v12207 = vadd.f32 %v11922, %v12206
      %12208 = vmatmul.bf16.gmra.mxu0 %v12096
      %v12209 = vpop.f32.mrf.mxu0
      %v12210 = vadd.f32 %v11925, %v12209
      %v12211 = vpop.f32.mrf.mxu0
      %v12212 = vadd.f32 %v11927, %v12211
      %12213 = vmatmul.bf16.gmra.mxu0 %v12096
      %v12214 = vpop.f32.mrf.mxu0
      %v12215 = vadd.f32 %v11930, %v12214
      %v12216 = vpop.f32.mrf.mxu0
      %v12217 = vadd.f32 %v11932, %v12216
      %12218 = vmatmul.bf16.gmra.mxu0 %v12099
      %v12219 = vpop.f32.mrf.mxu0
      %v12220 = vadd.f32 %v11935, %v12219
      %v12221 = vpop.f32.mrf.mxu0
      %v12222 = vadd.f32 %v11937, %v12221
      %12223 = vmatmul.bf16.gmra.mxu0 %v12102
      %v12224 = vpop.f32.mrf.mxu0
      %v12225 = vadd.f32 %v11940, %v12224
      %v12226 = vpop.f32.mrf.mxu0
      %v12227 = vadd.f32 %v11942, %v12226
      %12228 = vmatmul.bf16.gmra.mxu0 %v12105
      %v12229 = vpop.f32.mrf.mxu0
      %v12230 = vadd.f32 %v11945, %v12229
      %v12231 = vpop.f32.mrf.mxu0
      %v12232 = vadd.f32 %v11947, %v12231
      %12233 = vmatmul.bf16.gmra.mxu0 %v12108
      %v12234 = vpop.f32.mrf.mxu0
      %v12235 = vadd.f32 %v11950, %v12234
      %v12236 = vpop.f32.mrf.mxu0
      %v12237 = vadd.f32 %v11952, %v12236
      %12238 = vmatmul.bf16.gmra.mxu0 %v12111
      %v12239 = vpop.f32.mrf.mxu0
      %v12240 = vadd.f32 %v11955, %v12239
      %v12241 = vpop.f32.mrf.mxu0
      %v12242 = vadd.f32 %v11957, %v12241
      %12243 = vmatmul.bf16.gmra.mxu0 %v12114
      %v12244 = vpop.f32.mrf.mxu0
      %v12245 = vadd.f32 %v11960, %v12244
      %v12246 = vpop.f32.mrf.mxu0
      %v12247 = vadd.f32 %v11962, %v12246
      %12248 = vmatmul.bf16.gmra.mxu0 %v12117
      %v12249 = vpop.f32.mrf.mxu0
      %v12250 = vadd.f32 %v11965, %v12249
      %v12251 = vpop.f32.mrf.mxu0
      %v12252 = vadd.f32 %v11967, %v12251
      %12253 = vmatmul.bf16.gmra.mxu0 %v12120
      %v12254 = vpop.f32.mrf.mxu0
      %v12255 = vadd.f32 %v11970, %v12254
      %v12256 = vpop.f32.mrf.mxu0
      %v12257 = vadd.f32 %v11972, %v12256
      %12258 = vmatmul.bf16.gmra.mxu0 %v12123
      %v12259 = vpop.f32.mrf.mxu0
      %v12260 = vadd.f32 %v11975, %v12259
      %v12261 = vpop.f32.mrf.mxu0
      %v12262 = vadd.f32 %v11977, %v12261
      %12263 = vmatmul.bf16.gmra.mxu0 %v12126
      %v12264 = vpop.f32.mrf.mxu0
      %v12265 = vadd.f32 %v11980, %v12264
      %v12266 = vpop.f32.mrf.mxu0
      %v12267 = vadd.f32 %v11982, %v12266
      %12268 = vmatmul.bf16.gmra.mxu0 %v12129
      %v12269 = vpop.f32.mrf.mxu0
      %v12270 = vadd.f32 %v11985, %v12269
      %v12271 = vpop.f32.mrf.mxu0
      %v12272 = vadd.f32 %v11987, %v12271
      %12273 = vmatmul.bf16.gmra.mxu0 %v12132
      %v12274 = vpop.f32.mrf.mxu0
      %v12275 = vadd.f32 %v11990, %v12274
      %v12276 = vpop.f32.mrf.mxu0
      %v12277 = vadd.f32 %v11992, %v12276
      %12278 = vmatmul.bf16.gmra.mxu0 %v12135
      %v12279 = vpop.f32.mrf.mxu0
      %v12280 = vadd.f32 %v11995, %v12279
      %v12281 = vpop.f32.mrf.mxu0
      %v12282 = vadd.f32 %v11997, %v12281
      %12283 = vmatmul.bf16.gmra.mxu0 %v12138
      %v12284 = vpop.f32.mrf.mxu0
      %v12285 = vadd.f32 %v12000, %v12284
      %v12286 = vpop.f32.mrf.mxu0
      %v12287 = vadd.f32 %v12002, %v12286
      %12288 = vmatmul.bf16.gmra.mxu0 %v12141
      %v12289 = vpop.f32.mrf.mxu0
      %v12290 = vadd.f32 %v12005, %v12289
      %v12291 = vpop.f32.mrf.mxu0
      %v12292 = vadd.f32 %v12007, %v12291
      %12293 = vmatmul.bf16.gmra.mxu0 %v12144
      %v12294 = vpop.f32.mrf.mxu0
      %v12295 = vadd.f32 %v12010, %v12294
      %v12296 = vpop.f32.mrf.mxu0
      %v12297 = vadd.f32 %v12012, %v12296
      %12298 = vmatmul.bf16.gmra.mxu0 %v12147
      %v12299 = vpop.f32.mrf.mxu0
      %v12300 = vadd.f32 %v12015, %v12299
      %v12301 = vpop.f32.mrf.mxu0
      %v12302 = vadd.f32 %v12017, %v12301
      %12303 = vmatmul.bf16.gmra.mxu0 %v12150
      %v12304 = vpop.f32.mrf.mxu0
      %v12305 = vadd.f32 %v12020, %v12304
      %v12306 = vpop.f32.mrf.mxu0
      %v12307 = vadd.f32 %v12022, %v12306
      %12308 = vmatmul.bf16.gmra.mxu0 %v12153
      %v12309 = vpop.f32.mrf.mxu0
      %v12310 = vadd.f32 %v12025, %v12309
      %v12311 = vpop.f32.mrf.mxu0
      %v12312 = vadd.f32 %v12027, %v12311
      %12313 = vmatmul.bf16.gmra.mxu0 %v12156
      %v12314 = vpop.f32.mrf.mxu0
      %v12315 = vadd.f32 %v12030, %v12314
      %v12316 = vpop.f32.mrf.mxu0
      %v12317 = vadd.f32 %v12032, %v12316
      %12318 = vmatmul.bf16.gmra.mxu0 %v12159
      %v12319 = vpop.f32.mrf.mxu0
      %v12320 = vadd.f32 %v12035, %v12319
      %v12321 = vpop.f32.mrf.mxu0
      %v12322 = vadd.f32 %v12037, %v12321
      %12323 = vmatmul.bf16.gmra.mxu0 %v12162
      %v12324 = vpop.f32.mrf.mxu0
      %v12325 = vadd.f32 %v12040, %v12324
      %v12326 = vpop.f32.mrf.mxu0
      %v12327 = vadd.f32 %v12042, %v12326
      %12328 = vmatmul.bf16.gmra.mxu0 %v12165
      %v12329 = vpop.f32.mrf.mxu0
      %v12330 = vadd.f32 %v12045, %v12329
      %v12331 = vpop.f32.mrf.mxu0
      %v12332 = vadd.f32 %v12047, %v12331
      %12333 = vmatmul.bf16.gmra.mxu0 %v12168
      %v12334 = vpop.f32.mrf.mxu0
      %v12335 = vadd.f32 %v12050, %v12334
      %v12336 = vpop.f32.mrf.mxu0
      %v12337 = vadd.f32 %v12052, %v12336
      %12338 = vdwg.mxu0
      %s12339 = scalar_lea.vmem %s3, 112
      %v12340 = vld [vmem:[%s12339] sm:$0xf]
      %v12341 = vld [vmem:[%s12339 + $0x4] sm:$0xf]
      %v12342 = vld [vmem:[%s12339 + $0x8] sm:$0xf]
      %v12343 = vld [vmem:[%s12339 + $0xc] sm:$0xf]
      %v12344 = vld [vmem:[%s12339 + $0x10] sm:$0xf]
      %v12345 = vld [vmem:[%s12339 + $0x14] sm:$0xf]
      %v12346 = vld [vmem:[%s12339 + $0x18] sm:$0xf]
      %v12347 = vld [vmem:[%s12339 + $0x1c] sm:$0xf]
      %v12348 = vld [vmem:[%s12339 + $0x20] sm:$0xf]
      %v12349 = vld [vmem:[%s12339 + $0x24] sm:$0xf]
      %v12350 = vld [vmem:[%s12339 + $0x28] sm:$0xf]
      %v12351 = vld [vmem:[%s12339 + $0x2c] sm:$0xf]
      %v12352 = vld [vmem:[%s12339 + $0x30] sm:$0xf]
      %v12353 = vld [vmem:[%s12339 + $0x34] sm:$0xf]
      %v12368 = vunpack.c.l.b16 %v12340
      %v12369 = vunpack.c.l.b16 %v12341
      %v12370 = vunpack.c.l.b16 %v12342
      %v12371 = vunpack.c.l.b16 %v12343
      %v12372 = vunpack.c.l.b16 %v12344
      %v12373 = vunpack.c.l.b16 %v12345
      %v12374 = vunpack.c.l.b16 %v12346
      %v12375 = vunpack.c.l.b16 %v12347
      %v12376 = vunpack.c.l.b16 %v12348
      %v12377 = vunpack.c.l.b16 %v12349
      %v12378 = vunpack.c.l.b16 %v12350
      %v12379 = vunpack.c.l.b16 %v12351
      %v12380 = vunpack.c.l.b16 %v12352
      %v12381 = vunpack.c.l.b16 %v12353
      %v12382 = vpack.c.b16 %v12369, %v12368
      %v12383 = vpack.c.b16 %v12371, %v12370
      %v12384 = vpack.c.b16 %v12373, %v12372
      %v12385 = vpack.c.b16 %v12375, %v12374
      %v12386 = vpack.c.b16 %v12377, %v12376
      %v12387 = vpack.c.b16 %v12379, %v12378
      %v12388 = vpack.c.b16 %v12381, %v12380
      %12396 = vmatpush.bf16.msra.mxu0 0
      %12397 = vmatpush.bf16.msra.mxu0 %v12388
      %12398 = vmatpush.bf16.msra.mxu0 %v12387
      %12399 = vmatpush.bf16.msra.mxu0 %v12386
      %12400 = vmatpush.bf16.msra.mxu0 %v12385
      %12401 = vmatpush.bf16.msra.mxu0 %v12384
      %12402 = vmatpush.bf16.msra.mxu0 %v12383
      %12403 = vmatpush.bf16.msra.mxu0 %v12382
      %12404 = vmatmul.bf16.gmra.mxu0 %v12099
      %v12405 = vpop.f32.mrf.mxu0
      %v12406 = vadd.f32 0.0, %v12405
      %v12407 = vpop.f32.mrf.mxu0
      %v12408 = vadd.f32 0.0, %v12407
      %12409 = vmatmul.bf16.gmra.mxu0 %v12102
      %v12410 = vpop.f32.mrf.mxu0
      %v12411 = vadd.f32 0.0, %v12410
      %v12412 = vpop.f32.mrf.mxu0
      %v12413 = vadd.f32 0.0, %v12412
      %12414 = vmatmul.bf16.gmra.mxu0 %v12105
      %v12415 = vpop.f32.mrf.mxu0
      %v12416 = vadd.f32 0.0, %v12415
      %v12417 = vpop.f32.mrf.mxu0
      %v12418 = vadd.f32 0.0, %v12417
      %12419 = vmatmul.bf16.gmra.mxu0 %v12108
      %v12420 = vpop.f32.mrf.mxu0
      %v12421 = vadd.f32 0.0, %v12420
      %v12422 = vpop.f32.mrf.mxu0
      %v12423 = vadd.f32 0.0, %v12422
      %12424 = vmatmul.bf16.gmra.mxu0 %v12111
      %v12425 = vpop.f32.mrf.mxu0
      %v12426 = vadd.f32 0.0, %v12425
      %v12427 = vpop.f32.mrf.mxu0
      %v12428 = vadd.f32 0.0, %v12427
      %12429 = vmatmul.bf16.gmra.mxu0 %v12114
      %v12430 = vpop.f32.mrf.mxu0
      %v12431 = vadd.f32 0.0, %v12430
      %v12432 = vpop.f32.mrf.mxu0
      %v12433 = vadd.f32 0.0, %v12432
      %12434 = vmatmul.bf16.gmra.mxu0 %v12117
      %v12435 = vpop.f32.mrf.mxu0
      %v12436 = vadd.f32 0.0, %v12435
      %v12437 = vpop.f32.mrf.mxu0
      %v12438 = vadd.f32 0.0, %v12437
      %12439 = vmatmul.bf16.gmra.mxu0 %v12120
      %v12440 = vpop.f32.mrf.mxu0
      %v12441 = vadd.f32 0.0, %v12440
      %v12442 = vpop.f32.mrf.mxu0
      %v12443 = vadd.f32 0.0, %v12442
      %12444 = vmatmul.bf16.gmra.mxu0 %v12123
      %v12445 = vpop.f32.mrf.mxu0
      %v12446 = vadd.f32 0.0, %v12445
      %v12447 = vpop.f32.mrf.mxu0
      %v12448 = vadd.f32 0.0, %v12447
      %12449 = vmatmul.bf16.gmra.mxu0 %v12126
      %v12450 = vpop.f32.mrf.mxu0
      %v12451 = vadd.f32 0.0, %v12450
      %v12452 = vpop.f32.mrf.mxu0
      %v12453 = vadd.f32 0.0, %v12452
      %12454 = vmatmul.bf16.gmra.mxu0 %v12129
      %v12455 = vpop.f32.mrf.mxu0
      %v12456 = vadd.f32 0.0, %v12455
      %v12457 = vpop.f32.mrf.mxu0
      %v12458 = vadd.f32 0.0, %v12457
      %12459 = vmatmul.bf16.gmra.mxu0 %v12132
      %v12460 = vpop.f32.mrf.mxu0
      %v12461 = vadd.f32 0.0, %v12460
      %v12462 = vpop.f32.mrf.mxu0
      %v12463 = vadd.f32 0.0, %v12462
      %12464 = vmatmul.bf16.gmra.mxu0 %v12135
      %v12465 = vpop.f32.mrf.mxu0
      %v12466 = vadd.f32 0.0, %v12465
      %v12467 = vpop.f32.mrf.mxu0
      %v12468 = vadd.f32 0.0, %v12467
      %12469 = vmatmul.bf16.gmra.mxu0 %v12138
      %v12470 = vpop.f32.mrf.mxu0
      %v12471 = vadd.f32 0.0, %v12470
      %v12472 = vpop.f32.mrf.mxu0
      %v12473 = vadd.f32 0.0, %v12472
      %12474 = vmatmul.bf16.gmra.mxu0 %v12141
      %v12475 = vpop.f32.mrf.mxu0
      %v12476 = vadd.f32 0.0, %v12475
      %v12477 = vpop.f32.mrf.mxu0
      %v12478 = vadd.f32 0.0, %v12477
      %12479 = vmatmul.bf16.gmra.mxu0 %v12144
      %v12480 = vpop.f32.mrf.mxu0
      %v12481 = vadd.f32 0.0, %v12480
      %v12482 = vpop.f32.mrf.mxu0
      %v12483 = vadd.f32 0.0, %v12482
      %12484 = vmatmul.bf16.gmra.mxu0 %v12147
      %v12485 = vpop.f32.mrf.mxu0
      %v12486 = vadd.f32 0.0, %v12485
      %v12487 = vpop.f32.mrf.mxu0
      %v12488 = vadd.f32 0.0, %v12487
      %12489 = vmatmul.bf16.gmra.mxu0 %v12150
      %v12490 = vpop.f32.mrf.mxu0
      %v12491 = vadd.f32 0.0, %v12490
      %v12492 = vpop.f32.mrf.mxu0
      %v12493 = vadd.f32 0.0, %v12492
      %12494 = vmatmul.bf16.gmra.mxu0 %v12153
      %v12495 = vpop.f32.mrf.mxu0
      %v12496 = vadd.f32 0.0, %v12495
      %v12497 = vpop.f32.mrf.mxu0
      %v12498 = vadd.f32 0.0, %v12497
      %12499 = vmatmul.bf16.gmra.mxu0 %v12156
      %v12500 = vpop.f32.mrf.mxu0
      %v12501 = vadd.f32 0.0, %v12500
      %v12502 = vpop.f32.mrf.mxu0
      %v12503 = vadd.f32 0.0, %v12502
      %12504 = vmatmul.bf16.gmra.mxu0 %v12159
      %v12505 = vpop.f32.mrf.mxu0
      %v12506 = vadd.f32 0.0, %v12505
      %v12507 = vpop.f32.mrf.mxu0
      %v12508 = vadd.f32 0.0, %v12507
      %12509 = vmatmul.bf16.gmra.mxu0 %v12162
      %v12510 = vpop.f32.mrf.mxu0
      %v12511 = vadd.f32 0.0, %v12510
      %v12512 = vpop.f32.mrf.mxu0
      %v12513 = vadd.f32 0.0, %v12512
      %12514 = vmatmul.bf16.gmra.mxu0 %v12165
      %v12515 = vpop.f32.mrf.mxu0
      %v12516 = vadd.f32 0.0, %v12515
      %v12517 = vpop.f32.mrf.mxu0
      %v12518 = vadd.f32 0.0, %v12517
      %12519 = vmatmul.bf16.gmra.mxu0 %v12168
      %v12520 = vpop.f32.mrf.mxu0
      %v12521 = vadd.f32 0.0, %v12520
      %v12522 = vpop.f32.mrf.mxu0
      %v12523 = vadd.f32 0.0, %v12522
      %12524 = vmatmul.bf16.gmra.mxu0 %v12096
      %v12525 = vpop.f32.mrf.mxu0
      %v12526 = vadd.f32 0.0, %v12525
      %v12527 = vpop.f32.mrf.mxu0
      %v12528 = vadd.f32 0.0, %v12527
      %12529 = vmatmul.bf16.gmra.mxu0 %v12096
      %v12530 = vpop.f32.mrf.mxu0
      %v12531 = vadd.f32 0.0, %v12530
      %v12532 = vpop.f32.mrf.mxu0
      %v12533 = vadd.f32 0.0, %v12532
      %12534 = vmatmul.bf16.gmra.mxu0 %v12096
      %v12535 = vpop.f32.mrf.mxu0
      %v12536 = vadd.f32 0.0, %v12535
      %v12537 = vpop.f32.mrf.mxu0
      %v12538 = vadd.f32 0.0, %v12537
      %12539 = vmatmul.bf16.gmra.mxu0 %v12096
      %v12540 = vpop.f32.mrf.mxu0
      %v12541 = vadd.f32 0.0, %v12540
      %v12542 = vpop.f32.mrf.mxu0
      %v12543 = vadd.f32 0.0, %v12542
      %12544 = vmatmul.bf16.gmra.mxu0 %v12096
      %v12545 = vpop.f32.mrf.mxu0
      %v12546 = vadd.f32 0.0, %v12545
      %v12547 = vpop.f32.mrf.mxu0
      %v12548 = vadd.f32 0.0, %v12547
      %12549 = vmatmul.bf16.gmra.mxu0 %v12096
      %v12550 = vpop.f32.mrf.mxu0
      %v12551 = vadd.f32 0.0, %v12550
      %v12552 = vpop.f32.mrf.mxu0
      %v12553 = vadd.f32 0.0, %v12552
      %12554 = vmatmul.bf16.gmra.mxu0 %v12096
      %v12555 = vpop.f32.mrf.mxu0
      %v12556 = vadd.f32 0.0, %v12555
      %v12557 = vpop.f32.mrf.mxu0
      %v12558 = vadd.f32 0.0, %v12557
      %12559 = vmatmul.bf16.gmra.mxu0 %v12096
      %v12560 = vpop.f32.mrf.mxu0
      %v12561 = vadd.f32 0.0, %v12560
      %v12562 = vpop.f32.mrf.mxu0
      %v12563 = vadd.f32 0.0, %v12562
      %12564 = vdwg.mxu0
      %v12565 = vadd.f32 %v12180, %v12406
      %v12566 = vadd.f32 %v12182, %v12408
      %v12567 = vadd.f32 %v12185, %v12411
      %v12568 = vadd.f32 %v12187, %v12413
      %v12569 = vadd.f32 %v12190, %v12416
      %v12570 = vadd.f32 %v12192, %v12418
      %v12571 = vadd.f32 %v12195, %v12421
      %v12572 = vadd.f32 %v12197, %v12423
      %v12573 = vadd.f32 %v12200, %v12426
      %v12574 = vadd.f32 %v12202, %v12428
      %v12575 = vadd.f32 %v12205, %v12431
      %v12576 = vadd.f32 %v12207, %v12433
      %v12577 = vadd.f32 %v12210, %v12436
      %v12578 = vadd.f32 %v12212, %v12438
      %v12579 = vadd.f32 %v12215, %v12441
      %v12580 = vadd.f32 %v12217, %v12443
      %v12581 = vadd.f32 %v12220, %v12446
      %v12582 = vadd.f32 %v12222, %v12448
      %v12583 = vadd.f32 %v12225, %v12451
      %v12584 = vadd.f32 %v12227, %v12453
      %v12585 = vadd.f32 %v12230, %v12456
      %v12586 = vadd.f32 %v12232, %v12458
      %v12587 = vadd.f32 %v12235, %v12461
      %v12588 = vadd.f32 %v12237, %v12463
      %v12589 = vadd.f32 %v12240, %v12466
      %v12590 = vadd.f32 %v12242, %v12468
      %v12591 = vadd.f32 %v12245, %v12471
      %v12592 = vadd.f32 %v12247, %v12473
      %v12593 = vadd.f32 %v12250, %v12476
      %v12594 = vadd.f32 %v12252, %v12478
      %v12595 = vadd.f32 %v12255, %v12481
      %v12596 = vadd.f32 %v12257, %v12483
      %v12597 = vadd.f32 %v12260, %v12486
      %v12598 = vadd.f32 %v12262, %v12488
      %v12599 = vadd.f32 %v12265, %v12491
      %v12600 = vadd.f32 %v12267, %v12493
      %v12601 = vadd.f32 %v12270, %v12496
      %v12602 = vadd.f32 %v12272, %v12498
      %v12603 = vadd.f32 %v12275, %v12501
      %v12604 = vadd.f32 %v12277, %v12503
      %v12605 = vadd.f32 %v12280, %v12506
      %v12606 = vadd.f32 %v12282, %v12508
      %v12607 = vadd.f32 %v12285, %v12511
      %v12608 = vadd.f32 %v12287, %v12513
      %v12609 = vadd.f32 %v12290, %v12516
      %v12610 = vadd.f32 %v12292, %v12518
      %v12611 = vadd.f32 %v12295, %v12521
      %v12612 = vadd.f32 %v12297, %v12523
      %v12613 = vadd.f32 %v12300, %v12526
      %v12614 = vadd.f32 %v12302, %v12528
      %v12615 = vadd.f32 %v12305, %v12531
      %v12616 = vadd.f32 %v12307, %v12533
      %v12617 = vadd.f32 %v12310, %v12536
      %v12618 = vadd.f32 %v12312, %v12538
      %v12619 = vadd.f32 %v12315, %v12541
      %v12620 = vadd.f32 %v12317, %v12543
      %v12621 = vadd.f32 %v12320, %v12546
      %v12622 = vadd.f32 %v12322, %v12548
      %v12623 = vadd.f32 %v12325, %v12551
      %v12624 = vadd.f32 %v12327, %v12553
      %v12625 = vadd.f32 %v12330, %v12556
      %v12626 = vadd.f32 %v12332, %v12558
      %v12627 = vadd.f32 %v12335, %v12561
      %v12628 = vadd.f32 %v12337, %v12563
      %v12629 = vld [vmem:[%s6] sm:$0x1]
      %v12631 = vperm.slane %v12629, 0
      %v12633 = vadd.f32 %v12565, %v12631
      %v12634 = vadd.f32 %v12566, %v12631
      %v12635 = vadd.f32 %v12567, %v12631
      %v12636 = vadd.f32 %v12568, %v12631
      %v12637 = vadd.f32 %v12569, %v12631
      %v12638 = vadd.f32 %v12570, %v12631
      %v12639 = vadd.f32 %v12571, %v12631
      %v12640 = vadd.f32 %v12572, %v12631
      %v12641 = vadd.f32 %v12573, %v12631
      %v12642 = vadd.f32 %v12574, %v12631
      %v12643 = vadd.f32 %v12575, %v12631
      %v12644 = vadd.f32 %v12576, %v12631
      %v12645 = vadd.f32 %v12577, %v12631
      %v12646 = vadd.f32 %v12578, %v12631
      %v12647 = vadd.f32 %v12579, %v12631
      %v12648 = vadd.f32 %v12580, %v12631
      %v12649 = vadd.f32 %v12581, %v12631
      %v12650 = vadd.f32 %v12582, %v12631
      %v12651 = vadd.f32 %v12583, %v12631
      %v12652 = vadd.f32 %v12584, %v12631
      %v12653 = vadd.f32 %v12585, %v12631
      %v12654 = vadd.f32 %v12586, %v12631
      %v12655 = vadd.f32 %v12587, %v12631
      %v12656 = vadd.f32 %v12588, %v12631
      %v12657 = vadd.f32 %v12589, %v12631
      %v12658 = vadd.f32 %v12590, %v12631
      %v12659 = vadd.f32 %v12591, %v12631
      %v12660 = vadd.f32 %v12592, %v12631
      %v12661 = vadd.f32 %v12593, %v12631
      %v12662 = vadd.f32 %v12594, %v12631
      %v12663 = vadd.f32 %v12595, %v12631
      %v12664 = vadd.f32 %v12596, %v12631
      %v12665 = vadd.f32 %v12597, %v12631
      %v12666 = vadd.f32 %v12598, %v12631
      %v12667 = vadd.f32 %v12599, %v12631
      %v12668 = vadd.f32 %v12600, %v12631
      %v12669 = vadd.f32 %v12601, %v12631
      %v12670 = vadd.f32 %v12602, %v12631
      %v12671 = vadd.f32 %v12603, %v12631
      %v12672 = vadd.f32 %v12604, %v12631
      %v12673 = vadd.f32 %v12605, %v12631
      %v12674 = vadd.f32 %v12606, %v12631
      %v12675 = vadd.f32 %v12607, %v12631
      %v12676 = vadd.f32 %v12608, %v12631
      %v12677 = vadd.f32 %v12609, %v12631
      %v12678 = vadd.f32 %v12610, %v12631
      %v12679 = vadd.f32 %v12611, %v12631
      %v12680 = vadd.f32 %v12612, %v12631
      %v12681 = vadd.f32 %v12613, %v12631
      %v12682 = vadd.f32 %v12614, %v12631
      %v12683 = vadd.f32 %v12615, %v12631
      %v12684 = vadd.f32 %v12616, %v12631
      %v12685 = vadd.f32 %v12617, %v12631
      %v12686 = vadd.f32 %v12618, %v12631
      %v12687 = vadd.f32 %v12619, %v12631
      %v12688 = vadd.f32 %v12620, %v12631
      %v12689 = vadd.f32 %v12621, %v12631
      %v12690 = vadd.f32 %v12622, %v12631
      %v12691 = vadd.f32 %v12623, %v12631
      %v12692 = vadd.f32 %v12624, %v12631
      %v12693 = vadd.f32 %v12625, %v12631
      %v12694 = vadd.f32 %v12626, %v12631
      %v12695 = vadd.f32 %v12627, %v12631
      %v12696 = vadd.f32 %v12628, %v12631
      %v12697 = vmax.f32 %v12633, 0.0
      %v12698 = vmax.f32 %v12634, 0.0
      %v12699 = vmax.f32 %v12635, 0.0
      %v12700 = vmax.f32 %v12636, 0.0
      %v12701 = vmax.f32 %v12637, 0.0
      %v12702 = vmax.f32 %v12638, 0.0
      %v12703 = vmax.f32 %v12639, 0.0
      %v12704 = vmax.f32 %v12640, 0.0
      %v12705 = vmax.f32 %v12641, 0.0
      %v12706 = vmax.f32 %v12642, 0.0
      %v12707 = vmax.f32 %v12643, 0.0
      %v12708 = vmax.f32 %v12644, 0.0
      %v12709 = vmax.f32 %v12645, 0.0
      %v12710 = vmax.f32 %v12646, 0.0
      %v12711 = vmax.f32 %v12647, 0.0
      %v12712 = vmax.f32 %v12648, 0.0
      %v12713 = vmax.f32 %v12649, 0.0
      %v12714 = vmax.f32 %v12650, 0.0
      %v12715 = vmax.f32 %v12651, 0.0
      %v12716 = vmax.f32 %v12652, 0.0
      %v12717 = vmax.f32 %v12653, 0.0
      %v12718 = vmax.f32 %v12654, 0.0
      %v12719 = vmax.f32 %v12655, 0.0
      %v12720 = vmax.f32 %v12656, 0.0
      %v12721 = vmax.f32 %v12657, 0.0
      %v12722 = vmax.f32 %v12658, 0.0
      %v12723 = vmax.f32 %v12659, 0.0
      %v12724 = vmax.f32 %v12660, 0.0
      %v12725 = vmax.f32 %v12661, 0.0
      %v12726 = vmax.f32 %v12662, 0.0
      %v12727 = vmax.f32 %v12663, 0.0
      %v12728 = vmax.f32 %v12664, 0.0
      %v12729 = vmax.f32 %v12665, 0.0
      %v12730 = vmax.f32 %v12666, 0.0
      %v12731 = vmax.f32 %v12667, 0.0
      %v12732 = vmax.f32 %v12668, 0.0
      %v12733 = vmax.f32 %v12669, 0.0
      %v12734 = vmax.f32 %v12670, 0.0
      %v12735 = vmax.f32 %v12671, 0.0
      %v12736 = vmax.f32 %v12672, 0.0
      %v12737 = vmax.f32 %v12673, 0.0
      %v12738 = vmax.f32 %v12674, 0.0
      %v12739 = vmax.f32 %v12675, 0.0
      %v12740 = vmax.f32 %v12676, 0.0
      %v12741 = vmax.f32 %v12677, 0.0
      %v12742 = vmax.f32 %v12678, 0.0
      %v12743 = vmax.f32 %v12679, 0.0
      %v12744 = vmax.f32 %v12680, 0.0
      %v12745 = vmax.f32 %v12681, 0.0
      %v12746 = vmax.f32 %v12682, 0.0
      %v12747 = vmax.f32 %v12683, 0.0
      %v12748 = vmax.f32 %v12684, 0.0
      %v12749 = vmax.f32 %v12685, 0.0
      %v12750 = vmax.f32 %v12686, 0.0
      %v12751 = vmax.f32 %v12687, 0.0
      %v12752 = vmax.f32 %v12688, 0.0
      %v12753 = vmax.f32 %v12689, 0.0
      %v12754 = vmax.f32 %v12690, 0.0
      %v12755 = vmax.f32 %v12691, 0.0
      %v12756 = vmax.f32 %v12692, 0.0
      %v12757 = vmax.f32 %v12693, 0.0
      %v12758 = vmax.f32 %v12694, 0.0
      %v12759 = vmax.f32 %v12695, 0.0
      %v12760 = vmax.f32 %v12696, 0.0
      %v12761 = vadd.f32 %v12697, %v12713
      %v12762 = vadd.f32 %v12698, %v12714
      %v12763 = vadd.f32 %v12699, %v12715
      %v12764 = vadd.f32 %v12700, %v12716
      %v12765 = vadd.f32 %v12701, %v12717
      %v12766 = vadd.f32 %v12702, %v12718
      %v12767 = vadd.f32 %v12703, %v12719
      %v12768 = vadd.f32 %v12704, %v12720
      %v12769 = vadd.f32 %v12705, %v12721
      %v12770 = vadd.f32 %v12706, %v12722
      %v12771 = vadd.f32 %v12707, %v12723
      %v12772 = vadd.f32 %v12708, %v12724
      %v12773 = vadd.f32 %v12709, %v12725
      %v12774 = vadd.f32 %v12710, %v12726
      %v12775 = vadd.f32 %v12711, %v12727
      %v12776 = vadd.f32 %v12712, %v12728
      %v12777 = vadd.f32 %v12761, %v12729
      %v12778 = vadd.f32 %v12762, %v12730
      %v12779 = vadd.f32 %v12763, %v12731
      %v12780 = vadd.f32 %v12764, %v12732
      %v12781 = vadd.f32 %v12765, %v12733
      %v12782 = vadd.f32 %v12766, %v12734
      %v12783 = vadd.f32 %v12767, %v12735
      %v12784 = vadd.f32 %v12768, %v12736
      %v12785 = vadd.f32 %v12769, %v12737
      %v12786 = vadd.f32 %v12770, %v12738
      %v12787 = vadd.f32 %v12771, %v12739
      %v12788 = vadd.f32 %v12772, %v12740
      %v12789 = vadd.f32 %v12773, %v12741
      %v12790 = vadd.f32 %v12774, %v12742
      %v12791 = vadd.f32 %v12775, %v12743
      %v12792 = vadd.f32 %v12776, %v12744
      %v12793 = vadd.f32 %v12777, %v12745
      %v12794 = vadd.f32 %v12778, %v12746
      %v12795 = vadd.f32 %v12779, %v12747
      %v12796 = vadd.f32 %v12780, %v12748
      %v12797 = vadd.f32 %v12781, %v12749
      %v12798 = vadd.f32 %v12782, %v12750
      %v12799 = vadd.f32 %v12783, %v12751
      %v12800 = vadd.f32 %v12784, %v12752
      %v12801 = vadd.f32 %v12785, %v12753
      %v12802 = vadd.f32 %v12786, %v12754
      %v12803 = vadd.f32 %v12787, %v12755
      %v12804 = vadd.f32 %v12788, %v12756
      %v12805 = vadd.f32 %v12789, %v12757
      %v12806 = vadd.f32 %v12790, %v12758
      %v12807 = vadd.f32 %v12791, %v12759
      %v12808 = vadd.f32 %v12792, %v12760
      %12825 = vrot.lane.b32.xlu0 %v12793, 112
      %v12826 = vpop.permute.xlu0 %12825
      %12827 = vrot.lane.b32.xlu0 %v12794, 112
      %v12828 = vpop.permute.xlu0 %12827
      %12829 = vrot.lane.b32.xlu0 %v12795, 112
      %v12830 = vpop.permute.xlu0 %12829
      %12831 = vrot.lane.b32.xlu0 %v12796, 112
      %v12832 = vpop.permute.xlu0 %12831
      %12833 = vrot.lane.b32.xlu0 %v12797, 112
      %v12834 = vpop.permute.xlu0 %12833
      %12835 = vrot.lane.b32.xlu0 %v12798, 112
      %v12836 = vpop.permute.xlu0 %12835
      %12837 = vrot.lane.b32.xlu0 %v12799, 112
      %v12838 = vpop.permute.xlu0 %12837
      %12839 = vrot.lane.b32.xlu0 %v12800, 112
      %v12840 = vpop.permute.xlu0 %12839
      %12841 = vrot.lane.b32.xlu0 %v12801, 112
      %v12842 = vpop.permute.xlu0 %12841
      %12843 = vrot.lane.b32.xlu0 %v12802, 112
      %v12844 = vpop.permute.xlu0 %12843
      %12845 = vrot.lane.b32.xlu0 %v12803, 112
      %v12846 = vpop.permute.xlu0 %12845
      %12847 = vrot.lane.b32.xlu0 %v12804, 112
      %v12848 = vpop.permute.xlu0 %12847
      %12849 = vrot.lane.b32.xlu0 %v12805, 112
      %v12850 = vpop.permute.xlu0 %12849
      %12851 = vrot.lane.b32.xlu0 %v12806, 112
      %v12852 = vpop.permute.xlu0 %12851
      %12853 = vrot.lane.b32.xlu0 %v12807, 112
      %v12854 = vpop.permute.xlu0 %12853
      %12855 = vrot.lane.b32.xlu0 %v12808, 112
      %v12856 = vpop.permute.xlu0 %12855
      %v12873 = vadd.f32 %v12793, %v12826
      %v12874 = vadd.f32 %v12794, %v12828
      %v12875 = vadd.f32 %v12795, %v12830
      %v12876 = vadd.f32 %v12796, %v12832
      %v12877 = vadd.f32 %v12797, %v12834
      %v12878 = vadd.f32 %v12798, %v12836
      %v12879 = vadd.f32 %v12799, %v12838
      %v12880 = vadd.f32 %v12800, %v12840
      %v12881 = vadd.f32 %v12801, %v12842
      %v12882 = vadd.f32 %v12802, %v12844
      %v12883 = vadd.f32 %v12803, %v12846
      %v12884 = vadd.f32 %v12804, %v12848
      %v12885 = vadd.f32 %v12805, %v12850
      %v12886 = vadd.f32 %v12806, %v12852
      %v12887 = vadd.f32 %v12807, %v12854
      %v12888 = vadd.f32 %v12808, %v12856
      %12889 = vrot.lane.b32.xlu0 %v12793, 96
      %v12890 = vpop.permute.xlu0 %12889
      %12891 = vrot.lane.b32.xlu0 %v12794, 96
      %v12892 = vpop.permute.xlu0 %12891
      %12893 = vrot.lane.b32.xlu0 %v12795, 96
      %v12894 = vpop.permute.xlu0 %12893
      %12895 = vrot.lane.b32.xlu0 %v12796, 96
      %v12896 = vpop.permute.xlu0 %12895
      %12897 = vrot.lane.b32.xlu0 %v12797, 96
      %v12898 = vpop.permute.xlu0 %12897
      %12899 = vrot.lane.b32.xlu0 %v12798, 96
      %v12900 = vpop.permute.xlu0 %12899
      %12901 = vrot.lane.b32.xlu0 %v12799, 96
      %v12902 = vpop.permute.xlu0 %12901
      %12903 = vrot.lane.b32.xlu0 %v12800, 96
      %v12904 = vpop.permute.xlu0 %12903
      %12905 = vrot.lane.b32.xlu0 %v12801, 96
      %v12906 = vpop.permute.xlu0 %12905
      %12907 = vrot.lane.b32.xlu0 %v12802, 96
      %v12908 = vpop.permute.xlu0 %12907
      %12909 = vrot.lane.b32.xlu0 %v12803, 96
      %v12910 = vpop.permute.xlu0 %12909
      %12911 = vrot.lane.b32.xlu0 %v12804, 96
      %v12912 = vpop.permute.xlu0 %12911
      %12913 = vrot.lane.b32.xlu0 %v12805, 96
      %v12914 = vpop.permute.xlu0 %12913
      %12915 = vrot.lane.b32.xlu0 %v12806, 96
      %v12916 = vpop.permute.xlu0 %12915
      %12917 = vrot.lane.b32.xlu0 %v12807, 96
      %v12918 = vpop.permute.xlu0 %12917
      %12919 = vrot.lane.b32.xlu0 %v12808, 96
      %v12920 = vpop.permute.xlu0 %12919
      %v12937 = vadd.f32 %v12873, %v12890
      %v12938 = vadd.f32 %v12874, %v12892
      %v12939 = vadd.f32 %v12875, %v12894
      %v12940 = vadd.f32 %v12876, %v12896
      %v12941 = vadd.f32 %v12877, %v12898
      %v12942 = vadd.f32 %v12878, %v12900
      %v12943 = vadd.f32 %v12879, %v12902
      %v12944 = vadd.f32 %v12880, %v12904
      %v12945 = vadd.f32 %v12881, %v12906
      %v12946 = vadd.f32 %v12882, %v12908
      %v12947 = vadd.f32 %v12883, %v12910
      %v12948 = vadd.f32 %v12884, %v12912
      %v12949 = vadd.f32 %v12885, %v12914
      %v12950 = vadd.f32 %v12886, %v12916
      %v12951 = vadd.f32 %v12887, %v12918
      %v12952 = vadd.f32 %v12888, %v12920
      %12953 = vrot.lane.b32.xlu0 %v12793, 80
      %v12954 = vpop.permute.xlu0 %12953
      %12955 = vrot.lane.b32.xlu0 %v12794, 80
      %v12956 = vpop.permute.xlu0 %12955
      %12957 = vrot.lane.b32.xlu0 %v12795, 80
      %v12958 = vpop.permute.xlu0 %12957
      %12959 = vrot.lane.b32.xlu0 %v12796, 80
      %v12960 = vpop.permute.xlu0 %12959
      %12961 = vrot.lane.b32.xlu0 %v12797, 80
      %v12962 = vpop.permute.xlu0 %12961
      %12963 = vrot.lane.b32.xlu0 %v12798, 80
      %v12964 = vpop.permute.xlu0 %12963
      %12965 = vrot.lane.b32.xlu0 %v12799, 80
      %v12966 = vpop.permute.xlu0 %12965
      %12967 = vrot.lane.b32.xlu0 %v12800, 80
      %v12968 = vpop.permute.xlu0 %12967
      %12969 = vrot.lane.b32.xlu0 %v12801, 80
      %v12970 = vpop.permute.xlu0 %12969
      %12971 = vrot.lane.b32.xlu0 %v12802, 80
      %v12972 = vpop.permute.xlu0 %12971
      %12973 = vrot.lane.b32.xlu0 %v12803, 80
      %v12974 = vpop.permute.xlu0 %12973
      %12975 = vrot.lane.b32.xlu0 %v12804, 80
      %v12976 = vpop.permute.xlu0 %12975
      %12977 = vrot.lane.b32.xlu0 %v12805, 80
      %v12978 = vpop.permute.xlu0 %12977
      %12979 = vrot.lane.b32.xlu0 %v12806, 80
      %v12980 = vpop.permute.xlu0 %12979
      %12981 = vrot.lane.b32.xlu0 %v12807, 80
      %v12982 = vpop.permute.xlu0 %12981
      %12983 = vrot.lane.b32.xlu0 %v12808, 80
      %v12984 = vpop.permute.xlu0 %12983
      %v13001 = vadd.f32 %v12937, %v12954
      %v13002 = vadd.f32 %v12938, %v12956
      %v13003 = vadd.f32 %v12939, %v12958
      %v13004 = vadd.f32 %v12940, %v12960
      %v13005 = vadd.f32 %v12941, %v12962
      %v13006 = vadd.f32 %v12942, %v12964
      %v13007 = vadd.f32 %v12943, %v12966
      %v13008 = vadd.f32 %v12944, %v12968
      %v13009 = vadd.f32 %v12945, %v12970
      %v13010 = vadd.f32 %v12946, %v12972
      %v13011 = vadd.f32 %v12947, %v12974
      %v13012 = vadd.f32 %v12948, %v12976
      %v13013 = vadd.f32 %v12949, %v12978
      %v13014 = vadd.f32 %v12950, %v12980
      %v13015 = vadd.f32 %v12951, %v12982
      %v13016 = vadd.f32 %v12952, %v12984
      %v13017 = vmul.f32 %v13001, 0.0625
      %v13018 = vmul.f32 %v13002, 0.0625
      %v13019 = vmul.f32 %v13003, 0.0625
      %v13020 = vmul.f32 %v13004, 0.0625
      %v13021 = vmul.f32 %v13005, 0.0625
      %v13022 = vmul.f32 %v13006, 0.0625
      %v13023 = vmul.f32 %v13007, 0.0625
      %v13024 = vmul.f32 %v13008, 0.0625
      %v13025 = vmul.f32 %v13009, 0.0625
      %v13026 = vmul.f32 %v13010, 0.0625
      %v13027 = vmul.f32 %v13011, 0.0625
      %v13028 = vmul.f32 %v13012, 0.0625
      %v13029 = vmul.f32 %v13013, 0.0625
      %v13030 = vmul.f32 %v13014, 0.0625
      %v13031 = vmul.f32 %v13015, 0.0625
      %v13032 = vmul.f32 %v13016, 0.0625
      %v13033 = vsel %vm1437, %v13017, 0.0
      %v13034 = vsel %vm1437, %v13018, 0.0
      %v13035 = vsel %vm1437, %v13019, 0.0
      %v13036 = vsel %vm1437, %v13020, 0.0
      %v13037 = vsel %vm1437, %v13021, 0.0
      %v13038 = vsel %vm1437, %v13022, 0.0
      %v13039 = vsel %vm1437, %v13023, 0.0
      %v13040 = vsel %vm1437, %v13024, 0.0
      %v13041 = vsel %vm1437, %v13025, 0.0
      %v13042 = vsel %vm1437, %v13026, 0.0
      %v13043 = vsel %vm1437, %v13027, 0.0
      %v13044 = vsel %vm1437, %v13028, 0.0
      %v13045 = vsel %vm1437, %v13029, 0.0
      %v13046 = vsel %vm1437, %v13030, 0.0
      %v13047 = vsel %vm1437, %v13031, 0.0
      %v13048 = vsel %vm1437, %v13032, 0.0
      %13049 = vst [vmem:[%s283] sm:$0xff] %v13033
      %13050 = vst [vmem:[%s283 + $0x8] sm:$0xff] %v13034
      %13051 = vst [vmem:[%s283 + $0x10] sm:$0xff] %v13035
      %13052 = vst [vmem:[%s283 + $0x18] sm:$0xff] %v13036
      %13053 = vst [vmem:[%s283 + $0x20] sm:$0xff] %v13037
      %13054 = vst [vmem:[%s283 + $0x28] sm:$0xff] %v13038
      %13055 = vst [vmem:[%s283 + $0x30] sm:$0xff] %v13039
      %13056 = vst [vmem:[%s283 + $0x38] sm:$0xff] %v13040
      %13057 = vst [vmem:[%s283 + $0x40] sm:$0xff] %v13041
      %13058 = vst [vmem:[%s283 + $0x48] sm:$0xff] %v13042
      %13059 = vst [vmem:[%s283 + $0x50] sm:$0xff] %v13043
      %13060 = vst [vmem:[%s283 + $0x58] sm:$0xff] %v13044
      %13061 = vst [vmem:[%s283 + $0x60] sm:$0xff] %v13045
      %13062 = vst [vmem:[%s283 + $0x68] sm:$0xff] %v13046
      %13063 = vst [vmem:[%s283 + $0x70] sm:$0xff] %v13047
      %13064 = vst [vmem:[%s283 + $0x78] sm:$0xff] %v13048
      %s13065 = smul.u32 16, %s18
      %p13066 = scmp.lt.s32.totalorder %s13065, 31
      %s13067 = scalar_select %p13066, %s13065, 31
      %s13068 = smul.addr %s13067, 8
      %s13069 = scalar_lea.vmem %s7, %s13068
      // Predicated region
      $region49: #{mnist_cnn_forward.1} parent=47 // pred_check
        %p13070 = pneg %p188
      $region50: #{mnist_cnn_forward.1} parent=47 // pred_check_branch
        %13072 = sbr.rel (%p13070) target = $region52
      $region51: #{mnist_cnn_forward.1} parent=47 // pred_region
        %s13073 = smul.u32 16, %s18
      $region52: #{mnist_cnn_forward.1} parent=47 // pred_fallthru
        _
    $region48: #{mnist_cnn_forward.1} parent=5 // pred_fallthru
      _
    %p13074 = scmp.le.s32.totalorder 2, %s13
    // Predicated region
    $region53: #{mnist_cnn_forward.1} parent=5 // pred_check
      %p13075 = pneg %p13074
    $region54: #{mnist_cnn_forward.1} parent=5 // pred_check_branch
      %13077 = sbr.rel (%p13075) target = $region56
    $region55: #{mnist_cnn_forward.1} parent=5 // pred_region
      %s13078 = ssub.s32 %s13, 2
      // Predicated region
      $region57: #{mnist_cnn_forward.1} parent=55 // pred_check
        %p13079 = pneg %p194
      $region58: #{mnist_cnn_forward.1} parent=55 // pred_check_branch
        %13081 = sbr.rel (%p13079) target = $region60
      $region59: #{mnist_cnn_forward.1} parent=55 // pred_region
        %s13082 = smul.u32 16, %s19
        %p13083 = scmp.lt.s32.totalorder %s13082, 31
        %s13084 = scalar_select %p13083, %s13082, 31
        %s13085 = smul.addr %s13084, 8
        %s13086 = scalar_lea.vmem %s7, %s13085
      $region60: #{mnist_cnn_forward.1} parent=55 // pred_fallthru
        _
    $region56: #{mnist_cnn_forward.1} parent=5 // pred_fallthru
      _
  $region6: #{mnist_cnn_forward.1} parent=0 // loop_footer
    %s17 = sadd.s32 1, %s13
  $region7: #{mnist_cnn_forward.1} parent=0 // loop_footer_branch
    %12 = sbr.rel target = $region3
  $region8: #{mnist_cnn_forward.1} parent=0 // loop_exit
    _

</llo_original>
